<compile_context>
chip_gen: v6e
topology: v6e:2x2x1
jax: 0.10.0
libtpu: 0.0.40
codegen_flags: <defaults>
</compile_context>

<pallas_src>
import functools

import numpy as np
import jax
import jax.numpy as jnp
from jax import lax
from jax.experimental import pallas as pl
from jax.experimental.pallas import tpu as pltpu

ACT_BITWIDTH = 8
PROJ_TYPE = "pca"          # 'pca' | 'eye'  ('optim' not implemented)
PER_CHANNEL = True         # stats == 'channel'
MICRO_BLOCK = 2
CHANNELS_DIV = 1

DEFAULT_TILE_NE = 1024               # lane-axis tile (multiple of 128; sweep 512-4096)
VMEM_LIMIT_BYTES = 32 * 1024 * 1024  # explicit scoped-VMEM limit, safe on v5e/v6e/v7x


def _compiler_params(semantics):
    return pltpu.CompilerParams(dimension_semantics=semantics,
                                vmem_limit_bytes=VMEM_LIMIT_BYTES)


def _pick_tile(ne, max_tile):
    """Largest lane tile that is a multiple of 128, divides ne, and is <= max_tile."""
    if ne <= max_tile or ne % 128 != 0:
        return ne            # single full-width block (block == full dim is always legal)
    t = max(128, (max_tile // 128) * 128)
    while t > 128 and ne % t != 0:
        t -= 128
    return t if ne % t == 0 else ne


# ----------------------------------------------------------------------------
# Pallas kernels
# ----------------------------------------------------------------------------
def _mean_cov_kernel(x_ref, sum_ref, gram_ref):
    # Pass A (reduction): fused ReLU + per-channel sum + Gram matrix accumulation.
    @pl.when(pl.program_id(0) == 0)
    def _init():
        sum_ref[...] = jnp.zeros_like(sum_ref)
        gram_ref[...] = jnp.zeros_like(gram_ref)

    r = jnp.maximum(x_ref[...].astype(jnp.float32), 0.0)
    sum_ref[...] += jnp.sum(r, axis=1, keepdims=True)
    rb = r.astype(jnp.bfloat16)                          # bf16 MXU inputs, f32 accum
    gram_ref[...] += lax.dot_general(rb, rb, (((1,), (1,)), ((), ())),
                                     preferred_element_type=jnp.float32)


def _proj_stats_kernel(x_ref, ut_ref, mn_ref, absum_ref, pmax_ref, pmin_ref):
    # Pass B (reduction): centered PCA projection statistics (sum|p|, max p, min p).
    @pl.when(pl.program_id(0) == 0)
    def _init():
        absum_ref[...] = jnp.zeros_like(absum_ref)
        pmax_ref[...] = jnp.full_like(pmax_ref, -jnp.inf)
        pmin_ref[...] = jnp.full_like(pmin_ref, jnp.inf)

    r = jnp.maximum(x_ref[...].astype(jnp.float32), 0.0)
    imc = (r - mn_ref[...]).astype(jnp.bfloat16)
    proj = jnp.dot(ut_ref[...], imc, preferred_element_type=jnp.float32)
    absum_ref[...] += jnp.sum(jnp.abs(proj), axis=1, keepdims=True)
    pmax_ref[...] = jnp.maximum(pmax_ref[...], jnp.max(proj, axis=1, keepdims=True))
    pmin_ref[...] = jnp.minimum(pmin_ref[...], jnp.min(proj, axis=1, keepdims=True))


def _quantized_proj(x_ref, ut_ref, mn_ref, clamp_ref, scale_ref, mult_ref,
                    qmin_ref, same_ref, bitwidth):
    # Recompute the centered projection in-tile (it never round-trips HBM), then
    # clamp + quantize/dequantize with precomputed per-channel parameters.
    r = jnp.maximum(x_ref[...].astype(jnp.float32), 0.0)
    imc = (r - mn_ref[...]).astype(jnp.bfloat16)
    proj = jnp.dot(ut_ref[...], imc, preferred_element_type=jnp.float32)
    cv = clamp_ref[...]
    pc = jnp.clip(proj, -cv, cv)
    if bitwidth >= 30:
        return pc
    q = jnp.round((pc - qmin_ref[...]) * scale_ref[...])   # Round.apply
    deq = q * mult_ref[...] + qmin_ref[...]                 # q * (1/scale) + min (torch)
    return jnp.where(same_ref[...] > 0.5, pc, deq)          # part_quant max==min case


def _quant_mean_kernel(x_ref, ut_ref, mn_ref, clamp_ref, scale_ref, mult_ref,
                       qmin_ref, same_ref, psum_ref, *, bitwidth):
    # Pass C1 (reduction): per-channel sum of the dequantized projection
    # (mean(u @ p) == u @ mean(p), so re-centering needs no reduction over rec).
    @pl.when(pl.program_id(0) == 0)
    def _init():
        psum_ref[...] = jnp.zeros_like(psum_ref)

    p = _quantized_proj(x_ref, ut_ref, mn_ref, clamp_ref, scale_ref, mult_ref,
                        qmin_ref, same_ref, bitwidth)
    psum_ref[...] += jnp.sum(p, axis=1, keepdims=True)


def _reconstruct_kernel(x_ref, ut_ref, u_ref, mn_ref, clamp_ref, scale_ref, mult_ref,
                        qmin_ref, same_ref, rmean_ref, out_ref, *, bitwidth):
    # Pass C2 (parallel tiles): quant/dequant -> u @ p -> re-center -> + mn.
    p = _quantized_proj(x_ref, ut_ref, mn_ref, clamp_ref, scale_ref, mult_ref,
                        qmin_ref, same_ref, bitwidth)
    rec = jnp.dot(u_ref[...], p.astype(jnp.bfloat16),
                  preferred_element_type=jnp.float32)
    out_ref[...] = rec - rmean_ref[...] + mn_ref[...]


# ----------------------------------------------------------------------------
# pallas_call wrappers (all tiled over numElems)
# ----------------------------------------------------------------------------
def mean_cov_sums(im, tile):
    ch, ne = im.shape
    return pl.pallas_call(
        _mean_cov_kernel,
        grid_spec=pltpu.PrefetchScalarGridSpec(
            num_scalar_prefetch=0,
            grid=(ne // tile,),
            in_specs=[pl.BlockSpec((ch, tile), lambda k: (0, k))],
            out_specs=(pl.BlockSpec((ch, 1), lambda k: (0, 0)),
                       pl.BlockSpec((ch, ch), lambda k: (0, 0))),
        ),
        out_shape=(jax.ShapeDtypeStruct((ch, 1), jnp.float32),
                   jax.ShapeDtypeStruct((ch, ch), jnp.float32)),
        compiler_params=_compiler_params(("arbitrary",)),
    )(im)


def proj_stats(im, ut, mn, tile):
    ch, ne = im.shape
    vec = pl.BlockSpec((ch, 1), lambda k: (0, 0))
    mat = pl.BlockSpec((ch, ch), lambda k: (0, 0))
    return pl.pallas_call(
        _proj_stats_kernel,
        grid_spec=pltpu.PrefetchScalarGridSpec(
            num_scalar_prefetch=0,
            grid=(ne // tile,),
            in_specs=[pl.BlockSpec((ch, tile), lambda k: (0, k)), mat, vec],
            out_specs=(vec, vec, vec),
        ),
        out_shape=tuple(jax.ShapeDtypeStruct((ch, 1), jnp.float32) for _ in range(3)),
        compiler_params=_compiler_params(("arbitrary",)),
    )(im, ut, mn)


def quant_proj_mean(im, ut, mn, clamp, scale, mult, qmin, same, tile, bitwidth):
    ch, ne = im.shape
    vec = pl.BlockSpec((ch, 1), lambda k: (0, 0))
    mat = pl.BlockSpec((ch, ch), lambda k: (0, 0))
    return pl.pallas_call(
        functools.partial(_quant_mean_kernel, bitwidth=bitwidth),
        grid_spec=pltpu.PrefetchScalarGridSpec(
            num_scalar_prefetch=0,
            grid=(ne // tile,),
            in_specs=[pl.BlockSpec((ch, tile), lambda k: (0, k)),
                      mat, vec, vec, vec, vec, vec, vec],
            out_specs=vec,
        ),
        out_shape=jax.ShapeDtypeStruct((ch, 1), jnp.float32),
        compiler_params=_compiler_params(("arbitrary",)),
    )(im, ut, mn, clamp, scale, mult, qmin, same)


def quant_reconstruct(im, ut, u, mn, clamp, scale, mult, qmin, same, rec_mean,
                      tile, bitwidth):
    ch, ne = im.shape
    vec = pl.BlockSpec((ch, 1), lambda k: (0, 0))
    mat = pl.BlockSpec((ch, ch), lambda k: (0, 0))
    return pl.pallas_call(
        functools.partial(_reconstruct_kernel, bitwidth=bitwidth),
        grid_spec=pltpu.PrefetchScalarGridSpec(
            num_scalar_prefetch=0,
            grid=(ne // tile,),
            in_specs=[pl.BlockSpec((ch, tile), lambda k: (0, k)),
                      mat, mat, vec, vec, vec, vec, vec, vec, vec],
            out_specs=pl.BlockSpec((ch, tile), lambda k: (0, k)),
        ),
        out_shape=jax.ShapeDtypeStruct((ch, ne), jnp.float32),
        # Independent tiles -> "parallel": lets v7x shard across its 2 TensorCores.
        compiler_params=_compiler_params(("parallel",)),
    )(im, ut, u, mn, clamp, scale, mult, qmin, same, rec_mean)


# ----------------------------------------------------------------------------
# plain-JAX glue: collapsed reshapes, on-device SVD, on-device clamp solve
# ----------------------------------------------------------------------------
def features_reshape(x, N, C, H, W, micro, chdiv):
    # Equivalent to the torch featuresReshape chain, collapsed to one transpose.
    Ct = C // chdiv
    Hb, Wb = H // micro, W // micro
    x = x.reshape(N * chdiv, Ct, Hb, micro, Wb, micro)     # (a, ct, hb, ih, wb, iw)
    x = jnp.transpose(x, (1, 3, 5, 0, 2, 4))               # (ct, ih, iw, a, hb, wb)
    return x.reshape(Ct * micro * micro, N * chdiv * Hb * Wb)


def features_reshape_back(y, N, C, H, W, micro, chdiv):
    Ct = C // chdiv
    Hb, Wb = H // micro, W // micro
    y = y.reshape(Ct, micro, micro, N * chdiv, Hb, Wb)     # (ct, ih, iw, a, hb, wb)
    y = jnp.transpose(y, (3, 0, 4, 1, 5, 2))               # (a, ct, hb, ih, wb, iw)
    return y.reshape(N, C, H, W)


def solve_clamp_device(lap_b, bitwidth):
    # Per-channel Laplace-MSE-optimal clamp (replaces scipy.optimize.minimize_scalar)
    # via a vectorized on-device Newton solve: minimize b^2 e^{-a/b} + a^2/(24*2^(2B)).
    b = jnp.maximum(lap_b, 1e-30)
    d = 12.0 * (2.0 ** (2 * bitwidth))
    a0 = b * float(np.log(d))            # start just right of the root -> monotone conv.

    def body(_, a):
        e = jnp.exp(-a / b)
        g = -b * e + a / d               # derivative of mse_laplace
        gp = e + 1.0 / d
        return a - g / gp

    a = lax.fori_loop(0, 25, body, a0)
    return jnp.where(lap_b > 0, a, 0.0)


def relu_pca_forward(x, tile_ne=DEFAULT_TILE_NE):
    N, C, H, W = x.shape
    micro = min(MICRO_BLOCK, H)
    assert C % CHANNELS_DIV == 0 and H % micro == 0 and W % micro == 0

    im = features_reshape(x, N, C, H, W, micro, CHANNELS_DIV)   # (channels, numElems)
    ch, ne = im.shape
    im = im.astype(jnp.bfloat16)             # bf16 activation stream: halves HBM reads
    tile = _pick_tile(ne, tile_ne)

    # Pass A: ReLU + per-channel sum + Gram  ->  mean / covariance (no imc in HBM).
    rsum, gram = mean_cov_sums(im, tile)
    mn = rsum / ne
    cov = gram / ne - mn @ mn.T

    # collectStats: projection basis (torch.svd of cov) -- on-device, no host sync.
    if PROJ_TYPE == "pca":
        u, _s, _ = jnp.linalg.svd(cov)
    elif PROJ_TYPE == "eye":
        u = jnp.eye(ch, dtype=jnp.float32)
    else:
        raise ValueError("Wrong projection type")
    u = u.astype(jnp.float32)
    u_bf = u.astype(jnp.bfloat16)
    ut_bf = u.T.astype(jnp.bfloat16)         # pre-transposed: no in-kernel transpose

    # Pass B: per-channel sum|proj|, max(proj), min(proj)   (stats == 'channel').
    absum, pmax, pmin = proj_stats(im, ut_bf, mn, tile)
    lap_b = absum / ne
    clamp = solve_clamp_device(lap_b, ACT_BITWIDTH)

    # clamp() is monotone, so extrema of the clamped projection = clamp of raw extrema.
    dmax = jnp.clip(pmax, -clamp, clamp)
    dmin = jnp.clip(pmin, -clamp, clamp)
    same = (dmax == dmin).astype(jnp.float32)
    rng = jnp.where(same > 0.5, 1.0, dmax - dmin)
    act_scale = (2.0 ** ACT_BITWIDTH - 2.0) / rng
    mult = 1.0 / act_scale                   # part_quant: dequant = q * (1/scale) + min

    # Pass C1: per-channel mean of the dequantized projection (for re-centering).
    psum = quant_proj_mean(im, ut_bf, mn, clamp, act_scale, mult, dmin, same,
                           tile, ACT_BITWIDTH)
    rec_mean = u @ (psum / ne)

    # Pass C2 (parallel): clamp + quant/dequant -> u @ p -> re-center -> + mn.
    rec = quant_reconstruct(im, ut_bf, u_bf, mn, clamp, act_scale, mult, dmin, same,
                            rec_mean, tile, ACT_BITWIDTH)

    out = features_reshape_back(rec, N, C, H, W, micro, CHANNELS_DIV)
    aux = {"u": u, "clamp": clamp, "scale": act_scale, "mult": mult,
           "qmin": dmin, "same": same, "mn": mn}
    return out, aux


# ----------------------------------------------------------------------------
# numpy reference (float64), faithful to the PyTorch chain, using the same u/clamp
# ----------------------------------------------------------------------------
def reference_forward_np(x, u, clamp_val, micro, chdiv, bitwidth):
    x = np.asarray(x, dtype=np.float64)
    N, C, H, W = x.shape
    Ct = C // chdiv
    fs = micro * micro * Ct
    im = np.maximum(x, 0.0)
    im = im.reshape(-1, Ct, H, W).transpose(0, 2, 3, 1)
    im = im.reshape(-1, micro, W, Ct).transpose(0, 2, 1, 3)
    im = im.reshape(-1, micro, micro, Ct).transpose(0, 3, 2, 1)
    im = im.reshape(-1, fs).T
    mn = im.mean(axis=1, keepdims=True)
    im = im - mn
    u = np.asarray(u, dtype=np.float64)
    proj = u.T @ im
    cv = np.asarray(clamp_val, dtype=np.float64).reshape(-1, 1)
    proj = np.clip(proj, -cv, cv)
    if bitwidth < 30:
        dmax = proj.max(axis=1, keepdims=True)
        dmin = proj.min(axis=1, keepdims=True)
        same = dmax == dmin
        rng = np.where(same, 1.0, dmax - dmin)
        scale = (2.0 ** bitwidth - 2.0) / rng
        mult = 1.0 / scale
        q = np.round((proj - dmin) * scale)
        proj = np.where(same, proj, q * mult + dmin)
    rec = u @ proj
    rec = rec - rec.mean(axis=1, keepdims=True) + mn
    y = rec.T
    y = y.reshape(-1, Ct, micro, micro).transpose(0, 3, 2, 1)
    y = y.reshape(-1, H, micro, Ct).transpose(0, 2, 1, 3)
    y = y.reshape(-1, H, W, Ct).transpose(0, 3, 1, 2)
    return y.reshape(N, C, H, W)


if __name__ == "__main__":
    # Small but multi-tile: channels = 2*2*8 = 32, numElems = 2*8*32*32/32 = 512
    # -> 4 grid steps with tile_ne=128 (exercises the cross-tile accumulators).
    N, C, H, W = 2, 8, 32, 32
    key = jax.random.PRNGKey(0)
    x = jax.random.normal(key, (N, C, H, W), dtype=jnp.float32)

    fwd = jax.jit(functools.partial(relu_pca_forward, tile_ne=128))
    out, aux = fwd(x)
    out = jax.block_until_ready(out)

    assert out.shape == (N, C, H, W)
    assert bool(jnp.all(jnp.isfinite(out)))

    ref = reference_forward_np(np.asarray(x), np.asarray(aux["u"]),
                               np.asarray(aux["clamp"]),
                               min(MICRO_BLOCK, H), CHANNELS_DIV, ACT_BITWIDTH)
    got = np.asarray(out, dtype=np.float64)
    diff = np.abs(got - ref)
    rel = np.linalg.norm(got - ref) / np.linalg.norm(ref)
    # Tolerance: 8-bit quantization + bf16 MXU inputs -> occasional one-bin
    # discrepancies vs. the float64 reference (bin ~ (dmax-dmin)/254 per channel).
    assert rel < 0.1 and diff.max() < 0.5, (rel, float(diff.max()), float(diff.mean()))
    print("KERNEL_OK")
</pallas_src>

<mosaic_0001>
module attributes {stable_mosaic.version = 11 : i64} {
  func.func @_mean_cov_kernel(%arg0: i32, %arg1: memref<32x128xbf16, #tpu.memory_space<vmem>>, %arg2: memref<32x1xf32, #tpu.memory_space<vmem>>, %arg3: memref<32x32xf32, #tpu.memory_space<vmem>>) attributes {dimension_semantics = [#tpu.dimension_semantics<arbitrary>], iteration_bounds = array<i64: 4>, scalar_prefetch = 0 : i64, scratch_operands = 0 : i64, tpu.core_type = #tpu.core_type<tc>, window_params = [{transform_indices = @transform_0, window_bounds = array<i64: 32, 128>}, {pipeline_mode = #tpu.pipeline_mode<synchronous>, transform_indices = @transform_1, window_bounds = array<i64: 32, 1>}, {pipeline_mode = #tpu.pipeline_mode<synchronous>, transform_indices = @transform_2, window_bounds = array<i64: 32, 32>}]} {
    %c0_i32 = arith.constant 0 : i32
    %0 = arith.cmpi eq, %arg0, %c0_i32 : i32
    %1 = arith.extui %0 : i1 to i32
    %c0_i32_0 = arith.constant 0 : i32
    %2 = arith.cmpi ne, %1, %c0_i32_0 : i32
    scf.if %2 {
      %cst_12 = arith.constant 0.000000e+00 : f32
      %17 = vector.broadcast %cst_12 : f32 to vector<32x1xf32>
      %c0_13 = arith.constant 0 : index
      %c0_14 = arith.constant 0 : index
      %18 = vector.load %arg2[%c0_13, %c0_14] : memref<32x1xf32, #tpu.memory_space<vmem>>, vector<32x1xf32>
      tpu.vector_store %arg2[%c0_13, %c0_14], %17 {strides = array<i32>} : memref<32x1xf32, #tpu.memory_space<vmem>>, vector<32x1xf32>,
      %cst_15 = arith.constant 0.000000e+00 : f32
      %19 = vector.broadcast %cst_15 : f32 to vector<32x32xf32>
      %c0_16 = arith.constant 0 : index
      %c0_17 = arith.constant 0 : index
      %20 = vector.load %arg3[%c0_16, %c0_17] : memref<32x32xf32, #tpu.memory_space<vmem>>, vector<32x32xf32>
      tpu.vector_store %arg3[%c0_16, %c0_17], %19 {strides = array<i32>} : memref<32x32xf32, #tpu.memory_space<vmem>>, vector<32x32xf32>,
    } else {
    }
    %c0 = arith.constant 0 : index
    %c0_1 = arith.constant 0 : index
    %3 = vector.load %arg1[%c0, %c0_1] : memref<32x128xbf16, #tpu.memory_space<vmem>>, vector<32x128xbf16>
    %4 = arith.extf %3 : vector<32x128xbf16> to vector<32x128xf32>
    %cst = arith.constant 0.000000e+00 : f32
    %5 = vector.broadcast %cst : f32 to vector<32x128xf32>
    %6 = arith.maximumf %4, %5 : vector<32x128xf32>
    %c0_2 = arith.constant 0 : index
    %c0_3 = arith.constant 0 : index
    %7 = vector.load %arg2[%c0_2, %c0_3] : memref<32x1xf32, #tpu.memory_space<vmem>>, vector<32x1xf32>
    %cst_4 = arith.constant dense<0.000000e+00> : vector<32xf32>
    %8 = vector.multi_reduction <add>, %6, %cst_4 [1] : vector<32x128xf32> to vector<32xf32>
    %9 = vector.shape_cast %8 : vector<32xf32> to vector<32x1xf32>
    %10 = arith.addf %7, %9 : vector<32x1xf32>
    %c0_5 = arith.constant 0 : index
    %c0_6 = arith.constant 0 : index
    %11 = vector.load %arg2[%c0_5, %c0_6] : memref<32x1xf32, #tpu.memory_space<vmem>>, vector<32x1xf32>
    tpu.vector_store %arg2[%c0_5, %c0_6], %10 {strides = array<i32>} : memref<32x1xf32, #tpu.memory_space<vmem>>, vector<32x1xf32>,
    %12 = arith.truncf %6 : vector<32x128xf32> to vector<32x128xbf16>
    %c0_7 = arith.constant 0 : index
    %c0_8 = arith.constant 0 : index
    %13 = vector.load %arg3[%c0_7, %c0_8] : memref<32x32xf32, #tpu.memory_space<vmem>>, vector<32x32xf32>
    %cst_9 = arith.constant dense<0.000000e+00> : vector<32x32xf32>
    %14 = tpu.matmul %12, %12, %cst_9 {dimension_numbers = #tpu.dot_dimension_numbers<[1], [1], [0], [0], [0, 0, 1, 0], [], []>} : vector<32x128xbf16>, vector<32x128xbf16>, vector<32x32xf32> -> vector<32x32xf32>
    %15 = arith.addf %13, %14 : vector<32x32xf32>
    %c0_10 = arith.constant 0 : index
    %c0_11 = arith.constant 0 : index
    %16 = vector.load %arg3[%c0_10, %c0_11] : memref<32x32xf32, #tpu.memory_space<vmem>>, vector<32x32xf32>
    tpu.vector_store %arg3[%c0_10, %c0_11], %15 {strides = array<i32>} : memref<32x32xf32, #tpu.memory_space<vmem>>, vector<32x32xf32>,
    return
  }
  func.func @transform_0(%arg0: i32) -> (i32, i32) {
    %c0_i32 = arith.constant 0 : i32
    %c0_i32_0 = arith.constant 0 : i32
    return %c0_i32, %arg0 : i32, i32
  }
  func.func @transform_1(%arg0: i32) -> (i32, i32) {
    %c0_i32 = arith.constant 0 : i32
    %c0_i32_0 = arith.constant 0 : i32
    %c0_i32_1 = arith.constant 0 : i32
    return %c0_i32, %c0_i32_0 : i32, i32
  }
  func.func @transform_2(%arg0: i32) -> (i32, i32) {
    %c0_i32 = arith.constant 0 : i32
    %c0_i32_0 = arith.constant 0 : i32
    %c0_i32_1 = arith.constant 0 : i32
    return %c0_i32, %c0_i32_0 : i32, i32
  }
}

module attributes {stable_mosaic.version = 11 : i64} {
  func.func @_proj_stats_kernel(%arg0: i32, %arg1: memref<32x128xbf16, #tpu.memory_space<vmem>>, %arg2: memref<32x32xbf16, #tpu.memory_space<vmem>>, %arg3: memref<32x1xf32, #tpu.memory_space<vmem>>, %arg4: memref<32x1xf32, #tpu.memory_space<vmem>>, %arg5: memref<32x1xf32, #tpu.memory_space<vmem>>, %arg6: memref<32x1xf32, #tpu.memory_space<vmem>>) attributes {dimension_semantics = [#tpu.dimension_semantics<arbitrary>], iteration_bounds = array<i64: 4>, scalar_prefetch = 0 : i64, scratch_operands = 0 : i64, tpu.core_type = #tpu.core_type<tc>, window_params = [{transform_indices = @transform_0, window_bounds = array<i64: 32, 128>}, {pipeline_mode = #tpu.pipeline_mode<synchronous>, transform_indices = @transform_1, window_bounds = array<i64: 32, 32>}, {pipeline_mode = #tpu.pipeline_mode<synchronous>, transform_indices = @transform_2, window_bounds = array<i64: 32, 1>}, {pipeline_mode = #tpu.pipeline_mode<synchronous>, transform_indices = @transform_3, window_bounds = array<i64: 32, 1>}, {pipeline_mode = #tpu.pipeline_mode<synchronous>, transform_indices = @transform_4, window_bounds = array<i64: 32, 1>}, {pipeline_mode = #tpu.pipeline_mode<synchronous>, transform_indices = @transform_5, window_bounds = array<i64: 32, 1>}]} {
    %c0_i32 = arith.constant 0 : i32
    %0 = arith.cmpi eq, %arg0, %c0_i32 : i32
    %1 = arith.extui %0 : i1 to i32
    %c0_i32_0 = arith.constant 0 : i32
    %2 = arith.cmpi ne, %1, %c0_i32_0 : i32
    scf.if %2 {
      %cst_22 = arith.constant 0.000000e+00 : f32
      %29 = vector.broadcast %cst_22 : f32 to vector<32x1xf32>
      %c0_23 = arith.constant 0 : index
      %c0_24 = arith.constant 0 : index
      %30 = vector.load %arg4[%c0_23, %c0_24] : memref<32x1xf32, #tpu.memory_space<vmem>>, vector<32x1xf32>
      tpu.vector_store %arg4[%c0_23, %c0_24], %29 {strides = array<i32>} : memref<32x1xf32, #tpu.memory_space<vmem>>, vector<32x1xf32>,
      %cst_25 = arith.constant 0xFF800000 : f32
      %31 = vector.broadcast %cst_25 : f32 to vector<32x1xf32>
      %c0_26 = arith.constant 0 : index
      %c0_27 = arith.constant 0 : index
      %32 = vector.load %arg5[%c0_26, %c0_27] : memref<32x1xf32, #tpu.memory_space<vmem>>, vector<32x1xf32>
      tpu.vector_store %arg5[%c0_26, %c0_27], %31 {strides = array<i32>} : memref<32x1xf32, #tpu.memory_space<vmem>>, vector<32x1xf32>,
      %cst_28 = arith.constant 0x7F800000 : f32
      %33 = vector.broadcast %cst_28 : f32 to vector<32x1xf32>
      %c0_29 = arith.constant 0 : index
      %c0_30 = arith.constant 0 : index
      %34 = vector.load %arg6[%c0_29, %c0_30] : memref<32x1xf32, #tpu.memory_space<vmem>>, vector<32x1xf32>
      tpu.vector_store %arg6[%c0_29, %c0_30], %33 {strides = array<i32>} : memref<32x1xf32, #tpu.memory_space<vmem>>, vector<32x1xf32>,
    } else {
    }
    %c0 = arith.constant 0 : index
    %c0_1 = arith.constant 0 : index
    %3 = vector.load %arg1[%c0, %c0_1] : memref<32x128xbf16, #tpu.memory_space<vmem>>, vector<32x128xbf16>
    %4 = arith.extf %3 : vector<32x128xbf16> to vector<32x128xf32>
    %cst = arith.constant 0.000000e+00 : f32
    %5 = vector.broadcast %cst : f32 to vector<32x128xf32>
    %6 = arith.maximumf %4, %5 : vector<32x128xf32>
    %c0_2 = arith.constant 0 : index
    %c0_3 = arith.constant 0 : index
    %7 = vector.load %arg3[%c0_2, %c0_3] : memref<32x1xf32, #tpu.memory_space<vmem>>, vector<32x1xf32>
    %8 = vector.broadcast %7 : vector<32x1xf32> to vector<32x128xf32>
    %9 = arith.subf %6, %8 : vector<32x128xf32>
    %10 = arith.truncf %9 : vector<32x128xf32> to vector<32x128xbf16>
    %c0_4 = arith.constant 0 : index
    %c0_5 = arith.constant 0 : index
    %11 = vector.load %arg2[%c0_4, %c0_5] : memref<32x32xbf16, #tpu.memory_space<vmem>>, vector<32x32xbf16>
    %cst_6 = arith.constant dense<0.000000e+00> : vector<32x128xf32>
    %12 = tpu.matmul %11, %10, %cst_6 {dimension_numbers = #tpu.dot_dimension_numbers<[1], [0], [0], [1], [0, 0, 1, 1], [], []>} : vector<32x32xbf16>, vector<32x128xbf16>, vector<32x128xf32> -> vector<32x128xf32>
    %c0_7 = arith.constant 0 : index
    %c0_8 = arith.constant 0 : index
    %13 = vector.load %arg4[%c0_7, %c0_8] : memref<32x1xf32, #tpu.memory_space<vmem>>, vector<32x1xf32>
    %14 = math.absf %12 : vector<32x128xf32>
    %cst_9 = arith.constant dense<0.000000e+00> : vector<32xf32>
    %15 = vector.multi_reduction <add>, %14, %cst_9 [1] : vector<32x128xf32> to vector<32xf32>
    %16 = vector.shape_cast %15 : vector<32xf32> to vector<32x1xf32>
    %17 = arith.addf %13, %16 : vector<32x1xf32>
    %c0_10 = arith.constant 0 : index
    %c0_11 = arith.constant 0 : index
    %18 = vector.load %arg4[%c0_10, %c0_11] : memref<32x1xf32, #tpu.memory_space<vmem>>, vector<32x1xf32>
    tpu.vector_store %arg4[%c0_10, %c0_11], %17 {strides = array<i32>} : memref<32x1xf32, #tpu.memory_space<vmem>>, vector<32x1xf32>,
    %c0_12 = arith.constant 0 : index
    %c0_13 = arith.constant 0 : index
    %19 = vector.load %arg5[%c0_12, %c0_13] : memref<32x1xf32, #tpu.memory_space<vmem>>, vector<32x1xf32>
    %cst_14 = arith.constant dense<0xFF800000> : vector<32xf32>
    %20 = vector.multi_reduction <maximumf>, %12, %cst_14 [1] : vector<32x128xf32> to vector<32xf32>
    %21 = vector.shape_cast %20 : vector<32xf32> to vector<32x1xf32>
    %22 = arith.maximumf %19, %21 : vector<32x1xf32>
    %c0_15 = arith.constant 0 : index
    %c0_16 = arith.constant 0 : index
    %23 = vector.load %arg5[%c0_15, %c0_16] : memref<32x1xf32, #tpu.memory_space<vmem>>, vector<32x1xf32>
    tpu.vector_store %arg5[%c0_15, %c0_16], %22 {strides = array<i32>} : memref<32x1xf32, #tpu.memory_space<vmem>>, vector<32x1xf32>,
    %c0_17 = arith.constant 0 : index
    %c0_18 = arith.constant 0 : index
    %24 = vector.load %arg6[%c0_17, %c0_18] : memref<32x1xf32, #tpu.memory_space<vmem>>, vector<32x1xf32>
    %cst_19 = arith.constant dense<0x7F800000> : vector<32xf32>
    %25 = vector.multi_reduction <minimumf>, %12, %cst_19 [1] : vector<32x128xf32> to vector<32xf32>
    %26 = vector.shape_cast %25 : vector<32xf32> to vector<32x1xf32>
    %27 = arith.minimumf %24, %26 : vector<32x1xf32>
    %c0_20 = arith.constant 0 : index
    %c0_21 = arith.constant 0 : index
    %28 = vector.load %arg6[%c0_20, %c0_21] : memref<32x1xf32, #tpu.memory_space<vmem>>, vector<32x1xf32>
    tpu.vector_store %arg6[%c0_20, %c0_21], %27 {strides = array<i32>} : memref<32x1xf32, #tpu.memory_space<vmem>>, vector<32x1xf32>,
    return
  }
  func.func @transform_0(%arg0: i32) -> (i32, i32) {
    %c0_i32 = arith.constant 0 : i32
    %c0_i32_0 = arith.constant 0 : i32
    return %c0_i32, %arg0 : i32, i32
  }
  func.func @transform_1(%arg0: i32) -> (i32, i32) {
    %c0_i32 = arith.constant 0 : i32
    %c0_i32_0 = arith.constant 0 : i32
    %c0_i32_1 = arith.constant 0 : i32
    return %c0_i32, %c0_i32_0 : i32, i32
  }
  func.func @transform_2(%arg0: i32) -> (i32, i32) {
    %c0_i32 = arith.constant 0 : i32
    %c0_i32_0 = arith.constant 0 : i32
    %c0_i32_1 = arith.constant 0 : i32
    return %c0_i32, %c0_i32_0 : i32, i32
  }
  func.func @transform_3(%arg0: i32) -> (i32, i32) {
    %c0_i32 = arith.constant 0 : i32
    %c0_i32_0 = arith.constant 0 : i32
    %c0_i32_1 = arith.constant 0 : i32
    return %c0_i32, %c0_i32_0 : i32, i32
  }
  func.func @transform_4(%arg0: i32) -> (i32, i32) {
    %c0_i32 = arith.constant 0 : i32
    %c0_i32_0 = arith.constant 0 : i32
    %c0_i32_1 = arith.constant 0 : i32
    return %c0_i32, %c0_i32_0 : i32, i32
  }
  func.func @transform_5(%arg0: i32) -> (i32, i32) {
    %c0_i32 = arith.constant 0 : i32
    %c0_i32_0 = arith.constant 0 : i32
    %c0_i32_1 = arith.constant 0 : i32
    return %c0_i32, %c0_i32_0 : i32, i32
  }
}

module attributes {stable_mosaic.version = 11 : i64} {
  func.func @_quant_mean_kernel(%arg0: i32, %arg1: memref<32x128xbf16, #tpu.memory_space<vmem>>, %arg2: memref<32x32xbf16, #tpu.memory_space<vmem>>, %arg3: memref<32x1xf32, #tpu.memory_space<vmem>>, %arg4: memref<32x1xf32, #tpu.memory_space<vmem>>, %arg5: memref<32x1xf32, #tpu.memory_space<vmem>>, %arg6: memref<32x1xf32, #tpu.memory_space<vmem>>, %arg7: memref<32x1xf32, #tpu.memory_space<vmem>>, %arg8: memref<32x1xf32, #tpu.memory_space<vmem>>, %arg9: memref<32x1xf32, #tpu.memory_space<vmem>>) attributes {dimension_semantics = [#tpu.dimension_semantics<arbitrary>], iteration_bounds = array<i64: 4>, scalar_prefetch = 0 : i64, scratch_operands = 0 : i64, tpu.core_type = #tpu.core_type<tc>, window_params = [{transform_indices = @transform_0, window_bounds = array<i64: 32, 128>}, {pipeline_mode = #tpu.pipeline_mode<synchronous>, transform_indices = @transform_1, window_bounds = array<i64: 32, 32>}, {pipeline_mode = #tpu.pipeline_mode<synchronous>, transform_indices = @transform_2, window_bounds = array<i64: 32, 1>}, {pipeline_mode = #tpu.pipeline_mode<synchronous>, transform_indices = @transform_3, window_bounds = array<i64: 32, 1>}, {pipeline_mode = #tpu.pipeline_mode<synchronous>, transform_indices = @transform_4, window_bounds = array<i64: 32, 1>}, {pipeline_mode = #tpu.pipeline_mode<synchronous>, transform_indices = @transform_5, window_bounds = array<i64: 32, 1>}, {pipeline_mode = #tpu.pipeline_mode<synchronous>, transform_indices = @transform_6, window_bounds = array<i64: 32, 1>}, {pipeline_mode = #tpu.pipeline_mode<synchronous>, transform_indices = @transform_7, window_bounds = array<i64: 32, 1>}, {pipeline_mode = #tpu.pipeline_mode<synchronous>, transform_indices = @transform_8, window_bounds = array<i64: 32, 1>}]} {
    %c0_i32 = arith.constant 0 : i32
    %0 = arith.cmpi eq, %arg0, %c0_i32 : i32
    %1 = arith.extui %0 : i1 to i32
    %c0_i32_0 = arith.constant 0 : i32
    %2 = arith.cmpi ne, %1, %c0_i32_0 : i32
    scf.if %2 {
      %cst_26 = arith.constant 0.000000e+00 : f32
      %44 = vector.broadcast %cst_26 : f32 to vector<32x1xf32>
      %c0_27 = arith.constant 0 : index
      %c0_28 = arith.constant 0 : index
      %45 = vector.load %arg9[%c0_27, %c0_28] : memref<32x1xf32, #tpu.memory_space<vmem>>, vector<32x1xf32>
      tpu.vector_store %arg9[%c0_27, %c0_28], %44 {strides = array<i32>} : memref<32x1xf32, #tpu.memory_space<vmem>>, vector<32x1xf32>,
    } else {
    }
    %c0 = arith.constant 0 : index
    %c0_1 = arith.constant 0 : index
    %3 = vector.load %arg1[%c0, %c0_1] : memref<32x128xbf16, #tpu.memory_space<vmem>>, vector<32x128xbf16>
    %4 = arith.extf %3 : vector<32x128xbf16> to vector<32x128xf32>
    %cst = arith.constant 0.000000e+00 : f32
    %5 = vector.broadcast %cst : f32 to vector<32x128xf32>
    %6 = arith.maximumf %4, %5 : vector<32x128xf32>
    %c0_2 = arith.constant 0 : index
    %c0_3 = arith.constant 0 : index
    %7 = vector.load %arg3[%c0_2, %c0_3] : memref<32x1xf32, #tpu.memory_space<vmem>>, vector<32x1xf32>
    %8 = vector.broadcast %7 : vector<32x1xf32> to vector<32x128xf32>
    %9 = arith.subf %6, %8 : vector<32x128xf32>
    %10 = arith.truncf %9 : vector<32x128xf32> to vector<32x128xbf16>
    %c0_4 = arith.constant 0 : index
    %c0_5 = arith.constant 0 : index
    %11 = vector.load %arg2[%c0_4, %c0_5] : memref<32x32xbf16, #tpu.memory_space<vmem>>, vector<32x32xbf16>
    %cst_6 = arith.constant dense<0.000000e+00> : vector<32x128xf32>
    %12 = tpu.matmul %11, %10, %cst_6 {dimension_numbers = #tpu.dot_dimension_numbers<[1], [0], [0], [1], [0, 0, 1, 1], [], []>} : vector<32x32xbf16>, vector<32x128xbf16>, vector<32x128xf32> -> vector<32x128xf32>
    %c0_7 = arith.constant 0 : index
    %c0_8 = arith.constant 0 : index
    %13 = vector.load %arg4[%c0_7, %c0_8] : memref<32x1xf32, #tpu.memory_space<vmem>>, vector<32x1xf32>
    %cst_9 = arith.constant 0.000000e+00 : f32
    %14 = vector.broadcast %cst_9 : f32 to vector<32x1xf32>
    %15 = arith.subf %14, %13 : vector<32x1xf32>
    %16 = vector.broadcast %15 : vector<32x1xf32> to vector<32x128xf32>
    %17 = arith.maximumf %16, %12 : vector<32x128xf32>
    %18 = vector.broadcast %13 : vector<32x1xf32> to vector<32x128xf32>
    %19 = arith.minimumf %18, %17 : vector<32x128xf32>
    %c0_10 = arith.constant 0 : index
    %c0_11 = arith.constant 0 : index
    %20 = vector.load %arg7[%c0_10, %c0_11] : memref<32x1xf32, #tpu.memory_space<vmem>>, vector<32x1xf32>
    %21 = vector.broadcast %20 : vector<32x1xf32> to vector<32x128xf32>
    %22 = arith.subf %19, %21 : vector<32x128xf32>
    %c0_12 = arith.constant 0 : index
    %c0_13 = arith.constant 0 : index
    %23 = vector.load %arg5[%c0_12, %c0_13] : memref<32x1xf32, #tpu.memory_space<vmem>>, vector<32x1xf32>
    %24 = vector.broadcast %23 : vector<32x1xf32> to vector<32x128xf32>
    %25 = arith.mulf %22, %24 : vector<32x128xf32>
    %26 = math.roundeven %25 : vector<32x128xf32>
    %c0_14 = arith.constant 0 : index
    %c0_15 = arith.constant 0 : index
    %27 = vector.load %arg6[%c0_14, %c0_15] : memref<32x1xf32, #tpu.memory_space<vmem>>, vector<32x1xf32>
    %28 = vector.broadcast %27 : vector<32x1xf32> to vector<32x128xf32>
    %29 = arith.mulf %26, %28 : vector<32x128xf32>
    %c0_16 = arith.constant 0 : index
    %c0_17 = arith.constant 0 : index
    %30 = vector.load %arg7[%c0_16, %c0_17] : memref<32x1xf32, #tpu.memory_space<vmem>>, vector<32x1xf32>
    %31 = vector.broadcast %30 : vector<32x1xf32> to vector<32x128xf32>
    %32 = arith.addf %29, %31 : vector<32x128xf32>
    %c0_18 = arith.constant 0 : index
    %c0_19 = arith.constant 0 : index
    %33 = vector.load %arg8[%c0_18, %c0_19] : memref<32x1xf32, #tpu.memory_space<vmem>>, vector<32x1xf32>
    %cst_20 = arith.constant 5.000000e-01 : f32
    %34 = vector.broadcast %cst_20 : f32 to vector<32x1xf32>
    %35 = arith.cmpf ogt, %33, %34 : vector<32x1xf32>
    %36 = vector.shape_cast %35 : vector<32x1xi1> to vector<32x1xi1>
    %37 = vector.broadcast %36 : vector<32x1xi1> to vector<32x128xi1>
    %38 = arith.select %37, %19, %32 : vector<32x128xi1>, vector<32x128xf32>
    %c0_21 = arith.constant 0 : index
    %c0_22 = arith.constant 0 : index
    %39 = vector.load %arg9[%c0_21, %c0_22] : memref<32x1xf32, #tpu.memory_space<vmem>>, vector<32x1xf32>
    %cst_23 = arith.constant dense<0.000000e+00> : vector<32xf32>
    %40 = vector.multi_reduction <add>, %38, %cst_23 [1] : vector<32x128xf32> to vector<32xf32>
    %41 = vector.shape_cast %40 : vector<32xf32> to vector<32x1xf32>
    %42 = arith.addf %39, %41 : vector<32x1xf32>
    %c0_24 = arith.constant 0 : index
    %c0_25 = arith.constant 0 : index
    %43 = vector.load %arg9[%c0_24, %c0_25] : memref<32x1xf32, #tpu.memory_space<vmem>>, vector<32x1xf32>
    tpu.vector_store %arg9[%c0_24, %c0_25], %42 {strides = array<i32>} : memref<32x1xf32, #tpu.memory_space<vmem>>, vector<32x1xf32>,
    return
  }
  func.func @transform_0(%arg0: i32) -> (i32, i32) {
    %c0_i32 = arith.constant 0 : i32
    %c0_i32_0 = arith.constant 0 : i32
    return %c0_i32, %arg0 : i32, i32
  }
  func.func @transform_1(%arg0: i32) -> (i32, i32) {
    %c0_i32 = arith.constant 0 : i32
    %c0_i32_0 = arith.constant 0 : i32
    %c0_i32_1 = arith.constant 0 : i32
    return %c0_i32, %c0_i32_0 : i32, i32
  }
  func.func @transform_2(%arg0: i32) -> (i32, i32) {
    %c0_i32 = arith.constant 0 : i32
    %c0_i32_0 = arith.constant 0 : i32
    %c0_i32_1 = arith.constant 0 : i32
    return %c0_i32, %c0_i32_0 : i32, i32
  }
  func.func @transform_3(%arg0: i32) -> (i32, i32) {
    %c0_i32 = arith.constant 0 : i32
    %c0_i32_0 = arith.constant 0 : i32
    %c0_i32_1 = arith.constant 0 : i32
    return %c0_i32, %c0_i32_0 : i32, i32
  }
  func.func @transform_4(%arg0: i32) -> (i32, i32) {
    %c0_i32 = arith.constant 0 : i32
    %c0_i32_0 = arith.constant 0 : i32
    %c0_i32_1 = arith.constant 0 : i32
    return %c0_i32, %c0_i32_0 : i32, i32
  }
  func.func @transform_5(%arg0: i32) -> (i32, i32) {
    %c0_i32 = arith.constant 0 : i32
    %c0_i32_0 = arith.constant 0 : i32
    %c0_i32_1 = arith.constant 0 : i32
    return %c0_i32, %c0_i32_0 : i32, i32
  }
  func.func @transform_6(%arg0: i32) -> (i32, i32) {
    %c0_i32 = arith.constant 0 : i32
    %c0_i32_0 = arith.constant 0 : i32
    %c0_i32_1 = arith.constant 0 : i32
    return %c0_i32, %c0_i32_0 : i32, i32
  }
  func.func @transform_7(%arg0: i32) -> (i32, i32) {
    %c0_i32 = arith.constant 0 : i32
    %c0_i32_0 = arith.constant 0 : i32
    %c0_i32_1 = arith.constant 0 : i32
    return %c0_i32, %c0_i32_0 : i32, i32
  }
  func.func @transform_8(%arg0: i32) -> (i32, i32) {
    %c0_i32 = arith.constant 0 : i32
    %c0_i32_0 = arith.constant 0 : i32
    %c0_i32_1 = arith.constant 0 : i32
    return %c0_i32, %c0_i32_0 : i32, i32
  }
}

module attributes {stable_mosaic.version = 11 : i64} {
  func.func @_reconstruct_kernel(%arg0: i32, %arg1: memref<32x128xbf16, #tpu.memory_space<vmem>>, %arg2: memref<32x32xbf16, #tpu.memory_space<vmem>>, %arg3: memref<32x32xbf16, #tpu.memory_space<vmem>>, %arg4: memref<32x1xf32, #tpu.memory_space<vmem>>, %arg5: memref<32x1xf32, #tpu.memory_space<vmem>>, %arg6: memref<32x1xf32, #tpu.memory_space<vmem>>, %arg7: memref<32x1xf32, #tpu.memory_space<vmem>>, %arg8: memref<32x1xf32, #tpu.memory_space<vmem>>, %arg9: memref<32x1xf32, #tpu.memory_space<vmem>>, %arg10: memref<32x1xf32, #tpu.memory_space<vmem>>, %arg11: memref<32x128xf32, #tpu.memory_space<vmem>>) attributes {dimension_semantics = [#tpu.dimension_semantics<parallel>], iteration_bounds = array<i64: 4>, scalar_prefetch = 0 : i64, scratch_operands = 0 : i64, tpu.core_type = #tpu.core_type<tc>, window_params = [{transform_indices = @transform_0, window_bounds = array<i64: 32, 128>}, {pipeline_mode = #tpu.pipeline_mode<synchronous>, transform_indices = @transform_1, window_bounds = array<i64: 32, 32>}, {pipeline_mode = #tpu.pipeline_mode<synchronous>, transform_indices = @transform_2, window_bounds = array<i64: 32, 32>}, {pipeline_mode = #tpu.pipeline_mode<synchronous>, transform_indices = @transform_3, window_bounds = array<i64: 32, 1>}, {pipeline_mode = #tpu.pipeline_mode<synchronous>, transform_indices = @transform_4, window_bounds = array<i64: 32, 1>}, {pipeline_mode = #tpu.pipeline_mode<synchronous>, transform_indices = @transform_5, window_bounds = array<i64: 32, 1>}, {pipeline_mode = #tpu.pipeline_mode<synchronous>, transform_indices = @transform_6, window_bounds = array<i64: 32, 1>}, {pipeline_mode = #tpu.pipeline_mode<synchronous>, transform_indices = @transform_7, window_bounds = array<i64: 32, 1>}, {pipeline_mode = #tpu.pipeline_mode<synchronous>, transform_indices = @transform_8, window_bounds = array<i64: 32, 1>}, {pipeline_mode = #tpu.pipeline_mode<synchronous>, transform_indices = @transform_9, window_bounds = array<i64: 32, 1>}, {transform_indices = @transform_10, window_bounds = array<i64: 32, 128>}]} {
    %c0 = arith.constant 0 : index
    %c0_0 = arith.constant 0 : index
    %0 = vector.load %arg1[%c0, %c0_0] : memref<32x128xbf16, #tpu.memory_space<vmem>>, vector<32x128xbf16>
    %1 = arith.extf %0 : vector<32x128xbf16> to vector<32x128xf32>
    %cst = arith.constant 0.000000e+00 : f32
    %2 = vector.broadcast %cst : f32 to vector<32x128xf32>
    %3 = arith.maximumf %1, %2 : vector<32x128xf32>
    %c0_1 = arith.constant 0 : index
    %c0_2 = arith.constant 0 : index
    %4 = vector.load %arg4[%c0_1, %c0_2] : memref<32x1xf32, #tpu.memory_space<vmem>>, vector<32x1xf32>
    %5 = vector.broadcast %4 : vector<32x1xf32> to vector<32x128xf32>
    %6 = arith.subf %3, %5 : vector<32x128xf32>
    %7 = arith.truncf %6 : vector<32x128xf32> to vector<32x128xbf16>
    %c0_3 = arith.constant 0 : index
    %c0_4 = arith.constant 0 : index
    %8 = vector.load %arg2[%c0_3, %c0_4] : memref<32x32xbf16, #tpu.memory_space<vmem>>, vector<32x32xbf16>
    %cst_5 = arith.constant dense<0.000000e+00> : vector<32x128xf32>
    %9 = tpu.matmul %8, %7, %cst_5 {dimension_numbers = #tpu.dot_dimension_numbers<[1], [0], [0], [1], [0, 0, 1, 1], [], []>} : vector<32x32xbf16>, vector<32x128xbf16>, vector<32x128xf32> -> vector<32x128xf32>
    %c0_6 = arith.constant 0 : index
    %c0_7 = arith.constant 0 : index
    %10 = vector.load %arg5[%c0_6, %c0_7] : memref<32x1xf32, #tpu.memory_space<vmem>>, vector<32x1xf32>
    %cst_8 = arith.constant 0.000000e+00 : f32
    %11 = vector.broadcast %cst_8 : f32 to vector<32x1xf32>
    %12 = arith.subf %11, %10 : vector<32x1xf32>
    %13 = vector.broadcast %12 : vector<32x1xf32> to vector<32x128xf32>
    %14 = arith.maximumf %13, %9 : vector<32x128xf32>
    %15 = vector.broadcast %10 : vector<32x1xf32> to vector<32x128xf32>
    %16 = arith.minimumf %15, %14 : vector<32x128xf32>
    %c0_9 = arith.constant 0 : index
    %c0_10 = arith.constant 0 : index
    %17 = vector.load %arg8[%c0_9, %c0_10] : memref<32x1xf32, #tpu.memory_space<vmem>>, vector<32x1xf32>
    %18 = vector.broadcast %17 : vector<32x1xf32> to vector<32x128xf32>
    %19 = arith.subf %16, %18 : vector<32x128xf32>
    %c0_11 = arith.constant 0 : index
    %c0_12 = arith.constant 0 : index
    %20 = vector.load %arg6[%c0_11, %c0_12] : memref<32x1xf32, #tpu.memory_space<vmem>>, vector<32x1xf32>
    %21 = vector.broadcast %20 : vector<32x1xf32> to vector<32x128xf32>
    %22 = arith.mulf %19, %21 : vector<32x128xf32>
    %23 = math.roundeven %22 : vector<32x128xf32>
    %c0_13 = arith.constant 0 : index
    %c0_14 = arith.constant 0 : index
    %24 = vector.load %arg7[%c0_13, %c0_14] : memref<32x1xf32, #tpu.memory_space<vmem>>, vector<32x1xf32>
    %25 = vector.broadcast %24 : vector<32x1xf32> to vector<32x128xf32>
    %26 = arith.mulf %23, %25 : vector<32x128xf32>
    %c0_15 = arith.constant 0 : index
    %c0_16 = arith.constant 0 : index
    %27 = vector.load %arg8[%c0_15, %c0_16] : memref<32x1xf32, #tpu.memory_space<vmem>>, vector<32x1xf32>
    %28 = vector.broadcast %27 : vector<32x1xf32> to vector<32x128xf32>
    %29 = arith.addf %26, %28 : vector<32x128xf32>
    %c0_17 = arith.constant 0 : index
    %c0_18 = arith.constant 0 : index
    %30 = vector.load %arg9[%c0_17, %c0_18] : memref<32x1xf32, #tpu.memory_space<vmem>>, vector<32x1xf32>
    %cst_19 = arith.constant 5.000000e-01 : f32
    %31 = vector.broadcast %cst_19 : f32 to vector<32x1xf32>
    %32 = arith.cmpf ogt, %30, %31 : vector<32x1xf32>
    %33 = vector.shape_cast %32 : vector<32x1xi1> to vector<32x1xi1>
    %34 = vector.broadcast %33 : vector<32x1xi1> to vector<32x128xi1>
    %35 = arith.select %34, %16, %29 : vector<32x128xi1>, vector<32x128xf32>
    %c0_20 = arith.constant 0 : index
    %c0_21 = arith.constant 0 : index
    %36 = vector.load %arg3[%c0_20, %c0_21] : memref<32x32xbf16, #tpu.memory_space<vmem>>, vector<32x32xbf16>
    %37 = arith.truncf %35 : vector<32x128xf32> to vector<32x128xbf16>
    %cst_22 = arith.constant dense<0.000000e+00> : vector<32x128xf32>
    %38 = tpu.matmul %36, %37, %cst_22 {dimension_numbers = #tpu.dot_dimension_numbers<[1], [0], [0], [1], [0, 0, 1, 1], [], []>} : vector<32x32xbf16>, vector<32x128xbf16>, vector<32x128xf32> -> vector<32x128xf32>
    %c0_23 = arith.constant 0 : index
    %c0_24 = arith.constant 0 : index
    %39 = vector.load %arg10[%c0_23, %c0_24] : memref<32x1xf32, #tpu.memory_space<vmem>>, vector<32x1xf32>
    %40 = vector.broadcast %39 : vector<32x1xf32> to vector<32x128xf32>
    %41 = arith.subf %38, %40 : vector<32x128xf32>
    %c0_25 = arith.constant 0 : index
    %c0_26 = arith.constant 0 : index
    %42 = vector.load %arg4[%c0_25, %c0_26] : memref<32x1xf32, #tpu.memory_space<vmem>>, vector<32x1xf32>
    %43 = vector.broadcast %42 : vector<32x1xf32> to vector<32x128xf32>
    %44 = arith.addf %41, %43 : vector<32x128xf32>
    %c0_27 = arith.constant 0 : index
    %c0_28 = arith.constant 0 : index
    %45 = vector.load %arg11[%c0_27, %c0_28] : memref<32x128xf32, #tpu.memory_space<vmem>>, vector<32x128xf32>
    tpu.vector_store %arg11[%c0_27, %c0_28], %44 {strides = array<i32>} : memref<32x128xf32, #tpu.memory_space<vmem>>, vector<32x128xf32>,
    return
  }
  func.func @transform_0(%arg0: i32) -> (i32, i32) {
    %c0_i32 = arith.constant 0 : i32
    %c0_i32_0 = arith.constant 0 : i32
    return %c0_i32, %arg0 : i32, i32
  }
  func.func @transform_1(%arg0: i32) -> (i32, i32) {
    %c0_i32 = arith.constant 0 : i32
    %c0_i32_0 = arith.constant 0 : i32
    %c0_i32_1 = arith.constant 0 : i32
    return %c0_i32, %c0_i32_0 : i32, i32
  }
  func.func @transform_2(%arg0: i32) -> (i32, i32) {
    %c0_i32 = arith.constant 0 : i32
    %c0_i32_0 = arith.constant 0 : i32
    %c0_i32_1 = arith.constant 0 : i32
    return %c0_i32, %c0_i32_0 : i32, i32
  }
  func.func @transform_3(%arg0: i32) -> (i32, i32) {
    %c0_i32 = arith.constant 0 : i32
    %c0_i32_0 = arith.constant 0 : i32
    %c0_i32_1 = arith.constant 0 : i32
    return %c0_i32, %c0_i32_0 : i32, i32
  }
  func.func @transform_4(%arg0: i32) -> (i32, i32) {
    %c0_i32 = arith.constant 0 : i32
    %c0_i32_0 = arith.constant 0 : i32
    %c0_i32_1 = arith.constant 0 : i32
    return %c0_i32, %c0_i32_0 : i32, i32
  }
  func.func @transform_5(%arg0: i32) -> (i32, i32) {
    %c0_i32 = arith.constant 0 : i32
    %c0_i32_0 = arith.constant 0 : i32
    %c0_i32_1 = arith.constant 0 : i32
    return %c0_i32, %c0_i32_0 : i32, i32
  }
  func.func @transform_6(%arg0: i32) -> (i32, i32) {
    %c0_i32 = arith.constant 0 : i32
    %c0_i32_0 = arith.constant 0 : i32
    %c0_i32_1 = arith.constant 0 : i32
    return %c0_i32, %c0_i32_0 : i32, i32
  }
  func.func @transform_7(%arg0: i32) -> (i32, i32) {
    %c0_i32 = arith.constant 0 : i32
    %c0_i32_0 = arith.constant 0 : i32
    %c0_i32_1 = arith.constant 0 : i32
    return %c0_i32, %c0_i32_0 : i32, i32
  }
  func.func @transform_8(%arg0: i32) -> (i32, i32) {
    %c0_i32 = arith.constant 0 : i32
    %c0_i32_0 = arith.constant 0 : i32
    %c0_i32_1 = arith.constant 0 : i32
    return %c0_i32, %c0_i32_0 : i32, i32
  }
  func.func @transform_9(%arg0: i32) -> (i32, i32) {
    %c0_i32 = arith.constant 0 : i32
    %c0_i32_0 = arith.constant 0 : i32
    %c0_i32_1 = arith.constant 0 : i32
    return %c0_i32, %c0_i32_0 : i32, i32
  }
  func.func @transform_10(%arg0: i32) -> (i32, i32) {
    %c0_i32 = arith.constant 0 : i32
    %c0_i32_0 = arith.constant 0 : i32
    return %c0_i32, %arg0 : i32, i32
  }
}

</mosaic_0001>

<llo_original>
// kernel: relu_pca_forward.4
$region0: #{relu_pca_forward.4}
  #allocation0 [shape = 'u32[]', space=smem, size = 0x4, offset = 0x4, fixed_abs, tag = 'smem constant byte address 0x4 - core index']
  #allocation1 [shape = 'u32[144,128]{1,0:T(1,128)}', space=vmem, size = 0x12000, scoped, tag = 'internal scratch']
  %s0 = inlined_call_operand.vmem [shape: bf16[32,512], index: 0, kind: input, shape index: {}]
  %s1 = inlined_call_operand.vmem [shape: f32[32,1], index: 1, kind: output, shape index: {0}]
  %s2 = inlined_call_operand.vmem [shape: f32[32,32], index: 2, kind: output, shape index: {1}]
  %3 = xla_tuple %s1, %s2
  %s4 = sld [smem:[#allocation0]]
  $region90: #{relu_pca_forward.4} parent=0
    _
  %s6 = ssub.s32 1, %s4
  %s7 = scalar_select 0, %s6, %s4
  $region1: #{relu_pca_forward.4} parent=0
    #allocation2 [shape = 'u8[16384]{0}', space=vmem, size = 0x4000, scoped, tag = 'input window, operand 0']
    loop: start=0, step=1, limit=6
    $region2: #{relu_pca_forward.4} parent=1 // loop_pre_header
      _
    $region3: #{relu_pca_forward.4} parent=1 // loop_header
      %s9 = sphi 0, %s13
      %p10 = scmp.ge.s32.totalorder %s9, 6
      %s19 = sphi 0, %s21
      %s22 = sphi 0, %s19
      %s23 = sphi 0, %s22
      %s39 = sphi 0, %s23
      %s43 = sphi 0, %s43
      %s45 = sphi 0, %s43
      %s46 = sphi 0, %s45
      %s60 = sphi 0, %s46
      %s64 = sphi 0, %s64
      %s66 = sphi 0, %s64
      %s67 = sphi 0, %s66
      %s81 = sphi 0, %s67
    $region4: #{relu_pca_forward.4} parent=1 // loop_header_branch
      %12 = sbr.rel (%p10) target = $region8
    $region5: #{relu_pca_forward.4} parent=1 // loop_body
      %s14 = ssub.s32 %s9, 1
      %s15 = ssub.s32 %s9, 2
      %s16 = sadd.s32 %s9, 1
      %s17 = ssub.s32 %s9, %s16
      %p18 = scmp.eq.s32.totalorder %s17, 0
      %s20 = sadd.s32 %s19, 1
      %s21 = scalar_select %p18, %s19, %s20
      %p24 = pneg %p18
      %p25 = scmp.eq.s32.totalorder %s9, 3
      %p26 = por %p24, %p25
      %p27 = scmp.ne.s32.totalorder %s19, %s22
      %p28 = scmp.eq.s32.totalorder %s9, 0
      %p29 = por %p27, %p28
      %p30 = scmp.ne.s32.totalorder %s19, %s22
      %p31 = scmp.eq.s32.totalorder %s14, 3
      %p32 = por %p30, %p31
      %p33 = scmp.ne.s32.totalorder %s22, %s23
      %p34 = scmp.eq.s32.totalorder %s14, 0
      %p35 = por %p33, %p34
      %p36 = scmp.ne.s32.totalorder %s22, %s23
      %p37 = scmp.eq.s32.totalorder %s15, 3
      %p38 = por %p36, %p37
      %p40 = scmp.ne.s32.totalorder %s23, %s39
      %p41 = scmp.eq.s32.totalorder %s15, 0
      %p42 = por %p40, %p41
      %s44 = sadd.s32 %s43, 1
      %p47 = scmp.eq.s32.totalorder %s9, 3
      %p48 = scmp.ne.s32.totalorder %s43, %s45
      %p49 = scmp.eq.s32.totalorder %s9, 0
      %p50 = por %p48, %p49
      %p51 = scmp.ne.s32.totalorder %s43, %s45
      %p52 = scmp.eq.s32.totalorder %s14, 3
      %p53 = por %p51, %p52
      %p54 = scmp.ne.s32.totalorder %s45, %s46
      %p55 = scmp.eq.s32.totalorder %s14, 0
      %p56 = por %p54, %p55
      %p57 = scmp.ne.s32.totalorder %s45, %s46
      %p58 = scmp.eq.s32.totalorder %s15, 3
      %p59 = por %p57, %p58
      %p61 = scmp.ne.s32.totalorder %s46, %s60
      %p62 = scmp.eq.s32.totalorder %s15, 0
      %p63 = por %p61, %p62
      %s65 = sadd.s32 %s64, 1
      %p68 = scmp.eq.s32.totalorder %s9, 3
      %p69 = scmp.ne.s32.totalorder %s64, %s66
      %p70 = scmp.eq.s32.totalorder %s9, 0
      %p71 = por %p69, %p70
      %p72 = scmp.ne.s32.totalorder %s64, %s66
      %p73 = scmp.eq.s32.totalorder %s14, 3
      %p74 = por %p72, %p73
      %p75 = scmp.ne.s32.totalorder %s66, %s67
      %p76 = scmp.eq.s32.totalorder %s14, 0
      %p77 = por %p75, %p76
      %p78 = scmp.ne.s32.totalorder %s66, %s67
      %p79 = scmp.eq.s32.totalorder %s15, 3
      %p80 = por %p78, %p79
      %p82 = scmp.ne.s32.totalorder %s67, %s81
      %p83 = scmp.eq.s32.totalorder %s15, 0
      %p84 = por %p82, %p83
      %p85 = scmp.le.s32.totalorder 1, %s9
      %p86 = scmp.lt.s32.totalorder %s9, 5
      %p87 = pnand %p85, %p86
      %p88 = pneg %p87
      // Predicated region
      $region9: #{relu_pca_forward.4} parent=5 // pred_check
        _
      $region10: #{relu_pca_forward.4} parent=5 // pred_check_branch
        %90 = sbr.rel (%p87) target = $region12
      $region11: #{relu_pca_forward.4} parent=5 // pred_region
        %s91 = ssub.s32 %s9, 1
      $region12: #{relu_pca_forward.4} parent=5 // pred_fallthru
        _
      %p92 = scmp.lt.s32.totalorder %s9, 4
      // Predicated region
      $region13: #{relu_pca_forward.4} parent=5 // pred_check
        %p93 = pneg %p92
      $region14: #{relu_pca_forward.4} parent=5 // pred_check_branch
        %95 = sbr.rel (%p93) target = $region16
      $region15: #{relu_pca_forward.4} parent=5 // pred_region
        // Predicated region
        $region17: #{relu_pca_forward.4} parent=15 // pred_check
          %p96 = pneg %p29
        $region18: #{relu_pca_forward.4} parent=15 // pred_check_branch
          %98 = sbr.rel (%p96) target = $region20
        $region19: #{relu_pca_forward.4} parent=15 // pred_region
          %s99 = sand.u32 %s19, 1
          %s100 = sand.u32 %s19, 1
          %s101 = smul.addr %s100, 16
          %s102 = scalar_lea.vmem [#allocation2], %s101
          %s103 = smul.addr %s9, 4
          %s104 = scalar_lea.vmem %s0, %s103
          // Predicated region
          $region21: #{relu_pca_forward.4} parent=19 // pred_check
            _
          $region22: #{relu_pca_forward.4} parent=19 // pred_check_branch
            %106 = sbr.rel (0) target = $region24
          $region23: #{relu_pca_forward.4} parent=19 // pred_region
            // Predicated region
            $region25: #{relu_pca_forward.4} parent=23 // pred_check
              _
            $region26: #{relu_pca_forward.4} parent=23 // pred_check_branch
              %108 = sbr.rel target = $region28
            $region27: #{relu_pca_forward.4} parent=23 // pred_region
              // Predicated region
              $region40: #{relu_pca_forward.4} parent=27 // pred_check
                _
              $region41: #{relu_pca_forward.4} parent=27 // pred_check_branch
                %130 = sbr.rel (0) target = $region43
              $region42: #{relu_pca_forward.4} parent=27 // pred_region
                loop: start=0, step=1, limit=1
                $region44: #{relu_pca_forward.4} parent=42 // loop_pre_header
                  _
                $region45: #{relu_pca_forward.4} parent=42 // loop_header
                  %s132 = sphi 0, %s136
                  %p133 = scmp.ge.s32.totalorder %s132, 1
                  %s137 = sphi %s104, %s104
                  %s138 = sphi %s102, %s102
                $region46: #{relu_pca_forward.4} parent=42 // loop_header_branch
                  %135 = sbr.rel (%p133) target = $region50
                $region47: #{relu_pca_forward.4} parent=42 // loop_body
                  _
                $region48: #{relu_pca_forward.4} parent=42 // loop_footer
                  %s136 = sadd.s32 1, %s132
                $region49: #{relu_pca_forward.4} parent=42 // loop_footer_branch
                  %131 = sbr.rel target = $region45
                $region50: #{relu_pca_forward.4} parent=42 // loop_exit
                  _
                %s140 = ssub.s32 16, 1
                loop: start=0, step=1, limit=1
                $region51: #{relu_pca_forward.4} parent=42 // loop_pre_header
                  _
                $region52: #{relu_pca_forward.4} parent=42 // loop_header
                  %s142 = sphi 0, %s146
                  %p143 = scmp.ge.s32.totalorder %s142, 1
                  %s147 = sphi %s104, %s104
                  %s148 = sphi %s102, %s102
                $region53: #{relu_pca_forward.4} parent=42 // loop_header_branch
                  %145 = sbr.rel (%p143) target = $region57
                $region54: #{relu_pca_forward.4} parent=42 // loop_body
                  %v149 = vld [vmem:[%s147] sm:%s140]
                  %150 = vst [vmem:[%s148] sm:%s140] %v149
                  %v151 = vld [vmem:[%s147 + $0x10] sm:%s140]
                  %152 = vst [vmem:[%s148 + $0x4] sm:%s140] %v151
                  %v153 = vld [vmem:[%s147 + $0x20] sm:%s140]
                  %154 = vst [vmem:[%s148 + $0x8] sm:%s140] %v153
                  %v155 = vld [vmem:[%s147 + $0x30] sm:%s140]
                  %156 = vst [vmem:[%s148 + $0xc] sm:%s140] %v155
                $region55: #{relu_pca_forward.4} parent=42 // loop_footer
                  %s146 = sadd.s32 1, %s142
                $region56: #{relu_pca_forward.4} parent=42 // loop_footer_branch
                  %141 = sbr.rel target = $region52
                $region57: #{relu_pca_forward.4} parent=42 // loop_exit
                  _
              $region43: #{relu_pca_forward.4} parent=27 // pred_fallthru
                _
            $region28: #{relu_pca_forward.4} parent=23 // pred_fallthru
              _
            // Predicated region
            $region29: #{relu_pca_forward.4} parent=23 // pred_check
              _
            $region30: #{relu_pca_forward.4} parent=23 // pred_check_branch
              %110 = sbr.rel (0) target = $region32
            $region31: #{relu_pca_forward.4} parent=23 // pred_region
              %s112 = ssub.s32 16, 1
              loop: start=0, step=1, limit=1
              $region33: #{relu_pca_forward.4} parent=31 // loop_pre_header
                _
              $region34: #{relu_pca_forward.4} parent=31 // loop_header
                %s114 = sphi 0, %s118
                %p115 = scmp.ge.s32.totalorder %s114, 1
                %s119 = sphi %s104, %s104
                %s120 = sphi %s102, %s102
              $region35: #{relu_pca_forward.4} parent=31 // loop_header_branch
                %117 = sbr.rel (%p115) target = $region39
              $region36: #{relu_pca_forward.4} parent=31 // loop_body
                %v121 = vld [vmem:[%s119] sm:%s112]
                %122 = vst [vmem:[%s120] sm:%s112] %v121
                %v123 = vld [vmem:[%s119 + $0x10] sm:%s112]
                %124 = vst [vmem:[%s120 + $0x4] sm:%s112] %v123
                %v125 = vld [vmem:[%s119 + $0x20] sm:%s112]
                %126 = vst [vmem:[%s120 + $0x8] sm:%s112] %v125
                %v127 = vld [vmem:[%s119 + $0x30] sm:%s112]
                %128 = vst [vmem:[%s120 + $0xc] sm:%s112] %v127
              $region37: #{relu_pca_forward.4} parent=31 // loop_footer
                %s118 = sadd.s32 1, %s114
              $region38: #{relu_pca_forward.4} parent=31 // loop_footer_branch
                %113 = sbr.rel target = $region34
              $region39: #{relu_pca_forward.4} parent=31 // loop_exit
                _
            $region32: #{relu_pca_forward.4} parent=23 // pred_fallthru
              _
          $region24: #{relu_pca_forward.4} parent=19 // pred_fallthru
            _
          %157 = vnop
        $region20: #{relu_pca_forward.4} parent=15 // pred_fallthru
          _
      $region16: #{relu_pca_forward.4} parent=5 // pred_fallthru
        _
      %p158 = scmp.le.s32.totalorder 1, %s9
      %p159 = scmp.lt.s32.totalorder %s9, 5
      %p160 = pnand %p158, %p159
      %p161 = pneg %p160
      // Predicated region
      $region58: #{relu_pca_forward.4} parent=5 // pred_check
        _
      $region59: #{relu_pca_forward.4} parent=5 // pred_check_branch
        %163 = sbr.rel (%p160) target = $region61
      $region60: #{relu_pca_forward.4} parent=5 // pred_region
        %s164 = ssub.s32 %s9, 1
        %s165 = sand.u32 %s22, 1
        %s166 = sand.u32 %s22, 1
        %s167 = smul.addr %s166, 16
        %s168 = scalar_lea.vmem [#allocation2], %s167
        // Predicated region
        $region62: #{relu_pca_forward.4} parent=60 // pred_check
          %p169 = pneg %p35
        $region63: #{relu_pca_forward.4} parent=60 // pred_check_branch
          %171 = sbr.rel (%p169) target = $region65
        $region64: #{relu_pca_forward.4} parent=60 // pred_region
          _
        $region65: #{relu_pca_forward.4} parent=60 // pred_fallthru
          _
        %s172 = sand.u32 %s22, 1
        %s173 = sand.u32 %s22, 1
        %s174 = smul.addr %s173, 16
        %s175 = scalar_lea.vmem [#allocation2], %s174
        %p176 = pneg %p35
        %p177 = pneg %p32
        %p178 = pneg %p56
        %p179 = pneg %p53
        %p180 = pneg %p77
        %p181 = pneg %p74
        %p183 = scmp.eq.s32.totalorder %s14, 0
        // Predicated region
        $region66: #{relu_pca_forward.4} parent=60 // pred_check
          %p184 = pneg %p183
        $region67: #{relu_pca_forward.4} parent=60 // pred_check_branch
          %186 = sbr.rel (%p184) target = $region69
        $region68: #{relu_pca_forward.4} parent=60 // pred_region
          %vm187 = vcmask 7168
          %188 = vst.msk [vmem:[%s1] sm:$0xff] %vm187, 0.0
          %189 = vst.msk [vmem:[%s1 + $0x8] sm:$0xff] %vm187, 0.0
          %190 = vst.msk [vmem:[%s1 + $0x10] sm:$0xff] %vm187, 0.0
          %191 = vst.msk [vmem:[%s1 + $0x18] sm:$0xff] %vm187, 0.0
          %vm192 = vcmask 261120
          %193 = vst.msk [vmem:[%s2] sm:$0xff] %vm192, 0.0
          %194 = vst.msk [vmem:[%s2 + $0x8] sm:$0xff] %vm192, 0.0
          %195 = vst.msk [vmem:[%s2 + $0x10] sm:$0xff] %vm192, 0.0
          %196 = vst.msk [vmem:[%s2 + $0x18] sm:$0xff] %vm192, 0.0
        $region69: #{relu_pca_forward.4} parent=60 // pred_fallthru
          _
        %v197 = vld [vmem:[%s168] sm:$0xf]
        %v198 = vld [vmem:[%s168 + $0x4] sm:$0xf]
        %v199 = vld [vmem:[%s168 + $0x8] sm:$0xf]
        %v200 = vld [vmem:[%s168 + $0xc] sm:$0xf]
        %v201 = vunpack.c.l.bf16 %v197
        %v202 = vunpack.c.l.bf16 %v198
        %v203 = vunpack.c.l.bf16 %v199
        %v204 = vunpack.c.l.bf16 %v200
        %v205 = vmax.f32 %v201, 0.0
        %v206 = vmax.f32 %v202, 0.0
        %v207 = vmax.f32 %v203, 0.0
        %v208 = vmax.f32 %v204, 0.0
        %v209 = vld [vmem:[%s1] sm:$0xff]
        %v210 = vld [vmem:[%s1 + $0x8] sm:$0xff]
        %v211 = vld [vmem:[%s1 + $0x10] sm:$0xff]
        %v212 = vld [vmem:[%s1 + $0x18] sm:$0xff]
        %213 = vadd.xlane.f32.xlu0 %v205
        %v214 = vpop.xlane.xlu0 %213
        %215 = vadd.xlane.f32.xlu0 %v206
        %v216 = vpop.xlane.xlu0 %215
        %217 = vadd.xlane.f32.xlu0 %v207
        %v218 = vpop.xlane.xlu0 %217
        %219 = vadd.xlane.f32.xlu0 %v208
        %v220 = vpop.xlane.xlu0 %219
        %v221 = vadd.f32 %v209, %v214
        %v222 = vadd.f32 %v210, %v216
        %v223 = vadd.f32 %v211, %v218
        %v224 = vadd.f32 %v212, %v220
        %vm225 = vcmask 7168
        %226 = vst.msk [vmem:[%s1] sm:$0xff] %vm225, %v221
        %227 = vst.msk [vmem:[%s1 + $0x8] sm:$0xff] %vm225, %v222
        %228 = vst.msk [vmem:[%s1 + $0x10] sm:$0xff] %vm225, %v223
        %229 = vst.msk [vmem:[%s1 + $0x18] sm:$0xff] %vm225, %v224
        %v230 = vpack.c.bf16 %v206, %v205
        %v231 = vpack.c.bf16 %v208, %v207
        %v232 = vld [vmem:[%s2] sm:$0xff]
        %v233 = vld [vmem:[%s2 + $0x8] sm:$0xff]
        %v234 = vld [vmem:[%s2 + $0x10] sm:$0xff]
        %v235 = vld [vmem:[%s2 + $0x18] sm:$0xff]
        %236 = vmatprep.subr.bf16.mxu0 0
        %237 = vmatpush1.bf16.xpose.msra.mxu0 0
        %238 = vmatprep.subr.bf16.mxu0 0
        %239 = vmatpush1.bf16.xpose.msra.mxu0 0
        %240 = vmatprep.subr.bf16.mxu0 0
        %241 = vmatpush1.bf16.xpose.msra.mxu0 0
        %242 = vmatprep.subr.bf16.mxu0 0
        %243 = vmatpush1.bf16.xpose.msra.mxu0 0
        %244 = vmatprep.subr.bf16.mxu0 0
        %245 = vmatpush1.bf16.xpose.msra.mxu0 0
        %246 = vmatprep.subr.bf16.mxu0 0
        %247 = vmatpush1.bf16.xpose.msra.mxu0 0
        %248 = vmatprep.subr.bf16.mxu0 0
        %249 = vmatpush1.bf16.xpose.msra.mxu0 %v231
        %250 = vmatprep.subr.bf16.mxu0 0
        %251 = vmatpush1.bf16.xpose.msra.mxu0 %v230
        %252 = vmatprep.subr.bf16.mxu0 0
        %253 = vmatpush2.bf16.xpose.msra.mxu0 0
        %254 = vmatprep.subr.bf16.mxu0 0
        %255 = vmatpush2.bf16.xpose.msra.mxu0 0
        %256 = vmatprep.subr.bf16.mxu0 0
        %257 = vmatpush2.bf16.xpose.msra.mxu0 0
        %258 = vmatprep.subr.bf16.mxu0 0
        %259 = vmatpush2.bf16.xpose.msra.mxu0 0
        %260 = vmatprep.subr.bf16.mxu0 0
        %261 = vmatpush2.bf16.xpose.msra.mxu0 0
        %262 = vmatprep.subr.bf16.mxu0 0
        %263 = vmatpush2.bf16.xpose.msra.mxu0 0
        %264 = vmatprep.subr.bf16.mxu0 0
        %265 = vmatpush2.bf16.xpose.msra.mxu0 0
        %266 = vmatprep.subr.bf16.mxu0 0
        %267 = vmatpush2.bf16.xpose.msra.mxu0 0
        %268 = vmatprep.mubr.bf16.mxu0 0
        %269 = vmatmul.mubr.bf16.gmra.mxu0 %v230
        %v270 = vpop.f32.mrf.mxu0
        %v271 = vadd.f32 0.0, %v270
        %v272 = vpop.f32.mrf.mxu0
        %v273 = vpop.f32.mrf.mxu0
        %v274 = vadd.f32 0.0, %v273
        %v275 = vpop.f32.mrf.mxu0
        %276 = vmatprep.mubr.bf16.mxu0 0
        %277 = vmatmul.mubr.bf16.gmra.mxu0 %v231
        %v278 = vpop.f32.mrf.mxu0
        %v279 = vadd.f32 0.0, %v278
        %v280 = vpop.f32.mrf.mxu0
        %v281 = vpop.f32.mrf.mxu0
        %v282 = vadd.f32 0.0, %v281
        %v283 = vpop.f32.mrf.mxu0
        %284 = vdwg.mxu0
        %v285 = vadd.f32 %v232, %v271
        %v286 = vadd.f32 %v233, %v274
        %v287 = vadd.f32 %v234, %v279
        %v288 = vadd.f32 %v235, %v282
        %vm289 = vcmask 261120
        %290 = vst.msk [vmem:[%s2] sm:$0xff] %vm289, %v285
        %291 = vst.msk [vmem:[%s2 + $0x8] sm:$0xff] %vm289, %v286
        %292 = vst.msk [vmem:[%s2 + $0x10] sm:$0xff] %vm289, %v287
        %293 = vst.msk [vmem:[%s2 + $0x18] sm:$0xff] %vm289, %v288
        // Predicated region
        $region70: #{relu_pca_forward.4} parent=60 // pred_check
          %p294 = pneg %p53
        $region71: #{relu_pca_forward.4} parent=60 // pred_check_branch
          %296 = sbr.rel (%p294) target = $region73
        $region72: #{relu_pca_forward.4} parent=60 // pred_region
          _
        $region73: #{relu_pca_forward.4} parent=60 // pred_fallthru
          _
        // Predicated region
        $region74: #{relu_pca_forward.4} parent=60 // pred_check
          %p297 = pneg %p74
        $region75: #{relu_pca_forward.4} parent=60 // pred_check_branch
          %299 = sbr.rel (%p297) target = $region77
        $region76: #{relu_pca_forward.4} parent=60 // pred_region
          _
        $region77: #{relu_pca_forward.4} parent=60 // pred_fallthru
          _
        // Predicated region
        $region78: #{relu_pca_forward.4} parent=60 // pred_check
          %p300 = pneg %p53
        $region79: #{relu_pca_forward.4} parent=60 // pred_check_branch
          %302 = sbr.rel (%p300) target = $region81
        $region80: #{relu_pca_forward.4} parent=60 // pred_region
          _
        $region81: #{relu_pca_forward.4} parent=60 // pred_fallthru
          _
        // Predicated region
        $region82: #{relu_pca_forward.4} parent=60 // pred_check
          %p303 = pneg %p74
        $region83: #{relu_pca_forward.4} parent=60 // pred_check_branch
          %305 = sbr.rel (%p303) target = $region85
        $region84: #{relu_pca_forward.4} parent=60 // pred_region
          _
        $region85: #{relu_pca_forward.4} parent=60 // pred_fallthru
          _
      $region61: #{relu_pca_forward.4} parent=5 // pred_fallthru
        _
      %p306 = scmp.le.s32.totalorder 2, %s9
      // Predicated region
      $region86: #{relu_pca_forward.4} parent=5 // pred_check
        %p307 = pneg %p306
      $region87: #{relu_pca_forward.4} parent=5 // pred_check_branch
        %309 = sbr.rel (%p307) target = $region89
      $region88: #{relu_pca_forward.4} parent=5 // pred_region
        %s310 = ssub.s32 %s9, 2
      $region89: #{relu_pca_forward.4} parent=5 // pred_fallthru
        _
    $region6: #{relu_pca_forward.4} parent=1 // loop_footer
      %s13 = sadd.s32 1, %s9
    $region7: #{relu_pca_forward.4} parent=1 // loop_footer_branch
      %8 = sbr.rel target = $region3
    $region8: #{relu_pca_forward.4} parent=1 // loop_exit
      _

// kernel: custom-call.60
$region0: #{custom-call.60}
  %s0 = inlined_call_operand.vmem [shape: f32[64,32], index: 0, kind: input, shape index: {}]
  %s1 = inlined_call_operand.vmem [shape: f32[64,32], index: 1, kind: output, shape index: {0}]
  %s2 = inlined_call_operand.vmem [shape: f32[32], index: 2, kind: output, shape index: {1}]
  %3 = xla_tuple %s1, %s2
  $region1: #{custom-call.60} parent=0
    #allocation0 [shape = 'u8[32768]{0}', space=vmem, size = 0x8000, scoped, tag = 'operand span for operand 0']
    #allocation1 [shape = 'u8[32768]{0}', space=vmem, size = 0x8000, scoped, tag = 'operand span for operand 1']
    #allocation2 [shape = 'u8[4096]{0}', space=vmem, size = 0x1000, scoped, tag = 'operand span for operand 2']
    #allocation3 [shape = 'u8[512]{0}', space=vmem, size = 0x400, scoped, tag = 'packed  for operand 2']
    #allocation4 [shape = 'f32[64,128]{1,0}', space=vmem, size = 0x8000, scoped, tag = 'scratch for Householder reflectors']
    // Predicated region
    $region2: #{custom-call.60} parent=1 // pred_check
      _
    $region3: #{custom-call.60} parent=1 // pred_check_branch
      %5 = sbr.rel (0) target = $region5
    $region4: #{custom-call.60} parent=1 // pred_region
      // Predicated region
      $region6: #{custom-call.60} parent=4 // pred_check
        _
      $region7: #{custom-call.60} parent=4 // pred_check_branch
        %7 = sbr.rel (0) target = $region9
      $region8: #{custom-call.60} parent=4 // pred_region
        // Predicated region
        $region21: #{custom-call.60} parent=8 // pred_check
          _
        $region22: #{custom-call.60} parent=8 // pred_check_branch
          %37 = sbr.rel (0) target = $region24
        $region23: #{custom-call.60} parent=8 // pred_region
          loop: start=0, step=1, limit=1
          $region25: #{custom-call.60} parent=23 // loop_pre_header
            _
          $region26: #{custom-call.60} parent=23 // loop_header
            %s39 = sphi 0, %s43
            %p40 = scmp.ge.s32.totalorder %s39, 1
            %s44 = sphi %s0, %s0
            %s45 = sphi [#allocation0], [#allocation0]
          $region27: #{custom-call.60} parent=23 // loop_header_branch
            %42 = sbr.rel (%p40) target = $region31
          $region28: #{custom-call.60} parent=23 // loop_body
            %v46 = vld [vmem:[%s44] sm:$0xff]
            %47 = vst [vmem:[%s45] sm:$0xff] %v46
            %v48 = vld [vmem:[%s44 + $0x8] sm:$0xff]
            %49 = vst [vmem:[%s45 + $0x8] sm:$0xff] %v48
            %v50 = vld [vmem:[%s44 + $0x10] sm:$0xff]
            %51 = vst [vmem:[%s45 + $0x10] sm:$0xff] %v50
            %v52 = vld [vmem:[%s44 + $0x18] sm:$0xff]
            %53 = vst [vmem:[%s45 + $0x18] sm:$0xff] %v52
            %v54 = vld [vmem:[%s44 + $0x20] sm:$0xff]
            %55 = vst [vmem:[%s45 + $0x20] sm:$0xff] %v54
            %v56 = vld [vmem:[%s44 + $0x28] sm:$0xff]
            %57 = vst [vmem:[%s45 + $0x28] sm:$0xff] %v56
            %v58 = vld [vmem:[%s44 + $0x30] sm:$0xff]
            %59 = vst [vmem:[%s45 + $0x30] sm:$0xff] %v58
            %v60 = vld [vmem:[%s44 + $0x38] sm:$0xff]
            %61 = vst [vmem:[%s45 + $0x38] sm:$0xff] %v60
          $region29: #{custom-call.60} parent=23 // loop_footer
            %s43 = sadd.s32 1, %s39
          $region30: #{custom-call.60} parent=23 // loop_footer_branch
            %38 = sbr.rel target = $region26
          $region31: #{custom-call.60} parent=23 // loop_exit
            _
        $region24: #{custom-call.60} parent=8 // pred_fallthru
          _
        // Predicated region
        $region32: #{custom-call.60} parent=8 // pred_check
          _
        $region33: #{custom-call.60} parent=8 // pred_check_branch
          %63 = sbr.rel target = $region35
        $region34: #{custom-call.60} parent=8 // pred_region
          _
        $region35: #{custom-call.60} parent=8 // pred_fallthru
          _
      $region9: #{custom-call.60} parent=4 // pred_fallthru
        _
      // Predicated region
      $region10: #{custom-call.60} parent=4 // pred_check
        _
      $region11: #{custom-call.60} parent=4 // pred_check_branch
        %9 = sbr.rel target = $region13
      $region12: #{custom-call.60} parent=4 // pred_region
        %s11 = ssub.s32 256, 1
        loop: start=0, step=1, limit=1
        $region14: #{custom-call.60} parent=12 // loop_pre_header
          _
        $region15: #{custom-call.60} parent=12 // loop_header
          %s13 = sphi 0, %s17
          %p14 = scmp.ge.s32.totalorder %s13, 1
          %s18 = sphi %s0, %s0
          %s19 = sphi [#allocation0], [#allocation0]
        $region16: #{custom-call.60} parent=12 // loop_header_branch
          %16 = sbr.rel (%p14) target = $region20
        $region17: #{custom-call.60} parent=12 // loop_body
          %v20 = vld [vmem:[%s18] sm:%s11]
          %21 = vst [vmem:[%s19] sm:%s11] %v20
          %v22 = vld [vmem:[%s18 + $0x8] sm:%s11]
          %23 = vst [vmem:[%s19 + $0x8] sm:%s11] %v22
          %v24 = vld [vmem:[%s18 + $0x10] sm:%s11]
          %25 = vst [vmem:[%s19 + $0x10] sm:%s11] %v24
          %v26 = vld [vmem:[%s18 + $0x18] sm:%s11]
          %27 = vst [vmem:[%s19 + $0x18] sm:%s11] %v26
          %v28 = vld [vmem:[%s18 + $0x20] sm:%s11]
          %29 = vst [vmem:[%s19 + $0x20] sm:%s11] %v28
          %v30 = vld [vmem:[%s18 + $0x28] sm:%s11]
          %31 = vst [vmem:[%s19 + $0x28] sm:%s11] %v30
          %v32 = vld [vmem:[%s18 + $0x30] sm:%s11]
          %33 = vst [vmem:[%s19 + $0x30] sm:%s11] %v32
          %v34 = vld [vmem:[%s18 + $0x38] sm:%s11]
          %35 = vst [vmem:[%s19 + $0x38] sm:%s11] %v34
        $region18: #{custom-call.60} parent=12 // loop_footer
          %s17 = sadd.s32 1, %s13
        $region19: #{custom-call.60} parent=12 // loop_footer_branch
          %12 = sbr.rel target = $region15
        $region20: #{custom-call.60} parent=12 // loop_exit
          _
      $region13: #{custom-call.60} parent=4 // pred_fallthru
        _
    $region5: #{custom-call.60} parent=1 // pred_fallthru
      _
    %64 = vnop
    %v65 = vld [vmem:[#allocation0] sm:$0xff]
    %66 = vst [vmem:[#allocation1] sm:$0xff] %v65
    %s67 = scalar_lea.vmem [#allocation1], 8
    %s68 = scalar_lea.vmem [#allocation0], 8
    %v69 = vld [vmem:[%s68] sm:$0xff]
    %70 = vst [vmem:[%s67] sm:$0xff] %v69
    %s71 = scalar_lea.vmem [#allocation1], 16
    %s72 = scalar_lea.vmem [#allocation0], 16
    %v73 = vld [vmem:[%s72] sm:$0xff]
    %74 = vst [vmem:[%s71] sm:$0xff] %v73
    %s75 = scalar_lea.vmem [#allocation1], 24
    %s76 = scalar_lea.vmem [#allocation0], 24
    %v77 = vld [vmem:[%s76] sm:$0xff]
    %78 = vst [vmem:[%s75] sm:$0xff] %v77
    %s79 = scalar_lea.vmem [#allocation1], 32
    %s80 = scalar_lea.vmem [#allocation0], 32
    %v81 = vld [vmem:[%s80] sm:$0xff]
    %82 = vst [vmem:[%s79] sm:$0xff] %v81
    %s83 = scalar_lea.vmem [#allocation1], 40
    %s84 = scalar_lea.vmem [#allocation0], 40
    %v85 = vld [vmem:[%s84] sm:$0xff]
    %86 = vst [vmem:[%s83] sm:$0xff] %v85
    %s87 = scalar_lea.vmem [#allocation1], 48
    %s88 = scalar_lea.vmem [#allocation0], 48
    %v89 = vld [vmem:[%s88] sm:$0xff]
    %90 = vst [vmem:[%s87] sm:$0xff] %v89
    %s91 = scalar_lea.vmem [#allocation1], 56
    %s92 = scalar_lea.vmem [#allocation0], 56
    %v93 = vld [vmem:[%s92] sm:$0xff]
    %94 = vst [vmem:[%s91] sm:$0xff] %v93
    %95 = vst [vmem:[#allocation2] sm:$0x1] 0.0
    loop: start=0, step=1, limit=32
    $region36: #{custom-call.60} parent=1 // loop_pre_header
      _
    $region37: #{custom-call.60} parent=1 // loop_header
      %s97 = sphi 0, %s101
      %p98 = scmp.ge.s32.totalorder %s97, 32
    $region38: #{custom-call.60} parent=1 // loop_header_branch
      %100 = sbr.rel (%p98) target = $region42
    $region39: #{custom-call.60} parent=1 // loop_body
      %v102 = vld [vmem:[#allocation1] sm:$0xff]
      %v103 = vlaneseq
      %v104 = vshrl.u32 %v103, 7
      %v106 = vstv %s97
      %vm107 = vcmp.gt.s32.totalorder %v104, %v106
      %v108 = vsel %vm107, %v102, 0.0
      %v109 = vmul.f32 %v108, %v108
      %s110 = scalar_lea.vmem [#allocation1], 8
      %v111 = vld [vmem:[%s110] sm:$0xff]
      %v112 = vlaneseq
      %v113 = vshrl.u32 %v112, 7
      %v114 = vadd.s32 %v113, 8
      %v115 = vstv %s97
      %vm116 = vcmp.gt.s32.totalorder %v114, %v115
      %v117 = vsel %vm116, %v111, 0.0
      %v118 = vmul.f32 %v117, %v117
      %v119 = vadd.f32 %v109, %v118
      %s120 = scalar_lea.vmem [#allocation1], 16
      %v121 = vld [vmem:[%s120] sm:$0xff]
      %v122 = vlaneseq
      %v123 = vshrl.u32 %v122, 7
      %v124 = vadd.s32 %v123, 16
      %v125 = vstv %s97
      %vm126 = vcmp.gt.s32.totalorder %v124, %v125
      %v127 = vsel %vm126, %v121, 0.0
      %v128 = vmul.f32 %v127, %v127
      %v129 = vadd.f32 %v119, %v128
      %s130 = scalar_lea.vmem [#allocation1], 24
      %v131 = vld [vmem:[%s130] sm:$0xff]
      %v132 = vlaneseq
      %v133 = vshrl.u32 %v132, 7
      %v134 = vadd.s32 %v133, 24
      %v135 = vstv %s97
      %vm136 = vcmp.gt.s32.totalorder %v134, %v135
      %v137 = vsel %vm136, %v131, 0.0
      %v138 = vmul.f32 %v137, %v137
      %v139 = vadd.f32 %v129, %v138
      %s140 = scalar_lea.vmem [#allocation1], 32
      %v141 = vld [vmem:[%s140] sm:$0xff]
      %v142 = vlaneseq
      %v143 = vshrl.u32 %v142, 7
      %v144 = vadd.s32 %v143, 32
      %v145 = vstv %s97
      %vm146 = vcmp.gt.s32.totalorder %v144, %v145
      %v147 = vsel %vm146, %v141, 0.0
      %v148 = vmul.f32 %v147, %v147
      %v149 = vadd.f32 %v139, %v148
      %s150 = scalar_lea.vmem [#allocation1], 40
      %v151 = vld [vmem:[%s150] sm:$0xff]
      %v152 = vlaneseq
      %v153 = vshrl.u32 %v152, 7
      %v154 = vadd.s32 %v153, 40
      %v155 = vstv %s97
      %vm156 = vcmp.gt.s32.totalorder %v154, %v155
      %v157 = vsel %vm156, %v151, 0.0
      %v158 = vmul.f32 %v157, %v157
      %v159 = vadd.f32 %v149, %v158
      %s160 = scalar_lea.vmem [#allocation1], 48
      %v161 = vld [vmem:[%s160] sm:$0xff]
      %v162 = vlaneseq
      %v163 = vshrl.u32 %v162, 7
      %v164 = vadd.s32 %v163, 48
      %v165 = vstv %s97
      %vm166 = vcmp.gt.s32.totalorder %v164, %v165
      %v167 = vsel %vm166, %v161, 0.0
      %v168 = vmul.f32 %v167, %v167
      %v169 = vadd.f32 %v159, %v168
      %s170 = scalar_lea.vmem [#allocation1], 56
      %v171 = vld [vmem:[%s170] sm:$0xff]
      %v172 = vlaneseq
      %v173 = vshrl.u32 %v172, 7
      %v174 = vadd.s32 %v173, 56
      %v175 = vstv %s97
      %vm176 = vcmp.gt.s32.totalorder %v174, %v175
      %vm177 = vcmp.lt.s32.totalorder %v174, 64
      %vm178 = vmand %vm176, %vm177
      %v179 = vsel %vm178, %v171, 0.0
      %v180 = vmul.f32 %v179, %v179
      %v181 = vadd.f32 %v169, %v180
      %v182 = vrot.slane %v181, 4
      %v183 = vadd.f32 %v181, %v182
      %v184 = vrot.slane %v183, 2
      %v185 = vadd.f32 %v183, %v184
      %v186 = vrot.slane %v185, 1
      %v187 = vadd.f32 %v185, %v186
      %v188 = vrsqrt.pop %v187
      %v189 = vmul.f32 %v187, %v188
      %vm190 = vcmp.eq.f32.partialorder %v187, inf
      %v191 = vsel %vm190, %v187, %v189
      %vm192 = vcmp.eq.f32.partialorder %v187, 0.0
      %v193 = vand.u32 %v187, 2147483648
      %v194 = vsel %vm192, %v193, %v191
      %vm195 = vcmp.eq.f32.partialorder %v187, 0.0
      %s196 = sshrl.u32 %s97, 3
      %s197 = sand.u32 %s97, 7
      %s198 = smul.addr %s196, 8
      %s199 = sadd.s32 %s197, %s198
      %s200 = scalar_lea.vmem [#allocation1], %s199
      %v201 = vld [vmem:[%s200] ss:$0 sm:$0xff]
      %v202 = vand.u32 2147483647, %v201
      %v203 = vmax.f32 %v202, 0.0
      %v204 = vand.u32 2147483647, %v194
      %v205 = vmax.f32 %v203, %v204
      %v206 = vrcp.pop %v205
      %v207 = vmul.f32 %v202, %v206
      %v208 = vmul.f32 %v207, %v207
      %v209 = vrcp.pop %v205
      %v210 = vmul.f32 0.0, %v209
      %v211 = vmul.f32 %v210, %v210
      %v212 = vadd.f32 %v208, %v211
      %v213 = vrcp.pop %v205
      %v214 = vmul.f32 %v204, %v213
      %v215 = vmul.f32 %v214, %v214
      %v216 = vadd.f32 %v212, %v215
      %vm217 = vcmp.eq.f32.partialorder %v205, 0.0
      %v218 = vrsqrt.pop %v216
      %v219 = vmul.f32 %v216, %v218
      %vm220 = vcmp.eq.f32.partialorder %v216, inf
      %v221 = vsel %vm220, %v216, %v219
      %vm222 = vcmp.eq.f32.partialorder %v216, 0.0
      %v223 = vand.u32 %v216, 2147483648
      %v224 = vsel %vm222, %v223, %v221
      %v225 = vmul.f32 %v205, %v224
      %v226 = vsel %vm217, 0.0, %v225
      %vm227 = vcmp.lt.f32.partialorder %v201, 0.0
      %v228 = vxor.u32 %v226, 2147483648
      %v229 = vsel %vm227, %v226, %v228
      %v230 = vsub.f32 %v229, %v201
      %v231 = vrcp.pop %v229
      %v232 = vmul.f32 %v230, %v231
      %v233 = vsel %vm195, %v201, %v229
      %v234 = vsel %vm195, 0.0, %v232
      %v235 = vsub.f32 %v201, %v233
      %s236 = smov [#allocation1]
      %v237 = vlaneseq
      %v238 = vshrl.u32 %v237, 7
      %v239 = vmov %v238
      %v240 = vld [vmem:[%s236] sm:$0xff]
      %v242 = vstv %s97
      %vm243 = vcmp.gt.s32.totalorder %v239, %v242
      %v244 = vsel %vm243, %v240, 0.0
      %v245 = vrcp.pop %v235
      %v246 = vmul.f32 %v244, %v245
      %v247 = vsel %vm195, 0.0, %v246
      %v248 = vstv %s97
      %v249 = vlaneseq
      %v250 = vand.u32 %v249, 127
      %vm251 = vcmp.eq.s32.totalorder %v250, %v248
      %v252 = vsel %vm251, %v247, 0.0
      %253 = vadd.xlane.f32.xlu0 %v252
      %v254 = vpop.xlane.xlu0 %253
      %255 = vst [vmem:[#allocation4] sm:$0xff] %v254
      %s256 = scalar_lea.vmem %s236, 8
      %v257 = vld [vmem:[%s256] sm:$0xff]
      %v258 = vadd.s32 %v239, 8
      %v259 = vstv %s97
      %vm260 = vcmp.gt.s32.totalorder %v258, %v259
      %v261 = vsel %vm260, %v257, 0.0
      %v262 = vrcp.pop %v235
      %v263 = vmul.f32 %v261, %v262
      %v264 = vsel %vm195, 0.0, %v263
      %v265 = vstv %s97
      %v266 = vlaneseq
      %v267 = vand.u32 %v266, 127
      %vm268 = vcmp.eq.s32.totalorder %v267, %v265
      %v269 = vsel %vm268, %v264, 0.0
      %270 = vadd.xlane.f32.xlu0 %v269
      %v271 = vpop.xlane.xlu0 %270
      %s272 = scalar_lea.vmem [#allocation4], 8
      %273 = vst [vmem:[%s272] sm:$0xff] %v271
      %s274 = scalar_lea.vmem %s236, 16
      %v275 = vld [vmem:[%s274] sm:$0xff]
      %v276 = vadd.s32 %v239, 16
      %v277 = vstv %s97
      %vm278 = vcmp.gt.s32.totalorder %v276, %v277
      %v279 = vsel %vm278, %v275, 0.0
      %v280 = vrcp.pop %v235
      %v281 = vmul.f32 %v279, %v280
      %v282 = vsel %vm195, 0.0, %v281
      %v283 = vstv %s97
      %v284 = vlaneseq
      %v285 = vand.u32 %v284, 127
      %vm286 = vcmp.eq.s32.totalorder %v285, %v283
      %v287 = vsel %vm286, %v282, 0.0
      %288 = vadd.xlane.f32.xlu0 %v287
      %v289 = vpop.xlane.xlu0 %288
      %s290 = scalar_lea.vmem [#allocation4], 16
      %291 = vst [vmem:[%s290] sm:$0xff] %v289
      %s292 = scalar_lea.vmem %s236, 24
      %v293 = vld [vmem:[%s292] sm:$0xff]
      %v294 = vadd.s32 %v239, 24
      %v295 = vstv %s97
      %vm296 = vcmp.gt.s32.totalorder %v294, %v295
      %v297 = vsel %vm296, %v293, 0.0
      %v298 = vrcp.pop %v235
      %v299 = vmul.f32 %v297, %v298
      %v300 = vsel %vm195, 0.0, %v299
      %v301 = vstv %s97
      %v302 = vlaneseq
      %v303 = vand.u32 %v302, 127
      %vm304 = vcmp.eq.s32.totalorder %v303, %v301
      %v305 = vsel %vm304, %v300, 0.0
      %306 = vadd.xlane.f32.xlu0 %v305
      %v307 = vpop.xlane.xlu0 %306
      %s308 = scalar_lea.vmem [#allocation4], 24
      %309 = vst [vmem:[%s308] sm:$0xff] %v307
      %s310 = scalar_lea.vmem %s236, 32
      %v311 = vld [vmem:[%s310] sm:$0xff]
      %v312 = vadd.s32 %v239, 32
      %v313 = vstv %s97
      %vm314 = vcmp.gt.s32.totalorder %v312, %v313
      %v315 = vsel %vm314, %v311, 0.0
      %v316 = vrcp.pop %v235
      %v317 = vmul.f32 %v315, %v316
      %v318 = vsel %vm195, 0.0, %v317
      %v319 = vstv %s97
      %v320 = vlaneseq
      %v321 = vand.u32 %v320, 127
      %vm322 = vcmp.eq.s32.totalorder %v321, %v319
      %v323 = vsel %vm322, %v318, 0.0
      %324 = vadd.xlane.f32.xlu0 %v323
      %v325 = vpop.xlane.xlu0 %324
      %s326 = scalar_lea.vmem [#allocation4], 32
      %327 = vst [vmem:[%s326] sm:$0xff] %v325
      %s328 = scalar_lea.vmem %s236, 40
      %v329 = vld [vmem:[%s328] sm:$0xff]
      %v330 = vadd.s32 %v239, 40
      %v331 = vstv %s97
      %vm332 = vcmp.gt.s32.totalorder %v330, %v331
      %v333 = vsel %vm332, %v329, 0.0
      %v334 = vrcp.pop %v235
      %v335 = vmul.f32 %v333, %v334
      %v336 = vsel %vm195, 0.0, %v335
      %v337 = vstv %s97
      %v338 = vlaneseq
      %v339 = vand.u32 %v338, 127
      %vm340 = vcmp.eq.s32.totalorder %v339, %v337
      %v341 = vsel %vm340, %v336, 0.0
      %342 = vadd.xlane.f32.xlu0 %v341
      %v343 = vpop.xlane.xlu0 %342
      %s344 = scalar_lea.vmem [#allocation4], 40
      %345 = vst [vmem:[%s344] sm:$0xff] %v343
      %s346 = scalar_lea.vmem %s236, 48
      %v347 = vld [vmem:[%s346] sm:$0xff]
      %v348 = vadd.s32 %v239, 48
      %v349 = vstv %s97
      %vm350 = vcmp.gt.s32.totalorder %v348, %v349
      %v351 = vsel %vm350, %v347, 0.0
      %v352 = vrcp.pop %v235
      %v353 = vmul.f32 %v351, %v352
      %v354 = vsel %vm195, 0.0, %v353
      %v355 = vstv %s97
      %v356 = vlaneseq
      %v357 = vand.u32 %v356, 127
      %vm358 = vcmp.eq.s32.totalorder %v357, %v355
      %v359 = vsel %vm358, %v354, 0.0
      %360 = vadd.xlane.f32.xlu0 %v359
      %v361 = vpop.xlane.xlu0 %360
      %s362 = scalar_lea.vmem [#allocation4], 48
      %363 = vst [vmem:[%s362] sm:$0xff] %v361
      %s364 = scalar_lea.vmem %s236, 56
      %v365 = vld [vmem:[%s364] sm:$0xff]
      %v366 = vadd.s32 %v239, 56
      %v367 = vstv %s97
      %vm368 = vcmp.gt.s32.totalorder %v366, %v367
      %vm369 = vcmp.lt.s32.totalorder %v366, 64
      %vm370 = vmand %vm368, %vm369
      %v371 = vsel %vm370, %v365, 0.0
      %v372 = vrcp.pop %v235
      %v373 = vmul.f32 %v371, %v372
      %v374 = vsel %vm195, 0.0, %v373
      %v375 = vstv %s97
      %v376 = vlaneseq
      %v377 = vand.u32 %v376, 127
      %vm378 = vcmp.eq.s32.totalorder %v377, %v375
      %v379 = vsel %vm378, %v374, 0.0
      %380 = vadd.xlane.f32.xlu0 %v379
      %v381 = vpop.xlane.xlu0 %380
      %s382 = scalar_lea.vmem [#allocation4], 56
      %383 = vst [vmem:[%s382] sm:$0xff] %v381
      %s384 = scalar_lea.vmem [#allocation4], %s97
      %385 = vst [vmem:[%s384] sm:$0x1] 1.0
      %v386 = vstv %s97
      %v387 = vlaneseq
      %v388 = vand.u32 %v387, 127
      %vm389 = vcmp.eq.s32.totalorder %v388, %v386
      %v390 = vsel %vm389, %v234, 0.0
      %391 = vadd.xlane.f32.xlu0 %v390
      %v392 = vpop.xlane.xlu0 %391
      %v393 = vstv %s97
      %v394 = vlaneseq
      %v395 = vand.u32 %v394, 127
      %vm396 = vcmp.eq.s32.totalorder %v395, %v393
      %v397 = vld [vmem:[#allocation2] ss:$0 sm:$0xff]
      %v398 = vsel %vm396, %v392, %v397
      %399 = vst [vmem:[#allocation2] sm:$0x1] %v398
      %s400 = smov [#allocation1]
      %s401 = smov [#allocation4]
      %v402 = vlaneseq
      %v403 = vshrl.u32 %v402, 7
      %v404 = vmov %v403
      %v406 = vld [vmem:[%s401] sm:$0xff]
      %v407 = vld [vmem:[%s400] sm:$0xff]
      %v408 = vmul.f32 %v406, %v407
      %v409 = vadd.s32 %v404, 8
      %s410 = scalar_lea.vmem %s401, 8
      %v411 = vld [vmem:[%s410] sm:$0xff]
      %s412 = scalar_lea.vmem %s400, 8
      %v413 = vld [vmem:[%s412] sm:$0xff]
      %v414 = vmul.f32 %v411, %v413
      %v415 = vadd.f32 %v408, %v414
      %v416 = vadd.s32 %v404, 16
      %s417 = scalar_lea.vmem %s401, 16
      %v418 = vld [vmem:[%s417] sm:$0xff]
      %s419 = scalar_lea.vmem %s400, 16
      %v420 = vld [vmem:[%s419] sm:$0xff]
      %v421 = vmul.f32 %v418, %v420
      %v422 = vadd.f32 %v415, %v421
      %v423 = vadd.s32 %v404, 24
      %s424 = scalar_lea.vmem %s401, 24
      %v425 = vld [vmem:[%s424] sm:$0xff]
      %s426 = scalar_lea.vmem %s400, 24
      %v427 = vld [vmem:[%s426] sm:$0xff]
      %v428 = vmul.f32 %v425, %v427
      %v429 = vadd.f32 %v422, %v428
      %v430 = vadd.s32 %v404, 32
      %s431 = scalar_lea.vmem %s401, 32
      %v432 = vld [vmem:[%s431] sm:$0xff]
      %s433 = scalar_lea.vmem %s400, 32
      %v434 = vld [vmem:[%s433] sm:$0xff]
      %v435 = vmul.f32 %v432, %v434
      %v436 = vadd.f32 %v429, %v435
      %v437 = vadd.s32 %v404, 40
      %s438 = scalar_lea.vmem %s401, 40
      %v439 = vld [vmem:[%s438] sm:$0xff]
      %s440 = scalar_lea.vmem %s400, 40
      %v441 = vld [vmem:[%s440] sm:$0xff]
      %v442 = vmul.f32 %v439, %v441
      %v443 = vadd.f32 %v436, %v442
      %v444 = vadd.s32 %v404, 48
      %s445 = scalar_lea.vmem %s401, 48
      %v446 = vld [vmem:[%s445] sm:$0xff]
      %s447 = scalar_lea.vmem %s400, 48
      %v448 = vld [vmem:[%s447] sm:$0xff]
      %v449 = vmul.f32 %v446, %v448
      %v450 = vadd.f32 %v443, %v449
      %v451 = vadd.s32 %v404, 56
      %s452 = scalar_lea.vmem %s401, 56
      %v453 = vld [vmem:[%s452] sm:$0xff]
      %s454 = scalar_lea.vmem %s400, 56
      %v455 = vld [vmem:[%s454] sm:$0xff]
      %v456 = vmul.f32 %v453, %v455
      %vm457 = vcmp.lt.s32.totalorder %v451, 64
      %v458 = vsel %vm457, %v456, 0.0
      %v459 = vadd.f32 %v450, %v458
      %v460 = vrot.slane %v459, 4
      %v461 = vadd.f32 %v459, %v460
      %v462 = vrot.slane %v461, 2
      %v463 = vadd.f32 %v461, %v462
      %v464 = vrot.slane %v463, 1
      %v465 = vadd.f32 %v463, %v464
      %s466 = smov %s400
      %s467 = smov %s401
      %v468 = vlaneseq
      %v469 = vshrl.u32 %v468, 7
      %v470 = vmov %v469
      %v471 = vmul.f32 %v465, %v392
      %v473 = vlaneseq
      %v474 = vand.u32 %v473, 127
      %v475 = vld [vmem:[%s467] sm:$0xff]
      %v476 = vmul.f32 %v475, %v471
      %v477 = vld [vmem:[%s466] sm:$0xff]
      %v478 = vstv %s97
      %vm479 = vcmp.gt.s32.totalorder %v474, %v478
      %v480 = vsub.f32 %v477, %v476
      %v481 = vsel %vm479, %v480, %v477
      %v482 = vstv %s97
      %v483 = vlaneseq
      %v484 = vand.u32 %v483, 127
      %vm485 = vcmp.eq.s32.totalorder %v484, %v482
      %v486 = vstv %s97
      %vm487 = vcmp.ge.s32.totalorder %v470, %v486
      %vm488 = vmand %vm485, %vm487
      %v489 = vsel %vm488, %v475, %v481
      %490 = vst [vmem:[%s466] sm:$0xff] %v489
      %v491 = vadd.s32 %v470, 8
      %v492 = vlaneseq
      %v493 = vand.u32 %v492, 127
      %s494 = scalar_lea.vmem %s467, 8
      %v495 = vld [vmem:[%s494] sm:$0xff]
      %v496 = vmul.f32 %v495, %v471
      %s497 = scalar_lea.vmem %s466, 8
      %v498 = vld [vmem:[%s497] sm:$0xff]
      %v499 = vstv %s97
      %vm500 = vcmp.gt.s32.totalorder %v493, %v499
      %v501 = vsub.f32 %v498, %v496
      %v502 = vsel %vm500, %v501, %v498
      %v503 = vstv %s97
      %v504 = vlaneseq
      %v505 = vand.u32 %v504, 127
      %vm506 = vcmp.eq.s32.totalorder %v505, %v503
      %v507 = vstv %s97
      %vm508 = vcmp.ge.s32.totalorder %v491, %v507
      %vm509 = vmand %vm506, %vm508
      %v510 = vsel %vm509, %v495, %v502
      %511 = vst [vmem:[%s497] sm:$0xff] %v510
      %v512 = vadd.s32 %v470, 16
      %v513 = vlaneseq
      %v514 = vand.u32 %v513, 127
      %s515 = scalar_lea.vmem %s467, 16
      %v516 = vld [vmem:[%s515] sm:$0xff]
      %v517 = vmul.f32 %v516, %v471
      %s518 = scalar_lea.vmem %s466, 16
      %v519 = vld [vmem:[%s518] sm:$0xff]
      %v520 = vstv %s97
      %vm521 = vcmp.gt.s32.totalorder %v514, %v520
      %v522 = vsub.f32 %v519, %v517
      %v523 = vsel %vm521, %v522, %v519
      %v524 = vstv %s97
      %v525 = vlaneseq
      %v526 = vand.u32 %v525, 127
      %vm527 = vcmp.eq.s32.totalorder %v526, %v524
      %v528 = vstv %s97
      %vm529 = vcmp.ge.s32.totalorder %v512, %v528
      %vm530 = vmand %vm527, %vm529
      %v531 = vsel %vm530, %v516, %v523
      %532 = vst [vmem:[%s518] sm:$0xff] %v531
      %v533 = vadd.s32 %v470, 24
      %v534 = vlaneseq
      %v535 = vand.u32 %v534, 127
      %s536 = scalar_lea.vmem %s467, 24
      %v537 = vld [vmem:[%s536] sm:$0xff]
      %v538 = vmul.f32 %v537, %v471
      %s539 = scalar_lea.vmem %s466, 24
      %v540 = vld [vmem:[%s539] sm:$0xff]
      %v541 = vstv %s97
      %vm542 = vcmp.gt.s32.totalorder %v535, %v541
      %v543 = vsub.f32 %v540, %v538
      %v544 = vsel %vm542, %v543, %v540
      %v545 = vstv %s97
      %v546 = vlaneseq
      %v547 = vand.u32 %v546, 127
      %vm548 = vcmp.eq.s32.totalorder %v547, %v545
      %v549 = vstv %s97
      %vm550 = vcmp.ge.s32.totalorder %v533, %v549
      %vm551 = vmand %vm548, %vm550
      %v552 = vsel %vm551, %v537, %v544
      %553 = vst [vmem:[%s539] sm:$0xff] %v552
      %v554 = vadd.s32 %v470, 32
      %v555 = vlaneseq
      %v556 = vand.u32 %v555, 127
      %s557 = scalar_lea.vmem %s467, 32
      %v558 = vld [vmem:[%s557] sm:$0xff]
      %v559 = vmul.f32 %v558, %v471
      %s560 = scalar_lea.vmem %s466, 32
      %v561 = vld [vmem:[%s560] sm:$0xff]
      %v562 = vstv %s97
      %vm563 = vcmp.gt.s32.totalorder %v556, %v562
      %v564 = vsub.f32 %v561, %v559
      %v565 = vsel %vm563, %v564, %v561
      %v566 = vstv %s97
      %v567 = vlaneseq
      %v568 = vand.u32 %v567, 127
      %vm569 = vcmp.eq.s32.totalorder %v568, %v566
      %v570 = vstv %s97
      %vm571 = vcmp.ge.s32.totalorder %v554, %v570
      %vm572 = vmand %vm569, %vm571
      %v573 = vsel %vm572, %v558, %v565
      %574 = vst [vmem:[%s560] sm:$0xff] %v573
      %v575 = vadd.s32 %v470, 40
      %v576 = vlaneseq
      %v577 = vand.u32 %v576, 127
      %s578 = scalar_lea.vmem %s467, 40
      %v579 = vld [vmem:[%s578] sm:$0xff]
      %v580 = vmul.f32 %v579, %v471
      %s581 = scalar_lea.vmem %s466, 40
      %v582 = vld [vmem:[%s581] sm:$0xff]
      %v583 = vstv %s97
      %vm584 = vcmp.gt.s32.totalorder %v577, %v583
      %v585 = vsub.f32 %v582, %v580
      %v586 = vsel %vm584, %v585, %v582
      %v587 = vstv %s97
      %v588 = vlaneseq
      %v589 = vand.u32 %v588, 127
      %vm590 = vcmp.eq.s32.totalorder %v589, %v587
      %v591 = vstv %s97
      %vm592 = vcmp.ge.s32.totalorder %v575, %v591
      %vm593 = vmand %vm590, %vm592
      %v594 = vsel %vm593, %v579, %v586
      %595 = vst [vmem:[%s581] sm:$0xff] %v594
      %v596 = vadd.s32 %v470, 48
      %v597 = vlaneseq
      %v598 = vand.u32 %v597, 127
      %s599 = scalar_lea.vmem %s467, 48
      %v600 = vld [vmem:[%s599] sm:$0xff]
      %v601 = vmul.f32 %v600, %v471
      %s602 = scalar_lea.vmem %s466, 48
      %v603 = vld [vmem:[%s602] sm:$0xff]
      %v604 = vstv %s97
      %vm605 = vcmp.gt.s32.totalorder %v598, %v604
      %v606 = vsub.f32 %v603, %v601
      %v607 = vsel %vm605, %v606, %v603
      %v608 = vstv %s97
      %v609 = vlaneseq
      %v610 = vand.u32 %v609, 127
      %vm611 = vcmp.eq.s32.totalorder %v610, %v608
      %v612 = vstv %s97
      %vm613 = vcmp.ge.s32.totalorder %v596, %v612
      %vm614 = vmand %vm611, %vm613
      %v615 = vsel %vm614, %v600, %v607
      %616 = vst [vmem:[%s602] sm:$0xff] %v615
      %v617 = vadd.s32 %v470, 56
      %v618 = vlaneseq
      %v619 = vand.u32 %v618, 127
      %s620 = scalar_lea.vmem %s467, 56
      %v621 = vld [vmem:[%s620] sm:$0xff]
      %v622 = vmul.f32 %v621, %v471
      %s623 = scalar_lea.vmem %s466, 56
      %v624 = vld [vmem:[%s623] sm:$0xff]
      %v625 = vstv %s97
      %vm626 = vcmp.gt.s32.totalorder %v619, %v625
      %v627 = vsub.f32 %v624, %v622
      %v628 = vsel %vm626, %v627, %v624
      %v629 = vstv %s97
      %v630 = vlaneseq
      %v631 = vand.u32 %v630, 127
      %vm632 = vcmp.eq.s32.totalorder %v631, %v629
      %v633 = vstv %s97
      %vm634 = vcmp.ge.s32.totalorder %v617, %v633
      %vm635 = vmand %vm632, %vm634
      %v636 = vsel %vm635, %v621, %v628
      %637 = vst [vmem:[%s623] sm:$0xff] %v636
      %s638 = scalar_lea.vmem %s466, %s97
      %v639 = vld [vmem:[%s638] ss:$0 sm:$0xff]
      %v640 = vstv %s97
      %v641 = vlaneseq
      %v642 = vand.u32 %v641, 127
      %vm643 = vcmp.eq.s32.totalorder %v642, %v640
      %v644 = vsel %vm643, %v233, %v639
      %645 = vst [vmem:[%s638] sm:$0x1] %v644
    $region40: #{custom-call.60} parent=1 // loop_footer
      %s101 = sadd.s32 1, %s97
    $region41: #{custom-call.60} parent=1 // loop_footer_branch
      %96 = sbr.rel target = $region37
    $region42: #{custom-call.60} parent=1 // loop_exit
      _
    %s647 = sshll.u32 1, 1
    %s648 = ssub.s32 %s647, 1
    %v650 = vld [vmem:[#allocation2] sm:%s648]
    %s651 = sshll.u32 1, 1
    %s652 = ssub.s32 %s651, 1
    %653 = vst [vmem:[#allocation3] sm:%s652] %v650
    // Predicated region
    $region43: #{custom-call.60} parent=1 // pred_check
      _
    $region44: #{custom-call.60} parent=1 // pred_check_branch
      %655 = sbr.rel (0) target = $region46
    $region45: #{custom-call.60} parent=1 // pred_region
      // Predicated region
      $region47: #{custom-call.60} parent=45 // pred_check
        _
      $region48: #{custom-call.60} parent=45 // pred_check_branch
        %657 = sbr.rel (0) target = $region50
      $region49: #{custom-call.60} parent=45 // pred_region
        // Predicated region
        $region62: #{custom-call.60} parent=49 // pred_check
          _
        $region63: #{custom-call.60} parent=49 // pred_check_branch
          %687 = sbr.rel (0) target = $region65
        $region64: #{custom-call.60} parent=49 // pred_region
          loop: start=0, step=1, limit=1
          $region66: #{custom-call.60} parent=64 // loop_pre_header
            _
          $region67: #{custom-call.60} parent=64 // loop_header
            %s689 = sphi 0, %s693
            %p690 = scmp.ge.s32.totalorder %s689, 1
            %s694 = sphi [#allocation1], [#allocation1]
            %s695 = sphi %s1, %s1
          $region68: #{custom-call.60} parent=64 // loop_header_branch
            %692 = sbr.rel (%p690) target = $region72
          $region69: #{custom-call.60} parent=64 // loop_body
            %v696 = vld [vmem:[%s694] sm:$0xff]
            %697 = vst [vmem:[%s695] sm:$0xff] %v696
            %v698 = vld [vmem:[%s694 + $0x8] sm:$0xff]
            %699 = vst [vmem:[%s695 + $0x8] sm:$0xff] %v698
            %v700 = vld [vmem:[%s694 + $0x10] sm:$0xff]
            %701 = vst [vmem:[%s695 + $0x10] sm:$0xff] %v700
            %v702 = vld [vmem:[%s694 + $0x18] sm:$0xff]
            %703 = vst [vmem:[%s695 + $0x18] sm:$0xff] %v702
            %v704 = vld [vmem:[%s694 + $0x20] sm:$0xff]
            %705 = vst [vmem:[%s695 + $0x20] sm:$0xff] %v704
            %v706 = vld [vmem:[%s694 + $0x28] sm:$0xff]
            %707 = vst [vmem:[%s695 + $0x28] sm:$0xff] %v706
            %v708 = vld [vmem:[%s694 + $0x30] sm:$0xff]
            %709 = vst [vmem:[%s695 + $0x30] sm:$0xff] %v708
            %v710 = vld [vmem:[%s694 + $0x38] sm:$0xff]
            %711 = vst [vmem:[%s695 + $0x38] sm:$0xff] %v710
          $region70: #{custom-call.60} parent=64 // loop_footer
            %s693 = sadd.s32 1, %s689
          $region71: #{custom-call.60} parent=64 // loop_footer_branch
            %688 = sbr.rel target = $region67
          $region72: #{custom-call.60} parent=64 // loop_exit
            _
        $region65: #{custom-call.60} parent=49 // pred_fallthru
          _
        // Predicated region
        $region73: #{custom-call.60} parent=49 // pred_check
          _
        $region74: #{custom-call.60} parent=49 // pred_check_branch
          %713 = sbr.rel target = $region76
        $region75: #{custom-call.60} parent=49 // pred_region
          _
        $region76: #{custom-call.60} parent=49 // pred_fallthru
          _
      $region50: #{custom-call.60} parent=45 // pred_fallthru
        _
      // Predicated region
      $region51: #{custom-call.60} parent=45 // pred_check
        _
      $region52: #{custom-call.60} parent=45 // pred_check_branch
        %659 = sbr.rel target = $region54
      $region53: #{custom-call.60} parent=45 // pred_region
        %s661 = ssub.s32 256, 1
        loop: start=0, step=1, limit=1
        $region55: #{custom-call.60} parent=53 // loop_pre_header
          _
        $region56: #{custom-call.60} parent=53 // loop_header
          %s663 = sphi 0, %s667
          %p664 = scmp.ge.s32.totalorder %s663, 1
          %s668 = sphi [#allocation1], [#allocation1]
          %s669 = sphi %s1, %s1
        $region57: #{custom-call.60} parent=53 // loop_header_branch
          %666 = sbr.rel (%p664) target = $region61
        $region58: #{custom-call.60} parent=53 // loop_body
          %v670 = vld [vmem:[%s668] sm:%s661]
          %671 = vst [vmem:[%s669] sm:%s661] %v670
          %v672 = vld [vmem:[%s668 + $0x8] sm:%s661]
          %673 = vst [vmem:[%s669 + $0x8] sm:%s661] %v672
          %v674 = vld [vmem:[%s668 + $0x10] sm:%s661]
          %675 = vst [vmem:[%s669 + $0x10] sm:%s661] %v674
          %v676 = vld [vmem:[%s668 + $0x18] sm:%s661]
          %677 = vst [vmem:[%s669 + $0x18] sm:%s661] %v676
          %v678 = vld [vmem:[%s668 + $0x20] sm:%s661]
          %679 = vst [vmem:[%s669 + $0x20] sm:%s661] %v678
          %v680 = vld [vmem:[%s668 + $0x28] sm:%s661]
          %681 = vst [vmem:[%s669 + $0x28] sm:%s661] %v680
          %v682 = vld [vmem:[%s668 + $0x30] sm:%s661]
          %683 = vst [vmem:[%s669 + $0x30] sm:%s661] %v682
          %v684 = vld [vmem:[%s668 + $0x38] sm:%s661]
          %685 = vst [vmem:[%s669 + $0x38] sm:%s661] %v684
        $region59: #{custom-call.60} parent=53 // loop_footer
          %s667 = sadd.s32 1, %s663
        $region60: #{custom-call.60} parent=53 // loop_footer_branch
          %662 = sbr.rel target = $region56
        $region61: #{custom-call.60} parent=53 // loop_exit
          _
      $region54: #{custom-call.60} parent=45 // pred_fallthru
        _
    $region46: #{custom-call.60} parent=1 // pred_fallthru
      _
    %714 = vnop
    // Predicated region
    $region77: #{custom-call.60} parent=1 // pred_check
      _
    $region78: #{custom-call.60} parent=1 // pred_check_branch
      %716 = sbr.rel (0) target = $region80
    $region79: #{custom-call.60} parent=1 // pred_region
      // Predicated region
      $region81: #{custom-call.60} parent=79 // pred_check
        _
      $region82: #{custom-call.60} parent=79 // pred_check_branch
        %718 = sbr.rel (0) target = $region84
      $region83: #{custom-call.60} parent=79 // pred_region
        // Predicated region
        $region85: #{custom-call.60} parent=83 // pred_check
          _
        $region86: #{custom-call.60} parent=83 // pred_check_branch
          %720 = sbr.rel target = $region88
        $region87: #{custom-call.60} parent=83 // pred_region
          // Predicated region
          $region100: #{custom-call.60} parent=87 // pred_check
            _
          $region101: #{custom-call.60} parent=87 // pred_check_branch
            %736 = sbr.rel (0) target = $region103
          $region102: #{custom-call.60} parent=87 // pred_region
            %s738 = ssub.s32 2, 1
            loop: start=0, step=1, limit=1
            $region104: #{custom-call.60} parent=102 // loop_pre_header
              _
            $region105: #{custom-call.60} parent=102 // loop_header
              %s740 = sphi 0, %s744
              %p741 = scmp.ge.s32.totalorder %s740, 1
              %s745 = sphi [#allocation3], [#allocation3]
              %s746 = sphi %s2, %s2
            $region106: #{custom-call.60} parent=102 // loop_header_branch
              %743 = sbr.rel (%p741) target = $region110
            $region107: #{custom-call.60} parent=102 // loop_body
              %v747 = vld [vmem:[%s745] sm:%s738]
              %748 = vst [vmem:[%s746] sm:%s738] %v747
            $region108: #{custom-call.60} parent=102 // loop_footer
              %s744 = sadd.s32 1, %s740
            $region109: #{custom-call.60} parent=102 // loop_footer_branch
              %739 = sbr.rel target = $region105
            $region110: #{custom-call.60} parent=102 // loop_exit
              _
          $region103: #{custom-call.60} parent=87 // pred_fallthru
            _
        $region88: #{custom-call.60} parent=83 // pred_fallthru
          _
        // Predicated region
        $region89: #{custom-call.60} parent=83 // pred_check
          _
        $region90: #{custom-call.60} parent=83 // pred_check_branch
          %722 = sbr.rel (0) target = $region92
        $region91: #{custom-call.60} parent=83 // pred_region
          %s724 = ssub.s32 2, 1
          loop: start=0, step=1, limit=1
          $region93: #{custom-call.60} parent=91 // loop_pre_header
            _
          $region94: #{custom-call.60} parent=91 // loop_header
            %s726 = sphi 0, %s730
            %p727 = scmp.ge.s32.totalorder %s726, 1
            %s731 = sphi [#allocation3], [#allocation3]
            %s732 = sphi %s2, %s2
          $region95: #{custom-call.60} parent=91 // loop_header_branch
            %729 = sbr.rel (%p727) target = $region99
          $region96: #{custom-call.60} parent=91 // loop_body
            %v733 = vld [vmem:[%s731] sm:%s724]
            %734 = vst [vmem:[%s732] sm:%s724] %v733
          $region97: #{custom-call.60} parent=91 // loop_footer
            %s730 = sadd.s32 1, %s726
          $region98: #{custom-call.60} parent=91 // loop_footer_branch
            %725 = sbr.rel target = $region94
          $region99: #{custom-call.60} parent=91 // loop_exit
            _
        $region92: #{custom-call.60} parent=83 // pred_fallthru
          _
      $region84: #{custom-call.60} parent=79 // pred_fallthru
        _
      %749 = vnop
    $region80: #{custom-call.60} parent=1 // pred_fallthru
      _
    // Predicated region
    $region111: #{custom-call.60} parent=1 // pred_check
      _
    $region112: #{custom-call.60} parent=1 // pred_check_branch
      %751 = sbr.rel (0) target = $region114
    $region113: #{custom-call.60} parent=1 // pred_region
      _
    $region114: #{custom-call.60} parent=1 // pred_fallthru
      _

// kernel: custom-call.61
$region0: #{custom-call.61}
  %s0 = inlined_call_operand.vmem [shape: f32[32,32], index: 0, kind: input, shape index: {}]
  %s1 = inlined_call_operand.vmem [shape: f32[32,32], index: 1, kind: output, shape index: {}]
  $region1: #{custom-call.61} parent=0
    #allocation0 [shape = 'u8[16384]{0}', space=vmem, size = 0x4000, scoped, tag = 'operand span for operand 0']
    #allocation1 [shape = 'u8[16384]{0}', space=vmem, size = 0x4000, scoped, tag = 'operand span for operand 1']
    %p3 = scmp.gt.s32.totalorder 32, 0
    // Predicated region
    $region2: #{custom-call.61} parent=1 // pred_check
      %p4 = pneg %p3
    $region3: #{custom-call.61} parent=1 // pred_check_branch
      %6 = sbr.rel (%p4) target = $region5
    $region4: #{custom-call.61} parent=1 // pred_region
      %s7 = sshra.s32 32, 3
      %p8 = scmp.gt.s32.totalorder %s7, 0
      // Predicated region
      $region6: #{custom-call.61} parent=4 // pred_check
        %p9 = pneg %p8
      $region7: #{custom-call.61} parent=4 // pred_check_branch
        %11 = sbr.rel (%p9) target = $region9
      $region8: #{custom-call.61} parent=4 // pred_region
        %s12 = ssub.s32 %s7, 1
        %s13 = smul.u32 %s12, 128
        %s14 = sshra.s32 %s13, 4
        %s15 = scalar_lea.vmem %s0, %s14
        %v16 = vld [vmem:[%s0] sm:$0xff]
        // While loop
        $region10: #{custom-call.61} parent=8 // loop_pre_header
          _
        $region11: #{custom-call.61} parent=8 // loop_header
          %s17 = sphi %s0, %s39
          %s18 = sphi [#allocation0], %s40
          %v19 = vphi %v16, %v41
          %s20 = ssub.s32 %s15, 64
          %p21 = scmp.gt.s32.totalorder %s17, %s20
        $region12: #{custom-call.61} parent=8 // loop_header_branch
          %23 = sbr.rel (%p21) target = $region16
        $region13: #{custom-call.61} parent=8 // loop_body
          %24 = vst [vmem:[%s18] sm:$0xff] %v19
          %v25 = vld [vmem:[%s17 + $0x8] sm:$0xff]
          %26 = vst [vmem:[%s18 + $0x8] sm:$0xff] %v25
          %v27 = vld [vmem:[%s17 + $0x10] sm:$0xff]
          %28 = vst [vmem:[%s18 + $0x10] sm:$0xff] %v27
          %v29 = vld [vmem:[%s17 + $0x18] sm:$0xff]
          %30 = vst [vmem:[%s18 + $0x18] sm:$0xff] %v29
          %v31 = vld [vmem:[%s17 + $0x20] sm:$0xff]
          %32 = vst [vmem:[%s18 + $0x20] sm:$0xff] %v31
          %v33 = vld [vmem:[%s17 + $0x28] sm:$0xff]
          %34 = vst [vmem:[%s18 + $0x28] sm:$0xff] %v33
          %v35 = vld [vmem:[%s17 + $0x30] sm:$0xff]
          %36 = vst [vmem:[%s18 + $0x30] sm:$0xff] %v35
          %v37 = vld [vmem:[%s17 + $0x38] sm:$0xff]
          %38 = vst [vmem:[%s18 + $0x38] sm:$0xff] %v37
        $region14: #{custom-call.61} parent=8 // loop_footer
          %s39 = scalar_lea.vmem %s17, 64
          %s40 = scalar_lea.vmem %s18, 64
          %v41 = vld [vmem:[%s17 + $0x40] sm:$0xff]
        $region15: #{custom-call.61} parent=8 // loop_footer_branch
          %42 = sbr.rel target = $region11
        $region16: #{custom-call.61} parent=8 // loop_exit
          _
        // While loop
        $region17: #{custom-call.61} parent=8 // loop_pre_header
          _
        $region18: #{custom-call.61} parent=8 // loop_header
          %s43 = sphi %s17, %s51
          %s44 = sphi %s18, %s52
          %v45 = vphi %v19, %v45
          %p46 = scmp.gt.s32.totalorder %s43, %s15
        $region19: #{custom-call.61} parent=8 // loop_header_branch
          %48 = sbr.rel (%p46) target = $region23
        $region20: #{custom-call.61} parent=8 // loop_body
          %v49 = vld [vmem:[%s43] sm:$0xff]
          %50 = vst [vmem:[%s44] sm:$0xff] %v49
        $region21: #{custom-call.61} parent=8 // loop_footer
          %s51 = scalar_lea.vmem %s43, 8
          %s52 = scalar_lea.vmem %s44, 8
        $region22: #{custom-call.61} parent=8 // loop_footer_branch
          %53 = sbr.rel target = $region18
        $region23: #{custom-call.61} parent=8 // loop_exit
          _
      $region9: #{custom-call.61} parent=4 // pred_fallthru
        _
      %s54 = sand.u32 32, 7
      %s55 = sshll.u32 1, %s54
      %s56 = ssub.s32 %s55, 1
      %s57 = smul.u32 %s7, 128
      %s58 = sshra.s32 %s57, 4
      %s59 = scalar_lea.vmem [#allocation0], %s58
      %s60 = smul.u32 %s7, 128
      %s61 = sshra.s32 %s60, 4
      %s62 = scalar_lea.vmem %s0, %s61
      %v63 = vld [vmem:[%s62] sm:%s56]
      %64 = vst [vmem:[%s59] sm:%s56] %v63
    $region5: #{custom-call.61} parent=1 // pred_fallthru
      _
    %v65 = vlaneseq
    %v66 = vand.u32 %v65, 127
    %v67 = vlaneseq
    %v68 = vshrl.u32 %v67, 7
    %vm70 = vcmp.eq.s32.totalorder %v66, %v68
    %v71 = vld [vmem:[#allocation0] sm:$0xff]
    %v72 = vlaneseq
    %v73 = vand.u32 %v72, 127
    %vm74 = vcmp.eq.s32.totalorder %v73, 0
    %v75 = vsel %vm74, %v71, 1.0
    %v76 = vsel %vm70, %v75, 0.0
    %v77 = vlaneseq
    %v78 = vand.u32 %v77, 127
    %v79 = vlaneseq
    %v80 = vshrl.u32 %v79, 7
    %v81 = vadd.s32 %v80, 8
    %vm82 = vcmp.eq.s32.totalorder %v78, %v81
    %v83 = vsel %vm82, 1.0, 0.0
    %v84 = vlaneseq
    %v85 = vand.u32 %v84, 127
    %v86 = vlaneseq
    %v87 = vshrl.u32 %v86, 7
    %v88 = vadd.s32 %v87, 16
    %vm89 = vcmp.eq.s32.totalorder %v85, %v88
    %v90 = vsel %vm89, 1.0, 0.0
    %v91 = vlaneseq
    %v92 = vand.u32 %v91, 127
    %v93 = vlaneseq
    %v94 = vshrl.u32 %v93, 7
    %v95 = vadd.s32 %v94, 24
    %vm96 = vcmp.eq.s32.totalorder %v92, %v95
    %v97 = vsel %vm96, 1.0, 0.0
    %s98 = scalar_lea.vmem [#allocation0], 1
    %v99 = vld [vmem:[%s98] ss:$0 sm:$0xff]
    %vm100 = vcmask 261120
    %v101 = vsel %vm100, %v99, 0.0
    %v102 = vlaneseq
    %v103 = vand.u32 %v102, 127
    %vm104 = vcmp.eq.s32.totalorder %v103, 1
    %v105 = vmul.f32 %v101, %v76
    %106 = vadd.xlane.f32.xlu0 %v105
    %v107 = vpop.xlane.xlu0 %106
    %v108 = vsel %vm104, %v107, %v76
    %s109 = scalar_lea.vmem [#allocation0], 2
    %v110 = vld [vmem:[%s109] ss:$0 sm:$0xff]
    %vm111 = vcmask 261120
    %v112 = vsel %vm111, %v110, 0.0
    %v113 = vlaneseq
    %v114 = vand.u32 %v113, 127
    %vm115 = vcmp.eq.s32.totalorder %v114, 2
    %v116 = vmul.f32 %v112, %v108
    %117 = vadd.xlane.f32.xlu0 %v116
    %v118 = vpop.xlane.xlu0 %117
    %v119 = vsel %vm115, %v118, %v108
    %s120 = scalar_lea.vmem [#allocation0], 3
    %v121 = vld [vmem:[%s120] ss:$0 sm:$0xff]
    %vm122 = vcmask 261120
    %v123 = vsel %vm122, %v121, 0.0
    %v124 = vlaneseq
    %v125 = vand.u32 %v124, 127
    %vm126 = vcmp.eq.s32.totalorder %v125, 3
    %v127 = vmul.f32 %v123, %v119
    %128 = vadd.xlane.f32.xlu0 %v127
    %v129 = vpop.xlane.xlu0 %128
    %v130 = vsel %vm126, %v129, %v119
    %s131 = scalar_lea.vmem [#allocation0], 4
    %v132 = vld [vmem:[%s131] ss:$0 sm:$0xff]
    %vm133 = vcmask 261120
    %v134 = vsel %vm133, %v132, 0.0
    %v135 = vlaneseq
    %v136 = vand.u32 %v135, 127
    %vm137 = vcmp.eq.s32.totalorder %v136, 4
    %v138 = vmul.f32 %v134, %v130
    %139 = vadd.xlane.f32.xlu0 %v138
    %v140 = vpop.xlane.xlu0 %139
    %v141 = vsel %vm137, %v140, %v130
    %s142 = scalar_lea.vmem [#allocation0], 5
    %v143 = vld [vmem:[%s142] ss:$0 sm:$0xff]
    %vm144 = vcmask 261120
    %v145 = vsel %vm144, %v143, 0.0
    %v146 = vlaneseq
    %v147 = vand.u32 %v146, 127
    %vm148 = vcmp.eq.s32.totalorder %v147, 5
    %v149 = vmul.f32 %v145, %v141
    %150 = vadd.xlane.f32.xlu0 %v149
    %v151 = vpop.xlane.xlu0 %150
    %v152 = vsel %vm148, %v151, %v141
    %s153 = scalar_lea.vmem [#allocation0], 6
    %v154 = vld [vmem:[%s153] ss:$0 sm:$0xff]
    %vm155 = vcmask 261120
    %v156 = vsel %vm155, %v154, 0.0
    %v157 = vlaneseq
    %v158 = vand.u32 %v157, 127
    %vm159 = vcmp.eq.s32.totalorder %v158, 6
    %v160 = vmul.f32 %v156, %v152
    %161 = vadd.xlane.f32.xlu0 %v160
    %v162 = vpop.xlane.xlu0 %161
    %v163 = vsel %vm159, %v162, %v152
    %s164 = scalar_lea.vmem [#allocation0], 7
    %v165 = vld [vmem:[%s164] ss:$0 sm:$0xff]
    %vm166 = vcmask 261120
    %v167 = vsel %vm166, %v165, 0.0
    %v168 = vlaneseq
    %v169 = vand.u32 %v168, 127
    %vm170 = vcmp.eq.s32.totalorder %v169, 7
    %v171 = vmul.f32 %v167, %v163
    %172 = vadd.xlane.f32.xlu0 %v171
    %v173 = vpop.xlane.xlu0 %172
    %v174 = vsel %vm170, %v173, %v163
    %s175 = scalar_lea.vmem [#allocation0], 8
    %v176 = vld [vmem:[%s175] ss:$0 sm:$0xff]
    %vm177 = vcmask 261120
    %v178 = vsel %vm177, %v176, 0.0
    %v179 = vlaneseq
    %v180 = vand.u32 %v179, 127
    %vm181 = vcmp.eq.s32.totalorder %v180, 8
    %v182 = vmul.f32 %v178, %v174
    %183 = vadd.xlane.f32.xlu0 %v182
    %v184 = vpop.xlane.xlu0 %183
    %v185 = vsel %vm181, %v184, %v174
    %v186 = vmul.f32 %v178, %v83
    %187 = vadd.xlane.f32.xlu0 %v186
    %v188 = vpop.xlane.xlu0 %187
    %v189 = vsel %vm181, %v188, %v83
    %s190 = scalar_lea.vmem [#allocation0], 9
    %v191 = vld [vmem:[%s190] ss:$0 sm:$0xff]
    %vm192 = vcmask 261120
    %v193 = vsel %vm192, %v191, 0.0
    %v194 = vlaneseq
    %v195 = vand.u32 %v194, 127
    %vm196 = vcmp.eq.s32.totalorder %v195, 9
    %v197 = vmul.f32 %v193, %v185
    %198 = vadd.xlane.f32.xlu0 %v197
    %v199 = vpop.xlane.xlu0 %198
    %v200 = vsel %vm196, %v199, %v185
    %v201 = vmul.f32 %v193, %v189
    %202 = vadd.xlane.f32.xlu0 %v201
    %v203 = vpop.xlane.xlu0 %202
    %v204 = vsel %vm196, %v203, %v189
    %s205 = scalar_lea.vmem [#allocation0], 10
    %v206 = vld [vmem:[%s205] ss:$0 sm:$0xff]
    %vm207 = vcmask 261120
    %v208 = vsel %vm207, %v206, 0.0
    %v209 = vlaneseq
    %v210 = vand.u32 %v209, 127
    %vm211 = vcmp.eq.s32.totalorder %v210, 10
    %v212 = vmul.f32 %v208, %v200
    %213 = vadd.xlane.f32.xlu0 %v212
    %v214 = vpop.xlane.xlu0 %213
    %v215 = vsel %vm211, %v214, %v200
    %v216 = vmul.f32 %v208, %v204
    %217 = vadd.xlane.f32.xlu0 %v216
    %v218 = vpop.xlane.xlu0 %217
    %v219 = vsel %vm211, %v218, %v204
    %s220 = scalar_lea.vmem [#allocation0], 11
    %v221 = vld [vmem:[%s220] ss:$0 sm:$0xff]
    %vm222 = vcmask 261120
    %v223 = vsel %vm222, %v221, 0.0
    %v224 = vlaneseq
    %v225 = vand.u32 %v224, 127
    %vm226 = vcmp.eq.s32.totalorder %v225, 11
    %v227 = vmul.f32 %v223, %v215
    %228 = vadd.xlane.f32.xlu0 %v227
    %v229 = vpop.xlane.xlu0 %228
    %v230 = vsel %vm226, %v229, %v215
    %v231 = vmul.f32 %v223, %v219
    %232 = vadd.xlane.f32.xlu0 %v231
    %v233 = vpop.xlane.xlu0 %232
    %v234 = vsel %vm226, %v233, %v219
    %s235 = scalar_lea.vmem [#allocation0], 12
    %v236 = vld [vmem:[%s235] ss:$0 sm:$0xff]
    %vm237 = vcmask 261120
    %v238 = vsel %vm237, %v236, 0.0
    %v239 = vlaneseq
    %v240 = vand.u32 %v239, 127
    %vm241 = vcmp.eq.s32.totalorder %v240, 12
    %v242 = vmul.f32 %v238, %v230
    %243 = vadd.xlane.f32.xlu0 %v242
    %v244 = vpop.xlane.xlu0 %243
    %v245 = vsel %vm241, %v244, %v230
    %v246 = vmul.f32 %v238, %v234
    %247 = vadd.xlane.f32.xlu0 %v246
    %v248 = vpop.xlane.xlu0 %247
    %v249 = vsel %vm241, %v248, %v234
    %s250 = scalar_lea.vmem [#allocation0], 13
    %v251 = vld [vmem:[%s250] ss:$0 sm:$0xff]
    %vm252 = vcmask 261120
    %v253 = vsel %vm252, %v251, 0.0
    %v254 = vlaneseq
    %v255 = vand.u32 %v254, 127
    %vm256 = vcmp.eq.s32.totalorder %v255, 13
    %v257 = vmul.f32 %v253, %v245
    %258 = vadd.xlane.f32.xlu0 %v257
    %v259 = vpop.xlane.xlu0 %258
    %v260 = vsel %vm256, %v259, %v245
    %v261 = vmul.f32 %v253, %v249
    %262 = vadd.xlane.f32.xlu0 %v261
    %v263 = vpop.xlane.xlu0 %262
    %v264 = vsel %vm256, %v263, %v249
    %s265 = scalar_lea.vmem [#allocation0], 14
    %v266 = vld [vmem:[%s265] ss:$0 sm:$0xff]
    %vm267 = vcmask 261120
    %v268 = vsel %vm267, %v266, 0.0
    %v269 = vlaneseq
    %v270 = vand.u32 %v269, 127
    %vm271 = vcmp.eq.s32.totalorder %v270, 14
    %v272 = vmul.f32 %v268, %v260
    %273 = vadd.xlane.f32.xlu0 %v272
    %v274 = vpop.xlane.xlu0 %273
    %v275 = vsel %vm271, %v274, %v260
    %v276 = vmul.f32 %v268, %v264
    %277 = vadd.xlane.f32.xlu0 %v276
    %v278 = vpop.xlane.xlu0 %277
    %v279 = vsel %vm271, %v278, %v264
    %s280 = scalar_lea.vmem [#allocation0], 15
    %v281 = vld [vmem:[%s280] ss:$0 sm:$0xff]
    %vm282 = vcmask 261120
    %v283 = vsel %vm282, %v281, 0.0
    %v284 = vlaneseq
    %v285 = vand.u32 %v284, 127
    %vm286 = vcmp.eq.s32.totalorder %v285, 15
    %v287 = vmul.f32 %v283, %v275
    %288 = vadd.xlane.f32.xlu0 %v287
    %v289 = vpop.xlane.xlu0 %288
    %v290 = vsel %vm286, %v289, %v275
    %v291 = vmul.f32 %v283, %v279
    %292 = vadd.xlane.f32.xlu0 %v291
    %v293 = vpop.xlane.xlu0 %292
    %v294 = vsel %vm286, %v293, %v279
    %s295 = scalar_lea.vmem [#allocation0], 16
    %v296 = vld [vmem:[%s295] ss:$0 sm:$0xff]
    %vm297 = vcmask 261120
    %v298 = vsel %vm297, %v296, 0.0
    %v299 = vlaneseq
    %v300 = vand.u32 %v299, 127
    %vm301 = vcmp.eq.s32.totalorder %v300, 16
    %v302 = vmul.f32 %v298, %v290
    %303 = vadd.xlane.f32.xlu0 %v302
    %v304 = vpop.xlane.xlu0 %303
    %v305 = vsel %vm301, %v304, %v290
    %v306 = vmul.f32 %v298, %v294
    %307 = vadd.xlane.f32.xlu0 %v306
    %v308 = vpop.xlane.xlu0 %307
    %v309 = vsel %vm301, %v308, %v294
    %v310 = vmul.f32 %v298, %v90
    %311 = vadd.xlane.f32.xlu0 %v310
    %v312 = vpop.xlane.xlu0 %311
    %v313 = vsel %vm301, %v312, %v90
    %s314 = scalar_lea.vmem [#allocation0], 17
    %v315 = vld [vmem:[%s314] ss:$0 sm:$0xff]
    %vm316 = vcmask 261120
    %v317 = vsel %vm316, %v315, 0.0
    %v318 = vlaneseq
    %v319 = vand.u32 %v318, 127
    %vm320 = vcmp.eq.s32.totalorder %v319, 17
    %v321 = vmul.f32 %v317, %v305
    %322 = vadd.xlane.f32.xlu0 %v321
    %v323 = vpop.xlane.xlu0 %322
    %v324 = vsel %vm320, %v323, %v305
    %v325 = vmul.f32 %v317, %v309
    %326 = vadd.xlane.f32.xlu0 %v325
    %v327 = vpop.xlane.xlu0 %326
    %v328 = vsel %vm320, %v327, %v309
    %v329 = vmul.f32 %v317, %v313
    %330 = vadd.xlane.f32.xlu0 %v329
    %v331 = vpop.xlane.xlu0 %330
    %v332 = vsel %vm320, %v331, %v313
    %s333 = scalar_lea.vmem [#allocation0], 18
    %v334 = vld [vmem:[%s333] ss:$0 sm:$0xff]
    %vm335 = vcmask 261120
    %v336 = vsel %vm335, %v334, 0.0
    %v337 = vlaneseq
    %v338 = vand.u32 %v337, 127
    %vm339 = vcmp.eq.s32.totalorder %v338, 18
    %v340 = vmul.f32 %v336, %v324
    %341 = vadd.xlane.f32.xlu0 %v340
    %v342 = vpop.xlane.xlu0 %341
    %v343 = vsel %vm339, %v342, %v324
    %v344 = vmul.f32 %v336, %v328
    %345 = vadd.xlane.f32.xlu0 %v344
    %v346 = vpop.xlane.xlu0 %345
    %v347 = vsel %vm339, %v346, %v328
    %v348 = vmul.f32 %v336, %v332
    %349 = vadd.xlane.f32.xlu0 %v348
    %v350 = vpop.xlane.xlu0 %349
    %v351 = vsel %vm339, %v350, %v332
    %s352 = scalar_lea.vmem [#allocation0], 19
    %v353 = vld [vmem:[%s352] ss:$0 sm:$0xff]
    %vm354 = vcmask 261120
    %v355 = vsel %vm354, %v353, 0.0
    %v356 = vlaneseq
    %v357 = vand.u32 %v356, 127
    %vm358 = vcmp.eq.s32.totalorder %v357, 19
    %v359 = vmul.f32 %v355, %v343
    %360 = vadd.xlane.f32.xlu0 %v359
    %v361 = vpop.xlane.xlu0 %360
    %v362 = vsel %vm358, %v361, %v343
    %v363 = vmul.f32 %v355, %v347
    %364 = vadd.xlane.f32.xlu0 %v363
    %v365 = vpop.xlane.xlu0 %364
    %v366 = vsel %vm358, %v365, %v347
    %v367 = vmul.f32 %v355, %v351
    %368 = vadd.xlane.f32.xlu0 %v367
    %v369 = vpop.xlane.xlu0 %368
    %v370 = vsel %vm358, %v369, %v351
    %s371 = scalar_lea.vmem [#allocation0], 20
    %v372 = vld [vmem:[%s371] ss:$0 sm:$0xff]
    %vm373 = vcmask 261120
    %v374 = vsel %vm373, %v372, 0.0
    %v375 = vlaneseq
    %v376 = vand.u32 %v375, 127
    %vm377 = vcmp.eq.s32.totalorder %v376, 20
    %v378 = vmul.f32 %v374, %v362
    %379 = vadd.xlane.f32.xlu0 %v378
    %v380 = vpop.xlane.xlu0 %379
    %v381 = vsel %vm377, %v380, %v362
    %v382 = vmul.f32 %v374, %v366
    %383 = vadd.xlane.f32.xlu0 %v382
    %v384 = vpop.xlane.xlu0 %383
    %v385 = vsel %vm377, %v384, %v366
    %v386 = vmul.f32 %v374, %v370
    %387 = vadd.xlane.f32.xlu0 %v386
    %v388 = vpop.xlane.xlu0 %387
    %v389 = vsel %vm377, %v388, %v370
    %s390 = scalar_lea.vmem [#allocation0], 21
    %v391 = vld [vmem:[%s390] ss:$0 sm:$0xff]
    %vm392 = vcmask 261120
    %v393 = vsel %vm392, %v391, 0.0
    %v394 = vlaneseq
    %v395 = vand.u32 %v394, 127
    %vm396 = vcmp.eq.s32.totalorder %v395, 21
    %v397 = vmul.f32 %v393, %v381
    %398 = vadd.xlane.f32.xlu0 %v397
    %v399 = vpop.xlane.xlu0 %398
    %v400 = vsel %vm396, %v399, %v381
    %v401 = vmul.f32 %v393, %v385
    %402 = vadd.xlane.f32.xlu0 %v401
    %v403 = vpop.xlane.xlu0 %402
    %v404 = vsel %vm396, %v403, %v385
    %v405 = vmul.f32 %v393, %v389
    %406 = vadd.xlane.f32.xlu0 %v405
    %v407 = vpop.xlane.xlu0 %406
    %v408 = vsel %vm396, %v407, %v389
    %s409 = scalar_lea.vmem [#allocation0], 22
    %v410 = vld [vmem:[%s409] ss:$0 sm:$0xff]
    %vm411 = vcmask 261120
    %v412 = vsel %vm411, %v410, 0.0
    %v413 = vlaneseq
    %v414 = vand.u32 %v413, 127
    %vm415 = vcmp.eq.s32.totalorder %v414, 22
    %v416 = vmul.f32 %v412, %v400
    %417 = vadd.xlane.f32.xlu0 %v416
    %v418 = vpop.xlane.xlu0 %417
    %v419 = vsel %vm415, %v418, %v400
    %v420 = vmul.f32 %v412, %v404
    %421 = vadd.xlane.f32.xlu0 %v420
    %v422 = vpop.xlane.xlu0 %421
    %v423 = vsel %vm415, %v422, %v404
    %v424 = vmul.f32 %v412, %v408
    %425 = vadd.xlane.f32.xlu0 %v424
    %v426 = vpop.xlane.xlu0 %425
    %v427 = vsel %vm415, %v426, %v408
    %s428 = scalar_lea.vmem [#allocation0], 23
    %v429 = vld [vmem:[%s428] ss:$0 sm:$0xff]
    %vm430 = vcmask 261120
    %v431 = vsel %vm430, %v429, 0.0
    %v432 = vlaneseq
    %v433 = vand.u32 %v432, 127
    %vm434 = vcmp.eq.s32.totalorder %v433, 23
    %v435 = vmul.f32 %v431, %v419
    %436 = vadd.xlane.f32.xlu0 %v435
    %v437 = vpop.xlane.xlu0 %436
    %v438 = vsel %vm434, %v437, %v419
    %v439 = vmul.f32 %v431, %v423
    %440 = vadd.xlane.f32.xlu0 %v439
    %v441 = vpop.xlane.xlu0 %440
    %v442 = vsel %vm434, %v441, %v423
    %v443 = vmul.f32 %v431, %v427
    %444 = vadd.xlane.f32.xlu0 %v443
    %v445 = vpop.xlane.xlu0 %444
    %v446 = vsel %vm434, %v445, %v427
    %s447 = scalar_lea.vmem [#allocation0], 24
    %v448 = vld [vmem:[%s447] ss:$0 sm:$0xff]
    %vm449 = vcmask 261120
    %v450 = vsel %vm449, %v448, 0.0
    %v451 = vlaneseq
    %v452 = vand.u32 %v451, 127
    %vm453 = vcmp.eq.s32.totalorder %v452, 24
    %v454 = vmul.f32 %v450, %v438
    %455 = vadd.xlane.f32.xlu0 %v454
    %v456 = vpop.xlane.xlu0 %455
    %v457 = vsel %vm453, %v456, %v438
    %v458 = vmul.f32 %v450, %v442
    %459 = vadd.xlane.f32.xlu0 %v458
    %v460 = vpop.xlane.xlu0 %459
    %v461 = vsel %vm453, %v460, %v442
    %v462 = vmul.f32 %v450, %v446
    %463 = vadd.xlane.f32.xlu0 %v462
    %v464 = vpop.xlane.xlu0 %463
    %v465 = vsel %vm453, %v464, %v446
    %v466 = vmul.f32 %v450, %v97
    %467 = vadd.xlane.f32.xlu0 %v466
    %v468 = vpop.xlane.xlu0 %467
    %v469 = vsel %vm453, %v468, %v97
    %s470 = scalar_lea.vmem [#allocation0], 25
    %v471 = vld [vmem:[%s470] ss:$0 sm:$0xff]
    %vm472 = vcmask 261120
    %v473 = vsel %vm472, %v471, 0.0
    %v474 = vlaneseq
    %v475 = vand.u32 %v474, 127
    %vm476 = vcmp.eq.s32.totalorder %v475, 25
    %v477 = vmul.f32 %v473, %v457
    %478 = vadd.xlane.f32.xlu0 %v477
    %v479 = vpop.xlane.xlu0 %478
    %v480 = vsel %vm476, %v479, %v457
    %v481 = vmul.f32 %v473, %v461
    %482 = vadd.xlane.f32.xlu0 %v481
    %v483 = vpop.xlane.xlu0 %482
    %v484 = vsel %vm476, %v483, %v461
    %v485 = vmul.f32 %v473, %v465
    %486 = vadd.xlane.f32.xlu0 %v485
    %v487 = vpop.xlane.xlu0 %486
    %v488 = vsel %vm476, %v487, %v465
    %v489 = vmul.f32 %v473, %v469
    %490 = vadd.xlane.f32.xlu0 %v489
    %v491 = vpop.xlane.xlu0 %490
    %v492 = vsel %vm476, %v491, %v469
    %s493 = scalar_lea.vmem [#allocation0], 26
    %v494 = vld [vmem:[%s493] ss:$0 sm:$0xff]
    %vm495 = vcmask 261120
    %v496 = vsel %vm495, %v494, 0.0
    %v497 = vlaneseq
    %v498 = vand.u32 %v497, 127
    %vm499 = vcmp.eq.s32.totalorder %v498, 26
    %v500 = vmul.f32 %v496, %v480
    %501 = vadd.xlane.f32.xlu0 %v500
    %v502 = vpop.xlane.xlu0 %501
    %v503 = vsel %vm499, %v502, %v480
    %v504 = vmul.f32 %v496, %v484
    %505 = vadd.xlane.f32.xlu0 %v504
    %v506 = vpop.xlane.xlu0 %505
    %v507 = vsel %vm499, %v506, %v484
    %v508 = vmul.f32 %v496, %v488
    %509 = vadd.xlane.f32.xlu0 %v508
    %v510 = vpop.xlane.xlu0 %509
    %v511 = vsel %vm499, %v510, %v488
    %v512 = vmul.f32 %v496, %v492
    %513 = vadd.xlane.f32.xlu0 %v512
    %v514 = vpop.xlane.xlu0 %513
    %v515 = vsel %vm499, %v514, %v492
    %s516 = scalar_lea.vmem [#allocation0], 27
    %v517 = vld [vmem:[%s516] ss:$0 sm:$0xff]
    %vm518 = vcmask 261120
    %v519 = vsel %vm518, %v517, 0.0
    %v520 = vlaneseq
    %v521 = vand.u32 %v520, 127
    %vm522 = vcmp.eq.s32.totalorder %v521, 27
    %v523 = vmul.f32 %v519, %v503
    %524 = vadd.xlane.f32.xlu0 %v523
    %v525 = vpop.xlane.xlu0 %524
    %v526 = vsel %vm522, %v525, %v503
    %v527 = vmul.f32 %v519, %v507
    %528 = vadd.xlane.f32.xlu0 %v527
    %v529 = vpop.xlane.xlu0 %528
    %v530 = vsel %vm522, %v529, %v507
    %v531 = vmul.f32 %v519, %v511
    %532 = vadd.xlane.f32.xlu0 %v531
    %v533 = vpop.xlane.xlu0 %532
    %v534 = vsel %vm522, %v533, %v511
    %v535 = vmul.f32 %v519, %v515
    %536 = vadd.xlane.f32.xlu0 %v535
    %v537 = vpop.xlane.xlu0 %536
    %v538 = vsel %vm522, %v537, %v515
    %s539 = scalar_lea.vmem [#allocation0], 28
    %v540 = vld [vmem:[%s539] ss:$0 sm:$0xff]
    %vm541 = vcmask 261120
    %v542 = vsel %vm541, %v540, 0.0
    %v543 = vlaneseq
    %v544 = vand.u32 %v543, 127
    %vm545 = vcmp.eq.s32.totalorder %v544, 28
    %v546 = vmul.f32 %v542, %v526
    %547 = vadd.xlane.f32.xlu0 %v546
    %v548 = vpop.xlane.xlu0 %547
    %v549 = vsel %vm545, %v548, %v526
    %v550 = vmul.f32 %v542, %v530
    %551 = vadd.xlane.f32.xlu0 %v550
    %v552 = vpop.xlane.xlu0 %551
    %v553 = vsel %vm545, %v552, %v530
    %v554 = vmul.f32 %v542, %v534
    %555 = vadd.xlane.f32.xlu0 %v554
    %v556 = vpop.xlane.xlu0 %555
    %v557 = vsel %vm545, %v556, %v534
    %v558 = vmul.f32 %v542, %v538
    %559 = vadd.xlane.f32.xlu0 %v558
    %v560 = vpop.xlane.xlu0 %559
    %v561 = vsel %vm545, %v560, %v538
    %s562 = scalar_lea.vmem [#allocation0], 29
    %v563 = vld [vmem:[%s562] ss:$0 sm:$0xff]
    %vm564 = vcmask 261120
    %v565 = vsel %vm564, %v563, 0.0
    %v566 = vlaneseq
    %v567 = vand.u32 %v566, 127
    %vm568 = vcmp.eq.s32.totalorder %v567, 29
    %v569 = vmul.f32 %v565, %v549
    %570 = vadd.xlane.f32.xlu0 %v569
    %v571 = vpop.xlane.xlu0 %570
    %v572 = vsel %vm568, %v571, %v549
    %v573 = vmul.f32 %v565, %v553
    %574 = vadd.xlane.f32.xlu0 %v573
    %v575 = vpop.xlane.xlu0 %574
    %v576 = vsel %vm568, %v575, %v553
    %v577 = vmul.f32 %v565, %v557
    %578 = vadd.xlane.f32.xlu0 %v577
    %v579 = vpop.xlane.xlu0 %578
    %v580 = vsel %vm568, %v579, %v557
    %v581 = vmul.f32 %v565, %v561
    %582 = vadd.xlane.f32.xlu0 %v581
    %v583 = vpop.xlane.xlu0 %582
    %v584 = vsel %vm568, %v583, %v561
    %s585 = scalar_lea.vmem [#allocation0], 30
    %v586 = vld [vmem:[%s585] ss:$0 sm:$0xff]
    %vm587 = vcmask 261120
    %v588 = vsel %vm587, %v586, 0.0
    %v589 = vlaneseq
    %v590 = vand.u32 %v589, 127
    %vm591 = vcmp.eq.s32.totalorder %v590, 30
    %v592 = vmul.f32 %v588, %v572
    %593 = vadd.xlane.f32.xlu0 %v592
    %v594 = vpop.xlane.xlu0 %593
    %v595 = vsel %vm591, %v594, %v572
    %v596 = vmul.f32 %v588, %v576
    %597 = vadd.xlane.f32.xlu0 %v596
    %v598 = vpop.xlane.xlu0 %597
    %v599 = vsel %vm591, %v598, %v576
    %v600 = vmul.f32 %v588, %v580
    %601 = vadd.xlane.f32.xlu0 %v600
    %v602 = vpop.xlane.xlu0 %601
    %v603 = vsel %vm591, %v602, %v580
    %v604 = vmul.f32 %v588, %v584
    %605 = vadd.xlane.f32.xlu0 %v604
    %v606 = vpop.xlane.xlu0 %605
    %v607 = vsel %vm591, %v606, %v584
    %s608 = scalar_lea.vmem [#allocation0], 31
    %v609 = vld [vmem:[%s608] ss:$0 sm:$0xff]
    %vm610 = vcmask 261120
    %v611 = vsel %vm610, %v609, 0.0
    %v612 = vlaneseq
    %v613 = vand.u32 %v612, 127
    %vm614 = vcmp.eq.s32.totalorder %v613, 31
    %v615 = vmul.f32 %v611, %v595
    %616 = vadd.xlane.f32.xlu0 %v615
    %v617 = vpop.xlane.xlu0 %616
    %v618 = vsel %vm614, %v617, %v595
    %v619 = vmul.f32 %v611, %v599
    %620 = vadd.xlane.f32.xlu0 %v619
    %v621 = vpop.xlane.xlu0 %620
    %v622 = vsel %vm614, %v621, %v599
    %v623 = vmul.f32 %v611, %v603
    %624 = vadd.xlane.f32.xlu0 %v623
    %v625 = vpop.xlane.xlu0 %624
    %v626 = vsel %vm614, %v625, %v603
    %v627 = vmul.f32 %v611, %v607
    %628 = vadd.xlane.f32.xlu0 %v627
    %v629 = vpop.xlane.xlu0 %628
    %v630 = vsel %vm614, %v629, %v607
    %631 = vst [vmem:[#allocation1] sm:$0xff] %v618
    %s632 = scalar_lea.vmem [#allocation1], 8
    %633 = vst [vmem:[%s632] sm:$0xff] %v622
    %s634 = scalar_lea.vmem [#allocation1], 16
    %635 = vst [vmem:[%s634] sm:$0xff] %v626
    %s636 = scalar_lea.vmem [#allocation1], 24
    %637 = vst [vmem:[%s636] sm:$0xff] %v630
    %p639 = scmp.gt.s32.totalorder 32, 0
    // Predicated region
    $region24: #{custom-call.61} parent=1 // pred_check
      %p640 = pneg %p639
    $region25: #{custom-call.61} parent=1 // pred_check_branch
      %642 = sbr.rel (%p640) target = $region27
    $region26: #{custom-call.61} parent=1 // pred_region
      %s643 = sshra.s32 32, 3
      %p644 = scmp.gt.s32.totalorder %s643, 0
      // Predicated region
      $region28: #{custom-call.61} parent=26 // pred_check
        %p645 = pneg %p644
      $region29: #{custom-call.61} parent=26 // pred_check_branch
        %647 = sbr.rel (%p645) target = $region31
      $region30: #{custom-call.61} parent=26 // pred_region
        %s648 = ssub.s32 %s643, 1
        %s649 = smul.u32 %s648, 128
        %s650 = sshra.s32 %s649, 4
        %s651 = scalar_lea.vmem [#allocation1], %s650
        %v652 = vld [vmem:[#allocation1] sm:$0xff]
        // While loop
        $region32: #{custom-call.61} parent=30 // loop_pre_header
          _
        $region33: #{custom-call.61} parent=30 // loop_header
          %s653 = sphi [#allocation1], %s675
          %s654 = sphi %s1, %s676
          %v655 = vphi %v652, %v677
          %s656 = ssub.s32 %s651, 64
          %p657 = scmp.gt.s32.totalorder %s653, %s656
        $region34: #{custom-call.61} parent=30 // loop_header_branch
          %659 = sbr.rel (%p657) target = $region38
        $region35: #{custom-call.61} parent=30 // loop_body
          %660 = vst [vmem:[%s654] sm:$0xff] %v655
          %v661 = vld [vmem:[%s653 + $0x8] sm:$0xff]
          %662 = vst [vmem:[%s654 + $0x8] sm:$0xff] %v661
          %v663 = vld [vmem:[%s653 + $0x10] sm:$0xff]
          %664 = vst [vmem:[%s654 + $0x10] sm:$0xff] %v663
          %v665 = vld [vmem:[%s653 + $0x18] sm:$0xff]
          %666 = vst [vmem:[%s654 + $0x18] sm:$0xff] %v665
          %v667 = vld [vmem:[%s653 + $0x20] sm:$0xff]
          %668 = vst [vmem:[%s654 + $0x20] sm:$0xff] %v667
          %v669 = vld [vmem:[%s653 + $0x28] sm:$0xff]
          %670 = vst [vmem:[%s654 + $0x28] sm:$0xff] %v669
          %v671 = vld [vmem:[%s653 + $0x30] sm:$0xff]
          %672 = vst [vmem:[%s654 + $0x30] sm:$0xff] %v671
          %v673 = vld [vmem:[%s653 + $0x38] sm:$0xff]
          %674 = vst [vmem:[%s654 + $0x38] sm:$0xff] %v673
        $region36: #{custom-call.61} parent=30 // loop_footer
          %s675 = scalar_lea.vmem %s653, 64
          %s676 = scalar_lea.vmem %s654, 64
          %v677 = vld [vmem:[%s653 + $0x40] sm:$0xff]
        $region37: #{custom-call.61} parent=30 // loop_footer_branch
          %678 = sbr.rel target = $region33
        $region38: #{custom-call.61} parent=30 // loop_exit
          _
        // While loop
        $region39: #{custom-call.61} parent=30 // loop_pre_header
          _
        $region40: #{custom-call.61} parent=30 // loop_header
          %s679 = sphi %s653, %s687
          %s680 = sphi %s654, %s688
          %v681 = vphi %v655, %v681
          %p682 = scmp.gt.s32.totalorder %s679, %s651
        $region41: #{custom-call.61} parent=30 // loop_header_branch
          %684 = sbr.rel (%p682) target = $region45
        $region42: #{custom-call.61} parent=30 // loop_body
          %v685 = vld [vmem:[%s679] sm:$0xff]
          %686 = vst [vmem:[%s680] sm:$0xff] %v685
        $region43: #{custom-call.61} parent=30 // loop_footer
          %s687 = scalar_lea.vmem %s679, 8
          %s688 = scalar_lea.vmem %s680, 8
        $region44: #{custom-call.61} parent=30 // loop_footer_branch
          %689 = sbr.rel target = $region40
        $region45: #{custom-call.61} parent=30 // loop_exit
          _
      $region31: #{custom-call.61} parent=26 // pred_fallthru
        _
      %s690 = sand.u32 32, 7
      %s691 = sshll.u32 1, %s690
      %s692 = ssub.s32 %s691, 1
      %s693 = smul.u32 %s643, 128
      %s694 = sshra.s32 %s693, 4
      %s695 = scalar_lea.vmem %s1, %s694
      %s696 = smul.u32 %s643, 128
      %s697 = sshra.s32 %s696, 4
      %s698 = scalar_lea.vmem [#allocation1], %s697
      %v699 = vld [vmem:[%s698] sm:%s692]
      %700 = vst [vmem:[%s695] sm:%s692] %v699
    $region27: #{custom-call.61} parent=1 // pred_fallthru
      _

// kernel: custom-call.58
$region0: #{custom-call.58}
  %s0 = inlined_call_operand.vmem [shape: f32[32,32], index: 0, kind: input, shape index: {}]
  %s1 = inlined_call_operand.vmem [shape: f32[32,32], index: 1, kind: output, shape index: {}]
  $region1: #{custom-call.58} parent=0
    #allocation0 [shape = 'u8[16384]{0}', space=vmem, size = 0x4000, scoped, tag = 'operand span for operand 0']
    #allocation1 [shape = 'u8[16384]{0}', space=vmem, size = 0x4000, scoped, tag = 'operand span for operand 1']
    // Predicated region
    $region2: #{custom-call.58} parent=1 // pred_check
      _
    $region3: #{custom-call.58} parent=1 // pred_check_branch
      %3 = sbr.rel (0) target = $region5
    $region4: #{custom-call.58} parent=1 // pred_region
      // Predicated region
      $region6: #{custom-call.58} parent=4 // pred_check
        _
      $region7: #{custom-call.58} parent=4 // pred_check_branch
        %5 = sbr.rel (0) target = $region9
      $region8: #{custom-call.58} parent=4 // pred_region
        // Predicated region
        $region21: #{custom-call.58} parent=8 // pred_check
          _
        $region22: #{custom-call.58} parent=8 // pred_check_branch
          %27 = sbr.rel (0) target = $region24
        $region23: #{custom-call.58} parent=8 // pred_region
          loop: start=0, step=1, limit=1
          $region25: #{custom-call.58} parent=23 // loop_pre_header
            _
          $region26: #{custom-call.58} parent=23 // loop_header
            %s29 = sphi 0, %s33
            %p30 = scmp.ge.s32.totalorder %s29, 1
            %s34 = sphi %s0, %s0
            %s35 = sphi [#allocation0], [#allocation0]
          $region27: #{custom-call.58} parent=23 // loop_header_branch
            %32 = sbr.rel (%p30) target = $region31
          $region28: #{custom-call.58} parent=23 // loop_body
            %v36 = vld [vmem:[%s34] sm:$0xff]
            %37 = vst [vmem:[%s35] sm:$0xff] %v36
            %v38 = vld [vmem:[%s34 + $0x8] sm:$0xff]
            %39 = vst [vmem:[%s35 + $0x8] sm:$0xff] %v38
            %v40 = vld [vmem:[%s34 + $0x10] sm:$0xff]
            %41 = vst [vmem:[%s35 + $0x10] sm:$0xff] %v40
            %v42 = vld [vmem:[%s34 + $0x18] sm:$0xff]
            %43 = vst [vmem:[%s35 + $0x18] sm:$0xff] %v42
          $region29: #{custom-call.58} parent=23 // loop_footer
            %s33 = sadd.s32 1, %s29
          $region30: #{custom-call.58} parent=23 // loop_footer_branch
            %28 = sbr.rel target = $region26
          $region31: #{custom-call.58} parent=23 // loop_exit
            _
        $region24: #{custom-call.58} parent=8 // pred_fallthru
          _
        // Predicated region
        $region32: #{custom-call.58} parent=8 // pred_check
          _
        $region33: #{custom-call.58} parent=8 // pred_check_branch
          %45 = sbr.rel target = $region35
        $region34: #{custom-call.58} parent=8 // pred_region
          _
        $region35: #{custom-call.58} parent=8 // pred_fallthru
          _
      $region9: #{custom-call.58} parent=4 // pred_fallthru
        _
      // Predicated region
      $region10: #{custom-call.58} parent=4 // pred_check
        _
      $region11: #{custom-call.58} parent=4 // pred_check_branch
        %7 = sbr.rel target = $region13
      $region12: #{custom-call.58} parent=4 // pred_region
        %s9 = ssub.s32 256, 1
        loop: start=0, step=1, limit=1
        $region14: #{custom-call.58} parent=12 // loop_pre_header
          _
        $region15: #{custom-call.58} parent=12 // loop_header
          %s11 = sphi 0, %s15
          %p12 = scmp.ge.s32.totalorder %s11, 1
          %s16 = sphi %s0, %s0
          %s17 = sphi [#allocation0], [#allocation0]
        $region16: #{custom-call.58} parent=12 // loop_header_branch
          %14 = sbr.rel (%p12) target = $region20
        $region17: #{custom-call.58} parent=12 // loop_body
          %v18 = vld [vmem:[%s16] sm:%s9]
          %19 = vst [vmem:[%s17] sm:%s9] %v18
          %v20 = vld [vmem:[%s16 + $0x8] sm:%s9]
          %21 = vst [vmem:[%s17 + $0x8] sm:%s9] %v20
          %v22 = vld [vmem:[%s16 + $0x10] sm:%s9]
          %23 = vst [vmem:[%s17 + $0x10] sm:%s9] %v22
          %v24 = vld [vmem:[%s16 + $0x18] sm:%s9]
          %25 = vst [vmem:[%s17 + $0x18] sm:%s9] %v24
        $region18: #{custom-call.58} parent=12 // loop_footer
          %s15 = sadd.s32 1, %s11
        $region19: #{custom-call.58} parent=12 // loop_footer_branch
          %10 = sbr.rel target = $region15
        $region20: #{custom-call.58} parent=12 // loop_exit
          _
      $region13: #{custom-call.58} parent=4 // pred_fallthru
        _
    $region5: #{custom-call.58} parent=1 // pred_fallthru
      _
    %46 = vnop
    %47 = vst [vmem:[#allocation1] sm:$0xff] 0.0
    %s48 = scalar_lea.vmem [#allocation1], 8
    %49 = vst [vmem:[%s48] sm:$0xff] 0.0
    %s50 = scalar_lea.vmem [#allocation1], 16
    %51 = vst [vmem:[%s50] sm:$0xff] 0.0
    %s52 = scalar_lea.vmem [#allocation1], 24
    %53 = vst [vmem:[%s52] sm:$0xff] 0.0
    %vm54 = vcmask 7168
    %v55 = vld [vmem:[#allocation1] ss:$0 sm:$0xff]
    %v56 = vld [vmem:[#allocation0] ss:$0 sm:$0xff]
    %v57 = vmul.f32 %v55, %v55
    %58 = vadd.xlane.f32.xlu0 %v57
    %v59 = vpop.xlane.xlu0 %58
    %v60 = vsub.f32 %v56, %v59
    %v61 = vrsqrt.pop %v60
    %v62 = vld [vmem:[#allocation0] sm:$0xff]
    %v63 = vld [vmem:[#allocation1] sm:$0xff]
    %v64 = vmul.f32 %v63, %v55
    %65 = vadd.xlane.f32.xlu0 %v64
    %v66 = vpop.xlane.xlu0 %65
    %v67 = vsub.f32 %v62, %v66
    %v68 = vmul.f32 %v67, %v61
    %v69 = vsel %vm54, %v68, 0.0
    %v70 = vadd.f32 %v63, %v69
    %71 = vst [vmem:[#allocation1] sm:$0xff] %v70
    %s72 = scalar_lea.vmem [#allocation0], 8
    %v73 = vld [vmem:[%s72] sm:$0xff]
    %s74 = scalar_lea.vmem [#allocation1], 8
    %v75 = vld [vmem:[%s74] sm:$0xff]
    %v76 = vmul.f32 %v75, %v55
    %77 = vadd.xlane.f32.xlu0 %v76
    %v78 = vpop.xlane.xlu0 %77
    %v79 = vsub.f32 %v73, %v78
    %v80 = vmul.f32 %v79, %v61
    %v81 = vsel %vm54, %v80, 0.0
    %v82 = vadd.f32 %v75, %v81
    %s83 = scalar_lea.vmem [#allocation1], 8
    %84 = vst [vmem:[%s83] sm:$0xff] %v82
    %s85 = scalar_lea.vmem [#allocation0], 16
    %v86 = vld [vmem:[%s85] sm:$0xff]
    %s87 = scalar_lea.vmem [#allocation1], 16
    %v88 = vld [vmem:[%s87] sm:$0xff]
    %v89 = vmul.f32 %v88, %v55
    %90 = vadd.xlane.f32.xlu0 %v89
    %v91 = vpop.xlane.xlu0 %90
    %v92 = vsub.f32 %v86, %v91
    %v93 = vmul.f32 %v92, %v61
    %v94 = vsel %vm54, %v93, 0.0
    %v95 = vadd.f32 %v88, %v94
    %s96 = scalar_lea.vmem [#allocation1], 16
    %97 = vst [vmem:[%s96] sm:$0xff] %v95
    %s98 = scalar_lea.vmem [#allocation0], 24
    %v99 = vld [vmem:[%s98] sm:$0xff]
    %s100 = scalar_lea.vmem [#allocation1], 24
    %v101 = vld [vmem:[%s100] sm:$0xff]
    %v102 = vmul.f32 %v101, %v55
    %103 = vadd.xlane.f32.xlu0 %v102
    %v104 = vpop.xlane.xlu0 %103
    %v105 = vsub.f32 %v99, %v104
    %v106 = vmul.f32 %v105, %v61
    %v107 = vsel %vm54, %v106, 0.0
    %v108 = vadd.f32 %v101, %v107
    %s109 = scalar_lea.vmem [#allocation1], 24
    %110 = vst [vmem:[%s109] sm:$0xff] %v108
    %vm111 = vcmask 15368
    %s112 = scalar_lea.vmem [#allocation1], 1
    %v113 = vld [vmem:[%s112] ss:$0 sm:$0xff]
    %s114 = scalar_lea.vmem [#allocation0], 1
    %v115 = vld [vmem:[%s114] ss:$0 sm:$0xff]
    %v116 = vmul.f32 %v113, %v113
    %117 = vadd.xlane.f32.xlu0 %v116
    %v118 = vpop.xlane.xlu0 %117
    %v119 = vsub.f32 %v115, %v118
    %v120 = vrsqrt.pop %v119
    %v121 = vld [vmem:[#allocation0] sm:$0xff]
    %v122 = vld [vmem:[#allocation1] sm:$0xff]
    %v123 = vmul.f32 %v122, %v113
    %124 = vadd.xlane.f32.xlu0 %v123
    %v125 = vpop.xlane.xlu0 %124
    %v126 = vsub.f32 %v121, %v125
    %v127 = vmul.f32 %v126, %v120
    %vm128 = vcmask 1047553
    %vm129 = vmand %vm111, %vm128
    %v130 = vsel %vm129, %v127, 0.0
    %v131 = vadd.f32 %v122, %v130
    %132 = vst [vmem:[#allocation1] sm:$0xff] %v131
    %s133 = scalar_lea.vmem [#allocation0], 8
    %v134 = vld [vmem:[%s133] sm:$0xff]
    %s135 = scalar_lea.vmem [#allocation1], 8
    %v136 = vld [vmem:[%s135] sm:$0xff]
    %v137 = vmul.f32 %v136, %v113
    %138 = vadd.xlane.f32.xlu0 %v137
    %v139 = vpop.xlane.xlu0 %138
    %v140 = vsub.f32 %v134, %v139
    %v141 = vmul.f32 %v140, %v120
    %v142 = vsel %vm111, %v141, 0.0
    %v143 = vadd.f32 %v136, %v142
    %s144 = scalar_lea.vmem [#allocation1], 8
    %145 = vst [vmem:[%s144] sm:$0xff] %v143
    %s146 = scalar_lea.vmem [#allocation0], 16
    %v147 = vld [vmem:[%s146] sm:$0xff]
    %s148 = scalar_lea.vmem [#allocation1], 16
    %v149 = vld [vmem:[%s148] sm:$0xff]
    %v150 = vmul.f32 %v149, %v113
    %151 = vadd.xlane.f32.xlu0 %v150
    %v152 = vpop.xlane.xlu0 %151
    %v153 = vsub.f32 %v147, %v152
    %v154 = vmul.f32 %v153, %v120
    %v155 = vsel %vm111, %v154, 0.0
    %v156 = vadd.f32 %v149, %v155
    %s157 = scalar_lea.vmem [#allocation1], 16
    %158 = vst [vmem:[%s157] sm:$0xff] %v156
    %s159 = scalar_lea.vmem [#allocation0], 24
    %v160 = vld [vmem:[%s159] sm:$0xff]
    %s161 = scalar_lea.vmem [#allocation1], 24
    %v162 = vld [vmem:[%s161] sm:$0xff]
    %v163 = vmul.f32 %v162, %v113
    %164 = vadd.xlane.f32.xlu0 %v163
    %v165 = vpop.xlane.xlu0 %164
    %v166 = vsub.f32 %v160, %v165
    %v167 = vmul.f32 %v166, %v120
    %v168 = vsel %vm111, %v167, 0.0
    %v169 = vadd.f32 %v162, %v168
    %s170 = scalar_lea.vmem [#allocation1], 24
    %171 = vst [vmem:[%s170] sm:$0xff] %v169
    %vm172 = vcmask 23568
    %s173 = scalar_lea.vmem [#allocation1], 2
    %v174 = vld [vmem:[%s173] ss:$0 sm:$0xff]
    %s175 = scalar_lea.vmem [#allocation0], 2
    %v176 = vld [vmem:[%s175] ss:$0 sm:$0xff]
    %v177 = vmul.f32 %v174, %v174
    %178 = vadd.xlane.f32.xlu0 %v177
    %v179 = vpop.xlane.xlu0 %178
    %v180 = vsub.f32 %v176, %v179
    %v181 = vrsqrt.pop %v180
    %v182 = vld [vmem:[#allocation0] sm:$0xff]
    %v183 = vld [vmem:[#allocation1] sm:$0xff]
    %v184 = vmul.f32 %v183, %v174
    %185 = vadd.xlane.f32.xlu0 %v184
    %v186 = vpop.xlane.xlu0 %185
    %v187 = vsub.f32 %v182, %v186
    %v188 = vmul.f32 %v187, %v181
    %vm189 = vcmask 1047554
    %vm190 = vmand %vm172, %vm189
    %v191 = vsel %vm190, %v188, 0.0
    %v192 = vadd.f32 %v183, %v191
    %193 = vst [vmem:[#allocation1] sm:$0xff] %v192
    %s194 = scalar_lea.vmem [#allocation0], 8
    %v195 = vld [vmem:[%s194] sm:$0xff]
    %s196 = scalar_lea.vmem [#allocation1], 8
    %v197 = vld [vmem:[%s196] sm:$0xff]
    %v198 = vmul.f32 %v197, %v174
    %199 = vadd.xlane.f32.xlu0 %v198
    %v200 = vpop.xlane.xlu0 %199
    %v201 = vsub.f32 %v195, %v200
    %v202 = vmul.f32 %v201, %v181
    %v203 = vsel %vm172, %v202, 0.0
    %v204 = vadd.f32 %v197, %v203
    %s205 = scalar_lea.vmem [#allocation1], 8
    %206 = vst [vmem:[%s205] sm:$0xff] %v204
    %s207 = scalar_lea.vmem [#allocation0], 16
    %v208 = vld [vmem:[%s207] sm:$0xff]
    %s209 = scalar_lea.vmem [#allocation1], 16
    %v210 = vld [vmem:[%s209] sm:$0xff]
    %v211 = vmul.f32 %v210, %v174
    %212 = vadd.xlane.f32.xlu0 %v211
    %v213 = vpop.xlane.xlu0 %212
    %v214 = vsub.f32 %v208, %v213
    %v215 = vmul.f32 %v214, %v181
    %v216 = vsel %vm172, %v215, 0.0
    %v217 = vadd.f32 %v210, %v216
    %s218 = scalar_lea.vmem [#allocation1], 16
    %219 = vst [vmem:[%s218] sm:$0xff] %v217
    %s220 = scalar_lea.vmem [#allocation0], 24
    %v221 = vld [vmem:[%s220] sm:$0xff]
    %s222 = scalar_lea.vmem [#allocation1], 24
    %v223 = vld [vmem:[%s222] sm:$0xff]
    %v224 = vmul.f32 %v223, %v174
    %225 = vadd.xlane.f32.xlu0 %v224
    %v226 = vpop.xlane.xlu0 %225
    %v227 = vsub.f32 %v221, %v226
    %v228 = vmul.f32 %v227, %v181
    %v229 = vsel %vm172, %v228, 0.0
    %v230 = vadd.f32 %v223, %v229
    %s231 = scalar_lea.vmem [#allocation1], 24
    %232 = vst [vmem:[%s231] sm:$0xff] %v230
    %vm233 = vcmask 31768
    %s234 = scalar_lea.vmem [#allocation1], 3
    %v235 = vld [vmem:[%s234] ss:$0 sm:$0xff]
    %s236 = scalar_lea.vmem [#allocation0], 3
    %v237 = vld [vmem:[%s236] ss:$0 sm:$0xff]
    %v238 = vmul.f32 %v235, %v235
    %239 = vadd.xlane.f32.xlu0 %v238
    %v240 = vpop.xlane.xlu0 %239
    %v241 = vsub.f32 %v237, %v240
    %v242 = vrsqrt.pop %v241
    %v243 = vld [vmem:[#allocation0] sm:$0xff]
    %v244 = vld [vmem:[#allocation1] sm:$0xff]
    %v245 = vmul.f32 %v244, %v235
    %246 = vadd.xlane.f32.xlu0 %v245
    %v247 = vpop.xlane.xlu0 %246
    %v248 = vsub.f32 %v243, %v247
    %v249 = vmul.f32 %v248, %v242
    %vm250 = vcmask 1047555
    %vm251 = vmand %vm233, %vm250
    %v252 = vsel %vm251, %v249, 0.0
    %v253 = vadd.f32 %v244, %v252
    %254 = vst [vmem:[#allocation1] sm:$0xff] %v253
    %s255 = scalar_lea.vmem [#allocation0], 8
    %v256 = vld [vmem:[%s255] sm:$0xff]
    %s257 = scalar_lea.vmem [#allocation1], 8
    %v258 = vld [vmem:[%s257] sm:$0xff]
    %v259 = vmul.f32 %v258, %v235
    %260 = vadd.xlane.f32.xlu0 %v259
    %v261 = vpop.xlane.xlu0 %260
    %v262 = vsub.f32 %v256, %v261
    %v263 = vmul.f32 %v262, %v242
    %v264 = vsel %vm233, %v263, 0.0
    %v265 = vadd.f32 %v258, %v264
    %s266 = scalar_lea.vmem [#allocation1], 8
    %267 = vst [vmem:[%s266] sm:$0xff] %v265
    %s268 = scalar_lea.vmem [#allocation0], 16
    %v269 = vld [vmem:[%s268] sm:$0xff]
    %s270 = scalar_lea.vmem [#allocation1], 16
    %v271 = vld [vmem:[%s270] sm:$0xff]
    %v272 = vmul.f32 %v271, %v235
    %273 = vadd.xlane.f32.xlu0 %v272
    %v274 = vpop.xlane.xlu0 %273
    %v275 = vsub.f32 %v269, %v274
    %v276 = vmul.f32 %v275, %v242
    %v277 = vsel %vm233, %v276, 0.0
    %v278 = vadd.f32 %v271, %v277
    %s279 = scalar_lea.vmem [#allocation1], 16
    %280 = vst [vmem:[%s279] sm:$0xff] %v278
    %s281 = scalar_lea.vmem [#allocation0], 24
    %v282 = vld [vmem:[%s281] sm:$0xff]
    %s283 = scalar_lea.vmem [#allocation1], 24
    %v284 = vld [vmem:[%s283] sm:$0xff]
    %v285 = vmul.f32 %v284, %v235
    %286 = vadd.xlane.f32.xlu0 %v285
    %v287 = vpop.xlane.xlu0 %286
    %v288 = vsub.f32 %v282, %v287
    %v289 = vmul.f32 %v288, %v242
    %v290 = vsel %vm233, %v289, 0.0
    %v291 = vadd.f32 %v284, %v290
    %s292 = scalar_lea.vmem [#allocation1], 24
    %293 = vst [vmem:[%s292] sm:$0xff] %v291
    %vm294 = vcmask 39968
    %s295 = scalar_lea.vmem [#allocation1], 4
    %v296 = vld [vmem:[%s295] ss:$0 sm:$0xff]
    %s297 = scalar_lea.vmem [#allocation0], 4
    %v298 = vld [vmem:[%s297] ss:$0 sm:$0xff]
    %v299 = vmul.f32 %v296, %v296
    %300 = vadd.xlane.f32.xlu0 %v299
    %v301 = vpop.xlane.xlu0 %300
    %v302 = vsub.f32 %v298, %v301
    %v303 = vrsqrt.pop %v302
    %v304 = vld [vmem:[#allocation0] sm:$0xff]
    %v305 = vld [vmem:[#allocation1] sm:$0xff]
    %v306 = vmul.f32 %v305, %v296
    %307 = vadd.xlane.f32.xlu0 %v306
    %v308 = vpop.xlane.xlu0 %307
    %v309 = vsub.f32 %v304, %v308
    %v310 = vmul.f32 %v309, %v303
    %vm311 = vcmask 1047556
    %vm312 = vmand %vm294, %vm311
    %v313 = vsel %vm312, %v310, 0.0
    %v314 = vadd.f32 %v305, %v313
    %315 = vst [vmem:[#allocation1] sm:$0xff] %v314
    %s316 = scalar_lea.vmem [#allocation0], 8
    %v317 = vld [vmem:[%s316] sm:$0xff]
    %s318 = scalar_lea.vmem [#allocation1], 8
    %v319 = vld [vmem:[%s318] sm:$0xff]
    %v320 = vmul.f32 %v319, %v296
    %321 = vadd.xlane.f32.xlu0 %v320
    %v322 = vpop.xlane.xlu0 %321
    %v323 = vsub.f32 %v317, %v322
    %v324 = vmul.f32 %v323, %v303
    %v325 = vsel %vm294, %v324, 0.0
    %v326 = vadd.f32 %v319, %v325
    %s327 = scalar_lea.vmem [#allocation1], 8
    %328 = vst [vmem:[%s327] sm:$0xff] %v326
    %s329 = scalar_lea.vmem [#allocation0], 16
    %v330 = vld [vmem:[%s329] sm:$0xff]
    %s331 = scalar_lea.vmem [#allocation1], 16
    %v332 = vld [vmem:[%s331] sm:$0xff]
    %v333 = vmul.f32 %v332, %v296
    %334 = vadd.xlane.f32.xlu0 %v333
    %v335 = vpop.xlane.xlu0 %334
    %v336 = vsub.f32 %v330, %v335
    %v337 = vmul.f32 %v336, %v303
    %v338 = vsel %vm294, %v337, 0.0
    %v339 = vadd.f32 %v332, %v338
    %s340 = scalar_lea.vmem [#allocation1], 16
    %341 = vst [vmem:[%s340] sm:$0xff] %v339
    %s342 = scalar_lea.vmem [#allocation0], 24
    %v343 = vld [vmem:[%s342] sm:$0xff]
    %s344 = scalar_lea.vmem [#allocation1], 24
    %v345 = vld [vmem:[%s344] sm:$0xff]
    %v346 = vmul.f32 %v345, %v296
    %347 = vadd.xlane.f32.xlu0 %v346
    %v348 = vpop.xlane.xlu0 %347
    %v349 = vsub.f32 %v343, %v348
    %v350 = vmul.f32 %v349, %v303
    %v351 = vsel %vm294, %v350, 0.0
    %v352 = vadd.f32 %v345, %v351
    %s353 = scalar_lea.vmem [#allocation1], 24
    %354 = vst [vmem:[%s353] sm:$0xff] %v352
    %vm355 = vcmask 48168
    %s356 = scalar_lea.vmem [#allocation1], 5
    %v357 = vld [vmem:[%s356] ss:$0 sm:$0xff]
    %s358 = scalar_lea.vmem [#allocation0], 5
    %v359 = vld [vmem:[%s358] ss:$0 sm:$0xff]
    %v360 = vmul.f32 %v357, %v357
    %361 = vadd.xlane.f32.xlu0 %v360
    %v362 = vpop.xlane.xlu0 %361
    %v363 = vsub.f32 %v359, %v362
    %v364 = vrsqrt.pop %v363
    %v365 = vld [vmem:[#allocation0] sm:$0xff]
    %v366 = vld [vmem:[#allocation1] sm:$0xff]
    %v367 = vmul.f32 %v366, %v357
    %368 = vadd.xlane.f32.xlu0 %v367
    %v369 = vpop.xlane.xlu0 %368
    %v370 = vsub.f32 %v365, %v369
    %v371 = vmul.f32 %v370, %v364
    %vm372 = vcmask 1047557
    %vm373 = vmand %vm355, %vm372
    %v374 = vsel %vm373, %v371, 0.0
    %v375 = vadd.f32 %v366, %v374
    %376 = vst [vmem:[#allocation1] sm:$0xff] %v375
    %s377 = scalar_lea.vmem [#allocation0], 8
    %v378 = vld [vmem:[%s377] sm:$0xff]
    %s379 = scalar_lea.vmem [#allocation1], 8
    %v380 = vld [vmem:[%s379] sm:$0xff]
    %v381 = vmul.f32 %v380, %v357
    %382 = vadd.xlane.f32.xlu0 %v381
    %v383 = vpop.xlane.xlu0 %382
    %v384 = vsub.f32 %v378, %v383
    %v385 = vmul.f32 %v384, %v364
    %v386 = vsel %vm355, %v385, 0.0
    %v387 = vadd.f32 %v380, %v386
    %s388 = scalar_lea.vmem [#allocation1], 8
    %389 = vst [vmem:[%s388] sm:$0xff] %v387
    %s390 = scalar_lea.vmem [#allocation0], 16
    %v391 = vld [vmem:[%s390] sm:$0xff]
    %s392 = scalar_lea.vmem [#allocation1], 16
    %v393 = vld [vmem:[%s392] sm:$0xff]
    %v394 = vmul.f32 %v393, %v357
    %395 = vadd.xlane.f32.xlu0 %v394
    %v396 = vpop.xlane.xlu0 %395
    %v397 = vsub.f32 %v391, %v396
    %v398 = vmul.f32 %v397, %v364
    %v399 = vsel %vm355, %v398, 0.0
    %v400 = vadd.f32 %v393, %v399
    %s401 = scalar_lea.vmem [#allocation1], 16
    %402 = vst [vmem:[%s401] sm:$0xff] %v400
    %s403 = scalar_lea.vmem [#allocation0], 24
    %v404 = vld [vmem:[%s403] sm:$0xff]
    %s405 = scalar_lea.vmem [#allocation1], 24
    %v406 = vld [vmem:[%s405] sm:$0xff]
    %v407 = vmul.f32 %v406, %v357
    %408 = vadd.xlane.f32.xlu0 %v407
    %v409 = vpop.xlane.xlu0 %408
    %v410 = vsub.f32 %v404, %v409
    %v411 = vmul.f32 %v410, %v364
    %v412 = vsel %vm355, %v411, 0.0
    %v413 = vadd.f32 %v406, %v412
    %s414 = scalar_lea.vmem [#allocation1], 24
    %415 = vst [vmem:[%s414] sm:$0xff] %v413
    %vm416 = vcmask 56368
    %s417 = scalar_lea.vmem [#allocation1], 6
    %v418 = vld [vmem:[%s417] ss:$0 sm:$0xff]
    %s419 = scalar_lea.vmem [#allocation0], 6
    %v420 = vld [vmem:[%s419] ss:$0 sm:$0xff]
    %v421 = vmul.f32 %v418, %v418
    %422 = vadd.xlane.f32.xlu0 %v421
    %v423 = vpop.xlane.xlu0 %422
    %v424 = vsub.f32 %v420, %v423
    %v425 = vrsqrt.pop %v424
    %v426 = vld [vmem:[#allocation0] sm:$0xff]
    %v427 = vld [vmem:[#allocation1] sm:$0xff]
    %v428 = vmul.f32 %v427, %v418
    %429 = vadd.xlane.f32.xlu0 %v428
    %v430 = vpop.xlane.xlu0 %429
    %v431 = vsub.f32 %v426, %v430
    %v432 = vmul.f32 %v431, %v425
    %vm433 = vcmask 1047558
    %vm434 = vmand %vm416, %vm433
    %v435 = vsel %vm434, %v432, 0.0
    %v436 = vadd.f32 %v427, %v435
    %437 = vst [vmem:[#allocation1] sm:$0xff] %v436
    %s438 = scalar_lea.vmem [#allocation0], 8
    %v439 = vld [vmem:[%s438] sm:$0xff]
    %s440 = scalar_lea.vmem [#allocation1], 8
    %v441 = vld [vmem:[%s440] sm:$0xff]
    %v442 = vmul.f32 %v441, %v418
    %443 = vadd.xlane.f32.xlu0 %v442
    %v444 = vpop.xlane.xlu0 %443
    %v445 = vsub.f32 %v439, %v444
    %v446 = vmul.f32 %v445, %v425
    %v447 = vsel %vm416, %v446, 0.0
    %v448 = vadd.f32 %v441, %v447
    %s449 = scalar_lea.vmem [#allocation1], 8
    %450 = vst [vmem:[%s449] sm:$0xff] %v448
    %s451 = scalar_lea.vmem [#allocation0], 16
    %v452 = vld [vmem:[%s451] sm:$0xff]
    %s453 = scalar_lea.vmem [#allocation1], 16
    %v454 = vld [vmem:[%s453] sm:$0xff]
    %v455 = vmul.f32 %v454, %v418
    %456 = vadd.xlane.f32.xlu0 %v455
    %v457 = vpop.xlane.xlu0 %456
    %v458 = vsub.f32 %v452, %v457
    %v459 = vmul.f32 %v458, %v425
    %v460 = vsel %vm416, %v459, 0.0
    %v461 = vadd.f32 %v454, %v460
    %s462 = scalar_lea.vmem [#allocation1], 16
    %463 = vst [vmem:[%s462] sm:$0xff] %v461
    %s464 = scalar_lea.vmem [#allocation0], 24
    %v465 = vld [vmem:[%s464] sm:$0xff]
    %s466 = scalar_lea.vmem [#allocation1], 24
    %v467 = vld [vmem:[%s466] sm:$0xff]
    %v468 = vmul.f32 %v467, %v418
    %469 = vadd.xlane.f32.xlu0 %v468
    %v470 = vpop.xlane.xlu0 %469
    %v471 = vsub.f32 %v465, %v470
    %v472 = vmul.f32 %v471, %v425
    %v473 = vsel %vm416, %v472, 0.0
    %v474 = vadd.f32 %v467, %v473
    %s475 = scalar_lea.vmem [#allocation1], 24
    %476 = vst [vmem:[%s475] sm:$0xff] %v474
    %vm477 = vcmask 64568
    %s478 = scalar_lea.vmem [#allocation1], 7
    %v479 = vld [vmem:[%s478] ss:$0 sm:$0xff]
    %s480 = scalar_lea.vmem [#allocation0], 7
    %v481 = vld [vmem:[%s480] ss:$0 sm:$0xff]
    %v482 = vmul.f32 %v479, %v479
    %483 = vadd.xlane.f32.xlu0 %v482
    %v484 = vpop.xlane.xlu0 %483
    %v485 = vsub.f32 %v481, %v484
    %v486 = vrsqrt.pop %v485
    %v487 = vld [vmem:[#allocation0] sm:$0xff]
    %v488 = vld [vmem:[#allocation1] sm:$0xff]
    %v489 = vmul.f32 %v488, %v479
    %490 = vadd.xlane.f32.xlu0 %v489
    %v491 = vpop.xlane.xlu0 %490
    %v492 = vsub.f32 %v487, %v491
    %v493 = vmul.f32 %v492, %v486
    %vm494 = vcmask 1047559
    %vm495 = vmand %vm477, %vm494
    %v496 = vsel %vm495, %v493, 0.0
    %v497 = vadd.f32 %v488, %v496
    %498 = vst [vmem:[#allocation1] sm:$0xff] %v497
    %s499 = scalar_lea.vmem [#allocation0], 8
    %v500 = vld [vmem:[%s499] sm:$0xff]
    %s501 = scalar_lea.vmem [#allocation1], 8
    %v502 = vld [vmem:[%s501] sm:$0xff]
    %v503 = vmul.f32 %v502, %v479
    %504 = vadd.xlane.f32.xlu0 %v503
    %v505 = vpop.xlane.xlu0 %504
    %v506 = vsub.f32 %v500, %v505
    %v507 = vmul.f32 %v506, %v486
    %v508 = vsel %vm477, %v507, 0.0
    %v509 = vadd.f32 %v502, %v508
    %s510 = scalar_lea.vmem [#allocation1], 8
    %511 = vst [vmem:[%s510] sm:$0xff] %v509
    %s512 = scalar_lea.vmem [#allocation0], 16
    %v513 = vld [vmem:[%s512] sm:$0xff]
    %s514 = scalar_lea.vmem [#allocation1], 16
    %v515 = vld [vmem:[%s514] sm:$0xff]
    %v516 = vmul.f32 %v515, %v479
    %517 = vadd.xlane.f32.xlu0 %v516
    %v518 = vpop.xlane.xlu0 %517
    %v519 = vsub.f32 %v513, %v518
    %v520 = vmul.f32 %v519, %v486
    %v521 = vsel %vm477, %v520, 0.0
    %v522 = vadd.f32 %v515, %v521
    %s523 = scalar_lea.vmem [#allocation1], 16
    %524 = vst [vmem:[%s523] sm:$0xff] %v522
    %s525 = scalar_lea.vmem [#allocation0], 24
    %v526 = vld [vmem:[%s525] sm:$0xff]
    %s527 = scalar_lea.vmem [#allocation1], 24
    %v528 = vld [vmem:[%s527] sm:$0xff]
    %v529 = vmul.f32 %v528, %v479
    %530 = vadd.xlane.f32.xlu0 %v529
    %v531 = vpop.xlane.xlu0 %530
    %v532 = vsub.f32 %v526, %v531
    %v533 = vmul.f32 %v532, %v486
    %v534 = vsel %vm477, %v533, 0.0
    %v535 = vadd.f32 %v528, %v534
    %s536 = scalar_lea.vmem [#allocation1], 24
    %537 = vst [vmem:[%s536] sm:$0xff] %v535
    %vm538 = vcmask 72768
    %s539 = scalar_lea.vmem [#allocation1], 8
    %v540 = vld [vmem:[%s539] ss:$0 sm:$0xff]
    %s541 = scalar_lea.vmem [#allocation0], 8
    %v542 = vld [vmem:[%s541] ss:$0 sm:$0xff]
    %v543 = vmul.f32 %v540, %v540
    %544 = vadd.xlane.f32.xlu0 %v543
    %v545 = vpop.xlane.xlu0 %544
    %v546 = vsub.f32 %v542, %v545
    %v547 = vrsqrt.pop %v546
    %s548 = scalar_lea.vmem [#allocation0], 8
    %v549 = vld [vmem:[%s548] sm:$0xff]
    %s550 = scalar_lea.vmem [#allocation1], 8
    %v551 = vld [vmem:[%s550] sm:$0xff]
    %v552 = vmul.f32 %v551, %v540
    %553 = vadd.xlane.f32.xlu0 %v552
    %v554 = vpop.xlane.xlu0 %553
    %v555 = vsub.f32 %v549, %v554
    %v556 = vmul.f32 %v555, %v547
    %v557 = vsel %vm538, %v556, 0.0
    %v558 = vadd.f32 %v551, %v557
    %s559 = scalar_lea.vmem [#allocation1], 8
    %560 = vst [vmem:[%s559] sm:$0xff] %v558
    %s561 = scalar_lea.vmem [#allocation0], 16
    %v562 = vld [vmem:[%s561] sm:$0xff]
    %s563 = scalar_lea.vmem [#allocation1], 16
    %v564 = vld [vmem:[%s563] sm:$0xff]
    %v565 = vmul.f32 %v564, %v540
    %566 = vadd.xlane.f32.xlu0 %v565
    %v567 = vpop.xlane.xlu0 %566
    %v568 = vsub.f32 %v562, %v567
    %v569 = vmul.f32 %v568, %v547
    %v570 = vsel %vm538, %v569, 0.0
    %v571 = vadd.f32 %v564, %v570
    %s572 = scalar_lea.vmem [#allocation1], 16
    %573 = vst [vmem:[%s572] sm:$0xff] %v571
    %s574 = scalar_lea.vmem [#allocation0], 24
    %v575 = vld [vmem:[%s574] sm:$0xff]
    %s576 = scalar_lea.vmem [#allocation1], 24
    %v577 = vld [vmem:[%s576] sm:$0xff]
    %v578 = vmul.f32 %v577, %v540
    %579 = vadd.xlane.f32.xlu0 %v578
    %v580 = vpop.xlane.xlu0 %579
    %v581 = vsub.f32 %v575, %v580
    %v582 = vmul.f32 %v581, %v547
    %v583 = vsel %vm538, %v582, 0.0
    %v584 = vadd.f32 %v577, %v583
    %s585 = scalar_lea.vmem [#allocation1], 24
    %586 = vst [vmem:[%s585] sm:$0xff] %v584
    %vm587 = vcmask 80968
    %s588 = scalar_lea.vmem [#allocation1], 9
    %v589 = vld [vmem:[%s588] ss:$0 sm:$0xff]
    %s590 = scalar_lea.vmem [#allocation0], 9
    %v591 = vld [vmem:[%s590] ss:$0 sm:$0xff]
    %v592 = vmul.f32 %v589, %v589
    %593 = vadd.xlane.f32.xlu0 %v592
    %v594 = vpop.xlane.xlu0 %593
    %v595 = vsub.f32 %v591, %v594
    %v596 = vrsqrt.pop %v595
    %s597 = scalar_lea.vmem [#allocation0], 8
    %v598 = vld [vmem:[%s597] sm:$0xff]
    %s599 = scalar_lea.vmem [#allocation1], 8
    %v600 = vld [vmem:[%s599] sm:$0xff]
    %v601 = vmul.f32 %v600, %v589
    %602 = vadd.xlane.f32.xlu0 %v601
    %v603 = vpop.xlane.xlu0 %602
    %v604 = vsub.f32 %v598, %v603
    %v605 = vmul.f32 %v604, %v596
    %vm606 = vcmask 1047553
    %vm607 = vmand %vm587, %vm606
    %v608 = vsel %vm607, %v605, 0.0
    %v609 = vadd.f32 %v600, %v608
    %s610 = scalar_lea.vmem [#allocation1], 8
    %611 = vst [vmem:[%s610] sm:$0xff] %v609
    %s612 = scalar_lea.vmem [#allocation0], 16
    %v613 = vld [vmem:[%s612] sm:$0xff]
    %s614 = scalar_lea.vmem [#allocation1], 16
    %v615 = vld [vmem:[%s614] sm:$0xff]
    %v616 = vmul.f32 %v615, %v589
    %617 = vadd.xlane.f32.xlu0 %v616
    %v618 = vpop.xlane.xlu0 %617
    %v619 = vsub.f32 %v613, %v618
    %v620 = vmul.f32 %v619, %v596
    %v621 = vsel %vm587, %v620, 0.0
    %v622 = vadd.f32 %v615, %v621
    %s623 = scalar_lea.vmem [#allocation1], 16
    %624 = vst [vmem:[%s623] sm:$0xff] %v622
    %s625 = scalar_lea.vmem [#allocation0], 24
    %v626 = vld [vmem:[%s625] sm:$0xff]
    %s627 = scalar_lea.vmem [#allocation1], 24
    %v628 = vld [vmem:[%s627] sm:$0xff]
    %v629 = vmul.f32 %v628, %v589
    %630 = vadd.xlane.f32.xlu0 %v629
    %v631 = vpop.xlane.xlu0 %630
    %v632 = vsub.f32 %v626, %v631
    %v633 = vmul.f32 %v632, %v596
    %v634 = vsel %vm587, %v633, 0.0
    %v635 = vadd.f32 %v628, %v634
    %s636 = scalar_lea.vmem [#allocation1], 24
    %637 = vst [vmem:[%s636] sm:$0xff] %v635
    %vm638 = vcmask 89168
    %s639 = scalar_lea.vmem [#allocation1], 10
    %v640 = vld [vmem:[%s639] ss:$0 sm:$0xff]
    %s641 = scalar_lea.vmem [#allocation0], 10
    %v642 = vld [vmem:[%s641] ss:$0 sm:$0xff]
    %v643 = vmul.f32 %v640, %v640
    %644 = vadd.xlane.f32.xlu0 %v643
    %v645 = vpop.xlane.xlu0 %644
    %v646 = vsub.f32 %v642, %v645
    %v647 = vrsqrt.pop %v646
    %s648 = scalar_lea.vmem [#allocation0], 8
    %v649 = vld [vmem:[%s648] sm:$0xff]
    %s650 = scalar_lea.vmem [#allocation1], 8
    %v651 = vld [vmem:[%s650] sm:$0xff]
    %v652 = vmul.f32 %v651, %v640
    %653 = vadd.xlane.f32.xlu0 %v652
    %v654 = vpop.xlane.xlu0 %653
    %v655 = vsub.f32 %v649, %v654
    %v656 = vmul.f32 %v655, %v647
    %vm657 = vcmask 1047554
    %vm658 = vmand %vm638, %vm657
    %v659 = vsel %vm658, %v656, 0.0
    %v660 = vadd.f32 %v651, %v659
    %s661 = scalar_lea.vmem [#allocation1], 8
    %662 = vst [vmem:[%s661] sm:$0xff] %v660
    %s663 = scalar_lea.vmem [#allocation0], 16
    %v664 = vld [vmem:[%s663] sm:$0xff]
    %s665 = scalar_lea.vmem [#allocation1], 16
    %v666 = vld [vmem:[%s665] sm:$0xff]
    %v667 = vmul.f32 %v666, %v640
    %668 = vadd.xlane.f32.xlu0 %v667
    %v669 = vpop.xlane.xlu0 %668
    %v670 = vsub.f32 %v664, %v669
    %v671 = vmul.f32 %v670, %v647
    %v672 = vsel %vm638, %v671, 0.0
    %v673 = vadd.f32 %v666, %v672
    %s674 = scalar_lea.vmem [#allocation1], 16
    %675 = vst [vmem:[%s674] sm:$0xff] %v673
    %s676 = scalar_lea.vmem [#allocation0], 24
    %v677 = vld [vmem:[%s676] sm:$0xff]
    %s678 = scalar_lea.vmem [#allocation1], 24
    %v679 = vld [vmem:[%s678] sm:$0xff]
    %v680 = vmul.f32 %v679, %v640
    %681 = vadd.xlane.f32.xlu0 %v680
    %v682 = vpop.xlane.xlu0 %681
    %v683 = vsub.f32 %v677, %v682
    %v684 = vmul.f32 %v683, %v647
    %v685 = vsel %vm638, %v684, 0.0
    %v686 = vadd.f32 %v679, %v685
    %s687 = scalar_lea.vmem [#allocation1], 24
    %688 = vst [vmem:[%s687] sm:$0xff] %v686
    %vm689 = vcmask 97368
    %s690 = scalar_lea.vmem [#allocation1], 11
    %v691 = vld [vmem:[%s690] ss:$0 sm:$0xff]
    %s692 = scalar_lea.vmem [#allocation0], 11
    %v693 = vld [vmem:[%s692] ss:$0 sm:$0xff]
    %v694 = vmul.f32 %v691, %v691
    %695 = vadd.xlane.f32.xlu0 %v694
    %v696 = vpop.xlane.xlu0 %695
    %v697 = vsub.f32 %v693, %v696
    %v698 = vrsqrt.pop %v697
    %s699 = scalar_lea.vmem [#allocation0], 8
    %v700 = vld [vmem:[%s699] sm:$0xff]
    %s701 = scalar_lea.vmem [#allocation1], 8
    %v702 = vld [vmem:[%s701] sm:$0xff]
    %v703 = vmul.f32 %v702, %v691
    %704 = vadd.xlane.f32.xlu0 %v703
    %v705 = vpop.xlane.xlu0 %704
    %v706 = vsub.f32 %v700, %v705
    %v707 = vmul.f32 %v706, %v698
    %vm708 = vcmask 1047555
    %vm709 = vmand %vm689, %vm708
    %v710 = vsel %vm709, %v707, 0.0
    %v711 = vadd.f32 %v702, %v710
    %s712 = scalar_lea.vmem [#allocation1], 8
    %713 = vst [vmem:[%s712] sm:$0xff] %v711
    %s714 = scalar_lea.vmem [#allocation0], 16
    %v715 = vld [vmem:[%s714] sm:$0xff]
    %s716 = scalar_lea.vmem [#allocation1], 16
    %v717 = vld [vmem:[%s716] sm:$0xff]
    %v718 = vmul.f32 %v717, %v691
    %719 = vadd.xlane.f32.xlu0 %v718
    %v720 = vpop.xlane.xlu0 %719
    %v721 = vsub.f32 %v715, %v720
    %v722 = vmul.f32 %v721, %v698
    %v723 = vsel %vm689, %v722, 0.0
    %v724 = vadd.f32 %v717, %v723
    %s725 = scalar_lea.vmem [#allocation1], 16
    %726 = vst [vmem:[%s725] sm:$0xff] %v724
    %s727 = scalar_lea.vmem [#allocation0], 24
    %v728 = vld [vmem:[%s727] sm:$0xff]
    %s729 = scalar_lea.vmem [#allocation1], 24
    %v730 = vld [vmem:[%s729] sm:$0xff]
    %v731 = vmul.f32 %v730, %v691
    %732 = vadd.xlane.f32.xlu0 %v731
    %v733 = vpop.xlane.xlu0 %732
    %v734 = vsub.f32 %v728, %v733
    %v735 = vmul.f32 %v734, %v698
    %v736 = vsel %vm689, %v735, 0.0
    %v737 = vadd.f32 %v730, %v736
    %s738 = scalar_lea.vmem [#allocation1], 24
    %739 = vst [vmem:[%s738] sm:$0xff] %v737
    %vm740 = vcmask 105568
    %s741 = scalar_lea.vmem [#allocation1], 12
    %v742 = vld [vmem:[%s741] ss:$0 sm:$0xff]
    %s743 = scalar_lea.vmem [#allocation0], 12
    %v744 = vld [vmem:[%s743] ss:$0 sm:$0xff]
    %v745 = vmul.f32 %v742, %v742
    %746 = vadd.xlane.f32.xlu0 %v745
    %v747 = vpop.xlane.xlu0 %746
    %v748 = vsub.f32 %v744, %v747
    %v749 = vrsqrt.pop %v748
    %s750 = scalar_lea.vmem [#allocation0], 8
    %v751 = vld [vmem:[%s750] sm:$0xff]
    %s752 = scalar_lea.vmem [#allocation1], 8
    %v753 = vld [vmem:[%s752] sm:$0xff]
    %v754 = vmul.f32 %v753, %v742
    %755 = vadd.xlane.f32.xlu0 %v754
    %v756 = vpop.xlane.xlu0 %755
    %v757 = vsub.f32 %v751, %v756
    %v758 = vmul.f32 %v757, %v749
    %vm759 = vcmask 1047556
    %vm760 = vmand %vm740, %vm759
    %v761 = vsel %vm760, %v758, 0.0
    %v762 = vadd.f32 %v753, %v761
    %s763 = scalar_lea.vmem [#allocation1], 8
    %764 = vst [vmem:[%s763] sm:$0xff] %v762
    %s765 = scalar_lea.vmem [#allocation0], 16
    %v766 = vld [vmem:[%s765] sm:$0xff]
    %s767 = scalar_lea.vmem [#allocation1], 16
    %v768 = vld [vmem:[%s767] sm:$0xff]
    %v769 = vmul.f32 %v768, %v742
    %770 = vadd.xlane.f32.xlu0 %v769
    %v771 = vpop.xlane.xlu0 %770
    %v772 = vsub.f32 %v766, %v771
    %v773 = vmul.f32 %v772, %v749
    %v774 = vsel %vm740, %v773, 0.0
    %v775 = vadd.f32 %v768, %v774
    %s776 = scalar_lea.vmem [#allocation1], 16
    %777 = vst [vmem:[%s776] sm:$0xff] %v775
    %s778 = scalar_lea.vmem [#allocation0], 24
    %v779 = vld [vmem:[%s778] sm:$0xff]
    %s780 = scalar_lea.vmem [#allocation1], 24
    %v781 = vld [vmem:[%s780] sm:$0xff]
    %v782 = vmul.f32 %v781, %v742
    %783 = vadd.xlane.f32.xlu0 %v782
    %v784 = vpop.xlane.xlu0 %783
    %v785 = vsub.f32 %v779, %v784
    %v786 = vmul.f32 %v785, %v749
    %v787 = vsel %vm740, %v786, 0.0
    %v788 = vadd.f32 %v781, %v787
    %s789 = scalar_lea.vmem [#allocation1], 24
    %790 = vst [vmem:[%s789] sm:$0xff] %v788
    %vm791 = vcmask 113768
    %s792 = scalar_lea.vmem [#allocation1], 13
    %v793 = vld [vmem:[%s792] ss:$0 sm:$0xff]
    %s794 = scalar_lea.vmem [#allocation0], 13
    %v795 = vld [vmem:[%s794] ss:$0 sm:$0xff]
    %v796 = vmul.f32 %v793, %v793
    %797 = vadd.xlane.f32.xlu0 %v796
    %v798 = vpop.xlane.xlu0 %797
    %v799 = vsub.f32 %v795, %v798
    %v800 = vrsqrt.pop %v799
    %s801 = scalar_lea.vmem [#allocation0], 8
    %v802 = vld [vmem:[%s801] sm:$0xff]
    %s803 = scalar_lea.vmem [#allocation1], 8
    %v804 = vld [vmem:[%s803] sm:$0xff]
    %v805 = vmul.f32 %v804, %v793
    %806 = vadd.xlane.f32.xlu0 %v805
    %v807 = vpop.xlane.xlu0 %806
    %v808 = vsub.f32 %v802, %v807
    %v809 = vmul.f32 %v808, %v800
    %vm810 = vcmask 1047557
    %vm811 = vmand %vm791, %vm810
    %v812 = vsel %vm811, %v809, 0.0
    %v813 = vadd.f32 %v804, %v812
    %s814 = scalar_lea.vmem [#allocation1], 8
    %815 = vst [vmem:[%s814] sm:$0xff] %v813
    %s816 = scalar_lea.vmem [#allocation0], 16
    %v817 = vld [vmem:[%s816] sm:$0xff]
    %s818 = scalar_lea.vmem [#allocation1], 16
    %v819 = vld [vmem:[%s818] sm:$0xff]
    %v820 = vmul.f32 %v819, %v793
    %821 = vadd.xlane.f32.xlu0 %v820
    %v822 = vpop.xlane.xlu0 %821
    %v823 = vsub.f32 %v817, %v822
    %v824 = vmul.f32 %v823, %v800
    %v825 = vsel %vm791, %v824, 0.0
    %v826 = vadd.f32 %v819, %v825
    %s827 = scalar_lea.vmem [#allocation1], 16
    %828 = vst [vmem:[%s827] sm:$0xff] %v826
    %s829 = scalar_lea.vmem [#allocation0], 24
    %v830 = vld [vmem:[%s829] sm:$0xff]
    %s831 = scalar_lea.vmem [#allocation1], 24
    %v832 = vld [vmem:[%s831] sm:$0xff]
    %v833 = vmul.f32 %v832, %v793
    %834 = vadd.xlane.f32.xlu0 %v833
    %v835 = vpop.xlane.xlu0 %834
    %v836 = vsub.f32 %v830, %v835
    %v837 = vmul.f32 %v836, %v800
    %v838 = vsel %vm791, %v837, 0.0
    %v839 = vadd.f32 %v832, %v838
    %s840 = scalar_lea.vmem [#allocation1], 24
    %841 = vst [vmem:[%s840] sm:$0xff] %v839
    %vm842 = vcmask 121968
    %s843 = scalar_lea.vmem [#allocation1], 14
    %v844 = vld [vmem:[%s843] ss:$0 sm:$0xff]
    %s845 = scalar_lea.vmem [#allocation0], 14
    %v846 = vld [vmem:[%s845] ss:$0 sm:$0xff]
    %v847 = vmul.f32 %v844, %v844
    %848 = vadd.xlane.f32.xlu0 %v847
    %v849 = vpop.xlane.xlu0 %848
    %v850 = vsub.f32 %v846, %v849
    %v851 = vrsqrt.pop %v850
    %s852 = scalar_lea.vmem [#allocation0], 8
    %v853 = vld [vmem:[%s852] sm:$0xff]
    %s854 = scalar_lea.vmem [#allocation1], 8
    %v855 = vld [vmem:[%s854] sm:$0xff]
    %v856 = vmul.f32 %v855, %v844
    %857 = vadd.xlane.f32.xlu0 %v856
    %v858 = vpop.xlane.xlu0 %857
    %v859 = vsub.f32 %v853, %v858
    %v860 = vmul.f32 %v859, %v851
    %vm861 = vcmask 1047558
    %vm862 = vmand %vm842, %vm861
    %v863 = vsel %vm862, %v860, 0.0
    %v864 = vadd.f32 %v855, %v863
    %s865 = scalar_lea.vmem [#allocation1], 8
    %866 = vst [vmem:[%s865] sm:$0xff] %v864
    %s867 = scalar_lea.vmem [#allocation0], 16
    %v868 = vld [vmem:[%s867] sm:$0xff]
    %s869 = scalar_lea.vmem [#allocation1], 16
    %v870 = vld [vmem:[%s869] sm:$0xff]
    %v871 = vmul.f32 %v870, %v844
    %872 = vadd.xlane.f32.xlu0 %v871
    %v873 = vpop.xlane.xlu0 %872
    %v874 = vsub.f32 %v868, %v873
    %v875 = vmul.f32 %v874, %v851
    %v876 = vsel %vm842, %v875, 0.0
    %v877 = vadd.f32 %v870, %v876
    %s878 = scalar_lea.vmem [#allocation1], 16
    %879 = vst [vmem:[%s878] sm:$0xff] %v877
    %s880 = scalar_lea.vmem [#allocation0], 24
    %v881 = vld [vmem:[%s880] sm:$0xff]
    %s882 = scalar_lea.vmem [#allocation1], 24
    %v883 = vld [vmem:[%s882] sm:$0xff]
    %v884 = vmul.f32 %v883, %v844
    %885 = vadd.xlane.f32.xlu0 %v884
    %v886 = vpop.xlane.xlu0 %885
    %v887 = vsub.f32 %v881, %v886
    %v888 = vmul.f32 %v887, %v851
    %v889 = vsel %vm842, %v888, 0.0
    %v890 = vadd.f32 %v883, %v889
    %s891 = scalar_lea.vmem [#allocation1], 24
    %892 = vst [vmem:[%s891] sm:$0xff] %v890
    %vm893 = vcmask 130168
    %s894 = scalar_lea.vmem [#allocation1], 15
    %v895 = vld [vmem:[%s894] ss:$0 sm:$0xff]
    %s896 = scalar_lea.vmem [#allocation0], 15
    %v897 = vld [vmem:[%s896] ss:$0 sm:$0xff]
    %v898 = vmul.f32 %v895, %v895
    %899 = vadd.xlane.f32.xlu0 %v898
    %v900 = vpop.xlane.xlu0 %899
    %v901 = vsub.f32 %v897, %v900
    %v902 = vrsqrt.pop %v901
    %s903 = scalar_lea.vmem [#allocation0], 8
    %v904 = vld [vmem:[%s903] sm:$0xff]
    %s905 = scalar_lea.vmem [#allocation1], 8
    %v906 = vld [vmem:[%s905] sm:$0xff]
    %v907 = vmul.f32 %v906, %v895
    %908 = vadd.xlane.f32.xlu0 %v907
    %v909 = vpop.xlane.xlu0 %908
    %v910 = vsub.f32 %v904, %v909
    %v911 = vmul.f32 %v910, %v902
    %vm912 = vcmask 1047559
    %vm913 = vmand %vm893, %vm912
    %v914 = vsel %vm913, %v911, 0.0
    %v915 = vadd.f32 %v906, %v914
    %s916 = scalar_lea.vmem [#allocation1], 8
    %917 = vst [vmem:[%s916] sm:$0xff] %v915
    %s918 = scalar_lea.vmem [#allocation0], 16
    %v919 = vld [vmem:[%s918] sm:$0xff]
    %s920 = scalar_lea.vmem [#allocation1], 16
    %v921 = vld [vmem:[%s920] sm:$0xff]
    %v922 = vmul.f32 %v921, %v895
    %923 = vadd.xlane.f32.xlu0 %v922
    %v924 = vpop.xlane.xlu0 %923
    %v925 = vsub.f32 %v919, %v924
    %v926 = vmul.f32 %v925, %v902
    %v927 = vsel %vm893, %v926, 0.0
    %v928 = vadd.f32 %v921, %v927
    %s929 = scalar_lea.vmem [#allocation1], 16
    %930 = vst [vmem:[%s929] sm:$0xff] %v928
    %s931 = scalar_lea.vmem [#allocation0], 24
    %v932 = vld [vmem:[%s931] sm:$0xff]
    %s933 = scalar_lea.vmem [#allocation1], 24
    %v934 = vld [vmem:[%s933] sm:$0xff]
    %v935 = vmul.f32 %v934, %v895
    %936 = vadd.xlane.f32.xlu0 %v935
    %v937 = vpop.xlane.xlu0 %936
    %v938 = vsub.f32 %v932, %v937
    %v939 = vmul.f32 %v938, %v902
    %v940 = vsel %vm893, %v939, 0.0
    %v941 = vadd.f32 %v934, %v940
    %s942 = scalar_lea.vmem [#allocation1], 24
    %943 = vst [vmem:[%s942] sm:$0xff] %v941
    %vm944 = vcmask 138368
    %s945 = scalar_lea.vmem [#allocation1], 16
    %v946 = vld [vmem:[%s945] ss:$0 sm:$0xff]
    %s947 = scalar_lea.vmem [#allocation0], 16
    %v948 = vld [vmem:[%s947] ss:$0 sm:$0xff]
    %v949 = vmul.f32 %v946, %v946
    %950 = vadd.xlane.f32.xlu0 %v949
    %v951 = vpop.xlane.xlu0 %950
    %v952 = vsub.f32 %v948, %v951
    %v953 = vrsqrt.pop %v952
    %s954 = scalar_lea.vmem [#allocation0], 16
    %v955 = vld [vmem:[%s954] sm:$0xff]
    %s956 = scalar_lea.vmem [#allocation1], 16
    %v957 = vld [vmem:[%s956] sm:$0xff]
    %v958 = vmul.f32 %v957, %v946
    %959 = vadd.xlane.f32.xlu0 %v958
    %v960 = vpop.xlane.xlu0 %959
    %v961 = vsub.f32 %v955, %v960
    %v962 = vmul.f32 %v961, %v953
    %v963 = vsel %vm944, %v962, 0.0
    %v964 = vadd.f32 %v957, %v963
    %s965 = scalar_lea.vmem [#allocation1], 16
    %966 = vst [vmem:[%s965] sm:$0xff] %v964
    %s967 = scalar_lea.vmem [#allocation0], 24
    %v968 = vld [vmem:[%s967] sm:$0xff]
    %s969 = scalar_lea.vmem [#allocation1], 24
    %v970 = vld [vmem:[%s969] sm:$0xff]
    %v971 = vmul.f32 %v970, %v946
    %972 = vadd.xlane.f32.xlu0 %v971
    %v973 = vpop.xlane.xlu0 %972
    %v974 = vsub.f32 %v968, %v973
    %v975 = vmul.f32 %v974, %v953
    %v976 = vsel %vm944, %v975, 0.0
    %v977 = vadd.f32 %v970, %v976
    %s978 = scalar_lea.vmem [#allocation1], 24
    %979 = vst [vmem:[%s978] sm:$0xff] %v977
    %vm980 = vcmask 146568
    %s981 = scalar_lea.vmem [#allocation1], 17
    %v982 = vld [vmem:[%s981] ss:$0 sm:$0xff]
    %s983 = scalar_lea.vmem [#allocation0], 17
    %v984 = vld [vmem:[%s983] ss:$0 sm:$0xff]
    %v985 = vmul.f32 %v982, %v982
    %986 = vadd.xlane.f32.xlu0 %v985
    %v987 = vpop.xlane.xlu0 %986
    %v988 = vsub.f32 %v984, %v987
    %v989 = vrsqrt.pop %v988
    %s990 = scalar_lea.vmem [#allocation0], 16
    %v991 = vld [vmem:[%s990] sm:$0xff]
    %s992 = scalar_lea.vmem [#allocation1], 16
    %v993 = vld [vmem:[%s992] sm:$0xff]
    %v994 = vmul.f32 %v993, %v982
    %995 = vadd.xlane.f32.xlu0 %v994
    %v996 = vpop.xlane.xlu0 %995
    %v997 = vsub.f32 %v991, %v996
    %v998 = vmul.f32 %v997, %v989
    %vm999 = vcmask 1047553
    %vm1000 = vmand %vm980, %vm999
    %v1001 = vsel %vm1000, %v998, 0.0
    %v1002 = vadd.f32 %v993, %v1001
    %s1003 = scalar_lea.vmem [#allocation1], 16
    %1004 = vst [vmem:[%s1003] sm:$0xff] %v1002
    %s1005 = scalar_lea.vmem [#allocation0], 24
    %v1006 = vld [vmem:[%s1005] sm:$0xff]
    %s1007 = scalar_lea.vmem [#allocation1], 24
    %v1008 = vld [vmem:[%s1007] sm:$0xff]
    %v1009 = vmul.f32 %v1008, %v982
    %1010 = vadd.xlane.f32.xlu0 %v1009
    %v1011 = vpop.xlane.xlu0 %1010
    %v1012 = vsub.f32 %v1006, %v1011
    %v1013 = vmul.f32 %v1012, %v989
    %v1014 = vsel %vm980, %v1013, 0.0
    %v1015 = vadd.f32 %v1008, %v1014
    %s1016 = scalar_lea.vmem [#allocation1], 24
    %1017 = vst [vmem:[%s1016] sm:$0xff] %v1015
    %vm1018 = vcmask 154768
    %s1019 = scalar_lea.vmem [#allocation1], 18
    %v1020 = vld [vmem:[%s1019] ss:$0 sm:$0xff]
    %s1021 = scalar_lea.vmem [#allocation0], 18
    %v1022 = vld [vmem:[%s1021] ss:$0 sm:$0xff]
    %v1023 = vmul.f32 %v1020, %v1020
    %1024 = vadd.xlane.f32.xlu0 %v1023
    %v1025 = vpop.xlane.xlu0 %1024
    %v1026 = vsub.f32 %v1022, %v1025
    %v1027 = vrsqrt.pop %v1026
    %s1028 = scalar_lea.vmem [#allocation0], 16
    %v1029 = vld [vmem:[%s1028] sm:$0xff]
    %s1030 = scalar_lea.vmem [#allocation1], 16
    %v1031 = vld [vmem:[%s1030] sm:$0xff]
    %v1032 = vmul.f32 %v1031, %v1020
    %1033 = vadd.xlane.f32.xlu0 %v1032
    %v1034 = vpop.xlane.xlu0 %1033
    %v1035 = vsub.f32 %v1029, %v1034
    %v1036 = vmul.f32 %v1035, %v1027
    %vm1037 = vcmask 1047554
    %vm1038 = vmand %vm1018, %vm1037
    %v1039 = vsel %vm1038, %v1036, 0.0
    %v1040 = vadd.f32 %v1031, %v1039
    %s1041 = scalar_lea.vmem [#allocation1], 16
    %1042 = vst [vmem:[%s1041] sm:$0xff] %v1040
    %s1043 = scalar_lea.vmem [#allocation0], 24
    %v1044 = vld [vmem:[%s1043] sm:$0xff]
    %s1045 = scalar_lea.vmem [#allocation1], 24
    %v1046 = vld [vmem:[%s1045] sm:$0xff]
    %v1047 = vmul.f32 %v1046, %v1020
    %1048 = vadd.xlane.f32.xlu0 %v1047
    %v1049 = vpop.xlane.xlu0 %1048
    %v1050 = vsub.f32 %v1044, %v1049
    %v1051 = vmul.f32 %v1050, %v1027
    %v1052 = vsel %vm1018, %v1051, 0.0
    %v1053 = vadd.f32 %v1046, %v1052
    %s1054 = scalar_lea.vmem [#allocation1], 24
    %1055 = vst [vmem:[%s1054] sm:$0xff] %v1053
    %vm1056 = vcmask 162968
    %s1057 = scalar_lea.vmem [#allocation1], 19
    %v1058 = vld [vmem:[%s1057] ss:$0 sm:$0xff]
    %s1059 = scalar_lea.vmem [#allocation0], 19
    %v1060 = vld [vmem:[%s1059] ss:$0 sm:$0xff]
    %v1061 = vmul.f32 %v1058, %v1058
    %1062 = vadd.xlane.f32.xlu0 %v1061
    %v1063 = vpop.xlane.xlu0 %1062
    %v1064 = vsub.f32 %v1060, %v1063
    %v1065 = vrsqrt.pop %v1064
    %s1066 = scalar_lea.vmem [#allocation0], 16
    %v1067 = vld [vmem:[%s1066] sm:$0xff]
    %s1068 = scalar_lea.vmem [#allocation1], 16
    %v1069 = vld [vmem:[%s1068] sm:$0xff]
    %v1070 = vmul.f32 %v1069, %v1058
    %1071 = vadd.xlane.f32.xlu0 %v1070
    %v1072 = vpop.xlane.xlu0 %1071
    %v1073 = vsub.f32 %v1067, %v1072
    %v1074 = vmul.f32 %v1073, %v1065
    %vm1075 = vcmask 1047555
    %vm1076 = vmand %vm1056, %vm1075
    %v1077 = vsel %vm1076, %v1074, 0.0
    %v1078 = vadd.f32 %v1069, %v1077
    %s1079 = scalar_lea.vmem [#allocation1], 16
    %1080 = vst [vmem:[%s1079] sm:$0xff] %v1078
    %s1081 = scalar_lea.vmem [#allocation0], 24
    %v1082 = vld [vmem:[%s1081] sm:$0xff]
    %s1083 = scalar_lea.vmem [#allocation1], 24
    %v1084 = vld [vmem:[%s1083] sm:$0xff]
    %v1085 = vmul.f32 %v1084, %v1058
    %1086 = vadd.xlane.f32.xlu0 %v1085
    %v1087 = vpop.xlane.xlu0 %1086
    %v1088 = vsub.f32 %v1082, %v1087
    %v1089 = vmul.f32 %v1088, %v1065
    %v1090 = vsel %vm1056, %v1089, 0.0
    %v1091 = vadd.f32 %v1084, %v1090
    %s1092 = scalar_lea.vmem [#allocation1], 24
    %1093 = vst [vmem:[%s1092] sm:$0xff] %v1091
    %vm1094 = vcmask 171168
    %s1095 = scalar_lea.vmem [#allocation1], 20
    %v1096 = vld [vmem:[%s1095] ss:$0 sm:$0xff]
    %s1097 = scalar_lea.vmem [#allocation0], 20
    %v1098 = vld [vmem:[%s1097] ss:$0 sm:$0xff]
    %v1099 = vmul.f32 %v1096, %v1096
    %1100 = vadd.xlane.f32.xlu0 %v1099
    %v1101 = vpop.xlane.xlu0 %1100
    %v1102 = vsub.f32 %v1098, %v1101
    %v1103 = vrsqrt.pop %v1102
    %s1104 = scalar_lea.vmem [#allocation0], 16
    %v1105 = vld [vmem:[%s1104] sm:$0xff]
    %s1106 = scalar_lea.vmem [#allocation1], 16
    %v1107 = vld [vmem:[%s1106] sm:$0xff]
    %v1108 = vmul.f32 %v1107, %v1096
    %1109 = vadd.xlane.f32.xlu0 %v1108
    %v1110 = vpop.xlane.xlu0 %1109
    %v1111 = vsub.f32 %v1105, %v1110
    %v1112 = vmul.f32 %v1111, %v1103
    %vm1113 = vcmask 1047556
    %vm1114 = vmand %vm1094, %vm1113
    %v1115 = vsel %vm1114, %v1112, 0.0
    %v1116 = vadd.f32 %v1107, %v1115
    %s1117 = scalar_lea.vmem [#allocation1], 16
    %1118 = vst [vmem:[%s1117] sm:$0xff] %v1116
    %s1119 = scalar_lea.vmem [#allocation0], 24
    %v1120 = vld [vmem:[%s1119] sm:$0xff]
    %s1121 = scalar_lea.vmem [#allocation1], 24
    %v1122 = vld [vmem:[%s1121] sm:$0xff]
    %v1123 = vmul.f32 %v1122, %v1096
    %1124 = vadd.xlane.f32.xlu0 %v1123
    %v1125 = vpop.xlane.xlu0 %1124
    %v1126 = vsub.f32 %v1120, %v1125
    %v1127 = vmul.f32 %v1126, %v1103
    %v1128 = vsel %vm1094, %v1127, 0.0
    %v1129 = vadd.f32 %v1122, %v1128
    %s1130 = scalar_lea.vmem [#allocation1], 24
    %1131 = vst [vmem:[%s1130] sm:$0xff] %v1129
    %vm1132 = vcmask 179368
    %s1133 = scalar_lea.vmem [#allocation1], 21
    %v1134 = vld [vmem:[%s1133] ss:$0 sm:$0xff]
    %s1135 = scalar_lea.vmem [#allocation0], 21
    %v1136 = vld [vmem:[%s1135] ss:$0 sm:$0xff]
    %v1137 = vmul.f32 %v1134, %v1134
    %1138 = vadd.xlane.f32.xlu0 %v1137
    %v1139 = vpop.xlane.xlu0 %1138
    %v1140 = vsub.f32 %v1136, %v1139
    %v1141 = vrsqrt.pop %v1140
    %s1142 = scalar_lea.vmem [#allocation0], 16
    %v1143 = vld [vmem:[%s1142] sm:$0xff]
    %s1144 = scalar_lea.vmem [#allocation1], 16
    %v1145 = vld [vmem:[%s1144] sm:$0xff]
    %v1146 = vmul.f32 %v1145, %v1134
    %1147 = vadd.xlane.f32.xlu0 %v1146
    %v1148 = vpop.xlane.xlu0 %1147
    %v1149 = vsub.f32 %v1143, %v1148
    %v1150 = vmul.f32 %v1149, %v1141
    %vm1151 = vcmask 1047557
    %vm1152 = vmand %vm1132, %vm1151
    %v1153 = vsel %vm1152, %v1150, 0.0
    %v1154 = vadd.f32 %v1145, %v1153
    %s1155 = scalar_lea.vmem [#allocation1], 16
    %1156 = vst [vmem:[%s1155] sm:$0xff] %v1154
    %s1157 = scalar_lea.vmem [#allocation0], 24
    %v1158 = vld [vmem:[%s1157] sm:$0xff]
    %s1159 = scalar_lea.vmem [#allocation1], 24
    %v1160 = vld [vmem:[%s1159] sm:$0xff]
    %v1161 = vmul.f32 %v1160, %v1134
    %1162 = vadd.xlane.f32.xlu0 %v1161
    %v1163 = vpop.xlane.xlu0 %1162
    %v1164 = vsub.f32 %v1158, %v1163
    %v1165 = vmul.f32 %v1164, %v1141
    %v1166 = vsel %vm1132, %v1165, 0.0
    %v1167 = vadd.f32 %v1160, %v1166
    %s1168 = scalar_lea.vmem [#allocation1], 24
    %1169 = vst [vmem:[%s1168] sm:$0xff] %v1167
    %vm1170 = vcmask 187568
    %s1171 = scalar_lea.vmem [#allocation1], 22
    %v1172 = vld [vmem:[%s1171] ss:$0 sm:$0xff]
    %s1173 = scalar_lea.vmem [#allocation0], 22
    %v1174 = vld [vmem:[%s1173] ss:$0 sm:$0xff]
    %v1175 = vmul.f32 %v1172, %v1172
    %1176 = vadd.xlane.f32.xlu0 %v1175
    %v1177 = vpop.xlane.xlu0 %1176
    %v1178 = vsub.f32 %v1174, %v1177
    %v1179 = vrsqrt.pop %v1178
    %s1180 = scalar_lea.vmem [#allocation0], 16
    %v1181 = vld [vmem:[%s1180] sm:$0xff]
    %s1182 = scalar_lea.vmem [#allocation1], 16
    %v1183 = vld [vmem:[%s1182] sm:$0xff]
    %v1184 = vmul.f32 %v1183, %v1172
    %1185 = vadd.xlane.f32.xlu0 %v1184
    %v1186 = vpop.xlane.xlu0 %1185
    %v1187 = vsub.f32 %v1181, %v1186
    %v1188 = vmul.f32 %v1187, %v1179
    %vm1189 = vcmask 1047558
    %vm1190 = vmand %vm1170, %vm1189
    %v1191 = vsel %vm1190, %v1188, 0.0
    %v1192 = vadd.f32 %v1183, %v1191
    %s1193 = scalar_lea.vmem [#allocation1], 16
    %1194 = vst [vmem:[%s1193] sm:$0xff] %v1192
    %s1195 = scalar_lea.vmem [#allocation0], 24
    %v1196 = vld [vmem:[%s1195] sm:$0xff]
    %s1197 = scalar_lea.vmem [#allocation1], 24
    %v1198 = vld [vmem:[%s1197] sm:$0xff]
    %v1199 = vmul.f32 %v1198, %v1172
    %1200 = vadd.xlane.f32.xlu0 %v1199
    %v1201 = vpop.xlane.xlu0 %1200
    %v1202 = vsub.f32 %v1196, %v1201
    %v1203 = vmul.f32 %v1202, %v1179
    %v1204 = vsel %vm1170, %v1203, 0.0
    %v1205 = vadd.f32 %v1198, %v1204
    %s1206 = scalar_lea.vmem [#allocation1], 24
    %1207 = vst [vmem:[%s1206] sm:$0xff] %v1205
    %vm1208 = vcmask 195768
    %s1209 = scalar_lea.vmem [#allocation1], 23
    %v1210 = vld [vmem:[%s1209] ss:$0 sm:$0xff]
    %s1211 = scalar_lea.vmem [#allocation0], 23
    %v1212 = vld [vmem:[%s1211] ss:$0 sm:$0xff]
    %v1213 = vmul.f32 %v1210, %v1210
    %1214 = vadd.xlane.f32.xlu0 %v1213
    %v1215 = vpop.xlane.xlu0 %1214
    %v1216 = vsub.f32 %v1212, %v1215
    %v1217 = vrsqrt.pop %v1216
    %s1218 = scalar_lea.vmem [#allocation0], 16
    %v1219 = vld [vmem:[%s1218] sm:$0xff]
    %s1220 = scalar_lea.vmem [#allocation1], 16
    %v1221 = vld [vmem:[%s1220] sm:$0xff]
    %v1222 = vmul.f32 %v1221, %v1210
    %1223 = vadd.xlane.f32.xlu0 %v1222
    %v1224 = vpop.xlane.xlu0 %1223
    %v1225 = vsub.f32 %v1219, %v1224
    %v1226 = vmul.f32 %v1225, %v1217
    %vm1227 = vcmask 1047559
    %vm1228 = vmand %vm1208, %vm1227
    %v1229 = vsel %vm1228, %v1226, 0.0
    %v1230 = vadd.f32 %v1221, %v1229
    %s1231 = scalar_lea.vmem [#allocation1], 16
    %1232 = vst [vmem:[%s1231] sm:$0xff] %v1230
    %s1233 = scalar_lea.vmem [#allocation0], 24
    %v1234 = vld [vmem:[%s1233] sm:$0xff]
    %s1235 = scalar_lea.vmem [#allocation1], 24
    %v1236 = vld [vmem:[%s1235] sm:$0xff]
    %v1237 = vmul.f32 %v1236, %v1210
    %1238 = vadd.xlane.f32.xlu0 %v1237
    %v1239 = vpop.xlane.xlu0 %1238
    %v1240 = vsub.f32 %v1234, %v1239
    %v1241 = vmul.f32 %v1240, %v1217
    %v1242 = vsel %vm1208, %v1241, 0.0
    %v1243 = vadd.f32 %v1236, %v1242
    %s1244 = scalar_lea.vmem [#allocation1], 24
    %1245 = vst [vmem:[%s1244] sm:$0xff] %v1243
    %vm1246 = vcmask 203968
    %s1247 = scalar_lea.vmem [#allocation1], 24
    %v1248 = vld [vmem:[%s1247] ss:$0 sm:$0xff]
    %s1249 = scalar_lea.vmem [#allocation0], 24
    %v1250 = vld [vmem:[%s1249] ss:$0 sm:$0xff]
    %v1251 = vmul.f32 %v1248, %v1248
    %1252 = vadd.xlane.f32.xlu0 %v1251
    %v1253 = vpop.xlane.xlu0 %1252
    %v1254 = vsub.f32 %v1250, %v1253
    %v1255 = vrsqrt.pop %v1254
    %s1256 = scalar_lea.vmem [#allocation0], 24
    %v1257 = vld [vmem:[%s1256] sm:$0xff]
    %s1258 = scalar_lea.vmem [#allocation1], 24
    %v1259 = vld [vmem:[%s1258] sm:$0xff]
    %v1260 = vmul.f32 %v1259, %v1248
    %1261 = vadd.xlane.f32.xlu0 %v1260
    %v1262 = vpop.xlane.xlu0 %1261
    %v1263 = vsub.f32 %v1257, %v1262
    %v1264 = vmul.f32 %v1263, %v1255
    %v1265 = vsel %vm1246, %v1264, 0.0
    %v1266 = vadd.f32 %v1259, %v1265
    %s1267 = scalar_lea.vmem [#allocation1], 24
    %1268 = vst [vmem:[%s1267] sm:$0xff] %v1266
    %vm1269 = vcmask 212168
    %s1270 = scalar_lea.vmem [#allocation1], 25
    %v1271 = vld [vmem:[%s1270] ss:$0 sm:$0xff]
    %s1272 = scalar_lea.vmem [#allocation0], 25
    %v1273 = vld [vmem:[%s1272] ss:$0 sm:$0xff]
    %v1274 = vmul.f32 %v1271, %v1271
    %1275 = vadd.xlane.f32.xlu0 %v1274
    %v1276 = vpop.xlane.xlu0 %1275
    %v1277 = vsub.f32 %v1273, %v1276
    %v1278 = vrsqrt.pop %v1277
    %s1279 = scalar_lea.vmem [#allocation0], 24
    %v1280 = vld [vmem:[%s1279] sm:$0xff]
    %s1281 = scalar_lea.vmem [#allocation1], 24
    %v1282 = vld [vmem:[%s1281] sm:$0xff]
    %v1283 = vmul.f32 %v1282, %v1271
    %1284 = vadd.xlane.f32.xlu0 %v1283
    %v1285 = vpop.xlane.xlu0 %1284
    %v1286 = vsub.f32 %v1280, %v1285
    %v1287 = vmul.f32 %v1286, %v1278
    %vm1288 = vcmask 1047553
    %vm1289 = vmand %vm1269, %vm1288
    %v1290 = vsel %vm1289, %v1287, 0.0
    %v1291 = vadd.f32 %v1282, %v1290
    %s1292 = scalar_lea.vmem [#allocation1], 24
    %1293 = vst [vmem:[%s1292] sm:$0xff] %v1291
    %vm1294 = vcmask 220368
    %s1295 = scalar_lea.vmem [#allocation1], 26
    %v1296 = vld [vmem:[%s1295] ss:$0 sm:$0xff]
    %s1297 = scalar_lea.vmem [#allocation0], 26
    %v1298 = vld [vmem:[%s1297] ss:$0 sm:$0xff]
    %v1299 = vmul.f32 %v1296, %v1296
    %1300 = vadd.xlane.f32.xlu0 %v1299
    %v1301 = vpop.xlane.xlu0 %1300
    %v1302 = vsub.f32 %v1298, %v1301
    %v1303 = vrsqrt.pop %v1302
    %s1304 = scalar_lea.vmem [#allocation0], 24
    %v1305 = vld [vmem:[%s1304] sm:$0xff]
    %s1306 = scalar_lea.vmem [#allocation1], 24
    %v1307 = vld [vmem:[%s1306] sm:$0xff]
    %v1308 = vmul.f32 %v1307, %v1296
    %1309 = vadd.xlane.f32.xlu0 %v1308
    %v1310 = vpop.xlane.xlu0 %1309
    %v1311 = vsub.f32 %v1305, %v1310
    %v1312 = vmul.f32 %v1311, %v1303
    %vm1313 = vcmask 1047554
    %vm1314 = vmand %vm1294, %vm1313
    %v1315 = vsel %vm1314, %v1312, 0.0
    %v1316 = vadd.f32 %v1307, %v1315
    %s1317 = scalar_lea.vmem [#allocation1], 24
    %1318 = vst [vmem:[%s1317] sm:$0xff] %v1316
    %vm1319 = vcmask 228568
    %s1320 = scalar_lea.vmem [#allocation1], 27
    %v1321 = vld [vmem:[%s1320] ss:$0 sm:$0xff]
    %s1322 = scalar_lea.vmem [#allocation0], 27
    %v1323 = vld [vmem:[%s1322] ss:$0 sm:$0xff]
    %v1324 = vmul.f32 %v1321, %v1321
    %1325 = vadd.xlane.f32.xlu0 %v1324
    %v1326 = vpop.xlane.xlu0 %1325
    %v1327 = vsub.f32 %v1323, %v1326
    %v1328 = vrsqrt.pop %v1327
    %s1329 = scalar_lea.vmem [#allocation0], 24
    %v1330 = vld [vmem:[%s1329] sm:$0xff]
    %s1331 = scalar_lea.vmem [#allocation1], 24
    %v1332 = vld [vmem:[%s1331] sm:$0xff]
    %v1333 = vmul.f32 %v1332, %v1321
    %1334 = vadd.xlane.f32.xlu0 %v1333
    %v1335 = vpop.xlane.xlu0 %1334
    %v1336 = vsub.f32 %v1330, %v1335
    %v1337 = vmul.f32 %v1336, %v1328
    %vm1338 = vcmask 1047555
    %vm1339 = vmand %vm1319, %vm1338
    %v1340 = vsel %vm1339, %v1337, 0.0
    %v1341 = vadd.f32 %v1332, %v1340
    %s1342 = scalar_lea.vmem [#allocation1], 24
    %1343 = vst [vmem:[%s1342] sm:$0xff] %v1341
    %vm1344 = vcmask 236768
    %s1345 = scalar_lea.vmem [#allocation1], 28
    %v1346 = vld [vmem:[%s1345] ss:$0 sm:$0xff]
    %s1347 = scalar_lea.vmem [#allocation0], 28
    %v1348 = vld [vmem:[%s1347] ss:$0 sm:$0xff]
    %v1349 = vmul.f32 %v1346, %v1346
    %1350 = vadd.xlane.f32.xlu0 %v1349
    %v1351 = vpop.xlane.xlu0 %1350
    %v1352 = vsub.f32 %v1348, %v1351
    %v1353 = vrsqrt.pop %v1352
    %s1354 = scalar_lea.vmem [#allocation0], 24
    %v1355 = vld [vmem:[%s1354] sm:$0xff]
    %s1356 = scalar_lea.vmem [#allocation1], 24
    %v1357 = vld [vmem:[%s1356] sm:$0xff]
    %v1358 = vmul.f32 %v1357, %v1346
    %1359 = vadd.xlane.f32.xlu0 %v1358
    %v1360 = vpop.xlane.xlu0 %1359
    %v1361 = vsub.f32 %v1355, %v1360
    %v1362 = vmul.f32 %v1361, %v1353
    %vm1363 = vcmask 1047556
    %vm1364 = vmand %vm1344, %vm1363
    %v1365 = vsel %vm1364, %v1362, 0.0
    %v1366 = vadd.f32 %v1357, %v1365
    %s1367 = scalar_lea.vmem [#allocation1], 24
    %1368 = vst [vmem:[%s1367] sm:$0xff] %v1366
    %vm1369 = vcmask 244968
    %s1370 = scalar_lea.vmem [#allocation1], 29
    %v1371 = vld [vmem:[%s1370] ss:$0 sm:$0xff]
    %s1372 = scalar_lea.vmem [#allocation0], 29
    %v1373 = vld [vmem:[%s1372] ss:$0 sm:$0xff]
    %v1374 = vmul.f32 %v1371, %v1371
    %1375 = vadd.xlane.f32.xlu0 %v1374
    %v1376 = vpop.xlane.xlu0 %1375
    %v1377 = vsub.f32 %v1373, %v1376
    %v1378 = vrsqrt.pop %v1377
    %s1379 = scalar_lea.vmem [#allocation0], 24
    %v1380 = vld [vmem:[%s1379] sm:$0xff]
    %s1381 = scalar_lea.vmem [#allocation1], 24
    %v1382 = vld [vmem:[%s1381] sm:$0xff]
    %v1383 = vmul.f32 %v1382, %v1371
    %1384 = vadd.xlane.f32.xlu0 %v1383
    %v1385 = vpop.xlane.xlu0 %1384
    %v1386 = vsub.f32 %v1380, %v1385
    %v1387 = vmul.f32 %v1386, %v1378
    %vm1388 = vcmask 1047557
    %vm1389 = vmand %vm1369, %vm1388
    %v1390 = vsel %vm1389, %v1387, 0.0
    %v1391 = vadd.f32 %v1382, %v1390
    %s1392 = scalar_lea.vmem [#allocation1], 24
    %1393 = vst [vmem:[%s1392] sm:$0xff] %v1391
    %vm1394 = vcmask 253168
    %s1395 = scalar_lea.vmem [#allocation1], 30
    %v1396 = vld [vmem:[%s1395] ss:$0 sm:$0xff]
    %s1397 = scalar_lea.vmem [#allocation0], 30
    %v1398 = vld [vmem:[%s1397] ss:$0 sm:$0xff]
    %v1399 = vmul.f32 %v1396, %v1396
    %1400 = vadd.xlane.f32.xlu0 %v1399
    %v1401 = vpop.xlane.xlu0 %1400
    %v1402 = vsub.f32 %v1398, %v1401
    %v1403 = vrsqrt.pop %v1402
    %s1404 = scalar_lea.vmem [#allocation0], 24
    %v1405 = vld [vmem:[%s1404] sm:$0xff]
    %s1406 = scalar_lea.vmem [#allocation1], 24
    %v1407 = vld [vmem:[%s1406] sm:$0xff]
    %v1408 = vmul.f32 %v1407, %v1396
    %1409 = vadd.xlane.f32.xlu0 %v1408
    %v1410 = vpop.xlane.xlu0 %1409
    %v1411 = vsub.f32 %v1405, %v1410
    %v1412 = vmul.f32 %v1411, %v1403
    %vm1413 = vcmask 1047558
    %vm1414 = vmand %vm1394, %vm1413
    %v1415 = vsel %vm1414, %v1412, 0.0
    %v1416 = vadd.f32 %v1407, %v1415
    %s1417 = scalar_lea.vmem [#allocation1], 24
    %1418 = vst [vmem:[%s1417] sm:$0xff] %v1416
    %vm1419 = vcmask 261368
    %s1420 = scalar_lea.vmem [#allocation1], 31
    %v1421 = vld [vmem:[%s1420] ss:$0 sm:$0xff]
    %s1422 = scalar_lea.vmem [#allocation0], 31
    %v1423 = vld [vmem:[%s1422] ss:$0 sm:$0xff]
    %v1424 = vmul.f32 %v1421, %v1421
    %1425 = vadd.xlane.f32.xlu0 %v1424
    %v1426 = vpop.xlane.xlu0 %1425
    %v1427 = vsub.f32 %v1423, %v1426
    %v1428 = vrsqrt.pop %v1427
    %s1429 = scalar_lea.vmem [#allocation0], 24
    %v1430 = vld [vmem:[%s1429] sm:$0xff]
    %s1431 = scalar_lea.vmem [#allocation1], 24
    %v1432 = vld [vmem:[%s1431] sm:$0xff]
    %v1433 = vmul.f32 %v1432, %v1421
    %1434 = vadd.xlane.f32.xlu0 %v1433
    %v1435 = vpop.xlane.xlu0 %1434
    %v1436 = vsub.f32 %v1430, %v1435
    %v1437 = vmul.f32 %v1436, %v1428
    %vm1438 = vcmask 1047559
    %vm1439 = vmand %vm1419, %vm1438
    %v1440 = vsel %vm1439, %v1437, 0.0
    %v1441 = vadd.f32 %v1432, %v1440
    %s1442 = scalar_lea.vmem [#allocation1], 24
    %1443 = vst [vmem:[%s1442] sm:$0xff] %v1441
    // Predicated region
    $region36: #{custom-call.58} parent=1 // pred_check
      _
    $region37: #{custom-call.58} parent=1 // pred_check_branch
      %1445 = sbr.rel (0) target = $region39
    $region38: #{custom-call.58} parent=1 // pred_region
      // Predicated region
      $region40: #{custom-call.58} parent=38 // pred_check
        _
      $region41: #{custom-call.58} parent=38 // pred_check_branch
        %1447 = sbr.rel (0) target = $region43
      $region42: #{custom-call.58} parent=38 // pred_region
        // Predicated region
        $region55: #{custom-call.58} parent=42 // pred_check
          _
        $region56: #{custom-call.58} parent=42 // pred_check_branch
          %1469 = sbr.rel (0) target = $region58
        $region57: #{custom-call.58} parent=42 // pred_region
          loop: start=0, step=1, limit=1
          $region59: #{custom-call.58} parent=57 // loop_pre_header
            _
          $region60: #{custom-call.58} parent=57 // loop_header
            %s1471 = sphi 0, %s1475
            %p1472 = scmp.ge.s32.totalorder %s1471, 1
            %s1476 = sphi [#allocation1], [#allocation1]
            %s1477 = sphi %s1, %s1
          $region61: #{custom-call.58} parent=57 // loop_header_branch
            %1474 = sbr.rel (%p1472) target = $region65
          $region62: #{custom-call.58} parent=57 // loop_body
            %v1478 = vld [vmem:[%s1476] sm:$0xff]
            %1479 = vst [vmem:[%s1477] sm:$0xff] %v1478
            %v1480 = vld [vmem:[%s1476 + $0x8] sm:$0xff]
            %1481 = vst [vmem:[%s1477 + $0x8] sm:$0xff] %v1480
            %v1482 = vld [vmem:[%s1476 + $0x10] sm:$0xff]
            %1483 = vst [vmem:[%s1477 + $0x10] sm:$0xff] %v1482
            %v1484 = vld [vmem:[%s1476 + $0x18] sm:$0xff]
            %1485 = vst [vmem:[%s1477 + $0x18] sm:$0xff] %v1484
          $region63: #{custom-call.58} parent=57 // loop_footer
            %s1475 = sadd.s32 1, %s1471
          $region64: #{custom-call.58} parent=57 // loop_footer_branch
            %1470 = sbr.rel target = $region60
          $region65: #{custom-call.58} parent=57 // loop_exit
            _
        $region58: #{custom-call.58} parent=42 // pred_fallthru
          _
        // Predicated region
        $region66: #{custom-call.58} parent=42 // pred_check
          _
        $region67: #{custom-call.58} parent=42 // pred_check_branch
          %1487 = sbr.rel target = $region69
        $region68: #{custom-call.58} parent=42 // pred_region
          _
        $region69: #{custom-call.58} parent=42 // pred_fallthru
          _
      $region43: #{custom-call.58} parent=38 // pred_fallthru
        _
      // Predicated region
      $region44: #{custom-call.58} parent=38 // pred_check
        _
      $region45: #{custom-call.58} parent=38 // pred_check_branch
        %1449 = sbr.rel target = $region47
      $region46: #{custom-call.58} parent=38 // pred_region
        %s1451 = ssub.s32 256, 1
        loop: start=0, step=1, limit=1
        $region48: #{custom-call.58} parent=46 // loop_pre_header
          _
        $region49: #{custom-call.58} parent=46 // loop_header
          %s1453 = sphi 0, %s1457
          %p1454 = scmp.ge.s32.totalorder %s1453, 1
          %s1458 = sphi [#allocation1], [#allocation1]
          %s1459 = sphi %s1, %s1
        $region50: #{custom-call.58} parent=46 // loop_header_branch
          %1456 = sbr.rel (%p1454) target = $region54
        $region51: #{custom-call.58} parent=46 // loop_body
          %v1460 = vld [vmem:[%s1458] sm:%s1451]
          %1461 = vst [vmem:[%s1459] sm:%s1451] %v1460
          %v1462 = vld [vmem:[%s1458 + $0x8] sm:%s1451]
          %1463 = vst [vmem:[%s1459 + $0x8] sm:%s1451] %v1462
          %v1464 = vld [vmem:[%s1458 + $0x10] sm:%s1451]
          %1465 = vst [vmem:[%s1459 + $0x10] sm:%s1451] %v1464
          %v1466 = vld [vmem:[%s1458 + $0x18] sm:%s1451]
          %1467 = vst [vmem:[%s1459 + $0x18] sm:%s1451] %v1466
        $region52: #{custom-call.58} parent=46 // loop_footer
          %s1457 = sadd.s32 1, %s1453
        $region53: #{custom-call.58} parent=46 // loop_footer_branch
          %1452 = sbr.rel target = $region49
        $region54: #{custom-call.58} parent=46 // loop_exit
          _
      $region47: #{custom-call.58} parent=38 // pred_fallthru
        _
    $region39: #{custom-call.58} parent=1 // pred_fallthru
      _
    %1488 = vnop

// kernel: custom-call.59
$region0: #{custom-call.59}
  %s0 = inlined_call_operand.vmem [shape: f32[1,32,32], index: 0, kind: input, shape index: {}]
  %s1 = inlined_call_operand.vmem [shape: f32[1,32,32], index: 1, kind: output, shape index: {}]
  $region1: #{custom-call.59} parent=0
    #allocation0 [shape = 'u8[16384]{0}', space=vmem, size = 0x4000, scoped, tag = 'operand span for operand 0']
    #allocation1 [shape = 'u8[16384]{0}', space=vmem, size = 0x4000, scoped, tag = 'operand span for operand 1']
    #allocation2 [shape = 'f32[32,32]{1,0}', space=vmem, size = 0x4000, scoped, tag = 'rescaled input a']
    // Predicated region
    $region2: #{custom-call.59} parent=1 // pred_check
      _
    $region3: #{custom-call.59} parent=1 // pred_check_branch
      %3 = sbr.rel (0) target = $region5
    $region4: #{custom-call.59} parent=1 // pred_region
      // Predicated region
      $region6: #{custom-call.59} parent=4 // pred_check
        _
      $region7: #{custom-call.59} parent=4 // pred_check_branch
        %5 = sbr.rel (0) target = $region9
      $region8: #{custom-call.59} parent=4 // pred_region
        // Predicated region
        $region21: #{custom-call.59} parent=8 // pred_check
          _
        $region22: #{custom-call.59} parent=8 // pred_check_branch
          %27 = sbr.rel (0) target = $region24
        $region23: #{custom-call.59} parent=8 // pred_region
          loop: start=0, step=1, limit=1
          $region25: #{custom-call.59} parent=23 // loop_pre_header
            _
          $region26: #{custom-call.59} parent=23 // loop_header
            %s29 = sphi 0, %s33
            %p30 = scmp.ge.s32.totalorder %s29, 1
            %s34 = sphi %s0, %s0
            %s35 = sphi [#allocation0], [#allocation0]
          $region27: #{custom-call.59} parent=23 // loop_header_branch
            %32 = sbr.rel (%p30) target = $region31
          $region28: #{custom-call.59} parent=23 // loop_body
            %v36 = vld [vmem:[%s34] sm:$0xff]
            %37 = vst [vmem:[%s35] sm:$0xff] %v36
            %v38 = vld [vmem:[%s34 + $0x8] sm:$0xff]
            %39 = vst [vmem:[%s35 + $0x8] sm:$0xff] %v38
            %v40 = vld [vmem:[%s34 + $0x10] sm:$0xff]
            %41 = vst [vmem:[%s35 + $0x10] sm:$0xff] %v40
            %v42 = vld [vmem:[%s34 + $0x18] sm:$0xff]
            %43 = vst [vmem:[%s35 + $0x18] sm:$0xff] %v42
          $region29: #{custom-call.59} parent=23 // loop_footer
            %s33 = sadd.s32 1, %s29
          $region30: #{custom-call.59} parent=23 // loop_footer_branch
            %28 = sbr.rel target = $region26
          $region31: #{custom-call.59} parent=23 // loop_exit
            _
        $region24: #{custom-call.59} parent=8 // pred_fallthru
          _
        // Predicated region
        $region32: #{custom-call.59} parent=8 // pred_check
          _
        $region33: #{custom-call.59} parent=8 // pred_check_branch
          %45 = sbr.rel target = $region35
        $region34: #{custom-call.59} parent=8 // pred_region
          _
        $region35: #{custom-call.59} parent=8 // pred_fallthru
          _
      $region9: #{custom-call.59} parent=4 // pred_fallthru
        _
      // Predicated region
      $region10: #{custom-call.59} parent=4 // pred_check
        _
      $region11: #{custom-call.59} parent=4 // pred_check_branch
        %7 = sbr.rel target = $region13
      $region12: #{custom-call.59} parent=4 // pred_region
        %s9 = ssub.s32 256, 1
        loop: start=0, step=1, limit=1
        $region14: #{custom-call.59} parent=12 // loop_pre_header
          _
        $region15: #{custom-call.59} parent=12 // loop_header
          %s11 = sphi 0, %s15
          %p12 = scmp.ge.s32.totalorder %s11, 1
          %s16 = sphi %s0, %s0
          %s17 = sphi [#allocation0], [#allocation0]
        $region16: #{custom-call.59} parent=12 // loop_header_branch
          %14 = sbr.rel (%p12) target = $region20
        $region17: #{custom-call.59} parent=12 // loop_body
          %v18 = vld [vmem:[%s16] sm:%s9]
          %19 = vst [vmem:[%s17] sm:%s9] %v18
          %v20 = vld [vmem:[%s16 + $0x8] sm:%s9]
          %21 = vst [vmem:[%s17 + $0x8] sm:%s9] %v20
          %v22 = vld [vmem:[%s16 + $0x10] sm:%s9]
          %23 = vst [vmem:[%s17 + $0x10] sm:%s9] %v22
          %v24 = vld [vmem:[%s16 + $0x18] sm:%s9]
          %25 = vst [vmem:[%s17 + $0x18] sm:%s9] %v24
        $region18: #{custom-call.59} parent=12 // loop_footer
          %s15 = sadd.s32 1, %s11
        $region19: #{custom-call.59} parent=12 // loop_footer_branch
          %10 = sbr.rel target = $region15
        $region20: #{custom-call.59} parent=12 // loop_exit
          _
      $region13: #{custom-call.59} parent=4 // pred_fallthru
        _
    $region5: #{custom-call.59} parent=1 // pred_fallthru
      _
    %46 = vnop
    %v47 = vlaneseq
    %v48 = vand.u32 %v47, 127
    %vm49 = vcmp.lt.s32.totalorder %v48, 32
    %v50 = vlaneseq
    %v51 = vshrl.u32 %v50, 7
    %vm53 = vcmp.eq.s32.totalorder %v51, %v48
    %v54 = vld [vmem:[#allocation0] sm:$0xff]
    %v55 = vsel %vm53, %v54, 0.0
    %56 = vadd.xlane.f32.xlu0 %v55
    %v57 = vpop.xlane.xlu0 %56
    %vm58 = vcmp.ge.s32.totalorder %v51, %v48
    %vm59 = vmand %vm58, %vm49
    %v60 = vsel %vm59, %v54, 0.0
    %v61 = vrcp.pop %v57
    %v62 = vmul.f32 %v60, %v61
    %63 = vst [vmem:[#allocation2] sm:$0xff] %v62
    %s64 = scalar_lea.vmem [#allocation0], 8
    %s65 = scalar_lea.vmem [#allocation2], 8
    %v66 = vlaneseq
    %v67 = vshrl.u32 %v66, 7
    %v68 = vadd.s32 %v67, 8
    %vm69 = vcmp.eq.s32.totalorder %v68, %v48
    %v70 = vld [vmem:[%s64] sm:$0xff]
    %v71 = vsel %vm69, %v70, 0.0
    %72 = vadd.xlane.f32.xlu0 %v71
    %v73 = vpop.xlane.xlu0 %72
    %vm74 = vcmp.ge.s32.totalorder %v68, %v48
    %vm75 = vmand %vm74, %vm49
    %v76 = vsel %vm75, %v70, 0.0
    %v77 = vrcp.pop %v73
    %v78 = vmul.f32 %v76, %v77
    %79 = vst [vmem:[%s65] sm:$0xff] %v78
    %s80 = scalar_lea.vmem [#allocation0], 16
    %s81 = scalar_lea.vmem [#allocation2], 16
    %v82 = vlaneseq
    %v83 = vshrl.u32 %v82, 7
    %v84 = vadd.s32 %v83, 16
    %vm85 = vcmp.eq.s32.totalorder %v84, %v48
    %v86 = vld [vmem:[%s80] sm:$0xff]
    %v87 = vsel %vm85, %v86, 0.0
    %88 = vadd.xlane.f32.xlu0 %v87
    %v89 = vpop.xlane.xlu0 %88
    %vm90 = vcmp.ge.s32.totalorder %v84, %v48
    %vm91 = vmand %vm90, %vm49
    %v92 = vsel %vm91, %v86, 0.0
    %v93 = vrcp.pop %v89
    %v94 = vmul.f32 %v92, %v93
    %95 = vst [vmem:[%s81] sm:$0xff] %v94
    %s96 = scalar_lea.vmem [#allocation0], 24
    %s97 = scalar_lea.vmem [#allocation2], 24
    %v98 = vlaneseq
    %v99 = vshrl.u32 %v98, 7
    %v100 = vadd.s32 %v99, 24
    %vm101 = vcmp.eq.s32.totalorder %v100, %v48
    %v102 = vld [vmem:[%s96] sm:$0xff]
    %v103 = vsel %vm101, %v102, 0.0
    %104 = vadd.xlane.f32.xlu0 %v103
    %v105 = vpop.xlane.xlu0 %104
    %vm106 = vcmp.ge.s32.totalorder %v100, %v48
    %vm107 = vmand %vm106, %vm49
    %v108 = vsel %vm107, %v102, 0.0
    %v109 = vrcp.pop %v105
    %v110 = vmul.f32 %v108, %v109
    %111 = vst [vmem:[%s97] sm:$0xff] %v110
    %v112 = vlaneseq
    %v113 = vand.u32 %v112, 127
    %v114 = vlaneseq
    %v115 = vshrl.u32 %v114, 7
    %vm117 = vcmp.eq.s32.totalorder %v113, %v115
    %v118 = vlaneseq
    %v119 = vand.u32 %v118, 127
    %vm120 = vcmp.eq.s32.totalorder %v119, 0
    %v121 = vsel %vm120, 1.0, -1.0
    %v122 = vsel %vm117, %v121, 0.0
    %v123 = vlaneseq
    %v124 = vand.u32 %v123, 127
    %v125 = vlaneseq
    %v126 = vshrl.u32 %v125, 7
    %v127 = vadd.s32 %v126, 8
    %vm128 = vcmp.eq.s32.totalorder %v124, %v127
    %v129 = vsel %vm128, -1.0, 0.0
    %v130 = vlaneseq
    %v131 = vand.u32 %v130, 127
    %v132 = vlaneseq
    %v133 = vshrl.u32 %v132, 7
    %v134 = vadd.s32 %v133, 16
    %vm135 = vcmp.eq.s32.totalorder %v131, %v134
    %v136 = vsel %vm135, -1.0, 0.0
    %v137 = vlaneseq
    %v138 = vand.u32 %v137, 127
    %v139 = vlaneseq
    %v140 = vshrl.u32 %v139, 7
    %v141 = vadd.s32 %v140, 24
    %vm142 = vcmp.eq.s32.totalorder %v138, %v141
    %v143 = vsel %vm142, -1.0, 0.0
    %s144 = scalar_lea.vmem [#allocation2], 1
    %v145 = vld [vmem:[%s144] ss:$0 sm:$0xff]
    %v146 = vxor.u32 %v145, 2147483648
    %v147 = vlaneseq
    %v148 = vand.u32 %v147, 127
    %vm149 = vcmp.eq.s32.totalorder %v148, 1
    %v150 = vmul.f32 %v146, %v122
    %151 = vadd.xlane.f32.xlu0 %v150
    %v152 = vpop.xlane.xlu0 %151
    %v153 = vsel %vm149, %v152, %v122
    %s154 = scalar_lea.vmem [#allocation2], 2
    %v155 = vld [vmem:[%s154] ss:$0 sm:$0xff]
    %v156 = vxor.u32 %v155, 2147483648
    %v157 = vlaneseq
    %v158 = vand.u32 %v157, 127
    %vm159 = vcmp.eq.s32.totalorder %v158, 2
    %v160 = vmul.f32 %v156, %v153
    %161 = vadd.xlane.f32.xlu0 %v160
    %v162 = vpop.xlane.xlu0 %161
    %v163 = vsel %vm159, %v162, %v153
    %s164 = scalar_lea.vmem [#allocation2], 3
    %v165 = vld [vmem:[%s164] ss:$0 sm:$0xff]
    %v166 = vxor.u32 %v165, 2147483648
    %v167 = vlaneseq
    %v168 = vand.u32 %v167, 127
    %vm169 = vcmp.eq.s32.totalorder %v168, 3
    %v170 = vmul.f32 %v166, %v163
    %171 = vadd.xlane.f32.xlu0 %v170
    %v172 = vpop.xlane.xlu0 %171
    %v173 = vsel %vm169, %v172, %v163
    %s174 = scalar_lea.vmem [#allocation2], 4
    %v175 = vld [vmem:[%s174] ss:$0 sm:$0xff]
    %v176 = vxor.u32 %v175, 2147483648
    %v177 = vlaneseq
    %v178 = vand.u32 %v177, 127
    %vm179 = vcmp.eq.s32.totalorder %v178, 4
    %v180 = vmul.f32 %v176, %v173
    %181 = vadd.xlane.f32.xlu0 %v180
    %v182 = vpop.xlane.xlu0 %181
    %v183 = vsel %vm179, %v182, %v173
    %s184 = scalar_lea.vmem [#allocation2], 5
    %v185 = vld [vmem:[%s184] ss:$0 sm:$0xff]
    %v186 = vxor.u32 %v185, 2147483648
    %v187 = vlaneseq
    %v188 = vand.u32 %v187, 127
    %vm189 = vcmp.eq.s32.totalorder %v188, 5
    %v190 = vmul.f32 %v186, %v183
    %191 = vadd.xlane.f32.xlu0 %v190
    %v192 = vpop.xlane.xlu0 %191
    %v193 = vsel %vm189, %v192, %v183
    %s194 = scalar_lea.vmem [#allocation2], 6
    %v195 = vld [vmem:[%s194] ss:$0 sm:$0xff]
    %v196 = vxor.u32 %v195, 2147483648
    %v197 = vlaneseq
    %v198 = vand.u32 %v197, 127
    %vm199 = vcmp.eq.s32.totalorder %v198, 6
    %v200 = vmul.f32 %v196, %v193
    %201 = vadd.xlane.f32.xlu0 %v200
    %v202 = vpop.xlane.xlu0 %201
    %v203 = vsel %vm199, %v202, %v193
    %s204 = scalar_lea.vmem [#allocation2], 7
    %v205 = vld [vmem:[%s204] ss:$0 sm:$0xff]
    %v206 = vxor.u32 %v205, 2147483648
    %v207 = vlaneseq
    %v208 = vand.u32 %v207, 127
    %vm209 = vcmp.eq.s32.totalorder %v208, 7
    %v210 = vmul.f32 %v206, %v203
    %211 = vadd.xlane.f32.xlu0 %v210
    %v212 = vpop.xlane.xlu0 %211
    %v213 = vsel %vm209, %v212, %v203
    %s214 = scalar_lea.vmem [#allocation2], 8
    %v215 = vld [vmem:[%s214] ss:$0 sm:$0xff]
    %v216 = vxor.u32 %v215, 2147483648
    %v217 = vlaneseq
    %v218 = vand.u32 %v217, 127
    %vm219 = vcmp.eq.s32.totalorder %v218, 8
    %v220 = vmul.f32 %v216, %v213
    %221 = vadd.xlane.f32.xlu0 %v220
    %v222 = vpop.xlane.xlu0 %221
    %v223 = vsel %vm219, %v222, %v213
    %v224 = vmul.f32 %v216, %v129
    %225 = vadd.xlane.f32.xlu0 %v224
    %v226 = vpop.xlane.xlu0 %225
    %v227 = vsel %vm219, %v226, %v129
    %s228 = scalar_lea.vmem [#allocation2], 9
    %v229 = vld [vmem:[%s228] ss:$0 sm:$0xff]
    %v230 = vxor.u32 %v229, 2147483648
    %v231 = vlaneseq
    %v232 = vand.u32 %v231, 127
    %vm233 = vcmp.eq.s32.totalorder %v232, 9
    %v234 = vmul.f32 %v230, %v223
    %235 = vadd.xlane.f32.xlu0 %v234
    %v236 = vpop.xlane.xlu0 %235
    %v237 = vsel %vm233, %v236, %v223
    %v238 = vmul.f32 %v230, %v227
    %239 = vadd.xlane.f32.xlu0 %v238
    %v240 = vpop.xlane.xlu0 %239
    %v241 = vsel %vm233, %v240, %v227
    %s242 = scalar_lea.vmem [#allocation2], 10
    %v243 = vld [vmem:[%s242] ss:$0 sm:$0xff]
    %v244 = vxor.u32 %v243, 2147483648
    %v245 = vlaneseq
    %v246 = vand.u32 %v245, 127
    %vm247 = vcmp.eq.s32.totalorder %v246, 10
    %v248 = vmul.f32 %v244, %v237
    %249 = vadd.xlane.f32.xlu0 %v248
    %v250 = vpop.xlane.xlu0 %249
    %v251 = vsel %vm247, %v250, %v237
    %v252 = vmul.f32 %v244, %v241
    %253 = vadd.xlane.f32.xlu0 %v252
    %v254 = vpop.xlane.xlu0 %253
    %v255 = vsel %vm247, %v254, %v241
    %s256 = scalar_lea.vmem [#allocation2], 11
    %v257 = vld [vmem:[%s256] ss:$0 sm:$0xff]
    %v258 = vxor.u32 %v257, 2147483648
    %v259 = vlaneseq
    %v260 = vand.u32 %v259, 127
    %vm261 = vcmp.eq.s32.totalorder %v260, 11
    %v262 = vmul.f32 %v258, %v251
    %263 = vadd.xlane.f32.xlu0 %v262
    %v264 = vpop.xlane.xlu0 %263
    %v265 = vsel %vm261, %v264, %v251
    %v266 = vmul.f32 %v258, %v255
    %267 = vadd.xlane.f32.xlu0 %v266
    %v268 = vpop.xlane.xlu0 %267
    %v269 = vsel %vm261, %v268, %v255
    %s270 = scalar_lea.vmem [#allocation2], 12
    %v271 = vld [vmem:[%s270] ss:$0 sm:$0xff]
    %v272 = vxor.u32 %v271, 2147483648
    %v273 = vlaneseq
    %v274 = vand.u32 %v273, 127
    %vm275 = vcmp.eq.s32.totalorder %v274, 12
    %v276 = vmul.f32 %v272, %v265
    %277 = vadd.xlane.f32.xlu0 %v276
    %v278 = vpop.xlane.xlu0 %277
    %v279 = vsel %vm275, %v278, %v265
    %v280 = vmul.f32 %v272, %v269
    %281 = vadd.xlane.f32.xlu0 %v280
    %v282 = vpop.xlane.xlu0 %281
    %v283 = vsel %vm275, %v282, %v269
    %s284 = scalar_lea.vmem [#allocation2], 13
    %v285 = vld [vmem:[%s284] ss:$0 sm:$0xff]
    %v286 = vxor.u32 %v285, 2147483648
    %v287 = vlaneseq
    %v288 = vand.u32 %v287, 127
    %vm289 = vcmp.eq.s32.totalorder %v288, 13
    %v290 = vmul.f32 %v286, %v279
    %291 = vadd.xlane.f32.xlu0 %v290
    %v292 = vpop.xlane.xlu0 %291
    %v293 = vsel %vm289, %v292, %v279
    %v294 = vmul.f32 %v286, %v283
    %295 = vadd.xlane.f32.xlu0 %v294
    %v296 = vpop.xlane.xlu0 %295
    %v297 = vsel %vm289, %v296, %v283
    %s298 = scalar_lea.vmem [#allocation2], 14
    %v299 = vld [vmem:[%s298] ss:$0 sm:$0xff]
    %v300 = vxor.u32 %v299, 2147483648
    %v301 = vlaneseq
    %v302 = vand.u32 %v301, 127
    %vm303 = vcmp.eq.s32.totalorder %v302, 14
    %v304 = vmul.f32 %v300, %v293
    %305 = vadd.xlane.f32.xlu0 %v304
    %v306 = vpop.xlane.xlu0 %305
    %v307 = vsel %vm303, %v306, %v293
    %v308 = vmul.f32 %v300, %v297
    %309 = vadd.xlane.f32.xlu0 %v308
    %v310 = vpop.xlane.xlu0 %309
    %v311 = vsel %vm303, %v310, %v297
    %s312 = scalar_lea.vmem [#allocation2], 15
    %v313 = vld [vmem:[%s312] ss:$0 sm:$0xff]
    %v314 = vxor.u32 %v313, 2147483648
    %v315 = vlaneseq
    %v316 = vand.u32 %v315, 127
    %vm317 = vcmp.eq.s32.totalorder %v316, 15
    %v318 = vmul.f32 %v314, %v307
    %319 = vadd.xlane.f32.xlu0 %v318
    %v320 = vpop.xlane.xlu0 %319
    %v321 = vsel %vm317, %v320, %v307
    %v322 = vmul.f32 %v314, %v311
    %323 = vadd.xlane.f32.xlu0 %v322
    %v324 = vpop.xlane.xlu0 %323
    %v325 = vsel %vm317, %v324, %v311
    %s326 = scalar_lea.vmem [#allocation2], 16
    %v327 = vld [vmem:[%s326] ss:$0 sm:$0xff]
    %v328 = vxor.u32 %v327, 2147483648
    %v329 = vlaneseq
    %v330 = vand.u32 %v329, 127
    %vm331 = vcmp.eq.s32.totalorder %v330, 16
    %v332 = vmul.f32 %v328, %v321
    %333 = vadd.xlane.f32.xlu0 %v332
    %v334 = vpop.xlane.xlu0 %333
    %v335 = vsel %vm331, %v334, %v321
    %v336 = vmul.f32 %v328, %v325
    %337 = vadd.xlane.f32.xlu0 %v336
    %v338 = vpop.xlane.xlu0 %337
    %v339 = vsel %vm331, %v338, %v325
    %v340 = vmul.f32 %v328, %v136
    %341 = vadd.xlane.f32.xlu0 %v340
    %v342 = vpop.xlane.xlu0 %341
    %v343 = vsel %vm331, %v342, %v136
    %s344 = scalar_lea.vmem [#allocation2], 17
    %v345 = vld [vmem:[%s344] ss:$0 sm:$0xff]
    %v346 = vxor.u32 %v345, 2147483648
    %v347 = vlaneseq
    %v348 = vand.u32 %v347, 127
    %vm349 = vcmp.eq.s32.totalorder %v348, 17
    %v350 = vmul.f32 %v346, %v335
    %351 = vadd.xlane.f32.xlu0 %v350
    %v352 = vpop.xlane.xlu0 %351
    %v353 = vsel %vm349, %v352, %v335
    %v354 = vmul.f32 %v346, %v339
    %355 = vadd.xlane.f32.xlu0 %v354
    %v356 = vpop.xlane.xlu0 %355
    %v357 = vsel %vm349, %v356, %v339
    %v358 = vmul.f32 %v346, %v343
    %359 = vadd.xlane.f32.xlu0 %v358
    %v360 = vpop.xlane.xlu0 %359
    %v361 = vsel %vm349, %v360, %v343
    %s362 = scalar_lea.vmem [#allocation2], 18
    %v363 = vld [vmem:[%s362] ss:$0 sm:$0xff]
    %v364 = vxor.u32 %v363, 2147483648
    %v365 = vlaneseq
    %v366 = vand.u32 %v365, 127
    %vm367 = vcmp.eq.s32.totalorder %v366, 18
    %v368 = vmul.f32 %v364, %v353
    %369 = vadd.xlane.f32.xlu0 %v368
    %v370 = vpop.xlane.xlu0 %369
    %v371 = vsel %vm367, %v370, %v353
    %v372 = vmul.f32 %v364, %v357
    %373 = vadd.xlane.f32.xlu0 %v372
    %v374 = vpop.xlane.xlu0 %373
    %v375 = vsel %vm367, %v374, %v357
    %v376 = vmul.f32 %v364, %v361
    %377 = vadd.xlane.f32.xlu0 %v376
    %v378 = vpop.xlane.xlu0 %377
    %v379 = vsel %vm367, %v378, %v361
    %s380 = scalar_lea.vmem [#allocation2], 19
    %v381 = vld [vmem:[%s380] ss:$0 sm:$0xff]
    %v382 = vxor.u32 %v381, 2147483648
    %v383 = vlaneseq
    %v384 = vand.u32 %v383, 127
    %vm385 = vcmp.eq.s32.totalorder %v384, 19
    %v386 = vmul.f32 %v382, %v371
    %387 = vadd.xlane.f32.xlu0 %v386
    %v388 = vpop.xlane.xlu0 %387
    %v389 = vsel %vm385, %v388, %v371
    %v390 = vmul.f32 %v382, %v375
    %391 = vadd.xlane.f32.xlu0 %v390
    %v392 = vpop.xlane.xlu0 %391
    %v393 = vsel %vm385, %v392, %v375
    %v394 = vmul.f32 %v382, %v379
    %395 = vadd.xlane.f32.xlu0 %v394
    %v396 = vpop.xlane.xlu0 %395
    %v397 = vsel %vm385, %v396, %v379
    %s398 = scalar_lea.vmem [#allocation2], 20
    %v399 = vld [vmem:[%s398] ss:$0 sm:$0xff]
    %v400 = vxor.u32 %v399, 2147483648
    %v401 = vlaneseq
    %v402 = vand.u32 %v401, 127
    %vm403 = vcmp.eq.s32.totalorder %v402, 20
    %v404 = vmul.f32 %v400, %v389
    %405 = vadd.xlane.f32.xlu0 %v404
    %v406 = vpop.xlane.xlu0 %405
    %v407 = vsel %vm403, %v406, %v389
    %v408 = vmul.f32 %v400, %v393
    %409 = vadd.xlane.f32.xlu0 %v408
    %v410 = vpop.xlane.xlu0 %409
    %v411 = vsel %vm403, %v410, %v393
    %v412 = vmul.f32 %v400, %v397
    %413 = vadd.xlane.f32.xlu0 %v412
    %v414 = vpop.xlane.xlu0 %413
    %v415 = vsel %vm403, %v414, %v397
    %s416 = scalar_lea.vmem [#allocation2], 21
    %v417 = vld [vmem:[%s416] ss:$0 sm:$0xff]
    %v418 = vxor.u32 %v417, 2147483648
    %v419 = vlaneseq
    %v420 = vand.u32 %v419, 127
    %vm421 = vcmp.eq.s32.totalorder %v420, 21
    %v422 = vmul.f32 %v418, %v407
    %423 = vadd.xlane.f32.xlu0 %v422
    %v424 = vpop.xlane.xlu0 %423
    %v425 = vsel %vm421, %v424, %v407
    %v426 = vmul.f32 %v418, %v411
    %427 = vadd.xlane.f32.xlu0 %v426
    %v428 = vpop.xlane.xlu0 %427
    %v429 = vsel %vm421, %v428, %v411
    %v430 = vmul.f32 %v418, %v415
    %431 = vadd.xlane.f32.xlu0 %v430
    %v432 = vpop.xlane.xlu0 %431
    %v433 = vsel %vm421, %v432, %v415
    %s434 = scalar_lea.vmem [#allocation2], 22
    %v435 = vld [vmem:[%s434] ss:$0 sm:$0xff]
    %v436 = vxor.u32 %v435, 2147483648
    %v437 = vlaneseq
    %v438 = vand.u32 %v437, 127
    %vm439 = vcmp.eq.s32.totalorder %v438, 22
    %v440 = vmul.f32 %v436, %v425
    %441 = vadd.xlane.f32.xlu0 %v440
    %v442 = vpop.xlane.xlu0 %441
    %v443 = vsel %vm439, %v442, %v425
    %v444 = vmul.f32 %v436, %v429
    %445 = vadd.xlane.f32.xlu0 %v444
    %v446 = vpop.xlane.xlu0 %445
    %v447 = vsel %vm439, %v446, %v429
    %v448 = vmul.f32 %v436, %v433
    %449 = vadd.xlane.f32.xlu0 %v448
    %v450 = vpop.xlane.xlu0 %449
    %v451 = vsel %vm439, %v450, %v433
    %s452 = scalar_lea.vmem [#allocation2], 23
    %v453 = vld [vmem:[%s452] ss:$0 sm:$0xff]
    %v454 = vxor.u32 %v453, 2147483648
    %v455 = vlaneseq
    %v456 = vand.u32 %v455, 127
    %vm457 = vcmp.eq.s32.totalorder %v456, 23
    %v458 = vmul.f32 %v454, %v443
    %459 = vadd.xlane.f32.xlu0 %v458
    %v460 = vpop.xlane.xlu0 %459
    %v461 = vsel %vm457, %v460, %v443
    %v462 = vmul.f32 %v454, %v447
    %463 = vadd.xlane.f32.xlu0 %v462
    %v464 = vpop.xlane.xlu0 %463
    %v465 = vsel %vm457, %v464, %v447
    %v466 = vmul.f32 %v454, %v451
    %467 = vadd.xlane.f32.xlu0 %v466
    %v468 = vpop.xlane.xlu0 %467
    %v469 = vsel %vm457, %v468, %v451
    %s470 = scalar_lea.vmem [#allocation2], 24
    %v471 = vld [vmem:[%s470] ss:$0 sm:$0xff]
    %v472 = vxor.u32 %v471, 2147483648
    %v473 = vlaneseq
    %v474 = vand.u32 %v473, 127
    %vm475 = vcmp.eq.s32.totalorder %v474, 24
    %v476 = vmul.f32 %v472, %v461
    %477 = vadd.xlane.f32.xlu0 %v476
    %v478 = vpop.xlane.xlu0 %477
    %v479 = vsel %vm475, %v478, %v461
    %v480 = vmul.f32 %v472, %v465
    %481 = vadd.xlane.f32.xlu0 %v480
    %v482 = vpop.xlane.xlu0 %481
    %v483 = vsel %vm475, %v482, %v465
    %v484 = vmul.f32 %v472, %v469
    %485 = vadd.xlane.f32.xlu0 %v484
    %v486 = vpop.xlane.xlu0 %485
    %v487 = vsel %vm475, %v486, %v469
    %v488 = vmul.f32 %v472, %v143
    %489 = vadd.xlane.f32.xlu0 %v488
    %v490 = vpop.xlane.xlu0 %489
    %v491 = vsel %vm475, %v490, %v143
    %s492 = scalar_lea.vmem [#allocation2], 25
    %v493 = vld [vmem:[%s492] ss:$0 sm:$0xff]
    %v494 = vxor.u32 %v493, 2147483648
    %v495 = vlaneseq
    %v496 = vand.u32 %v495, 127
    %vm497 = vcmp.eq.s32.totalorder %v496, 25
    %v498 = vmul.f32 %v494, %v479
    %499 = vadd.xlane.f32.xlu0 %v498
    %v500 = vpop.xlane.xlu0 %499
    %v501 = vsel %vm497, %v500, %v479
    %v502 = vmul.f32 %v494, %v483
    %503 = vadd.xlane.f32.xlu0 %v502
    %v504 = vpop.xlane.xlu0 %503
    %v505 = vsel %vm497, %v504, %v483
    %v506 = vmul.f32 %v494, %v487
    %507 = vadd.xlane.f32.xlu0 %v506
    %v508 = vpop.xlane.xlu0 %507
    %v509 = vsel %vm497, %v508, %v487
    %v510 = vmul.f32 %v494, %v491
    %511 = vadd.xlane.f32.xlu0 %v510
    %v512 = vpop.xlane.xlu0 %511
    %v513 = vsel %vm497, %v512, %v491
    %s514 = scalar_lea.vmem [#allocation2], 26
    %v515 = vld [vmem:[%s514] ss:$0 sm:$0xff]
    %v516 = vxor.u32 %v515, 2147483648
    %v517 = vlaneseq
    %v518 = vand.u32 %v517, 127
    %vm519 = vcmp.eq.s32.totalorder %v518, 26
    %v520 = vmul.f32 %v516, %v501
    %521 = vadd.xlane.f32.xlu0 %v520
    %v522 = vpop.xlane.xlu0 %521
    %v523 = vsel %vm519, %v522, %v501
    %v524 = vmul.f32 %v516, %v505
    %525 = vadd.xlane.f32.xlu0 %v524
    %v526 = vpop.xlane.xlu0 %525
    %v527 = vsel %vm519, %v526, %v505
    %v528 = vmul.f32 %v516, %v509
    %529 = vadd.xlane.f32.xlu0 %v528
    %v530 = vpop.xlane.xlu0 %529
    %v531 = vsel %vm519, %v530, %v509
    %v532 = vmul.f32 %v516, %v513
    %533 = vadd.xlane.f32.xlu0 %v532
    %v534 = vpop.xlane.xlu0 %533
    %v535 = vsel %vm519, %v534, %v513
    %s536 = scalar_lea.vmem [#allocation2], 27
    %v537 = vld [vmem:[%s536] ss:$0 sm:$0xff]
    %v538 = vxor.u32 %v537, 2147483648
    %v539 = vlaneseq
    %v540 = vand.u32 %v539, 127
    %vm541 = vcmp.eq.s32.totalorder %v540, 27
    %v542 = vmul.f32 %v538, %v523
    %543 = vadd.xlane.f32.xlu0 %v542
    %v544 = vpop.xlane.xlu0 %543
    %v545 = vsel %vm541, %v544, %v523
    %v546 = vmul.f32 %v538, %v527
    %547 = vadd.xlane.f32.xlu0 %v546
    %v548 = vpop.xlane.xlu0 %547
    %v549 = vsel %vm541, %v548, %v527
    %v550 = vmul.f32 %v538, %v531
    %551 = vadd.xlane.f32.xlu0 %v550
    %v552 = vpop.xlane.xlu0 %551
    %v553 = vsel %vm541, %v552, %v531
    %v554 = vmul.f32 %v538, %v535
    %555 = vadd.xlane.f32.xlu0 %v554
    %v556 = vpop.xlane.xlu0 %555
    %v557 = vsel %vm541, %v556, %v535
    %s558 = scalar_lea.vmem [#allocation2], 28
    %v559 = vld [vmem:[%s558] ss:$0 sm:$0xff]
    %v560 = vxor.u32 %v559, 2147483648
    %v561 = vlaneseq
    %v562 = vand.u32 %v561, 127
    %vm563 = vcmp.eq.s32.totalorder %v562, 28
    %v564 = vmul.f32 %v560, %v545
    %565 = vadd.xlane.f32.xlu0 %v564
    %v566 = vpop.xlane.xlu0 %565
    %v567 = vsel %vm563, %v566, %v545
    %v568 = vmul.f32 %v560, %v549
    %569 = vadd.xlane.f32.xlu0 %v568
    %v570 = vpop.xlane.xlu0 %569
    %v571 = vsel %vm563, %v570, %v549
    %v572 = vmul.f32 %v560, %v553
    %573 = vadd.xlane.f32.xlu0 %v572
    %v574 = vpop.xlane.xlu0 %573
    %v575 = vsel %vm563, %v574, %v553
    %v576 = vmul.f32 %v560, %v557
    %577 = vadd.xlane.f32.xlu0 %v576
    %v578 = vpop.xlane.xlu0 %577
    %v579 = vsel %vm563, %v578, %v557
    %s580 = scalar_lea.vmem [#allocation2], 29
    %v581 = vld [vmem:[%s580] ss:$0 sm:$0xff]
    %v582 = vxor.u32 %v581, 2147483648
    %v583 = vlaneseq
    %v584 = vand.u32 %v583, 127
    %vm585 = vcmp.eq.s32.totalorder %v584, 29
    %v586 = vmul.f32 %v582, %v567
    %587 = vadd.xlane.f32.xlu0 %v586
    %v588 = vpop.xlane.xlu0 %587
    %v589 = vsel %vm585, %v588, %v567
    %v590 = vmul.f32 %v582, %v571
    %591 = vadd.xlane.f32.xlu0 %v590
    %v592 = vpop.xlane.xlu0 %591
    %v593 = vsel %vm585, %v592, %v571
    %v594 = vmul.f32 %v582, %v575
    %595 = vadd.xlane.f32.xlu0 %v594
    %v596 = vpop.xlane.xlu0 %595
    %v597 = vsel %vm585, %v596, %v575
    %v598 = vmul.f32 %v582, %v579
    %599 = vadd.xlane.f32.xlu0 %v598
    %v600 = vpop.xlane.xlu0 %599
    %v601 = vsel %vm585, %v600, %v579
    %s602 = scalar_lea.vmem [#allocation2], 30
    %v603 = vld [vmem:[%s602] ss:$0 sm:$0xff]
    %v604 = vxor.u32 %v603, 2147483648
    %v605 = vlaneseq
    %v606 = vand.u32 %v605, 127
    %vm607 = vcmp.eq.s32.totalorder %v606, 30
    %v608 = vmul.f32 %v604, %v589
    %609 = vadd.xlane.f32.xlu0 %v608
    %v610 = vpop.xlane.xlu0 %609
    %v611 = vsel %vm607, %v610, %v589
    %v612 = vmul.f32 %v604, %v593
    %613 = vadd.xlane.f32.xlu0 %v612
    %v614 = vpop.xlane.xlu0 %613
    %v615 = vsel %vm607, %v614, %v593
    %v616 = vmul.f32 %v604, %v597
    %617 = vadd.xlane.f32.xlu0 %v616
    %v618 = vpop.xlane.xlu0 %617
    %v619 = vsel %vm607, %v618, %v597
    %v620 = vmul.f32 %v604, %v601
    %621 = vadd.xlane.f32.xlu0 %v620
    %v622 = vpop.xlane.xlu0 %621
    %v623 = vsel %vm607, %v622, %v601
    %s624 = scalar_lea.vmem [#allocation2], 31
    %v625 = vld [vmem:[%s624] ss:$0 sm:$0xff]
    %v626 = vxor.u32 %v625, 2147483648
    %v627 = vlaneseq
    %v628 = vand.u32 %v627, 127
    %vm629 = vcmp.eq.s32.totalorder %v628, 31
    %v630 = vmul.f32 %v626, %v611
    %631 = vadd.xlane.f32.xlu0 %v630
    %v632 = vpop.xlane.xlu0 %631
    %v633 = vsel %vm629, %v632, %v611
    %v634 = vmul.f32 %v626, %v615
    %635 = vadd.xlane.f32.xlu0 %v634
    %v636 = vpop.xlane.xlu0 %635
    %v637 = vsel %vm629, %v636, %v615
    %v638 = vmul.f32 %v626, %v619
    %639 = vadd.xlane.f32.xlu0 %v638
    %v640 = vpop.xlane.xlu0 %639
    %v641 = vsel %vm629, %v640, %v619
    %v642 = vmul.f32 %v626, %v623
    %643 = vadd.xlane.f32.xlu0 %v642
    %v644 = vpop.xlane.xlu0 %643
    %v645 = vsel %vm629, %v644, %v623
    %v646 = vrcp.pop %v57
    %v647 = vmul.f32 %v633, %v646
    %vm648 = vweird.f32 %v57
    %v649 = vsel %vm648, %v633, %v647
    %650 = vst [vmem:[#allocation1] sm:$0xff] %v649
    %v651 = vrcp.pop %v73
    %v652 = vmul.f32 %v637, %v651
    %vm653 = vweird.f32 %v73
    %v654 = vsel %vm653, %v637, %v652
    %s655 = scalar_lea.vmem [#allocation1], 8
    %656 = vst [vmem:[%s655] sm:$0xff] %v654
    %v657 = vrcp.pop %v89
    %v658 = vmul.f32 %v641, %v657
    %vm659 = vweird.f32 %v89
    %v660 = vsel %vm659, %v641, %v658
    %s661 = scalar_lea.vmem [#allocation1], 16
    %662 = vst [vmem:[%s661] sm:$0xff] %v660
    %v663 = vrcp.pop %v105
    %v664 = vmul.f32 %v645, %v663
    %vm665 = vweird.f32 %v105
    %v666 = vsel %vm665, %v645, %v664
    %s667 = scalar_lea.vmem [#allocation1], 24
    %668 = vst [vmem:[%s667] sm:$0xff] %v666
    // Predicated region
    $region36: #{custom-call.59} parent=1 // pred_check
      _
    $region37: #{custom-call.59} parent=1 // pred_check_branch
      %670 = sbr.rel (0) target = $region39
    $region38: #{custom-call.59} parent=1 // pred_region
      // Predicated region
      $region40: #{custom-call.59} parent=38 // pred_check
        _
      $region41: #{custom-call.59} parent=38 // pred_check_branch
        %672 = sbr.rel (0) target = $region43
      $region42: #{custom-call.59} parent=38 // pred_region
        // Predicated region
        $region55: #{custom-call.59} parent=42 // pred_check
          _
        $region56: #{custom-call.59} parent=42 // pred_check_branch
          %694 = sbr.rel (0) target = $region58
        $region57: #{custom-call.59} parent=42 // pred_region
          loop: start=0, step=1, limit=1
          $region59: #{custom-call.59} parent=57 // loop_pre_header
            _
          $region60: #{custom-call.59} parent=57 // loop_header
            %s696 = sphi 0, %s700
            %p697 = scmp.ge.s32.totalorder %s696, 1
            %s701 = sphi [#allocation1], [#allocation1]
            %s702 = sphi %s1, %s1
          $region61: #{custom-call.59} parent=57 // loop_header_branch
            %699 = sbr.rel (%p697) target = $region65
          $region62: #{custom-call.59} parent=57 // loop_body
            %v703 = vld [vmem:[%s701] sm:$0xff]
            %704 = vst [vmem:[%s702] sm:$0xff] %v703
            %v705 = vld [vmem:[%s701 + $0x8] sm:$0xff]
            %706 = vst [vmem:[%s702 + $0x8] sm:$0xff] %v705
            %v707 = vld [vmem:[%s701 + $0x10] sm:$0xff]
            %708 = vst [vmem:[%s702 + $0x10] sm:$0xff] %v707
            %v709 = vld [vmem:[%s701 + $0x18] sm:$0xff]
            %710 = vst [vmem:[%s702 + $0x18] sm:$0xff] %v709
          $region63: #{custom-call.59} parent=57 // loop_footer
            %s700 = sadd.s32 1, %s696
          $region64: #{custom-call.59} parent=57 // loop_footer_branch
            %695 = sbr.rel target = $region60
          $region65: #{custom-call.59} parent=57 // loop_exit
            _
        $region58: #{custom-call.59} parent=42 // pred_fallthru
          _
        // Predicated region
        $region66: #{custom-call.59} parent=42 // pred_check
          _
        $region67: #{custom-call.59} parent=42 // pred_check_branch
          %712 = sbr.rel target = $region69
        $region68: #{custom-call.59} parent=42 // pred_region
          _
        $region69: #{custom-call.59} parent=42 // pred_fallthru
          _
      $region43: #{custom-call.59} parent=38 // pred_fallthru
        _
      // Predicated region
      $region44: #{custom-call.59} parent=38 // pred_check
        _
      $region45: #{custom-call.59} parent=38 // pred_check_branch
        %674 = sbr.rel target = $region47
      $region46: #{custom-call.59} parent=38 // pred_region
        %s676 = ssub.s32 256, 1
        loop: start=0, step=1, limit=1
        $region48: #{custom-call.59} parent=46 // loop_pre_header
          _
        $region49: #{custom-call.59} parent=46 // loop_header
          %s678 = sphi 0, %s682
          %p679 = scmp.ge.s32.totalorder %s678, 1
          %s683 = sphi [#allocation1], [#allocation1]
          %s684 = sphi %s1, %s1
        $region50: #{custom-call.59} parent=46 // loop_header_branch
          %681 = sbr.rel (%p679) target = $region54
        $region51: #{custom-call.59} parent=46 // loop_body
          %v685 = vld [vmem:[%s683] sm:%s676]
          %686 = vst [vmem:[%s684] sm:%s676] %v685
          %v687 = vld [vmem:[%s683 + $0x8] sm:%s676]
          %688 = vst [vmem:[%s684 + $0x8] sm:%s676] %v687
          %v689 = vld [vmem:[%s683 + $0x10] sm:%s676]
          %690 = vst [vmem:[%s684 + $0x10] sm:%s676] %v689
          %v691 = vld [vmem:[%s683 + $0x18] sm:%s676]
          %692 = vst [vmem:[%s684 + $0x18] sm:%s676] %v691
        $region52: #{custom-call.59} parent=46 // loop_footer
          %s682 = sadd.s32 1, %s678
        $region53: #{custom-call.59} parent=46 // loop_footer_branch
          %677 = sbr.rel target = $region49
        $region54: #{custom-call.59} parent=46 // loop_exit
          _
      $region47: #{custom-call.59} parent=38 // pred_fallthru
        _
    $region39: #{custom-call.59} parent=1 // pred_fallthru
      _
    %713 = vnop

// kernel: custom-call.22
$region0: #{custom-call.22}
  %s0 = inlined_call_operand.vmem [shape: f32[16,16], index: 0, kind: input, shape index: {}]
  %s1 = inlined_call_operand.vmem [shape: f32[16,16], index: 1, kind: input, shape index: {}]
  %s2 = inlined_call_operand.vmem [shape: f32[16,16], index: 2, kind: input, shape index: {}]
  %s3 = inlined_call_operand.vmem [shape: f32[16,16], index: 3, kind: input, shape index: {}]
  %s4 = inlined_call_operand.vmem [shape: f32[16], index: 4, kind: output, shape index: {0}]
  %s5 = inlined_call_operand.vmem [shape: f32[16], index: 5, kind: output, shape index: {1}]
  %s6 = inlined_call_operand.vmem [shape: f32[16,16], index: 6, kind: output, shape index: {2}]
  %s7 = inlined_call_operand.vmem [shape: f32[16,16], index: 7, kind: output, shape index: {3}]
  %s8 = inlined_call_operand.vmem [shape: f32[16,16], index: 8, kind: output, shape index: {4}]
  %s9 = inlined_call_operand.vmem [shape: f32[16,16], index: 9, kind: output, shape index: {5}]
  %10 = xla_tuple %s4, %s5, %s6, %s7, %s8, %s9
  $region1: #{custom-call.22} parent=0
    #allocation0 [shape = 'u8[8192]{0}', space=vmem, size = 0x2000, scoped, tag = 'operand span for operand 0']
    #allocation1 [shape = 'u8[8192]{0}', space=vmem, size = 0x2000, scoped, tag = 'operand span for operand 1']
    #allocation2 [shape = 'u8[8192]{0}', space=vmem, size = 0x2000, scoped, tag = 'operand span for operand 2']
    #allocation3 [shape = 'u8[8192]{0}', space=vmem, size = 0x2000, scoped, tag = 'operand span for operand 3']
    #allocation4 [shape = 'u8[4096]{0}', space=vmem, size = 0x1000, scoped, tag = 'operand span for operand 4']
    #allocation5 [shape = 'u8[512]{0}', space=vmem, size = 0x400, scoped, tag = 'packed  for operand 4']
    #allocation6 [shape = 'u8[4096]{0}', space=vmem, size = 0x1000, scoped, tag = 'operand span for operand 5']
    #allocation7 [shape = 'u8[512]{0}', space=vmem, size = 0x400, scoped, tag = 'packed  for operand 5']
    #allocation8 [shape = 'u8[8192]{0}', space=vmem, size = 0x2000, scoped, tag = 'operand span for operand 6']
    #allocation9 [shape = 'u8[8192]{0}', space=vmem, size = 0x2000, scoped, tag = 'operand span for operand 7']
    #allocation10 [shape = 'u8[8192]{0}', space=vmem, size = 0x2000, scoped, tag = 'operand span for operand 8']
    #allocation11 [shape = 'u8[8192]{0}', space=vmem, size = 0x2000, scoped, tag = 'operand span for operand 9']
    #allocation12 [shape = 'f32[16,16]{1,0}', space=vmem, size = 0x2000, scoped, tag = 'a top-left matrix']
    #allocation13 [shape = 'f32[16,16]{1,0}', space=vmem, size = 0x2000, scoped, tag = 'a top-right matrix']
    #allocation14 [shape = 'f32[16,16]{1,0}', space=vmem, size = 0x2000, scoped, tag = 'a bottom-left matrix']
    #allocation15 [shape = 'f32[16,16]{1,0}', space=vmem, size = 0x2000, scoped, tag = 'a bottom-right matrix']
    %p12 = scmp.gt.s32.totalorder 16, 0
    // Predicated region
    $region2: #{custom-call.22} parent=1 // pred_check
      %p13 = pneg %p12
    $region3: #{custom-call.22} parent=1 // pred_check_branch
      %15 = sbr.rel (%p13) target = $region5
    $region4: #{custom-call.22} parent=1 // pred_region
      %s16 = sshra.s32 16, 3
      %p17 = scmp.gt.s32.totalorder %s16, 0
      // Predicated region
      $region6: #{custom-call.22} parent=4 // pred_check
        %p18 = pneg %p17
      $region7: #{custom-call.22} parent=4 // pred_check_branch
        %20 = sbr.rel (%p18) target = $region9
      $region8: #{custom-call.22} parent=4 // pred_region
        %s21 = ssub.s32 %s16, 1
        %s22 = smul.u32 %s21, 128
        %s23 = sshra.s32 %s22, 4
        %s24 = scalar_lea.vmem %s0, %s23
        %v25 = vld [vmem:[%s0] sm:$0xff]
        // While loop
        $region10: #{custom-call.22} parent=8 // loop_pre_header
          _
        $region11: #{custom-call.22} parent=8 // loop_header
          %s26 = sphi %s0, %s48
          %s27 = sphi [#allocation0], %s49
          %v28 = vphi %v25, %v50
          %s29 = ssub.s32 %s24, 64
          %p30 = scmp.gt.s32.totalorder %s26, %s29
        $region12: #{custom-call.22} parent=8 // loop_header_branch
          %32 = sbr.rel (%p30) target = $region16
        $region13: #{custom-call.22} parent=8 // loop_body
          %33 = vst [vmem:[%s27] sm:$0xff] %v28
          %v34 = vld [vmem:[%s26 + $0x8] sm:$0xff]
          %35 = vst [vmem:[%s27 + $0x8] sm:$0xff] %v34
          %v36 = vld [vmem:[%s26 + $0x10] sm:$0xff]
          %37 = vst [vmem:[%s27 + $0x10] sm:$0xff] %v36
          %v38 = vld [vmem:[%s26 + $0x18] sm:$0xff]
          %39 = vst [vmem:[%s27 + $0x18] sm:$0xff] %v38
          %v40 = vld [vmem:[%s26 + $0x20] sm:$0xff]
          %41 = vst [vmem:[%s27 + $0x20] sm:$0xff] %v40
          %v42 = vld [vmem:[%s26 + $0x28] sm:$0xff]
          %43 = vst [vmem:[%s27 + $0x28] sm:$0xff] %v42
          %v44 = vld [vmem:[%s26 + $0x30] sm:$0xff]
          %45 = vst [vmem:[%s27 + $0x30] sm:$0xff] %v44
          %v46 = vld [vmem:[%s26 + $0x38] sm:$0xff]
          %47 = vst [vmem:[%s27 + $0x38] sm:$0xff] %v46
        $region14: #{custom-call.22} parent=8 // loop_footer
          %s48 = scalar_lea.vmem %s26, 64
          %s49 = scalar_lea.vmem %s27, 64
          %v50 = vld [vmem:[%s26 + $0x40] sm:$0xff]
        $region15: #{custom-call.22} parent=8 // loop_footer_branch
          %51 = sbr.rel target = $region11
        $region16: #{custom-call.22} parent=8 // loop_exit
          _
        // While loop
        $region17: #{custom-call.22} parent=8 // loop_pre_header
          _
        $region18: #{custom-call.22} parent=8 // loop_header
          %s52 = sphi %s26, %s60
          %s53 = sphi %s27, %s61
          %v54 = vphi %v28, %v54
          %p55 = scmp.gt.s32.totalorder %s52, %s24
        $region19: #{custom-call.22} parent=8 // loop_header_branch
          %57 = sbr.rel (%p55) target = $region23
        $region20: #{custom-call.22} parent=8 // loop_body
          %v58 = vld [vmem:[%s52] sm:$0xff]
          %59 = vst [vmem:[%s53] sm:$0xff] %v58
        $region21: #{custom-call.22} parent=8 // loop_footer
          %s60 = scalar_lea.vmem %s52, 8
          %s61 = scalar_lea.vmem %s53, 8
        $region22: #{custom-call.22} parent=8 // loop_footer_branch
          %62 = sbr.rel target = $region18
        $region23: #{custom-call.22} parent=8 // loop_exit
          _
      $region9: #{custom-call.22} parent=4 // pred_fallthru
        _
      %s63 = sand.u32 16, 7
      %s64 = sshll.u32 1, %s63
      %s65 = ssub.s32 %s64, 1
      %s66 = smul.u32 %s16, 128
      %s67 = sshra.s32 %s66, 4
      %s68 = scalar_lea.vmem [#allocation0], %s67
      %s69 = smul.u32 %s16, 128
      %s70 = sshra.s32 %s69, 4
      %s71 = scalar_lea.vmem %s0, %s70
      %v72 = vld [vmem:[%s71] sm:%s65]
      %73 = vst [vmem:[%s68] sm:%s65] %v72
    $region5: #{custom-call.22} parent=1 // pred_fallthru
      _
    %p75 = scmp.gt.s32.totalorder 16, 0
    // Predicated region
    $region24: #{custom-call.22} parent=1 // pred_check
      %p76 = pneg %p75
    $region25: #{custom-call.22} parent=1 // pred_check_branch
      %78 = sbr.rel (%p76) target = $region27
    $region26: #{custom-call.22} parent=1 // pred_region
      %s79 = sshra.s32 16, 3
      %p80 = scmp.gt.s32.totalorder %s79, 0
      // Predicated region
      $region28: #{custom-call.22} parent=26 // pred_check
        %p81 = pneg %p80
      $region29: #{custom-call.22} parent=26 // pred_check_branch
        %83 = sbr.rel (%p81) target = $region31
      $region30: #{custom-call.22} parent=26 // pred_region
        %s84 = ssub.s32 %s79, 1
        %s85 = smul.u32 %s84, 128
        %s86 = sshra.s32 %s85, 4
        %s87 = scalar_lea.vmem %s1, %s86
        %v88 = vld [vmem:[%s1] sm:$0xff]
        // While loop
        $region32: #{custom-call.22} parent=30 // loop_pre_header
          _
        $region33: #{custom-call.22} parent=30 // loop_header
          %s89 = sphi %s1, %s111
          %s90 = sphi [#allocation1], %s112
          %v91 = vphi %v88, %v113
          %s92 = ssub.s32 %s87, 64
          %p93 = scmp.gt.s32.totalorder %s89, %s92
        $region34: #{custom-call.22} parent=30 // loop_header_branch
          %95 = sbr.rel (%p93) target = $region38
        $region35: #{custom-call.22} parent=30 // loop_body
          %96 = vst [vmem:[%s90] sm:$0xff] %v91
          %v97 = vld [vmem:[%s89 + $0x8] sm:$0xff]
          %98 = vst [vmem:[%s90 + $0x8] sm:$0xff] %v97
          %v99 = vld [vmem:[%s89 + $0x10] sm:$0xff]
          %100 = vst [vmem:[%s90 + $0x10] sm:$0xff] %v99
          %v101 = vld [vmem:[%s89 + $0x18] sm:$0xff]
          %102 = vst [vmem:[%s90 + $0x18] sm:$0xff] %v101
          %v103 = vld [vmem:[%s89 + $0x20] sm:$0xff]
          %104 = vst [vmem:[%s90 + $0x20] sm:$0xff] %v103
          %v105 = vld [vmem:[%s89 + $0x28] sm:$0xff]
          %106 = vst [vmem:[%s90 + $0x28] sm:$0xff] %v105
          %v107 = vld [vmem:[%s89 + $0x30] sm:$0xff]
          %108 = vst [vmem:[%s90 + $0x30] sm:$0xff] %v107
          %v109 = vld [vmem:[%s89 + $0x38] sm:$0xff]
          %110 = vst [vmem:[%s90 + $0x38] sm:$0xff] %v109
        $region36: #{custom-call.22} parent=30 // loop_footer
          %s111 = scalar_lea.vmem %s89, 64
          %s112 = scalar_lea.vmem %s90, 64
          %v113 = vld [vmem:[%s89 + $0x40] sm:$0xff]
        $region37: #{custom-call.22} parent=30 // loop_footer_branch
          %114 = sbr.rel target = $region33
        $region38: #{custom-call.22} parent=30 // loop_exit
          _
        // While loop
        $region39: #{custom-call.22} parent=30 // loop_pre_header
          _
        $region40: #{custom-call.22} parent=30 // loop_header
          %s115 = sphi %s89, %s123
          %s116 = sphi %s90, %s124
          %v117 = vphi %v91, %v117
          %p118 = scmp.gt.s32.totalorder %s115, %s87
        $region41: #{custom-call.22} parent=30 // loop_header_branch
          %120 = sbr.rel (%p118) target = $region45
        $region42: #{custom-call.22} parent=30 // loop_body
          %v121 = vld [vmem:[%s115] sm:$0xff]
          %122 = vst [vmem:[%s116] sm:$0xff] %v121
        $region43: #{custom-call.22} parent=30 // loop_footer
          %s123 = scalar_lea.vmem %s115, 8
          %s124 = scalar_lea.vmem %s116, 8
        $region44: #{custom-call.22} parent=30 // loop_footer_branch
          %125 = sbr.rel target = $region40
        $region45: #{custom-call.22} parent=30 // loop_exit
          _
      $region31: #{custom-call.22} parent=26 // pred_fallthru
        _
      %s126 = sand.u32 16, 7
      %s127 = sshll.u32 1, %s126
      %s128 = ssub.s32 %s127, 1
      %s129 = smul.u32 %s79, 128
      %s130 = sshra.s32 %s129, 4
      %s131 = scalar_lea.vmem [#allocation1], %s130
      %s132 = smul.u32 %s79, 128
      %s133 = sshra.s32 %s132, 4
      %s134 = scalar_lea.vmem %s1, %s133
      %v135 = vld [vmem:[%s134] sm:%s128]
      %136 = vst [vmem:[%s131] sm:%s128] %v135
    $region27: #{custom-call.22} parent=1 // pred_fallthru
      _
    %p138 = scmp.gt.s32.totalorder 16, 0
    // Predicated region
    $region46: #{custom-call.22} parent=1 // pred_check
      %p139 = pneg %p138
    $region47: #{custom-call.22} parent=1 // pred_check_branch
      %141 = sbr.rel (%p139) target = $region49
    $region48: #{custom-call.22} parent=1 // pred_region
      %s142 = sshra.s32 16, 3
      %p143 = scmp.gt.s32.totalorder %s142, 0
      // Predicated region
      $region50: #{custom-call.22} parent=48 // pred_check
        %p144 = pneg %p143
      $region51: #{custom-call.22} parent=48 // pred_check_branch
        %146 = sbr.rel (%p144) target = $region53
      $region52: #{custom-call.22} parent=48 // pred_region
        %s147 = ssub.s32 %s142, 1
        %s148 = smul.u32 %s147, 128
        %s149 = sshra.s32 %s148, 4
        %s150 = scalar_lea.vmem %s2, %s149
        %v151 = vld [vmem:[%s2] sm:$0xff]
        // While loop
        $region54: #{custom-call.22} parent=52 // loop_pre_header
          _
        $region55: #{custom-call.22} parent=52 // loop_header
          %s152 = sphi %s2, %s174
          %s153 = sphi [#allocation2], %s175
          %v154 = vphi %v151, %v176
          %s155 = ssub.s32 %s150, 64
          %p156 = scmp.gt.s32.totalorder %s152, %s155
        $region56: #{custom-call.22} parent=52 // loop_header_branch
          %158 = sbr.rel (%p156) target = $region60
        $region57: #{custom-call.22} parent=52 // loop_body
          %159 = vst [vmem:[%s153] sm:$0xff] %v154
          %v160 = vld [vmem:[%s152 + $0x8] sm:$0xff]
          %161 = vst [vmem:[%s153 + $0x8] sm:$0xff] %v160
          %v162 = vld [vmem:[%s152 + $0x10] sm:$0xff]
          %163 = vst [vmem:[%s153 + $0x10] sm:$0xff] %v162
          %v164 = vld [vmem:[%s152 + $0x18] sm:$0xff]
          %165 = vst [vmem:[%s153 + $0x18] sm:$0xff] %v164
          %v166 = vld [vmem:[%s152 + $0x20] sm:$0xff]
          %167 = vst [vmem:[%s153 + $0x20] sm:$0xff] %v166
          %v168 = vld [vmem:[%s152 + $0x28] sm:$0xff]
          %169 = vst [vmem:[%s153 + $0x28] sm:$0xff] %v168
          %v170 = vld [vmem:[%s152 + $0x30] sm:$0xff]
          %171 = vst [vmem:[%s153 + $0x30] sm:$0xff] %v170
          %v172 = vld [vmem:[%s152 + $0x38] sm:$0xff]
          %173 = vst [vmem:[%s153 + $0x38] sm:$0xff] %v172
        $region58: #{custom-call.22} parent=52 // loop_footer
          %s174 = scalar_lea.vmem %s152, 64
          %s175 = scalar_lea.vmem %s153, 64
          %v176 = vld [vmem:[%s152 + $0x40] sm:$0xff]
        $region59: #{custom-call.22} parent=52 // loop_footer_branch
          %177 = sbr.rel target = $region55
        $region60: #{custom-call.22} parent=52 // loop_exit
          _
        // While loop
        $region61: #{custom-call.22} parent=52 // loop_pre_header
          _
        $region62: #{custom-call.22} parent=52 // loop_header
          %s178 = sphi %s152, %s186
          %s179 = sphi %s153, %s187
          %v180 = vphi %v154, %v180
          %p181 = scmp.gt.s32.totalorder %s178, %s150
        $region63: #{custom-call.22} parent=52 // loop_header_branch
          %183 = sbr.rel (%p181) target = $region67
        $region64: #{custom-call.22} parent=52 // loop_body
          %v184 = vld [vmem:[%s178] sm:$0xff]
          %185 = vst [vmem:[%s179] sm:$0xff] %v184
        $region65: #{custom-call.22} parent=52 // loop_footer
          %s186 = scalar_lea.vmem %s178, 8
          %s187 = scalar_lea.vmem %s179, 8
        $region66: #{custom-call.22} parent=52 // loop_footer_branch
          %188 = sbr.rel target = $region62
        $region67: #{custom-call.22} parent=52 // loop_exit
          _
      $region53: #{custom-call.22} parent=48 // pred_fallthru
        _
      %s189 = sand.u32 16, 7
      %s190 = sshll.u32 1, %s189
      %s191 = ssub.s32 %s190, 1
      %s192 = smul.u32 %s142, 128
      %s193 = sshra.s32 %s192, 4
      %s194 = scalar_lea.vmem [#allocation2], %s193
      %s195 = smul.u32 %s142, 128
      %s196 = sshra.s32 %s195, 4
      %s197 = scalar_lea.vmem %s2, %s196
      %v198 = vld [vmem:[%s197] sm:%s191]
      %199 = vst [vmem:[%s194] sm:%s191] %v198
    $region49: #{custom-call.22} parent=1 // pred_fallthru
      _
    %p201 = scmp.gt.s32.totalorder 16, 0
    // Predicated region
    $region68: #{custom-call.22} parent=1 // pred_check
      %p202 = pneg %p201
    $region69: #{custom-call.22} parent=1 // pred_check_branch
      %204 = sbr.rel (%p202) target = $region71
    $region70: #{custom-call.22} parent=1 // pred_region
      %s205 = sshra.s32 16, 3
      %p206 = scmp.gt.s32.totalorder %s205, 0
      // Predicated region
      $region72: #{custom-call.22} parent=70 // pred_check
        %p207 = pneg %p206
      $region73: #{custom-call.22} parent=70 // pred_check_branch
        %209 = sbr.rel (%p207) target = $region75
      $region74: #{custom-call.22} parent=70 // pred_region
        %s210 = ssub.s32 %s205, 1
        %s211 = smul.u32 %s210, 128
        %s212 = sshra.s32 %s211, 4
        %s213 = scalar_lea.vmem %s3, %s212
        %v214 = vld [vmem:[%s3] sm:$0xff]
        // While loop
        $region76: #{custom-call.22} parent=74 // loop_pre_header
          _
        $region77: #{custom-call.22} parent=74 // loop_header
          %s215 = sphi %s3, %s237
          %s216 = sphi [#allocation3], %s238
          %v217 = vphi %v214, %v239
          %s218 = ssub.s32 %s213, 64
          %p219 = scmp.gt.s32.totalorder %s215, %s218
        $region78: #{custom-call.22} parent=74 // loop_header_branch
          %221 = sbr.rel (%p219) target = $region82
        $region79: #{custom-call.22} parent=74 // loop_body
          %222 = vst [vmem:[%s216] sm:$0xff] %v217
          %v223 = vld [vmem:[%s215 + $0x8] sm:$0xff]
          %224 = vst [vmem:[%s216 + $0x8] sm:$0xff] %v223
          %v225 = vld [vmem:[%s215 + $0x10] sm:$0xff]
          %226 = vst [vmem:[%s216 + $0x10] sm:$0xff] %v225
          %v227 = vld [vmem:[%s215 + $0x18] sm:$0xff]
          %228 = vst [vmem:[%s216 + $0x18] sm:$0xff] %v227
          %v229 = vld [vmem:[%s215 + $0x20] sm:$0xff]
          %230 = vst [vmem:[%s216 + $0x20] sm:$0xff] %v229
          %v231 = vld [vmem:[%s215 + $0x28] sm:$0xff]
          %232 = vst [vmem:[%s216 + $0x28] sm:$0xff] %v231
          %v233 = vld [vmem:[%s215 + $0x30] sm:$0xff]
          %234 = vst [vmem:[%s216 + $0x30] sm:$0xff] %v233
          %v235 = vld [vmem:[%s215 + $0x38] sm:$0xff]
          %236 = vst [vmem:[%s216 + $0x38] sm:$0xff] %v235
        $region80: #{custom-call.22} parent=74 // loop_footer
          %s237 = scalar_lea.vmem %s215, 64
          %s238 = scalar_lea.vmem %s216, 64
          %v239 = vld [vmem:[%s215 + $0x40] sm:$0xff]
        $region81: #{custom-call.22} parent=74 // loop_footer_branch
          %240 = sbr.rel target = $region77
        $region82: #{custom-call.22} parent=74 // loop_exit
          _
        // While loop
        $region83: #{custom-call.22} parent=74 // loop_pre_header
          _
        $region84: #{custom-call.22} parent=74 // loop_header
          %s241 = sphi %s215, %s249
          %s242 = sphi %s216, %s250
          %v243 = vphi %v217, %v243
          %p244 = scmp.gt.s32.totalorder %s241, %s213
        $region85: #{custom-call.22} parent=74 // loop_header_branch
          %246 = sbr.rel (%p244) target = $region89
        $region86: #{custom-call.22} parent=74 // loop_body
          %v247 = vld [vmem:[%s241] sm:$0xff]
          %248 = vst [vmem:[%s242] sm:$0xff] %v247
        $region87: #{custom-call.22} parent=74 // loop_footer
          %s249 = scalar_lea.vmem %s241, 8
          %s250 = scalar_lea.vmem %s242, 8
        $region88: #{custom-call.22} parent=74 // loop_footer_branch
          %251 = sbr.rel target = $region84
        $region89: #{custom-call.22} parent=74 // loop_exit
          _
      $region75: #{custom-call.22} parent=70 // pred_fallthru
        _
      %s252 = sand.u32 16, 7
      %s253 = sshll.u32 1, %s252
      %s254 = ssub.s32 %s253, 1
      %s255 = smul.u32 %s205, 128
      %s256 = sshra.s32 %s255, 4
      %s257 = scalar_lea.vmem [#allocation3], %s256
      %s258 = smul.u32 %s205, 128
      %s259 = sshra.s32 %s258, 4
      %s260 = scalar_lea.vmem %s3, %s259
      %v261 = vld [vmem:[%s260] sm:%s254]
      %262 = vst [vmem:[%s257] sm:%s254] %v261
    $region71: #{custom-call.22} parent=1 // pred_fallthru
      _
    %s263 = smov [#allocation12]
    %v264 = vld [vmem:[#allocation0] sm:$0xff]
    %265 = vst [vmem:[%s263] sm:$0xff] %v264
    %s266 = scalar_lea.vmem %s263, 8
    %s267 = scalar_lea.vmem [#allocation0], 8
    %v268 = vld [vmem:[%s267] sm:$0xff]
    %269 = vst [vmem:[%s266] sm:$0xff] %v268
    %s270 = smov [#allocation13]
    %v271 = vld [vmem:[#allocation1] sm:$0xff]
    %272 = vst [vmem:[%s270] sm:$0xff] %v271
    %s273 = scalar_lea.vmem %s270, 8
    %s274 = scalar_lea.vmem [#allocation1], 8
    %v275 = vld [vmem:[%s274] sm:$0xff]
    %276 = vst [vmem:[%s273] sm:$0xff] %v275
    %s277 = smov [#allocation14]
    %v278 = vld [vmem:[#allocation2] sm:$0xff]
    %279 = vst [vmem:[%s277] sm:$0xff] %v278
    %s280 = scalar_lea.vmem %s277, 8
    %s281 = scalar_lea.vmem [#allocation2], 8
    %v282 = vld [vmem:[%s281] sm:$0xff]
    %283 = vst [vmem:[%s280] sm:$0xff] %v282
    %s284 = smov [#allocation15]
    %v285 = vld [vmem:[#allocation3] sm:$0xff]
    %286 = vst [vmem:[%s284] sm:$0xff] %v285
    %s287 = scalar_lea.vmem %s284, 8
    %s288 = scalar_lea.vmem [#allocation3], 8
    %v289 = vld [vmem:[%s288] sm:$0xff]
    %290 = vst [vmem:[%s287] sm:$0xff] %v289
    %291 = vst [vmem:[#allocation8] sm:$0xff] 0.0
    %s292 = scalar_lea.vmem [#allocation8], 8
    %293 = vst [vmem:[%s292] sm:$0xff] 0.0
    %294 = vst [vmem:[#allocation9] sm:$0xff] 0.0
    %s295 = scalar_lea.vmem [#allocation9], 8
    %296 = vst [vmem:[%s295] sm:$0xff] 0.0
    %297 = vst [vmem:[#allocation10] sm:$0xff] 0.0
    %s298 = scalar_lea.vmem [#allocation10], 8
    %299 = vst [vmem:[%s298] sm:$0xff] 0.0
    %300 = vst [vmem:[#allocation11] sm:$0xff] 0.0
    %s301 = scalar_lea.vmem [#allocation11], 8
    %302 = vst [vmem:[%s301] sm:$0xff] 0.0
    %s303 = smov [#allocation8]
    %v304 = vlaneseq
    %v305 = vand.u32 %v304, 127
    %v306 = vmov %v305
    %v307 = vlaneseq
    %v308 = vshrl.u32 %v307, 7
    %v309 = vmov %v308
    %v310 = vld [vmem:[%s303] sm:$0xff]
    %vm313 = vcmp.eq.s32.totalorder %v309, %v306
    %v314 = vsel %vm313, 1.0, %v310
    %315 = vst [vmem:[%s303] sm:$0xff] %v314
    %s316 = scalar_lea.vmem %s303, 8
    %v317 = vld [vmem:[%s316] sm:$0xff]
    %v319 = vadd.s32 %v309, 8
    %vm320 = vcmp.eq.s32.totalorder %v319, %v306
    %v321 = vsel %vm320, 1.0, %v317
    %322 = vst [vmem:[%s316] sm:$0xff] %v321
    %s323 = smov [#allocation11]
    %v324 = vlaneseq
    %v325 = vand.u32 %v324, 127
    %v326 = vmov %v325
    %v327 = vlaneseq
    %v328 = vshrl.u32 %v327, 7
    %v329 = vmov %v328
    %v330 = vld [vmem:[%s323] sm:$0xff]
    %vm333 = vcmp.eq.s32.totalorder %v329, %v326
    %v334 = vsel %vm333, 1.0, %v330
    %335 = vst [vmem:[%s323] sm:$0xff] %v334
    %s336 = scalar_lea.vmem %s323, 8
    %v337 = vld [vmem:[%s336] sm:$0xff]
    %v339 = vadd.s32 %v329, 8
    %vm340 = vcmp.eq.s32.totalorder %v339, %v326
    %v341 = vsel %vm340, 1.0, %v337
    %342 = vst [vmem:[%s336] sm:$0xff] %v341
    // While loop
    $region90: #{custom-call.22} parent=1 // loop_pre_header
      _
    $region91: #{custom-call.22} parent=1 // loop_header
      %s344 = sphi 0, %s1242
      %v345 = vlaneseq
      %v346 = vand.u32 %v345, 127
      %v347 = vmov %v346
      %v348 = vlaneseq
      %v349 = vshrl.u32 %v348, 7
      %v350 = vmov %v349
      %s351 = smov [#allocation12]
      %v352 = vlaneseq
      %v353 = vand.u32 %v352, 127
      %vm354 = vcmp.ge.s32.totalorder %v353, 0
      %vm355 = vcmp.lt.s32.totalorder %v353, 16
      %vm356 = vmand %vm354, %vm355
      %v357 = vld [vmem:[%s351] sm:$0xff]
      %v358 = vsel %vm356, %v357, 0.0
      %v359 = vmul.f32 %v358, %v358
      %vm362 = vcmp.eq.s32.totalorder %v350, %v347
      %v363 = vsel %vm362, 0.0, %v359
      %s364 = scalar_lea.vmem %s351, 8
      %v365 = vld [vmem:[%s364] sm:$0xff]
      %v366 = vsel %vm356, %v365, 0.0
      %v367 = vmul.f32 %v366, %v366
      %v369 = vadd.s32 %v350, 8
      %vm370 = vcmp.eq.s32.totalorder %v369, %v347
      %v371 = vsel %vm370, 0.0, %v367
      %v372 = vadd.f32 %v363, %v371
      %v373 = vadd.f32 %v359, %v367
      %v374 = vlaneseq
      %v375 = vand.u32 %v374, 127
      %v376 = vmov %v375
      %v377 = vlaneseq
      %v378 = vshrl.u32 %v377, 7
      %v379 = vmov %v378
      %s380 = smov [#allocation13]
      %v381 = vlaneseq
      %v382 = vand.u32 %v381, 127
      %vm383 = vcmp.ge.s32.totalorder %v382, 0
      %vm384 = vcmp.lt.s32.totalorder %v382, 16
      %vm385 = vmand %vm383, %vm384
      %v386 = vld [vmem:[%s380] sm:$0xff]
      %v387 = vsel %vm385, %v386, 0.0
      %v388 = vmul.f32 %v387, %v387
      %v389 = vadd.f32 %v372, %v388
      %v390 = vadd.f32 %v373, %v388
      %s391 = scalar_lea.vmem %s380, 8
      %v392 = vld [vmem:[%s391] sm:$0xff]
      %v393 = vsel %vm385, %v392, 0.0
      %v394 = vmul.f32 %v393, %v393
      %v395 = vadd.f32 %v389, %v394
      %v396 = vadd.f32 %v390, %v394
      %v397 = vlaneseq
      %v398 = vand.u32 %v397, 127
      %v399 = vmov %v398
      %v400 = vlaneseq
      %v401 = vshrl.u32 %v400, 7
      %v402 = vmov %v401
      %s403 = smov [#allocation14]
      %v404 = vlaneseq
      %v405 = vand.u32 %v404, 127
      %vm406 = vcmp.ge.s32.totalorder %v405, 0
      %vm407 = vcmp.lt.s32.totalorder %v405, 16
      %vm408 = vmand %vm406, %vm407
      %v409 = vld [vmem:[%s403] sm:$0xff]
      %v410 = vsel %vm408, %v409, 0.0
      %v411 = vmul.f32 %v410, %v410
      %v412 = vadd.f32 %v395, %v411
      %v413 = vadd.f32 %v396, %v411
      %s414 = scalar_lea.vmem %s403, 8
      %v415 = vld [vmem:[%s414] sm:$0xff]
      %v416 = vsel %vm408, %v415, 0.0
      %v417 = vmul.f32 %v416, %v416
      %v418 = vadd.f32 %v412, %v417
      %v419 = vadd.f32 %v413, %v417
      %v420 = vlaneseq
      %v421 = vand.u32 %v420, 127
      %v422 = vmov %v421
      %v423 = vlaneseq
      %v424 = vshrl.u32 %v423, 7
      %v425 = vmov %v424
      %s426 = smov [#allocation15]
      %v427 = vlaneseq
      %v428 = vand.u32 %v427, 127
      %vm429 = vcmp.ge.s32.totalorder %v428, 0
      %vm430 = vcmp.lt.s32.totalorder %v428, 16
      %vm431 = vmand %vm429, %vm430
      %v432 = vld [vmem:[%s426] sm:$0xff]
      %v433 = vsel %vm431, %v432, 0.0
      %v434 = vmul.f32 %v433, %v433
      %vm437 = vcmp.eq.s32.totalorder %v425, %v422
      %v438 = vsel %vm437, 0.0, %v434
      %v439 = vadd.f32 %v418, %v438
      %v440 = vadd.f32 %v419, %v434
      %s441 = scalar_lea.vmem %s426, 8
      %v442 = vld [vmem:[%s441] sm:$0xff]
      %v443 = vsel %vm431, %v442, 0.0
      %v444 = vmul.f32 %v443, %v443
      %v446 = vadd.s32 %v425, 8
      %vm447 = vcmp.eq.s32.totalorder %v446, %v422
      %v448 = vsel %vm447, 0.0, %v444
      %v449 = vadd.f32 %v439, %v448
      %v450 = vadd.f32 %v440, %v444
      %451 = vadd.xlane.f32.xlu0 %v450
      %v452 = vpop.xlane.xlu0 %451
      %v453 = vrot.slane %v452, 4
      %v454 = vadd.f32 %v452, %v453
      %v455 = vrot.slane %v454, 2
      %v456 = vadd.f32 %v454, %v455
      %v457 = vrot.slane %v456, 1
      %v458 = vadd.f32 %v456, %v457
      %459 = vadd.xlane.f32.xlu0 %v449
      %v460 = vpop.xlane.xlu0 %459
      %v461 = vrot.slane %v460, 4
      %v462 = vadd.f32 %v460, %v461
      %v463 = vrot.slane %v462, 2
      %v464 = vadd.f32 %v462, %v463
      %v465 = vrot.slane %v464, 1
      %v466 = vadd.f32 %v464, %v465
      %s467 = vtos %v466
      %s468 = vtos %v458
      %s469 = smul.f32 1e-10, %s468
      %p470 = scmp.le.f32.partialorder %s467, %s469
      %p471 = scmp.ge.s32.totalorder %s344, 15
      %p472 = por %p470, %p471
    $region92: #{custom-call.22} parent=1 // loop_header_branch
      %1244 = sbr.rel (%p472) target = $region96
    $region93: #{custom-call.22} parent=1 // loop_body
      loop: start=0, step=1, limit=31
      $region97: #{custom-call.22} parent=93 // loop_pre_header
        _
      $region98: #{custom-call.22} parent=93 // loop_header
        %s474 = sphi 0, %s478
        %p475 = scmp.ge.s32.totalorder %s474, 31
      $region99: #{custom-call.22} parent=93 // loop_header_branch
        %477 = sbr.rel (%p475) target = $region103
      $region100: #{custom-call.22} parent=93 // loop_body
        #allocation16 [shape = 'f32[1024]{0}', space=vmem, size = 0x1000, scoped, tag = 'a_tl_diag vmem']
        #allocation17 [shape = 'f32[1024]{0}', space=vmem, size = 0x1000, scoped, tag = 'a_tr_diag vmem']
        #allocation18 [shape = 'f32[1024]{0}', space=vmem, size = 0x1000, scoped, tag = 'a_br_diag vmem']
        #allocation19 [shape = 'f32[1024]{0}', space=vmem, size = 0x1000, scoped, tag = 'rt1 vmem']
        #allocation20 [shape = 'f32[1024]{0}', space=vmem, size = 0x1000, scoped, tag = 'rt2 vmem']
        #allocation21 [shape = 'f32[1024]{0}', space=vmem, size = 0x1000, scoped, tag = 'c vmem']
        #allocation22 [shape = 'f32[1024]{0}', space=vmem, size = 0x1000, scoped, tag = 's vmem']
        #allocation23 [shape = 'f32[8192]{0}', space=vmem, size = 0x8000, scoped, tag = 'c broadcast']
        #allocation24 [shape = 'f32[8192]{0}', space=vmem, size = 0x8000, scoped, tag = 's broadcast']
        %s479 = smov [#allocation12]
        %s480 = smov [#allocation16]
        %v481 = vlaneseq
        %v482 = vand.u32 %v481, 127
        %v483 = vmov %v482
        %v484 = vlaneseq
        %v485 = vshrl.u32 %v484, 7
        %v486 = vmov %v485
        %v487 = vld [vmem:[%s479] sm:$0xff]
        %vm490 = vcmp.eq.s32.totalorder %v486, %v483
        %v491 = vsel %vm490, %v487, 0.0
        %s492 = scalar_lea.vmem %s479, 8
        %v493 = vld [vmem:[%s492] sm:$0xff]
        %v495 = vadd.s32 %v486, 8
        %vm496 = vcmp.eq.s32.totalorder %v495, %v483
        %v497 = vsel %vm496, %v493, %v491
        %v498 = vrot.slane %v497, 4
        %v499 = vadd.f32 %v497, %v498
        %v500 = vrot.slane %v499, 2
        %v501 = vadd.f32 %v499, %v500
        %v502 = vrot.slane %v501, 1
        %v503 = vadd.f32 %v501, %v502
        %504 = vst [vmem:[%s480] sm:$0x1] %v503
        %s505 = smov [#allocation13]
        %s506 = smov [#allocation17]
        %v507 = vlaneseq
        %v508 = vand.u32 %v507, 127
        %v509 = vmov %v508
        %v510 = vlaneseq
        %v511 = vshrl.u32 %v510, 7
        %v512 = vmov %v511
        %v513 = vld [vmem:[%s505] sm:$0xff]
        %vm516 = vcmp.eq.s32.totalorder %v512, %v509
        %v517 = vsel %vm516, %v513, 0.0
        %s518 = scalar_lea.vmem %s505, 8
        %v519 = vld [vmem:[%s518] sm:$0xff]
        %v521 = vadd.s32 %v512, 8
        %vm522 = vcmp.eq.s32.totalorder %v521, %v509
        %v523 = vsel %vm522, %v519, %v517
        %v524 = vrot.slane %v523, 4
        %v525 = vadd.f32 %v523, %v524
        %v526 = vrot.slane %v525, 2
        %v527 = vadd.f32 %v525, %v526
        %v528 = vrot.slane %v527, 1
        %v529 = vadd.f32 %v527, %v528
        %530 = vst [vmem:[%s506] sm:$0x1] %v529
        %s531 = smov [#allocation15]
        %s532 = smov [#allocation18]
        %v533 = vlaneseq
        %v534 = vand.u32 %v533, 127
        %v535 = vmov %v534
        %v536 = vlaneseq
        %v537 = vshrl.u32 %v536, 7
        %v538 = vmov %v537
        %v539 = vld [vmem:[%s531] sm:$0xff]
        %vm542 = vcmp.eq.s32.totalorder %v538, %v535
        %v543 = vsel %vm542, %v539, 0.0
        %s544 = scalar_lea.vmem %s531, 8
        %v545 = vld [vmem:[%s544] sm:$0xff]
        %v547 = vadd.s32 %v538, 8
        %vm548 = vcmp.eq.s32.totalorder %v547, %v535
        %v549 = vsel %vm548, %v545, %v543
        %v550 = vrot.slane %v549, 4
        %v551 = vadd.f32 %v549, %v550
        %v552 = vrot.slane %v551, 2
        %v553 = vadd.f32 %v551, %v552
        %v554 = vrot.slane %v553, 1
        %v555 = vadd.f32 %v553, %v554
        %556 = vst [vmem:[%s532] sm:$0x1] %v555
        %s557 = smov [#allocation21]
        %s558 = smov [#allocation22]
        %s559 = smov [#allocation16]
        %v560 = vld [vmem:[%s559] sm:$0xff]
        %s561 = smov [#allocation17]
        %v562 = vld [vmem:[%s561] sm:$0xff]
        %s563 = smov [#allocation18]
        %v564 = vld [vmem:[%s563] sm:$0xff]
        %v565 = vsub.f32 %v564, %v560
        %v566 = vmul.f32 2.0, %v562
        %v567 = vrcp.pop %v566
        %v568 = vmul.f32 %v565, %v567
        %vm569 = vcmp.ge.f32.partialorder %v568, 0.0
        %v570 = vmul.f32 %v568, %v568
        %v571 = vadd.f32 1.0, %v570
        %v572 = vrsqrt.pop %v571
        %v573 = vmul.f32 %v571, %v572
        %vm574 = vcmp.eq.f32.partialorder %v571, inf
        %v575 = vsel %vm574, %v571, %v573
        %vm576 = vcmp.eq.f32.partialorder %v571, 0.0
        %v577 = vand.u32 %v571, 2147483648
        %v578 = vsel %vm576, %v577, %v575
        %v579 = vxor.u32 %v578, 2147483648
        %v580 = vsel %vm569, %v578, %v579
        %v581 = vadd.f32 %v568, %v580
        %v582 = vrcp.pop %v581
        %v583 = vand.u32 2147483647, %v560
        %v584 = vand.u32 2147483647, %v562
        %v585 = vand.u32 2147483647, %v564
        %v586 = vmin.f32 %v583, %v585
        %v587 = vmul.f32 1.1920929e-08, %v586
        %vm588 = vcmp.le.f32.partialorder %v584, %v587
        %v589 = vsel %vm588, 0.0, %v582
        %v590 = vmul.f32 %v589, %v589
        %v591 = vadd.f32 1.0, %v590
        %v592 = vrsqrt.pop %v591
        %v593 = vmul.f32 %v589, %v592
        %v594 = vmul.f32 %v589, %v562
        %v595 = vsub.f32 %v560, %v594
        %v596 = vmul.f32 %v589, %v562
        %v597 = vadd.f32 %v564, %v596
        %s598 = smov [#allocation19]
        %599 = vst [vmem:[%s598] sm:$0xff] %v595
        %s600 = smov [#allocation20]
        %601 = vst [vmem:[%s600] sm:$0xff] %v597
        %s602 = smov %s557
        %603 = vst [vmem:[%s602] sm:$0xff] %v592
        %s604 = smov %s558
        %605 = vst [vmem:[%s604] sm:$0xff] %v593
        %s606 = smov [#allocation21]
        %v607 = vld [vmem:[%s606] ss:$0 sm:$0xff]
        %v608 = vlaneseq
        %v609 = vand.u32 %v608, 127
        %v610 = vmov %v609
        %v611 = vlaneseq
        %v612 = vshrl.u32 %v611, 7
        %v613 = vmov %v612
        %vm615 = vcmp.eq.s32.totalorder %v613, %v610
        %v616 = vsel %vm615, %v607, 0.0
        %617 = vadd.xlane.f32.xlu0 %v616
        %v618 = vpop.xlane.xlu0 %617
        %s619 = smov [#allocation23]
        %620 = vst [vmem:[%s619] sm:$0xff] %v618
        %s621 = smov [#allocation21]
        %v622 = vld [vmem:[%s621] ss:$0 sm:$0xff]
        %v623 = vlaneseq
        %v624 = vand.u32 %v623, 127
        %v625 = vmov %v624
        %v626 = vlaneseq
        %v627 = vshrl.u32 %v626, 7
        %v628 = vmov %v627
        %v629 = vadd.s32 %v628, 8
        %vm630 = vcmp.eq.s32.totalorder %v629, %v625
        %v631 = vsel %vm630, %v622, 0.0
        %632 = vadd.xlane.f32.xlu0 %v631
        %v633 = vpop.xlane.xlu0 %632
        %s634 = smov [#allocation23]
        %s635 = scalar_lea.vmem %s634, 8
        %636 = vst [vmem:[%s635] sm:$0xff] %v633
        %s637 = smov [#allocation22]
        %v638 = vld [vmem:[%s637] ss:$0 sm:$0xff]
        %v639 = vlaneseq
        %v640 = vand.u32 %v639, 127
        %v641 = vmov %v640
        %v642 = vlaneseq
        %v643 = vshrl.u32 %v642, 7
        %v644 = vmov %v643
        %vm646 = vcmp.eq.s32.totalorder %v644, %v641
        %v647 = vsel %vm646, %v638, 0.0
        %648 = vadd.xlane.f32.xlu0 %v647
        %v649 = vpop.xlane.xlu0 %648
        %s650 = smov [#allocation24]
        %651 = vst [vmem:[%s650] sm:$0xff] %v649
        %s652 = smov [#allocation22]
        %v653 = vld [vmem:[%s652] ss:$0 sm:$0xff]
        %v654 = vlaneseq
        %v655 = vand.u32 %v654, 127
        %v656 = vmov %v655
        %v657 = vlaneseq
        %v658 = vshrl.u32 %v657, 7
        %v659 = vmov %v658
        %v660 = vadd.s32 %v659, 8
        %vm661 = vcmp.eq.s32.totalorder %v660, %v656
        %v662 = vsel %vm661, %v653, 0.0
        %663 = vadd.xlane.f32.xlu0 %v662
        %v664 = vpop.xlane.xlu0 %663
        %s665 = smov [#allocation24]
        %s666 = scalar_lea.vmem %s665, 8
        %667 = vst [vmem:[%s666] sm:$0xff] %v664
        %s668 = smov [#allocation23]
        %v669 = vld [vmem:[%s668] sm:$0xff]
        %s670 = smov [#allocation24]
        %v671 = vld [vmem:[%s670] sm:$0xff]
        %s672 = smov [#allocation12]
        %s673 = smov [#allocation13]
        %s674 = smov [#allocation14]
        %s675 = smov [#allocation15]
        %v676 = vld [vmem:[%s672] sm:$0xff]
        %v677 = vld [vmem:[%s673] sm:$0xff]
        %v678 = vld [vmem:[%s674] sm:$0xff]
        %v679 = vld [vmem:[%s675] sm:$0xff]
        %v680 = vmul.f32 %v669, %v676
        %v681 = vmul.f32 %v671, %v678
        %v682 = vsub.f32 %v680, %v681
        %v683 = vmul.f32 %v669, %v677
        %v684 = vmul.f32 %v671, %v679
        %v685 = vsub.f32 %v683, %v684
        %v686 = vmul.f32 %v671, %v676
        %v687 = vmul.f32 %v669, %v678
        %v688 = vadd.f32 %v686, %v687
        %v689 = vmul.f32 %v671, %v677
        %v690 = vmul.f32 %v669, %v679
        %v691 = vadd.f32 %v689, %v690
        %692 = vst [vmem:[%s672] sm:$0xff] %v682
        %693 = vst [vmem:[%s673] sm:$0xff] %v685
        %694 = vst [vmem:[%s674] sm:$0xff] %v688
        %695 = vst [vmem:[%s675] sm:$0xff] %v691
        %s696 = smov [#allocation23]
        %s697 = scalar_lea.vmem %s696, 8
        %v698 = vld [vmem:[%s697] sm:$0xff]
        %s699 = smov [#allocation24]
        %s700 = scalar_lea.vmem %s699, 8
        %v701 = vld [vmem:[%s700] sm:$0xff]
        %s702 = smov [#allocation12]
        %s703 = scalar_lea.vmem %s702, 8
        %s704 = smov [#allocation13]
        %s705 = scalar_lea.vmem %s704, 8
        %s706 = smov [#allocation14]
        %s707 = scalar_lea.vmem %s706, 8
        %s708 = smov [#allocation15]
        %s709 = scalar_lea.vmem %s708, 8
        %v710 = vld [vmem:[%s703] sm:$0xff]
        %v711 = vld [vmem:[%s705] sm:$0xff]
        %v712 = vld [vmem:[%s707] sm:$0xff]
        %v713 = vld [vmem:[%s709] sm:$0xff]
        %v714 = vmul.f32 %v698, %v710
        %v715 = vmul.f32 %v701, %v712
        %v716 = vsub.f32 %v714, %v715
        %v717 = vmul.f32 %v698, %v711
        %v718 = vmul.f32 %v701, %v713
        %v719 = vsub.f32 %v717, %v718
        %v720 = vmul.f32 %v701, %v710
        %v721 = vmul.f32 %v698, %v712
        %v722 = vadd.f32 %v720, %v721
        %v723 = vmul.f32 %v701, %v711
        %v724 = vmul.f32 %v698, %v713
        %v725 = vadd.f32 %v723, %v724
        %726 = vst [vmem:[%s703] sm:$0xff] %v716
        %727 = vst [vmem:[%s705] sm:$0xff] %v719
        %728 = vst [vmem:[%s707] sm:$0xff] %v722
        %729 = vst [vmem:[%s709] sm:$0xff] %v725
        %s730 = smov [#allocation21]
        %v731 = vld [vmem:[%s730] ss:$0 sm:$0xff]
        %s732 = smov [#allocation22]
        %v733 = vld [vmem:[%s732] ss:$0 sm:$0xff]
        %s734 = smov [#allocation12]
        %s735 = smov [#allocation13]
        %s736 = smov [#allocation14]
        %s737 = smov [#allocation15]
        %v738 = vld [vmem:[%s734] sm:$0xff]
        %v739 = vld [vmem:[%s735] sm:$0xff]
        %v740 = vld [vmem:[%s736] sm:$0xff]
        %v741 = vld [vmem:[%s737] sm:$0xff]
        %v742 = vmul.f32 %v731, %v738
        %v743 = vmul.f32 %v733, %v739
        %v744 = vsub.f32 %v742, %v743
        %v745 = vmul.f32 %v733, %v738
        %v746 = vmul.f32 %v731, %v739
        %v747 = vadd.f32 %v745, %v746
        %v748 = vmul.f32 %v731, %v740
        %v749 = vmul.f32 %v733, %v741
        %v750 = vsub.f32 %v748, %v749
        %v751 = vmul.f32 %v733, %v740
        %v752 = vmul.f32 %v731, %v741
        %v753 = vadd.f32 %v751, %v752
        %754 = vst [vmem:[%s734] sm:$0xff] %v744
        %755 = vst [vmem:[%s735] sm:$0xff] %v747
        %756 = vst [vmem:[%s736] sm:$0xff] %v750
        %757 = vst [vmem:[%s737] sm:$0xff] %v753
        %s758 = smov [#allocation12]
        %s759 = scalar_lea.vmem %s758, 8
        %s760 = smov [#allocation13]
        %s761 = scalar_lea.vmem %s760, 8
        %s762 = smov [#allocation14]
        %s763 = scalar_lea.vmem %s762, 8
        %s764 = smov [#allocation15]
        %s765 = scalar_lea.vmem %s764, 8
        %v766 = vld [vmem:[%s759] sm:$0xff]
        %v767 = vld [vmem:[%s761] sm:$0xff]
        %v768 = vld [vmem:[%s763] sm:$0xff]
        %v769 = vld [vmem:[%s765] sm:$0xff]
        %v770 = vmul.f32 %v731, %v766
        %v771 = vmul.f32 %v733, %v767
        %v772 = vsub.f32 %v770, %v771
        %v773 = vmul.f32 %v733, %v766
        %v774 = vmul.f32 %v731, %v767
        %v775 = vadd.f32 %v773, %v774
        %v776 = vmul.f32 %v731, %v768
        %v777 = vmul.f32 %v733, %v769
        %v778 = vsub.f32 %v776, %v777
        %v779 = vmul.f32 %v733, %v768
        %v780 = vmul.f32 %v731, %v769
        %v781 = vadd.f32 %v779, %v780
        %782 = vst [vmem:[%s759] sm:$0xff] %v772
        %783 = vst [vmem:[%s761] sm:$0xff] %v775
        %784 = vst [vmem:[%s763] sm:$0xff] %v778
        %785 = vst [vmem:[%s765] sm:$0xff] %v781
        %s786 = smov [#allocation12]
        %s787 = smov [#allocation19]
        %v788 = vlaneseq
        %v789 = vand.u32 %v788, 127
        %v790 = vmov %v789
        %v791 = vlaneseq
        %v792 = vshrl.u32 %v791, 7
        %v793 = vmov %v792
        %v794 = vld [vmem:[%s787] ss:$0 sm:$0xff]
        %v795 = vld [vmem:[%s786] sm:$0xff]
        %vm798 = vcmp.eq.s32.totalorder %v793, %v790
        %v799 = vsel %vm798, %v794, %v795
        %800 = vst [vmem:[%s786] sm:$0xff] %v799
        %v801 = vld [vmem:[%s787] ss:$0 sm:$0xff]
        %s802 = scalar_lea.vmem %s786, 8
        %v803 = vld [vmem:[%s802] sm:$0xff]
        %v805 = vadd.s32 %v793, 8
        %vm806 = vcmp.eq.s32.totalorder %v805, %v790
        %v807 = vsel %vm806, %v801, %v803
        %808 = vst [vmem:[%s802] sm:$0xff] %v807
        %s809 = smov [#allocation13]
        %v810 = vlaneseq
        %v811 = vand.u32 %v810, 127
        %v812 = vmov %v811
        %v813 = vlaneseq
        %v814 = vshrl.u32 %v813, 7
        %v815 = vmov %v814
        %v816 = vld [vmem:[%s809] sm:$0xff]
        %vm819 = vcmp.eq.s32.totalorder %v815, %v812
        %v820 = vsel %vm819, 0.0, %v816
        %821 = vst [vmem:[%s809] sm:$0xff] %v820
        %s822 = scalar_lea.vmem %s809, 8
        %v823 = vld [vmem:[%s822] sm:$0xff]
        %v825 = vadd.s32 %v815, 8
        %vm826 = vcmp.eq.s32.totalorder %v825, %v812
        %v827 = vsel %vm826, 0.0, %v823
        %828 = vst [vmem:[%s822] sm:$0xff] %v827
        %s829 = smov [#allocation14]
        %v830 = vlaneseq
        %v831 = vand.u32 %v830, 127
        %v832 = vmov %v831
        %v833 = vlaneseq
        %v834 = vshrl.u32 %v833, 7
        %v835 = vmov %v834
        %v836 = vld [vmem:[%s829] sm:$0xff]
        %vm839 = vcmp.eq.s32.totalorder %v835, %v832
        %v840 = vsel %vm839, 0.0, %v836
        %841 = vst [vmem:[%s829] sm:$0xff] %v840
        %s842 = scalar_lea.vmem %s829, 8
        %v843 = vld [vmem:[%s842] sm:$0xff]
        %v845 = vadd.s32 %v835, 8
        %vm846 = vcmp.eq.s32.totalorder %v845, %v832
        %v847 = vsel %vm846, 0.0, %v843
        %848 = vst [vmem:[%s842] sm:$0xff] %v847
        %s849 = smov [#allocation15]
        %s850 = smov [#allocation20]
        %v851 = vlaneseq
        %v852 = vand.u32 %v851, 127
        %v853 = vmov %v852
        %v854 = vlaneseq
        %v855 = vshrl.u32 %v854, 7
        %v856 = vmov %v855
        %v857 = vld [vmem:[%s850] ss:$0 sm:$0xff]
        %v858 = vld [vmem:[%s849] sm:$0xff]
        %vm861 = vcmp.eq.s32.totalorder %v856, %v853
        %v862 = vsel %vm861, %v857, %v858
        %863 = vst [vmem:[%s849] sm:$0xff] %v862
        %v864 = vld [vmem:[%s850] ss:$0 sm:$0xff]
        %s865 = scalar_lea.vmem %s849, 8
        %v866 = vld [vmem:[%s865] sm:$0xff]
        %v868 = vadd.s32 %v856, 8
        %vm869 = vcmp.eq.s32.totalorder %v868, %v853
        %v870 = vsel %vm869, %v864, %v866
        %871 = vst [vmem:[%s865] sm:$0xff] %v870
        %s872 = smov [#allocation12]
        %s873 = smov [#allocation13]
        %v874 = vld [vmem:[%s873] sm:$0xff]
        %875 = vrot.lane.b32.xlu0 %v874, 1
        %v876 = vpop.permute.xlu0 %875
        %v877 = vld [vmem:[%s872] sm:$0xff]
        %v878 = vld [vmem:[%s872] sm:$0xff]
        %879 = vrot.lane.b32.xlu0 %v878, 1
        %v880 = vpop.permute.xlu0 %879
        %v881 = vlaneseq
        %v882 = vand.u32 %v881, 127
        %vm883 = vcmp.eq.s32.totalorder %v882, 0
        %v884 = vsel %vm883, %v878, %v880
        %v885 = vlaneseq
        %v886 = vand.u32 %v885, 127
        %vm887 = vcmp.eq.s32.totalorder %v886, 1
        %v888 = vsel %vm887, %v876, %v884
        %v889 = vlaneseq
        %v890 = vand.u32 %v889, 127
        %vm891 = vcmp.ge.s32.totalorder %v890, 0
        %vm892 = vcmp.lt.s32.totalorder %v890, 16
        %vm893 = vmand %vm891, %vm892
        %v894 = vsel %vm893, %v888, 0.0
        %v895 = vld [vmem:[%s873] sm:$0xff]
        %896 = vrot.lane.b32.xlu0 %v895, 127
        %v897 = vpop.permute.xlu0 %896
        %v898 = vlaneseq
        %v899 = vand.u32 %v898, 127
        %vm900 = vcmp.eq.s32.totalorder %v899, 15
        %v901 = vsel %vm900, %v877, %v897
        %s902 = smov [#allocation12]
        %s903 = scalar_lea.vmem %s902, 8
        %s904 = smov [#allocation13]
        %s905 = scalar_lea.vmem %s904, 8
        %v906 = vld [vmem:[%s905] sm:$0xff]
        %907 = vrot.lane.b32.xlu0 %v906, 1
        %v908 = vpop.permute.xlu0 %907
        %v909 = vld [vmem:[%s903] sm:$0xff]
        %v910 = vld [vmem:[%s903] sm:$0xff]
        %911 = vrot.lane.b32.xlu0 %v910, 1
        %v912 = vpop.permute.xlu0 %911
        %v913 = vlaneseq
        %v914 = vand.u32 %v913, 127
        %vm915 = vcmp.eq.s32.totalorder %v914, 0
        %v916 = vsel %vm915, %v910, %v912
        %v917 = vlaneseq
        %v918 = vand.u32 %v917, 127
        %vm919 = vcmp.eq.s32.totalorder %v918, 1
        %v920 = vsel %vm919, %v908, %v916
        %v921 = vlaneseq
        %v922 = vand.u32 %v921, 127
        %vm923 = vcmp.ge.s32.totalorder %v922, 0
        %vm924 = vcmp.lt.s32.totalorder %v922, 16
        %vm925 = vmand %vm923, %vm924
        %v926 = vsel %vm925, %v920, 0.0
        %v927 = vld [vmem:[%s905] sm:$0xff]
        %928 = vrot.lane.b32.xlu0 %v927, 127
        %v929 = vpop.permute.xlu0 %928
        %v930 = vlaneseq
        %v931 = vand.u32 %v930, 127
        %vm932 = vcmp.eq.s32.totalorder %v931, 15
        %v933 = vsel %vm932, %v909, %v929
        %934 = vst [vmem:[%s872] sm:$0xff] %v894
        %935 = vst [vmem:[%s873] sm:$0xff] %v901
        %936 = vst [vmem:[%s903] sm:$0xff] %v926
        %937 = vst [vmem:[%s905] sm:$0xff] %v933
        %s938 = smov [#allocation14]
        %s939 = smov [#allocation15]
        %v940 = vld [vmem:[%s939] sm:$0xff]
        %941 = vrot.lane.b32.xlu0 %v940, 1
        %v942 = vpop.permute.xlu0 %941
        %v943 = vld [vmem:[%s938] sm:$0xff]
        %v944 = vld [vmem:[%s938] sm:$0xff]
        %945 = vrot.lane.b32.xlu0 %v944, 1
        %v946 = vpop.permute.xlu0 %945
        %v947 = vlaneseq
        %v948 = vand.u32 %v947, 127
        %vm949 = vcmp.eq.s32.totalorder %v948, 0
        %v950 = vsel %vm949, %v944, %v946
        %v951 = vlaneseq
        %v952 = vand.u32 %v951, 127
        %vm953 = vcmp.eq.s32.totalorder %v952, 1
        %v954 = vsel %vm953, %v942, %v950
        %v955 = vlaneseq
        %v956 = vand.u32 %v955, 127
        %vm957 = vcmp.ge.s32.totalorder %v956, 0
        %vm958 = vcmp.lt.s32.totalorder %v956, 16
        %vm959 = vmand %vm957, %vm958
        %v960 = vsel %vm959, %v954, 0.0
        %v961 = vld [vmem:[%s939] sm:$0xff]
        %962 = vrot.lane.b32.xlu0 %v961, 127
        %v963 = vpop.permute.xlu0 %962
        %v964 = vlaneseq
        %v965 = vand.u32 %v964, 127
        %vm966 = vcmp.eq.s32.totalorder %v965, 15
        %v967 = vsel %vm966, %v943, %v963
        %s968 = smov [#allocation14]
        %s969 = scalar_lea.vmem %s968, 8
        %s970 = smov [#allocation15]
        %s971 = scalar_lea.vmem %s970, 8
        %v972 = vld [vmem:[%s971] sm:$0xff]
        %973 = vrot.lane.b32.xlu0 %v972, 1
        %v974 = vpop.permute.xlu0 %973
        %v975 = vld [vmem:[%s969] sm:$0xff]
        %v976 = vld [vmem:[%s969] sm:$0xff]
        %977 = vrot.lane.b32.xlu0 %v976, 1
        %v978 = vpop.permute.xlu0 %977
        %v979 = vlaneseq
        %v980 = vand.u32 %v979, 127
        %vm981 = vcmp.eq.s32.totalorder %v980, 0
        %v982 = vsel %vm981, %v976, %v978
        %v983 = vlaneseq
        %v984 = vand.u32 %v983, 127
        %vm985 = vcmp.eq.s32.totalorder %v984, 1
        %v986 = vsel %vm985, %v974, %v982
        %v987 = vlaneseq
        %v988 = vand.u32 %v987, 127
        %vm989 = vcmp.ge.s32.totalorder %v988, 0
        %vm990 = vcmp.lt.s32.totalorder %v988, 16
        %vm991 = vmand %vm989, %vm990
        %v992 = vsel %vm991, %v986, 0.0
        %v993 = vld [vmem:[%s971] sm:$0xff]
        %994 = vrot.lane.b32.xlu0 %v993, 127
        %v995 = vpop.permute.xlu0 %994
        %v996 = vlaneseq
        %v997 = vand.u32 %v996, 127
        %vm998 = vcmp.eq.s32.totalorder %v997, 15
        %v999 = vsel %vm998, %v975, %v995
        %1000 = vst [vmem:[%s938] sm:$0xff] %v960
        %1001 = vst [vmem:[%s939] sm:$0xff] %v967
        %1002 = vst [vmem:[%s969] sm:$0xff] %v992
        %1003 = vst [vmem:[%s971] sm:$0xff] %v999
        %s1004 = smov [#allocation12]
        %s1005 = smov [#allocation14]
        %v1006 = vld [vmem:[%s1004] ss:$0 sm:$0xff]
        %s1008 = scalar_lea.vmem %s1004, 4294967295
        %v1009 = vld [vmem:[%s1008] sm:$0xfe]
        %v1010 = vlaneseq
        %v1011 = vshrl.u32 %v1010, 7
        %vm1012 = vcmp.eq.s32.totalorder %v1011, 0
        %v1013 = vsel %vm1012, %v1006, %v1009
        %s1014 = scalar_lea.vmem %s1004, 7
        %v1015 = vld [vmem:[%s1014] ss:$0 sm:$0xff]
        %1016 = vst [vmem:[%s1004] sm:$0xff] %v1013
        %s1017 = scalar_lea.vmem %s1004, 8
        %s1019 = scalar_lea.vmem %s1017, 4294967295
        %v1020 = vld [vmem:[%s1019] sm:$0xfe]
        %v1021 = vlaneseq
        %v1022 = vshrl.u32 %v1021, 7
        %vm1023 = vcmp.eq.s32.totalorder %v1022, 0
        %v1024 = vsel %vm1023, %v1015, %v1020
        %s1025 = scalar_lea.vmem %s1017, 7
        %v1026 = vld [vmem:[%s1025] ss:$0 sm:$0xff]
        %1027 = vst [vmem:[%s1017] sm:$0xff] %v1024
        %v1028 = vld [vmem:[%s1005] ss:$0 sm:$0xff]
        %s1029 = scalar_lea.vmem %s1004, 1
        %1030 = vst [vmem:[%s1029] sm:$0x1] %v1028
        %s1031 = scalar_lea.vmem %s1005, 8
        %s1032 = scalar_lea.vmem %s1031, 1
        %v1033 = vld [vmem:[%s1032] sm:$0x7f]
        %v1034 = vlaneseq
        %v1035 = vshrl.u32 %v1034, 7
        %vm1036 = vcmp.eq.s32.totalorder %v1035, 7
        %v1037 = vsel %vm1036, %v1026, %v1033
        %v1038 = vld [vmem:[%s1031] ss:$0 sm:$0xff]
        %1039 = vst [vmem:[%s1031] sm:$0xff] %v1037
        %s1040 = scalar_lea.vmem %s1005, 1
        %v1041 = vld [vmem:[%s1040] sm:$0x7f]
        %v1042 = vlaneseq
        %v1043 = vshrl.u32 %v1042, 7
        %vm1044 = vcmp.eq.s32.totalorder %v1043, 7
        %v1045 = vsel %vm1044, %v1038, %v1041
        %v1046 = vld [vmem:[%s1005] ss:$0 sm:$0xff]
        %1047 = vst [vmem:[%s1005] sm:$0xff] %v1045
        %s1048 = smov [#allocation13]
        %s1049 = smov [#allocation15]
        %v1050 = vld [vmem:[%s1048] ss:$0 sm:$0xff]
        %s1052 = scalar_lea.vmem %s1048, 4294967295
        %v1053 = vld [vmem:[%s1052] sm:$0xfe]
        %v1054 = vlaneseq
        %v1055 = vshrl.u32 %v1054, 7
        %vm1056 = vcmp.eq.s32.totalorder %v1055, 0
        %v1057 = vsel %vm1056, %v1050, %v1053
        %s1058 = scalar_lea.vmem %s1048, 7
        %v1059 = vld [vmem:[%s1058] ss:$0 sm:$0xff]
        %1060 = vst [vmem:[%s1048] sm:$0xff] %v1057
        %s1061 = scalar_lea.vmem %s1048, 8
        %s1063 = scalar_lea.vmem %s1061, 4294967295
        %v1064 = vld [vmem:[%s1063] sm:$0xfe]
        %v1065 = vlaneseq
        %v1066 = vshrl.u32 %v1065, 7
        %vm1067 = vcmp.eq.s32.totalorder %v1066, 0
        %v1068 = vsel %vm1067, %v1059, %v1064
        %s1069 = scalar_lea.vmem %s1061, 7
        %v1070 = vld [vmem:[%s1069] ss:$0 sm:$0xff]
        %1071 = vst [vmem:[%s1061] sm:$0xff] %v1068
        %v1072 = vld [vmem:[%s1049] ss:$0 sm:$0xff]
        %s1073 = scalar_lea.vmem %s1048, 1
        %1074 = vst [vmem:[%s1073] sm:$0x1] %v1072
        %s1075 = scalar_lea.vmem %s1049, 8
        %s1076 = scalar_lea.vmem %s1075, 1
        %v1077 = vld [vmem:[%s1076] sm:$0x7f]
        %v1078 = vlaneseq
        %v1079 = vshrl.u32 %v1078, 7
        %vm1080 = vcmp.eq.s32.totalorder %v1079, 7
        %v1081 = vsel %vm1080, %v1070, %v1077
        %v1082 = vld [vmem:[%s1075] ss:$0 sm:$0xff]
        %1083 = vst [vmem:[%s1075] sm:$0xff] %v1081
        %s1084 = scalar_lea.vmem %s1049, 1
        %v1085 = vld [vmem:[%s1084] sm:$0x7f]
        %v1086 = vlaneseq
        %v1087 = vshrl.u32 %v1086, 7
        %vm1088 = vcmp.eq.s32.totalorder %v1087, 7
        %v1089 = vsel %vm1088, %v1082, %v1085
        %v1090 = vld [vmem:[%s1049] ss:$0 sm:$0xff]
        %1091 = vst [vmem:[%s1049] sm:$0xff] %v1089
        %s1092 = smov [#allocation23]
        %v1093 = vld [vmem:[%s1092] sm:$0xff]
        %s1094 = smov [#allocation24]
        %v1095 = vld [vmem:[%s1094] sm:$0xff]
        %s1096 = smov [#allocation8]
        %s1097 = smov [#allocation9]
        %s1098 = smov [#allocation10]
        %s1099 = smov [#allocation11]
        %v1100 = vld [vmem:[%s1096] sm:$0xff]
        %v1101 = vld [vmem:[%s1097] sm:$0xff]
        %v1102 = vld [vmem:[%s1098] sm:$0xff]
        %v1103 = vld [vmem:[%s1099] sm:$0xff]
        %v1104 = vmul.f32 %v1093, %v1100
        %v1105 = vmul.f32 %v1095, %v1102
        %v1106 = vsub.f32 %v1104, %v1105
        %v1107 = vmul.f32 %v1093, %v1101
        %v1108 = vmul.f32 %v1095, %v1103
        %v1109 = vsub.f32 %v1107, %v1108
        %v1110 = vmul.f32 %v1095, %v1100
        %v1111 = vmul.f32 %v1093, %v1102
        %v1112 = vadd.f32 %v1110, %v1111
        %v1113 = vmul.f32 %v1095, %v1101
        %v1114 = vmul.f32 %v1093, %v1103
        %v1115 = vadd.f32 %v1113, %v1114
        %1116 = vst [vmem:[%s1096] sm:$0xff] %v1106
        %1117 = vst [vmem:[%s1097] sm:$0xff] %v1109
        %1118 = vst [vmem:[%s1098] sm:$0xff] %v1112
        %1119 = vst [vmem:[%s1099] sm:$0xff] %v1115
        %s1120 = smov [#allocation23]
        %s1121 = scalar_lea.vmem %s1120, 8
        %v1122 = vld [vmem:[%s1121] sm:$0xff]
        %s1123 = smov [#allocation24]
        %s1124 = scalar_lea.vmem %s1123, 8
        %v1125 = vld [vmem:[%s1124] sm:$0xff]
        %s1126 = smov [#allocation8]
        %s1127 = scalar_lea.vmem %s1126, 8
        %s1128 = smov [#allocation9]
        %s1129 = scalar_lea.vmem %s1128, 8
        %s1130 = smov [#allocation10]
        %s1131 = scalar_lea.vmem %s1130, 8
        %s1132 = smov [#allocation11]
        %s1133 = scalar_lea.vmem %s1132, 8
        %v1134 = vld [vmem:[%s1127] sm:$0xff]
        %v1135 = vld [vmem:[%s1129] sm:$0xff]
        %v1136 = vld [vmem:[%s1131] sm:$0xff]
        %v1137 = vld [vmem:[%s1133] sm:$0xff]
        %v1138 = vmul.f32 %v1122, %v1134
        %v1139 = vmul.f32 %v1125, %v1136
        %v1140 = vsub.f32 %v1138, %v1139
        %v1141 = vmul.f32 %v1122, %v1135
        %v1142 = vmul.f32 %v1125, %v1137
        %v1143 = vsub.f32 %v1141, %v1142
        %v1144 = vmul.f32 %v1125, %v1134
        %v1145 = vmul.f32 %v1122, %v1136
        %v1146 = vadd.f32 %v1144, %v1145
        %v1147 = vmul.f32 %v1125, %v1135
        %v1148 = vmul.f32 %v1122, %v1137
        %v1149 = vadd.f32 %v1147, %v1148
        %1150 = vst [vmem:[%s1127] sm:$0xff] %v1140
        %1151 = vst [vmem:[%s1129] sm:$0xff] %v1143
        %1152 = vst [vmem:[%s1131] sm:$0xff] %v1146
        %1153 = vst [vmem:[%s1133] sm:$0xff] %v1149
        %s1154 = smov [#allocation8]
        %s1155 = smov [#allocation10]
        %v1156 = vld [vmem:[%s1154] ss:$0 sm:$0xff]
        %s1158 = scalar_lea.vmem %s1154, 4294967295
        %v1159 = vld [vmem:[%s1158] sm:$0xfe]
        %v1160 = vlaneseq
        %v1161 = vshrl.u32 %v1160, 7
        %vm1162 = vcmp.eq.s32.totalorder %v1161, 0
        %v1163 = vsel %vm1162, %v1156, %v1159
        %s1164 = scalar_lea.vmem %s1154, 7
        %v1165 = vld [vmem:[%s1164] ss:$0 sm:$0xff]
        %1166 = vst [vmem:[%s1154] sm:$0xff] %v1163
        %s1167 = scalar_lea.vmem %s1154, 8
        %s1169 = scalar_lea.vmem %s1167, 4294967295
        %v1170 = vld [vmem:[%s1169] sm:$0xfe]
        %v1171 = vlaneseq
        %v1172 = vshrl.u32 %v1171, 7
        %vm1173 = vcmp.eq.s32.totalorder %v1172, 0
        %v1174 = vsel %vm1173, %v1165, %v1170
        %s1175 = scalar_lea.vmem %s1167, 7
        %v1176 = vld [vmem:[%s1175] ss:$0 sm:$0xff]
        %1177 = vst [vmem:[%s1167] sm:$0xff] %v1174
        %v1178 = vld [vmem:[%s1155] ss:$0 sm:$0xff]
        %s1179 = scalar_lea.vmem %s1154, 1
        %1180 = vst [vmem:[%s1179] sm:$0x1] %v1178
        %s1181 = scalar_lea.vmem %s1155, 8
        %s1182 = scalar_lea.vmem %s1181, 1
        %v1183 = vld [vmem:[%s1182] sm:$0x7f]
        %v1184 = vlaneseq
        %v1185 = vshrl.u32 %v1184, 7
        %vm1186 = vcmp.eq.s32.totalorder %v1185, 7
        %v1187 = vsel %vm1186, %v1176, %v1183
        %v1188 = vld [vmem:[%s1181] ss:$0 sm:$0xff]
        %1189 = vst [vmem:[%s1181] sm:$0xff] %v1187
        %s1190 = scalar_lea.vmem %s1155, 1
        %v1191 = vld [vmem:[%s1190] sm:$0x7f]
        %v1192 = vlaneseq
        %v1193 = vshrl.u32 %v1192, 7
        %vm1194 = vcmp.eq.s32.totalorder %v1193, 7
        %v1195 = vsel %vm1194, %v1188, %v1191
        %v1196 = vld [vmem:[%s1155] ss:$0 sm:$0xff]
        %1197 = vst [vmem:[%s1155] sm:$0xff] %v1195
        %s1198 = smov [#allocation9]
        %s1199 = smov [#allocation11]
        %v1200 = vld [vmem:[%s1198] ss:$0 sm:$0xff]
        %s1202 = scalar_lea.vmem %s1198, 4294967295
        %v1203 = vld [vmem:[%s1202] sm:$0xfe]
        %v1204 = vlaneseq
        %v1205 = vshrl.u32 %v1204, 7
        %vm1206 = vcmp.eq.s32.totalorder %v1205, 0
        %v1207 = vsel %vm1206, %v1200, %v1203
        %s1208 = scalar_lea.vmem %s1198, 7
        %v1209 = vld [vmem:[%s1208] ss:$0 sm:$0xff]
        %1210 = vst [vmem:[%s1198] sm:$0xff] %v1207
        %s1211 = scalar_lea.vmem %s1198, 8
        %s1213 = scalar_lea.vmem %s1211, 4294967295
        %v1214 = vld [vmem:[%s1213] sm:$0xfe]
        %v1215 = vlaneseq
        %v1216 = vshrl.u32 %v1215, 7
        %vm1217 = vcmp.eq.s32.totalorder %v1216, 0
        %v1218 = vsel %vm1217, %v1209, %v1214
        %s1219 = scalar_lea.vmem %s1211, 7
        %v1220 = vld [vmem:[%s1219] ss:$0 sm:$0xff]
        %1221 = vst [vmem:[%s1211] sm:$0xff] %v1218
        %v1222 = vld [vmem:[%s1199] ss:$0 sm:$0xff]
        %s1223 = scalar_lea.vmem %s1198, 1
        %1224 = vst [vmem:[%s1223] sm:$0x1] %v1222
        %s1225 = scalar_lea.vmem %s1199, 8
        %s1226 = scalar_lea.vmem %s1225, 1
        %v1227 = vld [vmem:[%s1226] sm:$0x7f]
        %v1228 = vlaneseq
        %v1229 = vshrl.u32 %v1228, 7
        %vm1230 = vcmp.eq.s32.totalorder %v1229, 7
        %v1231 = vsel %vm1230, %v1220, %v1227
        %v1232 = vld [vmem:[%s1225] ss:$0 sm:$0xff]
        %1233 = vst [vmem:[%s1225] sm:$0xff] %v1231
        %s1234 = scalar_lea.vmem %s1199, 1
        %v1235 = vld [vmem:[%s1234] sm:$0x7f]
        %v1236 = vlaneseq
        %v1237 = vshrl.u32 %v1236, 7
        %vm1238 = vcmp.eq.s32.totalorder %v1237, 7
        %v1239 = vsel %vm1238, %v1232, %v1235
        %v1240 = vld [vmem:[%s1199] ss:$0 sm:$0xff]
        %1241 = vst [vmem:[%s1199] sm:$0xff] %v1239
      $region101: #{custom-call.22} parent=93 // loop_footer
        %s478 = sadd.s32 1, %s474
      $region102: #{custom-call.22} parent=93 // loop_footer_branch
        %473 = sbr.rel target = $region98
      $region103: #{custom-call.22} parent=93 // loop_exit
        _
      %s1242 = sadd.s32 %s344, 1
    $region94: #{custom-call.22} parent=1 // loop_footer
      _
    $region95: #{custom-call.22} parent=1 // loop_footer_branch
      %343 = sbr.rel target = $region91
    $region96: #{custom-call.22} parent=1 // loop_exit
      _
    %s1245 = smov [#allocation12]
    %s1246 = smov [#allocation4]
    %v1247 = vlaneseq
    %v1248 = vand.u32 %v1247, 127
    %v1249 = vmov %v1248
    %v1250 = vlaneseq
    %v1251 = vshrl.u32 %v1250, 7
    %v1252 = vmov %v1251
    %v1253 = vld [vmem:[%s1245] sm:$0xff]
    %vm1256 = vcmp.eq.s32.totalorder %v1252, %v1249
    %v1257 = vsel %vm1256, %v1253, 0.0
    %s1258 = scalar_lea.vmem %s1245, 8
    %v1259 = vld [vmem:[%s1258] sm:$0xff]
    %v1261 = vadd.s32 %v1252, 8
    %vm1262 = vcmp.eq.s32.totalorder %v1261, %v1249
    %v1263 = vsel %vm1262, %v1259, %v1257
    %v1264 = vrot.slane %v1263, 4
    %v1265 = vadd.f32 %v1263, %v1264
    %v1266 = vrot.slane %v1265, 2
    %v1267 = vadd.f32 %v1265, %v1266
    %v1268 = vrot.slane %v1267, 1
    %v1269 = vadd.f32 %v1267, %v1268
    %1270 = vst [vmem:[%s1246] sm:$0x1] %v1269
    %s1271 = smov [#allocation15]
    %s1272 = smov [#allocation6]
    %v1273 = vlaneseq
    %v1274 = vand.u32 %v1273, 127
    %v1275 = vmov %v1274
    %v1276 = vlaneseq
    %v1277 = vshrl.u32 %v1276, 7
    %v1278 = vmov %v1277
    %v1279 = vld [vmem:[%s1271] sm:$0xff]
    %vm1282 = vcmp.eq.s32.totalorder %v1278, %v1275
    %v1283 = vsel %vm1282, %v1279, 0.0
    %s1284 = scalar_lea.vmem %s1271, 8
    %v1285 = vld [vmem:[%s1284] sm:$0xff]
    %v1287 = vadd.s32 %v1278, 8
    %vm1288 = vcmp.eq.s32.totalorder %v1287, %v1275
    %v1289 = vsel %vm1288, %v1285, %v1283
    %v1290 = vrot.slane %v1289, 4
    %v1291 = vadd.f32 %v1289, %v1290
    %v1292 = vrot.slane %v1291, 2
    %v1293 = vadd.f32 %v1291, %v1292
    %v1294 = vrot.slane %v1293, 1
    %v1295 = vadd.f32 %v1293, %v1294
    %1296 = vst [vmem:[%s1272] sm:$0x1] %v1295
    %s1298 = sshll.u32 1, 1
    %s1299 = ssub.s32 %s1298, 1
    %v1301 = vld [vmem:[#allocation4] sm:%s1299]
    %s1302 = sshll.u32 1, 1
    %s1303 = ssub.s32 %s1302, 1
    %1304 = vst [vmem:[#allocation5] sm:%s1303] %v1301
    %s1306 = sshll.u32 1, 1
    %s1307 = ssub.s32 %s1306, 1
    %v1309 = vld [vmem:[#allocation6] sm:%s1307]
    %s1310 = sshll.u32 1, 1
    %s1311 = ssub.s32 %s1310, 1
    %1312 = vst [vmem:[#allocation7] sm:%s1311] %v1309
    // Predicated region
    $region104: #{custom-call.22} parent=1 // pred_check
      _
    $region105: #{custom-call.22} parent=1 // pred_check_branch
      %1314 = sbr.rel (0) target = $region107
    $region106: #{custom-call.22} parent=1 // pred_region
      %p1316 = scmp.gt.s32.totalorder 1, 0
      // Predicated region
      $region108: #{custom-call.22} parent=106 // pred_check
        %p1317 = pneg %p1316
      $region109: #{custom-call.22} parent=106 // pred_check_branch
        %1319 = sbr.rel (%p1317) target = $region111
      $region110: #{custom-call.22} parent=106 // pred_region
        %s1320 = sshra.s32 1, 3
        %p1321 = scmp.gt.s32.totalorder %s1320, 0
        // Predicated region
        $region112: #{custom-call.22} parent=110 // pred_check
          %p1322 = pneg %p1321
        $region113: #{custom-call.22} parent=110 // pred_check_branch
          %1324 = sbr.rel (%p1322) target = $region115
        $region114: #{custom-call.22} parent=110 // pred_region
          %s1325 = ssub.s32 %s1320, 1
          %s1326 = smul.u32 %s1325, 128
          %s1327 = sshra.s32 %s1326, 4
          %s1328 = scalar_lea.vmem [#allocation5], %s1327
          %v1329 = vld [vmem:[#allocation5] sm:$0xff]
          // While loop
          $region116: #{custom-call.22} parent=114 // loop_pre_header
            _
          $region117: #{custom-call.22} parent=114 // loop_header
            %s1330 = sphi [#allocation5], %s1352
            %s1331 = sphi %s4, %s1353
            %v1332 = vphi %v1329, %v1354
            %s1333 = ssub.s32 %s1328, 64
            %p1334 = scmp.gt.s32.totalorder %s1330, %s1333
          $region118: #{custom-call.22} parent=114 // loop_header_branch
            %1336 = sbr.rel (%p1334) target = $region122
          $region119: #{custom-call.22} parent=114 // loop_body
            %1337 = vst [vmem:[%s1331] sm:$0xff] %v1332
            %v1338 = vld [vmem:[%s1330 + $0x8] sm:$0xff]
            %1339 = vst [vmem:[%s1331 + $0x8] sm:$0xff] %v1338
            %v1340 = vld [vmem:[%s1330 + $0x10] sm:$0xff]
            %1341 = vst [vmem:[%s1331 + $0x10] sm:$0xff] %v1340
            %v1342 = vld [vmem:[%s1330 + $0x18] sm:$0xff]
            %1343 = vst [vmem:[%s1331 + $0x18] sm:$0xff] %v1342
            %v1344 = vld [vmem:[%s1330 + $0x20] sm:$0xff]
            %1345 = vst [vmem:[%s1331 + $0x20] sm:$0xff] %v1344
            %v1346 = vld [vmem:[%s1330 + $0x28] sm:$0xff]
            %1347 = vst [vmem:[%s1331 + $0x28] sm:$0xff] %v1346
            %v1348 = vld [vmem:[%s1330 + $0x30] sm:$0xff]
            %1349 = vst [vmem:[%s1331 + $0x30] sm:$0xff] %v1348
            %v1350 = vld [vmem:[%s1330 + $0x38] sm:$0xff]
            %1351 = vst [vmem:[%s1331 + $0x38] sm:$0xff] %v1350
          $region120: #{custom-call.22} parent=114 // loop_footer
            %s1352 = scalar_lea.vmem %s1330, 64
            %s1353 = scalar_lea.vmem %s1331, 64
            %v1354 = vld [vmem:[%s1330 + $0x40] sm:$0xff]
          $region121: #{custom-call.22} parent=114 // loop_footer_branch
            %1355 = sbr.rel target = $region117
          $region122: #{custom-call.22} parent=114 // loop_exit
            _
          // While loop
          $region123: #{custom-call.22} parent=114 // loop_pre_header
            _
          $region124: #{custom-call.22} parent=114 // loop_header
            %s1356 = sphi %s1330, %s1364
            %s1357 = sphi %s1331, %s1365
            %v1358 = vphi %v1332, %v1358
            %p1359 = scmp.gt.s32.totalorder %s1356, %s1328
          $region125: #{custom-call.22} parent=114 // loop_header_branch
            %1361 = sbr.rel (%p1359) target = $region129
          $region126: #{custom-call.22} parent=114 // loop_body
            %v1362 = vld [vmem:[%s1356] sm:$0xff]
            %1363 = vst [vmem:[%s1357] sm:$0xff] %v1362
          $region127: #{custom-call.22} parent=114 // loop_footer
            %s1364 = scalar_lea.vmem %s1356, 8
            %s1365 = scalar_lea.vmem %s1357, 8
          $region128: #{custom-call.22} parent=114 // loop_footer_branch
            %1366 = sbr.rel target = $region124
          $region129: #{custom-call.22} parent=114 // loop_exit
            _
        $region115: #{custom-call.22} parent=110 // pred_fallthru
          _
        %s1367 = sand.u32 1, 7
        %s1368 = sshll.u32 1, %s1367
        %s1369 = ssub.s32 %s1368, 1
        %s1370 = smul.u32 %s1320, 128
        %s1371 = sshra.s32 %s1370, 4
        %s1372 = scalar_lea.vmem %s4, %s1371
        %s1373 = smul.u32 %s1320, 128
        %s1374 = sshra.s32 %s1373, 4
        %s1375 = scalar_lea.vmem [#allocation5], %s1374
        %v1376 = vld [vmem:[%s1375] sm:%s1369]
        %1377 = vst [vmem:[%s1372] sm:%s1369] %v1376
      $region111: #{custom-call.22} parent=106 // pred_fallthru
        _
    $region107: #{custom-call.22} parent=1 // pred_fallthru
      _
    // Predicated region
    $region130: #{custom-call.22} parent=1 // pred_check
      _
    $region131: #{custom-call.22} parent=1 // pred_check_branch
      %1379 = sbr.rel (0) target = $region133
    $region132: #{custom-call.22} parent=1 // pred_region
      %p1381 = scmp.gt.s32.totalorder 1, 0
      // Predicated region
      $region134: #{custom-call.22} parent=132 // pred_check
        %p1382 = pneg %p1381
      $region135: #{custom-call.22} parent=132 // pred_check_branch
        %1384 = sbr.rel (%p1382) target = $region137
      $region136: #{custom-call.22} parent=132 // pred_region
        %s1385 = sshra.s32 1, 3
        %p1386 = scmp.gt.s32.totalorder %s1385, 0
        // Predicated region
        $region138: #{custom-call.22} parent=136 // pred_check
          %p1387 = pneg %p1386
        $region139: #{custom-call.22} parent=136 // pred_check_branch
          %1389 = sbr.rel (%p1387) target = $region141
        $region140: #{custom-call.22} parent=136 // pred_region
          %s1390 = ssub.s32 %s1385, 1
          %s1391 = smul.u32 %s1390, 128
          %s1392 = sshra.s32 %s1391, 4
          %s1393 = scalar_lea.vmem [#allocation7], %s1392
          %v1394 = vld [vmem:[#allocation7] sm:$0xff]
          // While loop
          $region142: #{custom-call.22} parent=140 // loop_pre_header
            _
          $region143: #{custom-call.22} parent=140 // loop_header
            %s1395 = sphi [#allocation7], %s1417
            %s1396 = sphi %s5, %s1418
            %v1397 = vphi %v1394, %v1419
            %s1398 = ssub.s32 %s1393, 64
            %p1399 = scmp.gt.s32.totalorder %s1395, %s1398
          $region144: #{custom-call.22} parent=140 // loop_header_branch
            %1401 = sbr.rel (%p1399) target = $region148
          $region145: #{custom-call.22} parent=140 // loop_body
            %1402 = vst [vmem:[%s1396] sm:$0xff] %v1397
            %v1403 = vld [vmem:[%s1395 + $0x8] sm:$0xff]
            %1404 = vst [vmem:[%s1396 + $0x8] sm:$0xff] %v1403
            %v1405 = vld [vmem:[%s1395 + $0x10] sm:$0xff]
            %1406 = vst [vmem:[%s1396 + $0x10] sm:$0xff] %v1405
            %v1407 = vld [vmem:[%s1395 + $0x18] sm:$0xff]
            %1408 = vst [vmem:[%s1396 + $0x18] sm:$0xff] %v1407
            %v1409 = vld [vmem:[%s1395 + $0x20] sm:$0xff]
            %1410 = vst [vmem:[%s1396 + $0x20] sm:$0xff] %v1409
            %v1411 = vld [vmem:[%s1395 + $0x28] sm:$0xff]
            %1412 = vst [vmem:[%s1396 + $0x28] sm:$0xff] %v1411
            %v1413 = vld [vmem:[%s1395 + $0x30] sm:$0xff]
            %1414 = vst [vmem:[%s1396 + $0x30] sm:$0xff] %v1413
            %v1415 = vld [vmem:[%s1395 + $0x38] sm:$0xff]
            %1416 = vst [vmem:[%s1396 + $0x38] sm:$0xff] %v1415
          $region146: #{custom-call.22} parent=140 // loop_footer
            %s1417 = scalar_lea.vmem %s1395, 64
            %s1418 = scalar_lea.vmem %s1396, 64
            %v1419 = vld [vmem:[%s1395 + $0x40] sm:$0xff]
          $region147: #{custom-call.22} parent=140 // loop_footer_branch
            %1420 = sbr.rel target = $region143
          $region148: #{custom-call.22} parent=140 // loop_exit
            _
          // While loop
          $region149: #{custom-call.22} parent=140 // loop_pre_header
            _
          $region150: #{custom-call.22} parent=140 // loop_header
            %s1421 = sphi %s1395, %s1429
            %s1422 = sphi %s1396, %s1430
            %v1423 = vphi %v1397, %v1423
            %p1424 = scmp.gt.s32.totalorder %s1421, %s1393
          $region151: #{custom-call.22} parent=140 // loop_header_branch
            %1426 = sbr.rel (%p1424) target = $region155
          $region152: #{custom-call.22} parent=140 // loop_body
            %v1427 = vld [vmem:[%s1421] sm:$0xff]
            %1428 = vst [vmem:[%s1422] sm:$0xff] %v1427
          $region153: #{custom-call.22} parent=140 // loop_footer
            %s1429 = scalar_lea.vmem %s1421, 8
            %s1430 = scalar_lea.vmem %s1422, 8
          $region154: #{custom-call.22} parent=140 // loop_footer_branch
            %1431 = sbr.rel target = $region150
          $region155: #{custom-call.22} parent=140 // loop_exit
            _
        $region141: #{custom-call.22} parent=136 // pred_fallthru
          _
        %s1432 = sand.u32 1, 7
        %s1433 = sshll.u32 1, %s1432
        %s1434 = ssub.s32 %s1433, 1
        %s1435 = smul.u32 %s1385, 128
        %s1436 = sshra.s32 %s1435, 4
        %s1437 = scalar_lea.vmem %s5, %s1436
        %s1438 = smul.u32 %s1385, 128
        %s1439 = sshra.s32 %s1438, 4
        %s1440 = scalar_lea.vmem [#allocation7], %s1439
        %v1441 = vld [vmem:[%s1440] sm:%s1434]
        %1442 = vst [vmem:[%s1437] sm:%s1434] %v1441
      $region137: #{custom-call.22} parent=132 // pred_fallthru
        _
    $region133: #{custom-call.22} parent=1 // pred_fallthru
      _
    %p1444 = scmp.gt.s32.totalorder 16, 0
    // Predicated region
    $region156: #{custom-call.22} parent=1 // pred_check
      %p1445 = pneg %p1444
    $region157: #{custom-call.22} parent=1 // pred_check_branch
      %1447 = sbr.rel (%p1445) target = $region159
    $region158: #{custom-call.22} parent=1 // pred_region
      %s1448 = sshra.s32 16, 3
      %p1449 = scmp.gt.s32.totalorder %s1448, 0
      // Predicated region
      $region160: #{custom-call.22} parent=158 // pred_check
        %p1450 = pneg %p1449
      $region161: #{custom-call.22} parent=158 // pred_check_branch
        %1452 = sbr.rel (%p1450) target = $region163
      $region162: #{custom-call.22} parent=158 // pred_region
        %s1453 = ssub.s32 %s1448, 1
        %s1454 = smul.u32 %s1453, 128
        %s1455 = sshra.s32 %s1454, 4
        %s1456 = scalar_lea.vmem [#allocation8], %s1455
        %v1457 = vld [vmem:[#allocation8] sm:$0xff]
        // While loop
        $region164: #{custom-call.22} parent=162 // loop_pre_header
          _
        $region165: #{custom-call.22} parent=162 // loop_header
          %s1458 = sphi [#allocation8], %s1480
          %s1459 = sphi %s6, %s1481
          %v1460 = vphi %v1457, %v1482
          %s1461 = ssub.s32 %s1456, 64
          %p1462 = scmp.gt.s32.totalorder %s1458, %s1461
        $region166: #{custom-call.22} parent=162 // loop_header_branch
          %1464 = sbr.rel (%p1462) target = $region170
        $region167: #{custom-call.22} parent=162 // loop_body
          %1465 = vst [vmem:[%s1459] sm:$0xff] %v1460
          %v1466 = vld [vmem:[%s1458 + $0x8] sm:$0xff]
          %1467 = vst [vmem:[%s1459 + $0x8] sm:$0xff] %v1466
          %v1468 = vld [vmem:[%s1458 + $0x10] sm:$0xff]
          %1469 = vst [vmem:[%s1459 + $0x10] sm:$0xff] %v1468
          %v1470 = vld [vmem:[%s1458 + $0x18] sm:$0xff]
          %1471 = vst [vmem:[%s1459 + $0x18] sm:$0xff] %v1470
          %v1472 = vld [vmem:[%s1458 + $0x20] sm:$0xff]
          %1473 = vst [vmem:[%s1459 + $0x20] sm:$0xff] %v1472
          %v1474 = vld [vmem:[%s1458 + $0x28] sm:$0xff]
          %1475 = vst [vmem:[%s1459 + $0x28] sm:$0xff] %v1474
          %v1476 = vld [vmem:[%s1458 + $0x30] sm:$0xff]
          %1477 = vst [vmem:[%s1459 + $0x30] sm:$0xff] %v1476
          %v1478 = vld [vmem:[%s1458 + $0x38] sm:$0xff]
          %1479 = vst [vmem:[%s1459 + $0x38] sm:$0xff] %v1478
        $region168: #{custom-call.22} parent=162 // loop_footer
          %s1480 = scalar_lea.vmem %s1458, 64
          %s1481 = scalar_lea.vmem %s1459, 64
          %v1482 = vld [vmem:[%s1458 + $0x40] sm:$0xff]
        $region169: #{custom-call.22} parent=162 // loop_footer_branch
          %1483 = sbr.rel target = $region165
        $region170: #{custom-call.22} parent=162 // loop_exit
          _
        // While loop
        $region171: #{custom-call.22} parent=162 // loop_pre_header
          _
        $region172: #{custom-call.22} parent=162 // loop_header
          %s1484 = sphi %s1458, %s1492
          %s1485 = sphi %s1459, %s1493
          %v1486 = vphi %v1460, %v1486
          %p1487 = scmp.gt.s32.totalorder %s1484, %s1456
        $region173: #{custom-call.22} parent=162 // loop_header_branch
          %1489 = sbr.rel (%p1487) target = $region177
        $region174: #{custom-call.22} parent=162 // loop_body
          %v1490 = vld [vmem:[%s1484] sm:$0xff]
          %1491 = vst [vmem:[%s1485] sm:$0xff] %v1490
        $region175: #{custom-call.22} parent=162 // loop_footer
          %s1492 = scalar_lea.vmem %s1484, 8
          %s1493 = scalar_lea.vmem %s1485, 8
        $region176: #{custom-call.22} parent=162 // loop_footer_branch
          %1494 = sbr.rel target = $region172
        $region177: #{custom-call.22} parent=162 // loop_exit
          _
      $region163: #{custom-call.22} parent=158 // pred_fallthru
        _
      %s1495 = sand.u32 16, 7
      %s1496 = sshll.u32 1, %s1495
      %s1497 = ssub.s32 %s1496, 1
      %s1498 = smul.u32 %s1448, 128
      %s1499 = sshra.s32 %s1498, 4
      %s1500 = scalar_lea.vmem %s6, %s1499
      %s1501 = smul.u32 %s1448, 128
      %s1502 = sshra.s32 %s1501, 4
      %s1503 = scalar_lea.vmem [#allocation8], %s1502
      %v1504 = vld [vmem:[%s1503] sm:%s1497]
      %1505 = vst [vmem:[%s1500] sm:%s1497] %v1504
    $region159: #{custom-call.22} parent=1 // pred_fallthru
      _
    %p1507 = scmp.gt.s32.totalorder 16, 0
    // Predicated region
    $region178: #{custom-call.22} parent=1 // pred_check
      %p1508 = pneg %p1507
    $region179: #{custom-call.22} parent=1 // pred_check_branch
      %1510 = sbr.rel (%p1508) target = $region181
    $region180: #{custom-call.22} parent=1 // pred_region
      %s1511 = sshra.s32 16, 3
      %p1512 = scmp.gt.s32.totalorder %s1511, 0
      // Predicated region
      $region182: #{custom-call.22} parent=180 // pred_check
        %p1513 = pneg %p1512
      $region183: #{custom-call.22} parent=180 // pred_check_branch
        %1515 = sbr.rel (%p1513) target = $region185
      $region184: #{custom-call.22} parent=180 // pred_region
        %s1516 = ssub.s32 %s1511, 1
        %s1517 = smul.u32 %s1516, 128
        %s1518 = sshra.s32 %s1517, 4
        %s1519 = scalar_lea.vmem [#allocation9], %s1518
        %v1520 = vld [vmem:[#allocation9] sm:$0xff]
        // While loop
        $region186: #{custom-call.22} parent=184 // loop_pre_header
          _
        $region187: #{custom-call.22} parent=184 // loop_header
          %s1521 = sphi [#allocation9], %s1543
          %s1522 = sphi %s7, %s1544
          %v1523 = vphi %v1520, %v1545
          %s1524 = ssub.s32 %s1519, 64
          %p1525 = scmp.gt.s32.totalorder %s1521, %s1524
        $region188: #{custom-call.22} parent=184 // loop_header_branch
          %1527 = sbr.rel (%p1525) target = $region192
        $region189: #{custom-call.22} parent=184 // loop_body
          %1528 = vst [vmem:[%s1522] sm:$0xff] %v1523
          %v1529 = vld [vmem:[%s1521 + $0x8] sm:$0xff]
          %1530 = vst [vmem:[%s1522 + $0x8] sm:$0xff] %v1529
          %v1531 = vld [vmem:[%s1521 + $0x10] sm:$0xff]
          %1532 = vst [vmem:[%s1522 + $0x10] sm:$0xff] %v1531
          %v1533 = vld [vmem:[%s1521 + $0x18] sm:$0xff]
          %1534 = vst [vmem:[%s1522 + $0x18] sm:$0xff] %v1533
          %v1535 = vld [vmem:[%s1521 + $0x20] sm:$0xff]
          %1536 = vst [vmem:[%s1522 + $0x20] sm:$0xff] %v1535
          %v1537 = vld [vmem:[%s1521 + $0x28] sm:$0xff]
          %1538 = vst [vmem:[%s1522 + $0x28] sm:$0xff] %v1537
          %v1539 = vld [vmem:[%s1521 + $0x30] sm:$0xff]
          %1540 = vst [vmem:[%s1522 + $0x30] sm:$0xff] %v1539
          %v1541 = vld [vmem:[%s1521 + $0x38] sm:$0xff]
          %1542 = vst [vmem:[%s1522 + $0x38] sm:$0xff] %v1541
        $region190: #{custom-call.22} parent=184 // loop_footer
          %s1543 = scalar_lea.vmem %s1521, 64
          %s1544 = scalar_lea.vmem %s1522, 64
          %v1545 = vld [vmem:[%s1521 + $0x40] sm:$0xff]
        $region191: #{custom-call.22} parent=184 // loop_footer_branch
          %1546 = sbr.rel target = $region187
        $region192: #{custom-call.22} parent=184 // loop_exit
          _
        // While loop
        $region193: #{custom-call.22} parent=184 // loop_pre_header
          _
        $region194: #{custom-call.22} parent=184 // loop_header
          %s1547 = sphi %s1521, %s1555
          %s1548 = sphi %s1522, %s1556
          %v1549 = vphi %v1523, %v1549
          %p1550 = scmp.gt.s32.totalorder %s1547, %s1519
        $region195: #{custom-call.22} parent=184 // loop_header_branch
          %1552 = sbr.rel (%p1550) target = $region199
        $region196: #{custom-call.22} parent=184 // loop_body
          %v1553 = vld [vmem:[%s1547] sm:$0xff]
          %1554 = vst [vmem:[%s1548] sm:$0xff] %v1553
        $region197: #{custom-call.22} parent=184 // loop_footer
          %s1555 = scalar_lea.vmem %s1547, 8
          %s1556 = scalar_lea.vmem %s1548, 8
        $region198: #{custom-call.22} parent=184 // loop_footer_branch
          %1557 = sbr.rel target = $region194
        $region199: #{custom-call.22} parent=184 // loop_exit
          _
      $region185: #{custom-call.22} parent=180 // pred_fallthru
        _
      %s1558 = sand.u32 16, 7
      %s1559 = sshll.u32 1, %s1558
      %s1560 = ssub.s32 %s1559, 1
      %s1561 = smul.u32 %s1511, 128
      %s1562 = sshra.s32 %s1561, 4
      %s1563 = scalar_lea.vmem %s7, %s1562
      %s1564 = smul.u32 %s1511, 128
      %s1565 = sshra.s32 %s1564, 4
      %s1566 = scalar_lea.vmem [#allocation9], %s1565
      %v1567 = vld [vmem:[%s1566] sm:%s1560]
      %1568 = vst [vmem:[%s1563] sm:%s1560] %v1567
    $region181: #{custom-call.22} parent=1 // pred_fallthru
      _
    %p1570 = scmp.gt.s32.totalorder 16, 0
    // Predicated region
    $region200: #{custom-call.22} parent=1 // pred_check
      %p1571 = pneg %p1570
    $region201: #{custom-call.22} parent=1 // pred_check_branch
      %1573 = sbr.rel (%p1571) target = $region203
    $region202: #{custom-call.22} parent=1 // pred_region
      %s1574 = sshra.s32 16, 3
      %p1575 = scmp.gt.s32.totalorder %s1574, 0
      // Predicated region
      $region204: #{custom-call.22} parent=202 // pred_check
        %p1576 = pneg %p1575
      $region205: #{custom-call.22} parent=202 // pred_check_branch
        %1578 = sbr.rel (%p1576) target = $region207
      $region206: #{custom-call.22} parent=202 // pred_region
        %s1579 = ssub.s32 %s1574, 1
        %s1580 = smul.u32 %s1579, 128
        %s1581 = sshra.s32 %s1580, 4
        %s1582 = scalar_lea.vmem [#allocation10], %s1581
        %v1583 = vld [vmem:[#allocation10] sm:$0xff]
        // While loop
        $region208: #{custom-call.22} parent=206 // loop_pre_header
          _
        $region209: #{custom-call.22} parent=206 // loop_header
          %s1584 = sphi [#allocation10], %s1606
          %s1585 = sphi %s8, %s1607
          %v1586 = vphi %v1583, %v1608
          %s1587 = ssub.s32 %s1582, 64
          %p1588 = scmp.gt.s32.totalorder %s1584, %s1587
        $region210: #{custom-call.22} parent=206 // loop_header_branch
          %1590 = sbr.rel (%p1588) target = $region214
        $region211: #{custom-call.22} parent=206 // loop_body
          %1591 = vst [vmem:[%s1585] sm:$0xff] %v1586
          %v1592 = vld [vmem:[%s1584 + $0x8] sm:$0xff]
          %1593 = vst [vmem:[%s1585 + $0x8] sm:$0xff] %v1592
          %v1594 = vld [vmem:[%s1584 + $0x10] sm:$0xff]
          %1595 = vst [vmem:[%s1585 + $0x10] sm:$0xff] %v1594
          %v1596 = vld [vmem:[%s1584 + $0x18] sm:$0xff]
          %1597 = vst [vmem:[%s1585 + $0x18] sm:$0xff] %v1596
          %v1598 = vld [vmem:[%s1584 + $0x20] sm:$0xff]
          %1599 = vst [vmem:[%s1585 + $0x20] sm:$0xff] %v1598
          %v1600 = vld [vmem:[%s1584 + $0x28] sm:$0xff]
          %1601 = vst [vmem:[%s1585 + $0x28] sm:$0xff] %v1600
          %v1602 = vld [vmem:[%s1584 + $0x30] sm:$0xff]
          %1603 = vst [vmem:[%s1585 + $0x30] sm:$0xff] %v1602
          %v1604 = vld [vmem:[%s1584 + $0x38] sm:$0xff]
          %1605 = vst [vmem:[%s1585 + $0x38] sm:$0xff] %v1604
        $region212: #{custom-call.22} parent=206 // loop_footer
          %s1606 = scalar_lea.vmem %s1584, 64
          %s1607 = scalar_lea.vmem %s1585, 64
          %v1608 = vld [vmem:[%s1584 + $0x40] sm:$0xff]
        $region213: #{custom-call.22} parent=206 // loop_footer_branch
          %1609 = sbr.rel target = $region209
        $region214: #{custom-call.22} parent=206 // loop_exit
          _
        // While loop
        $region215: #{custom-call.22} parent=206 // loop_pre_header
          _
        $region216: #{custom-call.22} parent=206 // loop_header
          %s1610 = sphi %s1584, %s1618
          %s1611 = sphi %s1585, %s1619
          %v1612 = vphi %v1586, %v1612
          %p1613 = scmp.gt.s32.totalorder %s1610, %s1582
        $region217: #{custom-call.22} parent=206 // loop_header_branch
          %1615 = sbr.rel (%p1613) target = $region221
        $region218: #{custom-call.22} parent=206 // loop_body
          %v1616 = vld [vmem:[%s1610] sm:$0xff]
          %1617 = vst [vmem:[%s1611] sm:$0xff] %v1616
        $region219: #{custom-call.22} parent=206 // loop_footer
          %s1618 = scalar_lea.vmem %s1610, 8
          %s1619 = scalar_lea.vmem %s1611, 8
        $region220: #{custom-call.22} parent=206 // loop_footer_branch
          %1620 = sbr.rel target = $region216
        $region221: #{custom-call.22} parent=206 // loop_exit
          _
      $region207: #{custom-call.22} parent=202 // pred_fallthru
        _
      %s1621 = sand.u32 16, 7
      %s1622 = sshll.u32 1, %s1621
      %s1623 = ssub.s32 %s1622, 1
      %s1624 = smul.u32 %s1574, 128
      %s1625 = sshra.s32 %s1624, 4
      %s1626 = scalar_lea.vmem %s8, %s1625
      %s1627 = smul.u32 %s1574, 128
      %s1628 = sshra.s32 %s1627, 4
      %s1629 = scalar_lea.vmem [#allocation10], %s1628
      %v1630 = vld [vmem:[%s1629] sm:%s1623]
      %1631 = vst [vmem:[%s1626] sm:%s1623] %v1630
    $region203: #{custom-call.22} parent=1 // pred_fallthru
      _
    %p1633 = scmp.gt.s32.totalorder 16, 0
    // Predicated region
    $region222: #{custom-call.22} parent=1 // pred_check
      %p1634 = pneg %p1633
    $region223: #{custom-call.22} parent=1 // pred_check_branch
      %1636 = sbr.rel (%p1634) target = $region225
    $region224: #{custom-call.22} parent=1 // pred_region
      %s1637 = sshra.s32 16, 3
      %p1638 = scmp.gt.s32.totalorder %s1637, 0
      // Predicated region
      $region226: #{custom-call.22} parent=224 // pred_check
        %p1639 = pneg %p1638
      $region227: #{custom-call.22} parent=224 // pred_check_branch
        %1641 = sbr.rel (%p1639) target = $region229
      $region228: #{custom-call.22} parent=224 // pred_region
        %s1642 = ssub.s32 %s1637, 1
        %s1643 = smul.u32 %s1642, 128
        %s1644 = sshra.s32 %s1643, 4
        %s1645 = scalar_lea.vmem [#allocation11], %s1644
        %v1646 = vld [vmem:[#allocation11] sm:$0xff]
        // While loop
        $region230: #{custom-call.22} parent=228 // loop_pre_header
          _
        $region231: #{custom-call.22} parent=228 // loop_header
          %s1647 = sphi [#allocation11], %s1669
          %s1648 = sphi %s9, %s1670
          %v1649 = vphi %v1646, %v1671
          %s1650 = ssub.s32 %s1645, 64
          %p1651 = scmp.gt.s32.totalorder %s1647, %s1650
        $region232: #{custom-call.22} parent=228 // loop_header_branch
          %1653 = sbr.rel (%p1651) target = $region236
        $region233: #{custom-call.22} parent=228 // loop_body
          %1654 = vst [vmem:[%s1648] sm:$0xff] %v1649
          %v1655 = vld [vmem:[%s1647 + $0x8] sm:$0xff]
          %1656 = vst [vmem:[%s1648 + $0x8] sm:$0xff] %v1655
          %v1657 = vld [vmem:[%s1647 + $0x10] sm:$0xff]
          %1658 = vst [vmem:[%s1648 + $0x10] sm:$0xff] %v1657
          %v1659 = vld [vmem:[%s1647 + $0x18] sm:$0xff]
          %1660 = vst [vmem:[%s1648 + $0x18] sm:$0xff] %v1659
          %v1661 = vld [vmem:[%s1647 + $0x20] sm:$0xff]
          %1662 = vst [vmem:[%s1648 + $0x20] sm:$0xff] %v1661
          %v1663 = vld [vmem:[%s1647 + $0x28] sm:$0xff]
          %1664 = vst [vmem:[%s1648 + $0x28] sm:$0xff] %v1663
          %v1665 = vld [vmem:[%s1647 + $0x30] sm:$0xff]
          %1666 = vst [vmem:[%s1648 + $0x30] sm:$0xff] %v1665
          %v1667 = vld [vmem:[%s1647 + $0x38] sm:$0xff]
          %1668 = vst [vmem:[%s1648 + $0x38] sm:$0xff] %v1667
        $region234: #{custom-call.22} parent=228 // loop_footer
          %s1669 = scalar_lea.vmem %s1647, 64
          %s1670 = scalar_lea.vmem %s1648, 64
          %v1671 = vld [vmem:[%s1647 + $0x40] sm:$0xff]
        $region235: #{custom-call.22} parent=228 // loop_footer_branch
          %1672 = sbr.rel target = $region231
        $region236: #{custom-call.22} parent=228 // loop_exit
          _
        // While loop
        $region237: #{custom-call.22} parent=228 // loop_pre_header
          _
        $region238: #{custom-call.22} parent=228 // loop_header
          %s1673 = sphi %s1647, %s1681
          %s1674 = sphi %s1648, %s1682
          %v1675 = vphi %v1649, %v1675
          %p1676 = scmp.gt.s32.totalorder %s1673, %s1645
        $region239: #{custom-call.22} parent=228 // loop_header_branch
          %1678 = sbr.rel (%p1676) target = $region243
        $region240: #{custom-call.22} parent=228 // loop_body
          %v1679 = vld [vmem:[%s1673] sm:$0xff]
          %1680 = vst [vmem:[%s1674] sm:$0xff] %v1679
        $region241: #{custom-call.22} parent=228 // loop_footer
          %s1681 = scalar_lea.vmem %s1673, 8
          %s1682 = scalar_lea.vmem %s1674, 8
        $region242: #{custom-call.22} parent=228 // loop_footer_branch
          %1683 = sbr.rel target = $region238
        $region243: #{custom-call.22} parent=228 // loop_exit
          _
      $region229: #{custom-call.22} parent=224 // pred_fallthru
        _
      %s1684 = sand.u32 16, 7
      %s1685 = sshll.u32 1, %s1684
      %s1686 = ssub.s32 %s1685, 1
      %s1687 = smul.u32 %s1637, 128
      %s1688 = sshra.s32 %s1687, 4
      %s1689 = scalar_lea.vmem %s9, %s1688
      %s1690 = smul.u32 %s1637, 128
      %s1691 = sshra.s32 %s1690, 4
      %s1692 = scalar_lea.vmem [#allocation11], %s1691
      %v1693 = vld [vmem:[%s1692] sm:%s1686]
      %1694 = vst [vmem:[%s1689] sm:%s1686] %v1693
    $region225: #{custom-call.22} parent=1 // pred_fallthru
      _
    // Predicated region
    $region244: #{custom-call.22} parent=1 // pred_check
      _
    $region245: #{custom-call.22} parent=1 // pred_check_branch
      %1696 = sbr.rel (0) target = $region247
    $region246: #{custom-call.22} parent=1 // pred_region
      _
    $region247: #{custom-call.22} parent=1 // pred_fallthru
      _
    // Predicated region
    $region248: #{custom-call.22} parent=1 // pred_check
      _
    $region249: #{custom-call.22} parent=1 // pred_check_branch
      %1698 = sbr.rel (0) target = $region251
    $region250: #{custom-call.22} parent=1 // pred_region
      _
    $region251: #{custom-call.22} parent=1 // pred_fallthru
      _

// kernel: reverse
$region0: #{reverse}
  %s0 = inlined_call_operand.vmem [shape: f32[32], index: 0, kind: input, shape index: {}]
  %s1 = inlined_call_operand.vmem [shape: f32[32], index: 1, kind: output, shape index: {}]
  %v2 = vlaneseq
  %v3 = vsub.s32 31, %v2
  %4 = vset.pattern.permute.xlu0 %v3
  $region1: #{reverse} parent=0
    #allocation0 [shape = 'u8[8192]{0}', space=vmem, size = 0x2000, scoped, tag = 'operand span for operand 0']
    #allocation1 [shape = 'u8[1024]{0}', space=vmem, size = 0x400, scoped, tag = 'packed  for operand 0']
    #allocation2 [shape = 'u8[4096]{0}', space=vmem, size = 0x1000, scoped, tag = 'operand span for operand 1']
    #allocation3 [shape = 'u8[512]{0}', space=vmem, size = 0x400, scoped, tag = 'packed  for operand 1']
    %s5 = scalar_lea.vmem [#allocation1], 1
    // Predicated region
    $region2: #{reverse} parent=1 // pred_check
      _
    $region3: #{reverse} parent=1 // pred_check_branch
      %7 = sbr.rel (0) target = $region5
    $region4: #{reverse} parent=1 // pred_region
      // Predicated region
      $region6: #{reverse} parent=4 // pred_check
        _
      $region7: #{reverse} parent=4 // pred_check_branch
        %9 = sbr.rel target = $region9
      $region8: #{reverse} parent=4 // pred_region
        // Predicated region
        $region21: #{reverse} parent=8 // pred_check
          _
        $region22: #{reverse} parent=8 // pred_check_branch
          %25 = sbr.rel (0) target = $region24
        $region23: #{reverse} parent=8 // pred_region
          %s27 = ssub.s32 2, 1
          loop: start=0, step=1, limit=1
          $region25: #{reverse} parent=23 // loop_pre_header
            _
          $region26: #{reverse} parent=23 // loop_header
            %s29 = sphi 0, %s33
            %p30 = scmp.ge.s32.totalorder %s29, 1
            %s34 = sphi %s0, %s0
            %s35 = sphi %s5, %s5
          $region27: #{reverse} parent=23 // loop_header_branch
            %32 = sbr.rel (%p30) target = $region31
          $region28: #{reverse} parent=23 // loop_body
            %v36 = vld [vmem:[%s34] sm:%s27]
            %37 = vst [vmem:[%s35] sm:%s27] %v36
          $region29: #{reverse} parent=23 // loop_footer
            %s33 = sadd.s32 1, %s29
          $region30: #{reverse} parent=23 // loop_footer_branch
            %28 = sbr.rel target = $region26
          $region31: #{reverse} parent=23 // loop_exit
            _
        $region24: #{reverse} parent=8 // pred_fallthru
          _
      $region9: #{reverse} parent=4 // pred_fallthru
        _
      // Predicated region
      $region10: #{reverse} parent=4 // pred_check
        _
      $region11: #{reverse} parent=4 // pred_check_branch
        %11 = sbr.rel (0) target = $region13
      $region12: #{reverse} parent=4 // pred_region
        %s13 = ssub.s32 2, 1
        loop: start=0, step=1, limit=1
        $region14: #{reverse} parent=12 // loop_pre_header
          _
        $region15: #{reverse} parent=12 // loop_header
          %s15 = sphi 0, %s19
          %p16 = scmp.ge.s32.totalorder %s15, 1
          %s20 = sphi %s0, %s0
          %s21 = sphi %s5, %s5
        $region16: #{reverse} parent=12 // loop_header_branch
          %18 = sbr.rel (%p16) target = $region20
        $region17: #{reverse} parent=12 // loop_body
          %v22 = vld [vmem:[%s20] sm:%s13]
          %23 = vst [vmem:[%s21] sm:%s13] %v22
        $region18: #{reverse} parent=12 // loop_footer
          %s19 = sadd.s32 1, %s15
        $region19: #{reverse} parent=12 // loop_footer_branch
          %14 = sbr.rel target = $region15
        $region20: #{reverse} parent=12 // loop_exit
          _
      $region13: #{reverse} parent=4 // pred_fallthru
        _
    $region5: #{reverse} parent=1 // pred_fallthru
      _
    %38 = vnop
    %s40 = sshll.u32 1, 1
    %s41 = ssub.s32 %s40, 1
    %s42 = scalar_lea.vmem [#allocation1], 1
    %v43 = vld [vmem:[%s42] sm:%s41]
    %s44 = scalar_lea.vmem [#allocation0], 8
    %45 = vst [vmem:[%s44] sm:%s41] %v43
    %v46 = vld [vmem:[#allocation1] sm:%s41]
    %47 = vst [vmem:[#allocation0] sm:%s41] %v46
    %s48 = scalar_lea.vmem [#allocation0], 7
    %v49 = vld [vmem:[%s48] ss:$-1 sm:$0xff]
    %v50 = vrot.slane %v49, 7
    %51 = vperm.xlu0 %4, %v50
    %v52 = vpop.permute.xlu0 %51
    %53 = vst [vmem:[#allocation2] sm:$0xff] %v52
    %s54 = scalar_lea.vmem [#allocation0], 8
    %s55 = scalar_lea.vmem %s54, 7 [#allocation0]
    %v56 = vld [vmem:[%s55] ss:$-1 sm:$0xff]
    %v57 = vrot.slane %v56, 7
    %58 = vperm.xlu0 %4, %v57
    %v59 = vpop.permute.xlu0 %58
    %v60 = vlaneseq
    %v61 = vshrl.u32 %v60, 7
    %vm62 = vcmp.lt.s32.totalorder %v61, 1
    %63 = vst.msk [vmem:[#allocation2] sm:$0xff] %vm62, %v59
    %s65 = sshll.u32 1, 1
    %s66 = ssub.s32 %s65, 1
    %v68 = vld [vmem:[#allocation2] sm:%s66]
    %s69 = sshll.u32 1, 1
    %s70 = ssub.s32 %s69, 1
    %71 = vst [vmem:[#allocation3] sm:%s70] %v68
    // Predicated region
    $region32: #{reverse} parent=1 // pred_check
      _
    $region33: #{reverse} parent=1 // pred_check_branch
      %73 = sbr.rel (0) target = $region35
    $region34: #{reverse} parent=1 // pred_region
      // Predicated region
      $region36: #{reverse} parent=34 // pred_check
        _
      $region37: #{reverse} parent=34 // pred_check_branch
        %75 = sbr.rel target = $region39
      $region38: #{reverse} parent=34 // pred_region
        // Predicated region
        $region51: #{reverse} parent=38 // pred_check
          _
        $region52: #{reverse} parent=38 // pred_check_branch
          %91 = sbr.rel (0) target = $region54
        $region53: #{reverse} parent=38 // pred_region
          %s93 = ssub.s32 2, 1
          loop: start=0, step=1, limit=1
          $region55: #{reverse} parent=53 // loop_pre_header
            _
          $region56: #{reverse} parent=53 // loop_header
            %s95 = sphi 0, %s99
            %p96 = scmp.ge.s32.totalorder %s95, 1
            %s100 = sphi [#allocation3], [#allocation3]
            %s101 = sphi %s1, %s1
          $region57: #{reverse} parent=53 // loop_header_branch
            %98 = sbr.rel (%p96) target = $region61
          $region58: #{reverse} parent=53 // loop_body
            %v102 = vld [vmem:[%s100] sm:%s93]
            %103 = vst [vmem:[%s101] sm:%s93] %v102
          $region59: #{reverse} parent=53 // loop_footer
            %s99 = sadd.s32 1, %s95
          $region60: #{reverse} parent=53 // loop_footer_branch
            %94 = sbr.rel target = $region56
          $region61: #{reverse} parent=53 // loop_exit
            _
        $region54: #{reverse} parent=38 // pred_fallthru
          _
      $region39: #{reverse} parent=34 // pred_fallthru
        _
      // Predicated region
      $region40: #{reverse} parent=34 // pred_check
        _
      $region41: #{reverse} parent=34 // pred_check_branch
        %77 = sbr.rel (0) target = $region43
      $region42: #{reverse} parent=34 // pred_region
        %s79 = ssub.s32 2, 1
        loop: start=0, step=1, limit=1
        $region44: #{reverse} parent=42 // loop_pre_header
          _
        $region45: #{reverse} parent=42 // loop_header
          %s81 = sphi 0, %s85
          %p82 = scmp.ge.s32.totalorder %s81, 1
          %s86 = sphi [#allocation3], [#allocation3]
          %s87 = sphi %s1, %s1
        $region46: #{reverse} parent=42 // loop_header_branch
          %84 = sbr.rel (%p82) target = $region50
        $region47: #{reverse} parent=42 // loop_body
          %v88 = vld [vmem:[%s86] sm:%s79]
          %89 = vst [vmem:[%s87] sm:%s79] %v88
        $region48: #{reverse} parent=42 // loop_footer
          %s85 = sadd.s32 1, %s81
        $region49: #{reverse} parent=42 // loop_footer_branch
          %80 = sbr.rel target = $region45
        $region50: #{reverse} parent=42 // loop_exit
          _
      $region43: #{reverse} parent=34 // pred_fallthru
        _
    $region35: #{reverse} parent=1 // pred_fallthru
      _
    %104 = vnop

// kernel: custom-call.16
$region0: #{custom-call.16}
  %s0 = inlined_call_operand.vmem [shape: f32[32,32], index: 0, kind: input, shape index: {}]
  %s1 = inlined_call_operand.vmem [shape: f32[32,32], index: 1, kind: output, shape index: {0}]
  %s2 = inlined_call_operand.vmem [shape: f32[32], index: 2, kind: output, shape index: {1}]
  %3 = xla_tuple %s1, %s2
  $region1: #{custom-call.16} parent=0
    #allocation0 [shape = 'u8[16384]{0}', space=vmem, size = 0x4000, scoped, tag = 'operand span for operand 0']
    #allocation1 [shape = 'u8[16384]{0}', space=vmem, size = 0x4000, scoped, tag = 'operand span for operand 1']
    #allocation2 [shape = 'u8[4096]{0}', space=vmem, size = 0x1000, scoped, tag = 'operand span for operand 2']
    #allocation3 [shape = 'u8[512]{0}', space=vmem, size = 0x400, scoped, tag = 'packed  for operand 2']
    #allocation4 [shape = 'f32[32,128]{1,0}', space=vmem, size = 0x4000, scoped, tag = 'scratch for Householder reflectors']
    // Predicated region
    $region2: #{custom-call.16} parent=1 // pred_check
      _
    $region3: #{custom-call.16} parent=1 // pred_check_branch
      %5 = sbr.rel (0) target = $region5
    $region4: #{custom-call.16} parent=1 // pred_region
      // Predicated region
      $region6: #{custom-call.16} parent=4 // pred_check
        _
      $region7: #{custom-call.16} parent=4 // pred_check_branch
        %7 = sbr.rel (0) target = $region9
      $region8: #{custom-call.16} parent=4 // pred_region
        // Predicated region
        $region21: #{custom-call.16} parent=8 // pred_check
          _
        $region22: #{custom-call.16} parent=8 // pred_check_branch
          %29 = sbr.rel (0) target = $region24
        $region23: #{custom-call.16} parent=8 // pred_region
          loop: start=0, step=1, limit=1
          $region25: #{custom-call.16} parent=23 // loop_pre_header
            _
          $region26: #{custom-call.16} parent=23 // loop_header
            %s31 = sphi 0, %s35
            %p32 = scmp.ge.s32.totalorder %s31, 1
            %s36 = sphi %s0, %s0
            %s37 = sphi [#allocation0], [#allocation0]
          $region27: #{custom-call.16} parent=23 // loop_header_branch
            %34 = sbr.rel (%p32) target = $region31
          $region28: #{custom-call.16} parent=23 // loop_body
            %v38 = vld [vmem:[%s36] sm:$0xff]
            %39 = vst [vmem:[%s37] sm:$0xff] %v38
            %v40 = vld [vmem:[%s36 + $0x8] sm:$0xff]
            %41 = vst [vmem:[%s37 + $0x8] sm:$0xff] %v40
            %v42 = vld [vmem:[%s36 + $0x10] sm:$0xff]
            %43 = vst [vmem:[%s37 + $0x10] sm:$0xff] %v42
            %v44 = vld [vmem:[%s36 + $0x18] sm:$0xff]
            %45 = vst [vmem:[%s37 + $0x18] sm:$0xff] %v44
          $region29: #{custom-call.16} parent=23 // loop_footer
            %s35 = sadd.s32 1, %s31
          $region30: #{custom-call.16} parent=23 // loop_footer_branch
            %30 = sbr.rel target = $region26
          $region31: #{custom-call.16} parent=23 // loop_exit
            _
        $region24: #{custom-call.16} parent=8 // pred_fallthru
          _
        // Predicated region
        $region32: #{custom-call.16} parent=8 // pred_check
          _
        $region33: #{custom-call.16} parent=8 // pred_check_branch
          %47 = sbr.rel target = $region35
        $region34: #{custom-call.16} parent=8 // pred_region
          _
        $region35: #{custom-call.16} parent=8 // pred_fallthru
          _
      $region9: #{custom-call.16} parent=4 // pred_fallthru
        _
      // Predicated region
      $region10: #{custom-call.16} parent=4 // pred_check
        _
      $region11: #{custom-call.16} parent=4 // pred_check_branch
        %9 = sbr.rel target = $region13
      $region12: #{custom-call.16} parent=4 // pred_region
        %s11 = ssub.s32 256, 1
        loop: start=0, step=1, limit=1
        $region14: #{custom-call.16} parent=12 // loop_pre_header
          _
        $region15: #{custom-call.16} parent=12 // loop_header
          %s13 = sphi 0, %s17
          %p14 = scmp.ge.s32.totalorder %s13, 1
          %s18 = sphi %s0, %s0
          %s19 = sphi [#allocation0], [#allocation0]
        $region16: #{custom-call.16} parent=12 // loop_header_branch
          %16 = sbr.rel (%p14) target = $region20
        $region17: #{custom-call.16} parent=12 // loop_body
          %v20 = vld [vmem:[%s18] sm:%s11]
          %21 = vst [vmem:[%s19] sm:%s11] %v20
          %v22 = vld [vmem:[%s18 + $0x8] sm:%s11]
          %23 = vst [vmem:[%s19 + $0x8] sm:%s11] %v22
          %v24 = vld [vmem:[%s18 + $0x10] sm:%s11]
          %25 = vst [vmem:[%s19 + $0x10] sm:%s11] %v24
          %v26 = vld [vmem:[%s18 + $0x18] sm:%s11]
          %27 = vst [vmem:[%s19 + $0x18] sm:%s11] %v26
        $region18: #{custom-call.16} parent=12 // loop_footer
          %s17 = sadd.s32 1, %s13
        $region19: #{custom-call.16} parent=12 // loop_footer_branch
          %12 = sbr.rel target = $region15
        $region20: #{custom-call.16} parent=12 // loop_exit
          _
      $region13: #{custom-call.16} parent=4 // pred_fallthru
        _
    $region5: #{custom-call.16} parent=1 // pred_fallthru
      _
    %48 = vnop
    %v49 = vld [vmem:[#allocation0] sm:$0xff]
    %50 = vst [vmem:[#allocation1] sm:$0xff] %v49
    %s51 = scalar_lea.vmem [#allocation1], 8
    %s52 = scalar_lea.vmem [#allocation0], 8
    %v53 = vld [vmem:[%s52] sm:$0xff]
    %54 = vst [vmem:[%s51] sm:$0xff] %v53
    %s55 = scalar_lea.vmem [#allocation1], 16
    %s56 = scalar_lea.vmem [#allocation0], 16
    %v57 = vld [vmem:[%s56] sm:$0xff]
    %58 = vst [vmem:[%s55] sm:$0xff] %v57
    %s59 = scalar_lea.vmem [#allocation1], 24
    %s60 = scalar_lea.vmem [#allocation0], 24
    %v61 = vld [vmem:[%s60] sm:$0xff]
    %62 = vst [vmem:[%s59] sm:$0xff] %v61
    %63 = vst [vmem:[#allocation2] sm:$0x1] 0.0
    loop: start=0, step=1, limit=32
    $region36: #{custom-call.16} parent=1 // loop_pre_header
      _
    $region37: #{custom-call.16} parent=1 // loop_header
      %s65 = sphi 0, %s69
      %p66 = scmp.ge.s32.totalorder %s65, 32
    $region38: #{custom-call.16} parent=1 // loop_header_branch
      %68 = sbr.rel (%p66) target = $region42
    $region39: #{custom-call.16} parent=1 // loop_body
      %v70 = vld [vmem:[#allocation1] sm:$0xff]
      %v71 = vlaneseq
      %v72 = vshrl.u32 %v71, 7
      %v74 = vstv %s65
      %vm75 = vcmp.gt.s32.totalorder %v72, %v74
      %v76 = vsel %vm75, %v70, 0.0
      %v77 = vmul.f32 %v76, %v76
      %s78 = scalar_lea.vmem [#allocation1], 8
      %v79 = vld [vmem:[%s78] sm:$0xff]
      %v80 = vlaneseq
      %v81 = vshrl.u32 %v80, 7
      %v82 = vadd.s32 %v81, 8
      %v83 = vstv %s65
      %vm84 = vcmp.gt.s32.totalorder %v82, %v83
      %v85 = vsel %vm84, %v79, 0.0
      %v86 = vmul.f32 %v85, %v85
      %v87 = vadd.f32 %v77, %v86
      %s88 = scalar_lea.vmem [#allocation1], 16
      %v89 = vld [vmem:[%s88] sm:$0xff]
      %v90 = vlaneseq
      %v91 = vshrl.u32 %v90, 7
      %v92 = vadd.s32 %v91, 16
      %v93 = vstv %s65
      %vm94 = vcmp.gt.s32.totalorder %v92, %v93
      %v95 = vsel %vm94, %v89, 0.0
      %v96 = vmul.f32 %v95, %v95
      %v97 = vadd.f32 %v87, %v96
      %s98 = scalar_lea.vmem [#allocation1], 24
      %v99 = vld [vmem:[%s98] sm:$0xff]
      %v100 = vlaneseq
      %v101 = vshrl.u32 %v100, 7
      %v102 = vadd.s32 %v101, 24
      %v103 = vstv %s65
      %vm104 = vcmp.gt.s32.totalorder %v102, %v103
      %vm105 = vcmp.lt.s32.totalorder %v102, 32
      %vm106 = vmand %vm104, %vm105
      %v107 = vsel %vm106, %v99, 0.0
      %v108 = vmul.f32 %v107, %v107
      %v109 = vadd.f32 %v97, %v108
      %v110 = vrot.slane %v109, 4
      %v111 = vadd.f32 %v109, %v110
      %v112 = vrot.slane %v111, 2
      %v113 = vadd.f32 %v111, %v112
      %v114 = vrot.slane %v113, 1
      %v115 = vadd.f32 %v113, %v114
      %v116 = vrsqrt.pop %v115
      %v117 = vmul.f32 %v115, %v116
      %vm118 = vcmp.eq.f32.partialorder %v115, inf
      %v119 = vsel %vm118, %v115, %v117
      %vm120 = vcmp.eq.f32.partialorder %v115, 0.0
      %v121 = vand.u32 %v115, 2147483648
      %v122 = vsel %vm120, %v121, %v119
      %vm123 = vcmp.eq.f32.partialorder %v115, 0.0
      %s124 = sshrl.u32 %s65, 3
      %s125 = sand.u32 %s65, 7
      %s126 = smul.addr %s124, 8
      %s127 = sadd.s32 %s125, %s126
      %s128 = scalar_lea.vmem [#allocation1], %s127
      %v129 = vld [vmem:[%s128] ss:$0 sm:$0xff]
      %v130 = vand.u32 2147483647, %v129
      %v131 = vmax.f32 %v130, 0.0
      %v132 = vand.u32 2147483647, %v122
      %v133 = vmax.f32 %v131, %v132
      %v134 = vrcp.pop %v133
      %v135 = vmul.f32 %v130, %v134
      %v136 = vmul.f32 %v135, %v135
      %v137 = vrcp.pop %v133
      %v138 = vmul.f32 0.0, %v137
      %v139 = vmul.f32 %v138, %v138
      %v140 = vadd.f32 %v136, %v139
      %v141 = vrcp.pop %v133
      %v142 = vmul.f32 %v132, %v141
      %v143 = vmul.f32 %v142, %v142
      %v144 = vadd.f32 %v140, %v143
      %vm145 = vcmp.eq.f32.partialorder %v133, 0.0
      %v146 = vrsqrt.pop %v144
      %v147 = vmul.f32 %v144, %v146
      %vm148 = vcmp.eq.f32.partialorder %v144, inf
      %v149 = vsel %vm148, %v144, %v147
      %vm150 = vcmp.eq.f32.partialorder %v144, 0.0
      %v151 = vand.u32 %v144, 2147483648
      %v152 = vsel %vm150, %v151, %v149
      %v153 = vmul.f32 %v133, %v152
      %v154 = vsel %vm145, 0.0, %v153
      %vm155 = vcmp.lt.f32.partialorder %v129, 0.0
      %v156 = vxor.u32 %v154, 2147483648
      %v157 = vsel %vm155, %v154, %v156
      %v158 = vsub.f32 %v157, %v129
      %v159 = vrcp.pop %v157
      %v160 = vmul.f32 %v158, %v159
      %v161 = vsel %vm123, %v129, %v157
      %v162 = vsel %vm123, 0.0, %v160
      %v163 = vsub.f32 %v129, %v161
      %s164 = smov [#allocation1]
      %v165 = vlaneseq
      %v166 = vshrl.u32 %v165, 7
      %v167 = vmov %v166
      %v168 = vld [vmem:[%s164] sm:$0xff]
      %v170 = vstv %s65
      %vm171 = vcmp.gt.s32.totalorder %v167, %v170
      %v172 = vsel %vm171, %v168, 0.0
      %v173 = vrcp.pop %v163
      %v174 = vmul.f32 %v172, %v173
      %v175 = vsel %vm123, 0.0, %v174
      %v176 = vstv %s65
      %v177 = vlaneseq
      %v178 = vand.u32 %v177, 127
      %vm179 = vcmp.eq.s32.totalorder %v178, %v176
      %v180 = vsel %vm179, %v175, 0.0
      %181 = vadd.xlane.f32.xlu0 %v180
      %v182 = vpop.xlane.xlu0 %181
      %183 = vst [vmem:[#allocation4] sm:$0xff] %v182
      %s184 = scalar_lea.vmem %s164, 8
      %v185 = vld [vmem:[%s184] sm:$0xff]
      %v186 = vadd.s32 %v167, 8
      %v187 = vstv %s65
      %vm188 = vcmp.gt.s32.totalorder %v186, %v187
      %v189 = vsel %vm188, %v185, 0.0
      %v190 = vrcp.pop %v163
      %v191 = vmul.f32 %v189, %v190
      %v192 = vsel %vm123, 0.0, %v191
      %v193 = vstv %s65
      %v194 = vlaneseq
      %v195 = vand.u32 %v194, 127
      %vm196 = vcmp.eq.s32.totalorder %v195, %v193
      %v197 = vsel %vm196, %v192, 0.0
      %198 = vadd.xlane.f32.xlu0 %v197
      %v199 = vpop.xlane.xlu0 %198
      %s200 = scalar_lea.vmem [#allocation4], 8
      %201 = vst [vmem:[%s200] sm:$0xff] %v199
      %s202 = scalar_lea.vmem %s164, 16
      %v203 = vld [vmem:[%s202] sm:$0xff]
      %v204 = vadd.s32 %v167, 16
      %v205 = vstv %s65
      %vm206 = vcmp.gt.s32.totalorder %v204, %v205
      %v207 = vsel %vm206, %v203, 0.0
      %v208 = vrcp.pop %v163
      %v209 = vmul.f32 %v207, %v208
      %v210 = vsel %vm123, 0.0, %v209
      %v211 = vstv %s65
      %v212 = vlaneseq
      %v213 = vand.u32 %v212, 127
      %vm214 = vcmp.eq.s32.totalorder %v213, %v211
      %v215 = vsel %vm214, %v210, 0.0
      %216 = vadd.xlane.f32.xlu0 %v215
      %v217 = vpop.xlane.xlu0 %216
      %s218 = scalar_lea.vmem [#allocation4], 16
      %219 = vst [vmem:[%s218] sm:$0xff] %v217
      %s220 = scalar_lea.vmem %s164, 24
      %v221 = vld [vmem:[%s220] sm:$0xff]
      %v222 = vadd.s32 %v167, 24
      %v223 = vstv %s65
      %vm224 = vcmp.gt.s32.totalorder %v222, %v223
      %vm225 = vcmp.lt.s32.totalorder %v222, 32
      %vm226 = vmand %vm224, %vm225
      %v227 = vsel %vm226, %v221, 0.0
      %v228 = vrcp.pop %v163
      %v229 = vmul.f32 %v227, %v228
      %v230 = vsel %vm123, 0.0, %v229
      %v231 = vstv %s65
      %v232 = vlaneseq
      %v233 = vand.u32 %v232, 127
      %vm234 = vcmp.eq.s32.totalorder %v233, %v231
      %v235 = vsel %vm234, %v230, 0.0
      %236 = vadd.xlane.f32.xlu0 %v235
      %v237 = vpop.xlane.xlu0 %236
      %s238 = scalar_lea.vmem [#allocation4], 24
      %239 = vst [vmem:[%s238] sm:$0xff] %v237
      %s240 = scalar_lea.vmem [#allocation4], %s65
      %241 = vst [vmem:[%s240] sm:$0x1] 1.0
      %v242 = vstv %s65
      %v243 = vlaneseq
      %v244 = vand.u32 %v243, 127
      %vm245 = vcmp.eq.s32.totalorder %v244, %v242
      %v246 = vsel %vm245, %v162, 0.0
      %247 = vadd.xlane.f32.xlu0 %v246
      %v248 = vpop.xlane.xlu0 %247
      %v249 = vstv %s65
      %v250 = vlaneseq
      %v251 = vand.u32 %v250, 127
      %vm252 = vcmp.eq.s32.totalorder %v251, %v249
      %v253 = vld [vmem:[#allocation2] ss:$0 sm:$0xff]
      %v254 = vsel %vm252, %v248, %v253
      %255 = vst [vmem:[#allocation2] sm:$0x1] %v254
      %s256 = smov [#allocation1]
      %s257 = smov [#allocation4]
      %v258 = vlaneseq
      %v259 = vshrl.u32 %v258, 7
      %v260 = vmov %v259
      %v262 = vld [vmem:[%s257] sm:$0xff]
      %v263 = vld [vmem:[%s256] sm:$0xff]
      %v264 = vmul.f32 %v262, %v263
      %v265 = vadd.s32 %v260, 8
      %s266 = scalar_lea.vmem %s257, 8
      %v267 = vld [vmem:[%s266] sm:$0xff]
      %s268 = scalar_lea.vmem %s256, 8
      %v269 = vld [vmem:[%s268] sm:$0xff]
      %v270 = vmul.f32 %v267, %v269
      %v271 = vadd.f32 %v264, %v270
      %v272 = vadd.s32 %v260, 16
      %s273 = scalar_lea.vmem %s257, 16
      %v274 = vld [vmem:[%s273] sm:$0xff]
      %s275 = scalar_lea.vmem %s256, 16
      %v276 = vld [vmem:[%s275] sm:$0xff]
      %v277 = vmul.f32 %v274, %v276
      %v278 = vadd.f32 %v271, %v277
      %v279 = vadd.s32 %v260, 24
      %s280 = scalar_lea.vmem %s257, 24
      %v281 = vld [vmem:[%s280] sm:$0xff]
      %s282 = scalar_lea.vmem %s256, 24
      %v283 = vld [vmem:[%s282] sm:$0xff]
      %v284 = vmul.f32 %v281, %v283
      %vm285 = vcmp.lt.s32.totalorder %v279, 32
      %v286 = vsel %vm285, %v284, 0.0
      %v287 = vadd.f32 %v278, %v286
      %v288 = vrot.slane %v287, 4
      %v289 = vadd.f32 %v287, %v288
      %v290 = vrot.slane %v289, 2
      %v291 = vadd.f32 %v289, %v290
      %v292 = vrot.slane %v291, 1
      %v293 = vadd.f32 %v291, %v292
      %s294 = smov %s256
      %s295 = smov %s257
      %v296 = vlaneseq
      %v297 = vshrl.u32 %v296, 7
      %v298 = vmov %v297
      %v299 = vmul.f32 %v293, %v248
      %v301 = vlaneseq
      %v302 = vand.u32 %v301, 127
      %v303 = vld [vmem:[%s295] sm:$0xff]
      %v304 = vmul.f32 %v303, %v299
      %v305 = vld [vmem:[%s294] sm:$0xff]
      %v306 = vstv %s65
      %vm307 = vcmp.gt.s32.totalorder %v302, %v306
      %v308 = vsub.f32 %v305, %v304
      %v309 = vsel %vm307, %v308, %v305
      %v310 = vstv %s65
      %v311 = vlaneseq
      %v312 = vand.u32 %v311, 127
      %vm313 = vcmp.eq.s32.totalorder %v312, %v310
      %v314 = vstv %s65
      %vm315 = vcmp.ge.s32.totalorder %v298, %v314
      %vm316 = vmand %vm313, %vm315
      %v317 = vsel %vm316, %v303, %v309
      %318 = vst [vmem:[%s294] sm:$0xff] %v317
      %v319 = vadd.s32 %v298, 8
      %v320 = vlaneseq
      %v321 = vand.u32 %v320, 127
      %s322 = scalar_lea.vmem %s295, 8
      %v323 = vld [vmem:[%s322] sm:$0xff]
      %v324 = vmul.f32 %v323, %v299
      %s325 = scalar_lea.vmem %s294, 8
      %v326 = vld [vmem:[%s325] sm:$0xff]
      %v327 = vstv %s65
      %vm328 = vcmp.gt.s32.totalorder %v321, %v327
      %v329 = vsub.f32 %v326, %v324
      %v330 = vsel %vm328, %v329, %v326
      %v331 = vstv %s65
      %v332 = vlaneseq
      %v333 = vand.u32 %v332, 127
      %vm334 = vcmp.eq.s32.totalorder %v333, %v331
      %v335 = vstv %s65
      %vm336 = vcmp.ge.s32.totalorder %v319, %v335
      %vm337 = vmand %vm334, %vm336
      %v338 = vsel %vm337, %v323, %v330
      %339 = vst [vmem:[%s325] sm:$0xff] %v338
      %v340 = vadd.s32 %v298, 16
      %v341 = vlaneseq
      %v342 = vand.u32 %v341, 127
      %s343 = scalar_lea.vmem %s295, 16
      %v344 = vld [vmem:[%s343] sm:$0xff]
      %v345 = vmul.f32 %v344, %v299
      %s346 = scalar_lea.vmem %s294, 16
      %v347 = vld [vmem:[%s346] sm:$0xff]
      %v348 = vstv %s65
      %vm349 = vcmp.gt.s32.totalorder %v342, %v348
      %v350 = vsub.f32 %v347, %v345
      %v351 = vsel %vm349, %v350, %v347
      %v352 = vstv %s65
      %v353 = vlaneseq
      %v354 = vand.u32 %v353, 127
      %vm355 = vcmp.eq.s32.totalorder %v354, %v352
      %v356 = vstv %s65
      %vm357 = vcmp.ge.s32.totalorder %v340, %v356
      %vm358 = vmand %vm355, %vm357
      %v359 = vsel %vm358, %v344, %v351
      %360 = vst [vmem:[%s346] sm:$0xff] %v359
      %v361 = vadd.s32 %v298, 24
      %v362 = vlaneseq
      %v363 = vand.u32 %v362, 127
      %s364 = scalar_lea.vmem %s295, 24
      %v365 = vld [vmem:[%s364] sm:$0xff]
      %v366 = vmul.f32 %v365, %v299
      %s367 = scalar_lea.vmem %s294, 24
      %v368 = vld [vmem:[%s367] sm:$0xff]
      %v369 = vstv %s65
      %vm370 = vcmp.gt.s32.totalorder %v363, %v369
      %v371 = vsub.f32 %v368, %v366
      %v372 = vsel %vm370, %v371, %v368
      %v373 = vstv %s65
      %v374 = vlaneseq
      %v375 = vand.u32 %v374, 127
      %vm376 = vcmp.eq.s32.totalorder %v375, %v373
      %v377 = vstv %s65
      %vm378 = vcmp.ge.s32.totalorder %v361, %v377
      %vm379 = vmand %vm376, %vm378
      %v380 = vsel %vm379, %v365, %v372
      %381 = vst [vmem:[%s367] sm:$0xff] %v380
      %s382 = scalar_lea.vmem %s294, %s65
      %v383 = vld [vmem:[%s382] ss:$0 sm:$0xff]
      %v384 = vstv %s65
      %v385 = vlaneseq
      %v386 = vand.u32 %v385, 127
      %vm387 = vcmp.eq.s32.totalorder %v386, %v384
      %v388 = vsel %vm387, %v161, %v383
      %389 = vst [vmem:[%s382] sm:$0x1] %v388
    $region40: #{custom-call.16} parent=1 // loop_footer
      %s69 = sadd.s32 1, %s65
    $region41: #{custom-call.16} parent=1 // loop_footer_branch
      %64 = sbr.rel target = $region37
    $region42: #{custom-call.16} parent=1 // loop_exit
      _
    %s391 = sshll.u32 1, 1
    %s392 = ssub.s32 %s391, 1
    %v394 = vld [vmem:[#allocation2] sm:%s392]
    %s395 = sshll.u32 1, 1
    %s396 = ssub.s32 %s395, 1
    %397 = vst [vmem:[#allocation3] sm:%s396] %v394
    // Predicated region
    $region43: #{custom-call.16} parent=1 // pred_check
      _
    $region44: #{custom-call.16} parent=1 // pred_check_branch
      %399 = sbr.rel (0) target = $region46
    $region45: #{custom-call.16} parent=1 // pred_region
      // Predicated region
      $region47: #{custom-call.16} parent=45 // pred_check
        _
      $region48: #{custom-call.16} parent=45 // pred_check_branch
        %401 = sbr.rel (0) target = $region50
      $region49: #{custom-call.16} parent=45 // pred_region
        // Predicated region
        $region62: #{custom-call.16} parent=49 // pred_check
          _
        $region63: #{custom-call.16} parent=49 // pred_check_branch
          %423 = sbr.rel (0) target = $region65
        $region64: #{custom-call.16} parent=49 // pred_region
          loop: start=0, step=1, limit=1
          $region66: #{custom-call.16} parent=64 // loop_pre_header
            _
          $region67: #{custom-call.16} parent=64 // loop_header
            %s425 = sphi 0, %s429
            %p426 = scmp.ge.s32.totalorder %s425, 1
            %s430 = sphi [#allocation1], [#allocation1]
            %s431 = sphi %s1, %s1
          $region68: #{custom-call.16} parent=64 // loop_header_branch
            %428 = sbr.rel (%p426) target = $region72
          $region69: #{custom-call.16} parent=64 // loop_body
            %v432 = vld [vmem:[%s430] sm:$0xff]
            %433 = vst [vmem:[%s431] sm:$0xff] %v432
            %v434 = vld [vmem:[%s430 + $0x8] sm:$0xff]
            %435 = vst [vmem:[%s431 + $0x8] sm:$0xff] %v434
            %v436 = vld [vmem:[%s430 + $0x10] sm:$0xff]
            %437 = vst [vmem:[%s431 + $0x10] sm:$0xff] %v436
            %v438 = vld [vmem:[%s430 + $0x18] sm:$0xff]
            %439 = vst [vmem:[%s431 + $0x18] sm:$0xff] %v438
          $region70: #{custom-call.16} parent=64 // loop_footer
            %s429 = sadd.s32 1, %s425
          $region71: #{custom-call.16} parent=64 // loop_footer_branch
            %424 = sbr.rel target = $region67
          $region72: #{custom-call.16} parent=64 // loop_exit
            _
        $region65: #{custom-call.16} parent=49 // pred_fallthru
          _
        // Predicated region
        $region73: #{custom-call.16} parent=49 // pred_check
          _
        $region74: #{custom-call.16} parent=49 // pred_check_branch
          %441 = sbr.rel target = $region76
        $region75: #{custom-call.16} parent=49 // pred_region
          _
        $region76: #{custom-call.16} parent=49 // pred_fallthru
          _
      $region50: #{custom-call.16} parent=45 // pred_fallthru
        _
      // Predicated region
      $region51: #{custom-call.16} parent=45 // pred_check
        _
      $region52: #{custom-call.16} parent=45 // pred_check_branch
        %403 = sbr.rel target = $region54
      $region53: #{custom-call.16} parent=45 // pred_region
        %s405 = ssub.s32 256, 1
        loop: start=0, step=1, limit=1
        $region55: #{custom-call.16} parent=53 // loop_pre_header
          _
        $region56: #{custom-call.16} parent=53 // loop_header
          %s407 = sphi 0, %s411
          %p408 = scmp.ge.s32.totalorder %s407, 1
          %s412 = sphi [#allocation1], [#allocation1]
          %s413 = sphi %s1, %s1
        $region57: #{custom-call.16} parent=53 // loop_header_branch
          %410 = sbr.rel (%p408) target = $region61
        $region58: #{custom-call.16} parent=53 // loop_body
          %v414 = vld [vmem:[%s412] sm:%s405]
          %415 = vst [vmem:[%s413] sm:%s405] %v414
          %v416 = vld [vmem:[%s412 + $0x8] sm:%s405]
          %417 = vst [vmem:[%s413 + $0x8] sm:%s405] %v416
          %v418 = vld [vmem:[%s412 + $0x10] sm:%s405]
          %419 = vst [vmem:[%s413 + $0x10] sm:%s405] %v418
          %v420 = vld [vmem:[%s412 + $0x18] sm:%s405]
          %421 = vst [vmem:[%s413 + $0x18] sm:%s405] %v420
        $region59: #{custom-call.16} parent=53 // loop_footer
          %s411 = sadd.s32 1, %s407
        $region60: #{custom-call.16} parent=53 // loop_footer_branch
          %406 = sbr.rel target = $region56
        $region61: #{custom-call.16} parent=53 // loop_exit
          _
      $region54: #{custom-call.16} parent=45 // pred_fallthru
        _
    $region46: #{custom-call.16} parent=1 // pred_fallthru
      _
    %442 = vnop
    // Predicated region
    $region77: #{custom-call.16} parent=1 // pred_check
      _
    $region78: #{custom-call.16} parent=1 // pred_check_branch
      %444 = sbr.rel (0) target = $region80
    $region79: #{custom-call.16} parent=1 // pred_region
      // Predicated region
      $region81: #{custom-call.16} parent=79 // pred_check
        _
      $region82: #{custom-call.16} parent=79 // pred_check_branch
        %446 = sbr.rel (0) target = $region84
      $region83: #{custom-call.16} parent=79 // pred_region
        // Predicated region
        $region85: #{custom-call.16} parent=83 // pred_check
          _
        $region86: #{custom-call.16} parent=83 // pred_check_branch
          %448 = sbr.rel target = $region88
        $region87: #{custom-call.16} parent=83 // pred_region
          // Predicated region
          $region100: #{custom-call.16} parent=87 // pred_check
            _
          $region101: #{custom-call.16} parent=87 // pred_check_branch
            %464 = sbr.rel (0) target = $region103
          $region102: #{custom-call.16} parent=87 // pred_region
            %s466 = ssub.s32 2, 1
            loop: start=0, step=1, limit=1
            $region104: #{custom-call.16} parent=102 // loop_pre_header
              _
            $region105: #{custom-call.16} parent=102 // loop_header
              %s468 = sphi 0, %s472
              %p469 = scmp.ge.s32.totalorder %s468, 1
              %s473 = sphi [#allocation3], [#allocation3]
              %s474 = sphi %s2, %s2
            $region106: #{custom-call.16} parent=102 // loop_header_branch
              %471 = sbr.rel (%p469) target = $region110
            $region107: #{custom-call.16} parent=102 // loop_body
              %v475 = vld [vmem:[%s473] sm:%s466]
              %476 = vst [vmem:[%s474] sm:%s466] %v475
            $region108: #{custom-call.16} parent=102 // loop_footer
              %s472 = sadd.s32 1, %s468
            $region109: #{custom-call.16} parent=102 // loop_footer_branch
              %467 = sbr.rel target = $region105
            $region110: #{custom-call.16} parent=102 // loop_exit
              _
          $region103: #{custom-call.16} parent=87 // pred_fallthru
            _
        $region88: #{custom-call.16} parent=83 // pred_fallthru
          _
        // Predicated region
        $region89: #{custom-call.16} parent=83 // pred_check
          _
        $region90: #{custom-call.16} parent=83 // pred_check_branch
          %450 = sbr.rel (0) target = $region92
        $region91: #{custom-call.16} parent=83 // pred_region
          %s452 = ssub.s32 2, 1
          loop: start=0, step=1, limit=1
          $region93: #{custom-call.16} parent=91 // loop_pre_header
            _
          $region94: #{custom-call.16} parent=91 // loop_header
            %s454 = sphi 0, %s458
            %p455 = scmp.ge.s32.totalorder %s454, 1
            %s459 = sphi [#allocation3], [#allocation3]
            %s460 = sphi %s2, %s2
          $region95: #{custom-call.16} parent=91 // loop_header_branch
            %457 = sbr.rel (%p455) target = $region99
          $region96: #{custom-call.16} parent=91 // loop_body
            %v461 = vld [vmem:[%s459] sm:%s452]
            %462 = vst [vmem:[%s460] sm:%s452] %v461
          $region97: #{custom-call.16} parent=91 // loop_footer
            %s458 = sadd.s32 1, %s454
          $region98: #{custom-call.16} parent=91 // loop_footer_branch
            %453 = sbr.rel target = $region94
          $region99: #{custom-call.16} parent=91 // loop_exit
            _
        $region92: #{custom-call.16} parent=83 // pred_fallthru
          _
      $region84: #{custom-call.16} parent=79 // pred_fallthru
        _
      %477 = vnop
    $region80: #{custom-call.16} parent=1 // pred_fallthru
      _
    // Predicated region
    $region111: #{custom-call.16} parent=1 // pred_check
      _
    $region112: #{custom-call.16} parent=1 // pred_check_branch
      %479 = sbr.rel (0) target = $region114
    $region113: #{custom-call.16} parent=1 // pred_region
      _
    $region114: #{custom-call.16} parent=1 // pred_fallthru
      _

// kernel: relu_pca_forward.5
$region0: #{relu_pca_forward.5}
  #allocation0 [shape = 'u32[]', space=smem, size = 0x4, offset = 0x4, fixed_abs, tag = 'smem constant byte address 0x4 - core index']
  #allocation1 [shape = 'u32[144,128]{1,0:T(1,128)}', space=vmem, size = 0x12000, scoped, tag = 'internal scratch']
  %s0 = inlined_call_operand.vmem [shape: bf16[32,512], index: 0, kind: input, shape index: {}]
  %s1 = inlined_call_operand.vmem [shape: bf16[32,32], index: 1, kind: input, shape index: {}]
  %s2 = inlined_call_operand.vmem [shape: f32[32,1], index: 2, kind: input, shape index: {}]
  %s3 = inlined_call_operand.vmem [shape: f32[32,1], index: 3, kind: output, shape index: {0}]
  %s4 = inlined_call_operand.vmem [shape: f32[32,1], index: 4, kind: output, shape index: {1}]
  %s5 = inlined_call_operand.vmem [shape: f32[32,1], index: 5, kind: output, shape index: {2}]
  %6 = xla_tuple %s3, %s4, %s5
  %s7 = sld [smem:[#allocation0]]
  $region106: #{relu_pca_forward.5} parent=0
    _
  %s9 = ssub.s32 1, %s7
  %s10 = scalar_select 0, %s9, %s7
  $region1: #{relu_pca_forward.5} parent=0
    #allocation2 [shape = 'u8[16384]{0}', space=vmem, size = 0x4000, scoped, tag = 'input window, operand 0']
    loop: start=0, step=1, limit=6
    $region2: #{relu_pca_forward.5} parent=1 // loop_pre_header
      _
    $region3: #{relu_pca_forward.5} parent=1 // loop_header
      %s12 = sphi 0, %s16
      %p13 = scmp.ge.s32.totalorder %s12, 6
      %s22 = sphi 0, %s24
      %s25 = sphi 0, %s22
      %s26 = sphi 0, %s25
      %s42 = sphi 0, %s26
      %s46 = sphi 0, %s46
      %s48 = sphi 0, %s46
      %s49 = sphi 0, %s48
      %s63 = sphi 0, %s49
      %s67 = sphi 0, %s67
      %s69 = sphi 0, %s67
      %s70 = sphi 0, %s69
      %s84 = sphi 0, %s70
      %s88 = sphi 0, %s88
      %s90 = sphi 0, %s88
      %s91 = sphi 0, %s90
      %s105 = sphi 0, %s91
      %s109 = sphi 0, %s109
      %s111 = sphi 0, %s109
      %s112 = sphi 0, %s111
      %s126 = sphi 0, %s112
      %s130 = sphi 0, %s130
      %s132 = sphi 0, %s130
      %s133 = sphi 0, %s132
      %s147 = sphi 0, %s133
    $region4: #{relu_pca_forward.5} parent=1 // loop_header_branch
      %15 = sbr.rel (%p13) target = $region8
    $region5: #{relu_pca_forward.5} parent=1 // loop_body
      %s17 = ssub.s32 %s12, 1
      %s18 = ssub.s32 %s12, 2
      %s19 = sadd.s32 %s12, 1
      %s20 = ssub.s32 %s12, %s19
      %p21 = scmp.eq.s32.totalorder %s20, 0
      %s23 = sadd.s32 %s22, 1
      %s24 = scalar_select %p21, %s22, %s23
      %p27 = pneg %p21
      %p28 = scmp.eq.s32.totalorder %s12, 3
      %p29 = por %p27, %p28
      %p30 = scmp.ne.s32.totalorder %s22, %s25
      %p31 = scmp.eq.s32.totalorder %s12, 0
      %p32 = por %p30, %p31
      %p33 = scmp.ne.s32.totalorder %s22, %s25
      %p34 = scmp.eq.s32.totalorder %s17, 3
      %p35 = por %p33, %p34
      %p36 = scmp.ne.s32.totalorder %s25, %s26
      %p37 = scmp.eq.s32.totalorder %s17, 0
      %p38 = por %p36, %p37
      %p39 = scmp.ne.s32.totalorder %s25, %s26
      %p40 = scmp.eq.s32.totalorder %s18, 3
      %p41 = por %p39, %p40
      %p43 = scmp.ne.s32.totalorder %s26, %s42
      %p44 = scmp.eq.s32.totalorder %s18, 0
      %p45 = por %p43, %p44
      %s47 = sadd.s32 %s46, 1
      %p50 = scmp.eq.s32.totalorder %s12, 3
      %p51 = scmp.ne.s32.totalorder %s46, %s48
      %p52 = scmp.eq.s32.totalorder %s12, 0
      %p53 = por %p51, %p52
      %p54 = scmp.ne.s32.totalorder %s46, %s48
      %p55 = scmp.eq.s32.totalorder %s17, 3
      %p56 = por %p54, %p55
      %p57 = scmp.ne.s32.totalorder %s48, %s49
      %p58 = scmp.eq.s32.totalorder %s17, 0
      %p59 = por %p57, %p58
      %p60 = scmp.ne.s32.totalorder %s48, %s49
      %p61 = scmp.eq.s32.totalorder %s18, 3
      %p62 = por %p60, %p61
      %p64 = scmp.ne.s32.totalorder %s49, %s63
      %p65 = scmp.eq.s32.totalorder %s18, 0
      %p66 = por %p64, %p65
      %s68 = sadd.s32 %s67, 1
      %p71 = scmp.eq.s32.totalorder %s12, 3
      %p72 = scmp.ne.s32.totalorder %s67, %s69
      %p73 = scmp.eq.s32.totalorder %s12, 0
      %p74 = por %p72, %p73
      %p75 = scmp.ne.s32.totalorder %s67, %s69
      %p76 = scmp.eq.s32.totalorder %s17, 3
      %p77 = por %p75, %p76
      %p78 = scmp.ne.s32.totalorder %s69, %s70
      %p79 = scmp.eq.s32.totalorder %s17, 0
      %p80 = por %p78, %p79
      %p81 = scmp.ne.s32.totalorder %s69, %s70
      %p82 = scmp.eq.s32.totalorder %s18, 3
      %p83 = por %p81, %p82
      %p85 = scmp.ne.s32.totalorder %s70, %s84
      %p86 = scmp.eq.s32.totalorder %s18, 0
      %p87 = por %p85, %p86
      %s89 = sadd.s32 %s88, 1
      %p92 = scmp.eq.s32.totalorder %s12, 3
      %p93 = scmp.ne.s32.totalorder %s88, %s90
      %p94 = scmp.eq.s32.totalorder %s12, 0
      %p95 = por %p93, %p94
      %p96 = scmp.ne.s32.totalorder %s88, %s90
      %p97 = scmp.eq.s32.totalorder %s17, 3
      %p98 = por %p96, %p97
      %p99 = scmp.ne.s32.totalorder %s90, %s91
      %p100 = scmp.eq.s32.totalorder %s17, 0
      %p101 = por %p99, %p100
      %p102 = scmp.ne.s32.totalorder %s90, %s91
      %p103 = scmp.eq.s32.totalorder %s18, 3
      %p104 = por %p102, %p103
      %p106 = scmp.ne.s32.totalorder %s91, %s105
      %p107 = scmp.eq.s32.totalorder %s18, 0
      %p108 = por %p106, %p107
      %s110 = sadd.s32 %s109, 1
      %p113 = scmp.eq.s32.totalorder %s12, 3
      %p114 = scmp.ne.s32.totalorder %s109, %s111
      %p115 = scmp.eq.s32.totalorder %s12, 0
      %p116 = por %p114, %p115
      %p117 = scmp.ne.s32.totalorder %s109, %s111
      %p118 = scmp.eq.s32.totalorder %s17, 3
      %p119 = por %p117, %p118
      %p120 = scmp.ne.s32.totalorder %s111, %s112
      %p121 = scmp.eq.s32.totalorder %s17, 0
      %p122 = por %p120, %p121
      %p123 = scmp.ne.s32.totalorder %s111, %s112
      %p124 = scmp.eq.s32.totalorder %s18, 3
      %p125 = por %p123, %p124
      %p127 = scmp.ne.s32.totalorder %s112, %s126
      %p128 = scmp.eq.s32.totalorder %s18, 0
      %p129 = por %p127, %p128
      %s131 = sadd.s32 %s130, 1
      %p134 = scmp.eq.s32.totalorder %s12, 3
      %p135 = scmp.ne.s32.totalorder %s130, %s132
      %p136 = scmp.eq.s32.totalorder %s12, 0
      %p137 = por %p135, %p136
      %p138 = scmp.ne.s32.totalorder %s130, %s132
      %p139 = scmp.eq.s32.totalorder %s17, 3
      %p140 = por %p138, %p139
      %p141 = scmp.ne.s32.totalorder %s132, %s133
      %p142 = scmp.eq.s32.totalorder %s17, 0
      %p143 = por %p141, %p142
      %p144 = scmp.ne.s32.totalorder %s132, %s133
      %p145 = scmp.eq.s32.totalorder %s18, 3
      %p146 = por %p144, %p145
      %p148 = scmp.ne.s32.totalorder %s133, %s147
      %p149 = scmp.eq.s32.totalorder %s18, 0
      %p150 = por %p148, %p149
      %p151 = scmp.le.s32.totalorder 1, %s12
      %p152 = scmp.lt.s32.totalorder %s12, 5
      %p153 = pnand %p151, %p152
      %p154 = pneg %p153
      // Predicated region
      $region9: #{relu_pca_forward.5} parent=5 // pred_check
        _
      $region10: #{relu_pca_forward.5} parent=5 // pred_check_branch
        %156 = sbr.rel (%p153) target = $region12
      $region11: #{relu_pca_forward.5} parent=5 // pred_region
        %s157 = ssub.s32 %s12, 1
        // Predicated region
        $region13: #{relu_pca_forward.5} parent=11 // pred_check
          %p158 = pneg %p59
        $region14: #{relu_pca_forward.5} parent=11 // pred_check_branch
          %160 = sbr.rel (%p158) target = $region16
        $region15: #{relu_pca_forward.5} parent=11 // pred_region
          _
        $region16: #{relu_pca_forward.5} parent=11 // pred_fallthru
          _
        // Predicated region
        $region17: #{relu_pca_forward.5} parent=11 // pred_check
          %p161 = pneg %p80
        $region18: #{relu_pca_forward.5} parent=11 // pred_check_branch
          %163 = sbr.rel (%p161) target = $region20
        $region19: #{relu_pca_forward.5} parent=11 // pred_region
          _
        $region20: #{relu_pca_forward.5} parent=11 // pred_fallthru
          _
      $region12: #{relu_pca_forward.5} parent=5 // pred_fallthru
        _
      %p164 = scmp.lt.s32.totalorder %s12, 4
      // Predicated region
      $region21: #{relu_pca_forward.5} parent=5 // pred_check
        %p165 = pneg %p164
      $region22: #{relu_pca_forward.5} parent=5 // pred_check_branch
        %167 = sbr.rel (%p165) target = $region24
      $region23: #{relu_pca_forward.5} parent=5 // pred_region
        // Predicated region
        $region25: #{relu_pca_forward.5} parent=23 // pred_check
          %p168 = pneg %p32
        $region26: #{relu_pca_forward.5} parent=23 // pred_check_branch
          %170 = sbr.rel (%p168) target = $region28
        $region27: #{relu_pca_forward.5} parent=23 // pred_region
          %s171 = sand.u32 %s22, 1
          %s172 = sand.u32 %s22, 1
          %s173 = smul.addr %s172, 16
          %s174 = scalar_lea.vmem [#allocation2], %s173
          %s175 = smul.addr %s12, 4
          %s176 = scalar_lea.vmem %s0, %s175
          // Predicated region
          $region29: #{relu_pca_forward.5} parent=27 // pred_check
            _
          $region30: #{relu_pca_forward.5} parent=27 // pred_check_branch
            %178 = sbr.rel (0) target = $region32
          $region31: #{relu_pca_forward.5} parent=27 // pred_region
            // Predicated region
            $region33: #{relu_pca_forward.5} parent=31 // pred_check
              _
            $region34: #{relu_pca_forward.5} parent=31 // pred_check_branch
              %180 = sbr.rel target = $region36
            $region35: #{relu_pca_forward.5} parent=31 // pred_region
              // Predicated region
              $region48: #{relu_pca_forward.5} parent=35 // pred_check
                _
              $region49: #{relu_pca_forward.5} parent=35 // pred_check_branch
                %202 = sbr.rel (0) target = $region51
              $region50: #{relu_pca_forward.5} parent=35 // pred_region
                loop: start=0, step=1, limit=1
                $region52: #{relu_pca_forward.5} parent=50 // loop_pre_header
                  _
                $region53: #{relu_pca_forward.5} parent=50 // loop_header
                  %s204 = sphi 0, %s208
                  %p205 = scmp.ge.s32.totalorder %s204, 1
                  %s209 = sphi %s176, %s176
                  %s210 = sphi %s174, %s174
                $region54: #{relu_pca_forward.5} parent=50 // loop_header_branch
                  %207 = sbr.rel (%p205) target = $region58
                $region55: #{relu_pca_forward.5} parent=50 // loop_body
                  _
                $region56: #{relu_pca_forward.5} parent=50 // loop_footer
                  %s208 = sadd.s32 1, %s204
                $region57: #{relu_pca_forward.5} parent=50 // loop_footer_branch
                  %203 = sbr.rel target = $region53
                $region58: #{relu_pca_forward.5} parent=50 // loop_exit
                  _
                %s212 = ssub.s32 16, 1
                loop: start=0, step=1, limit=1
                $region59: #{relu_pca_forward.5} parent=50 // loop_pre_header
                  _
                $region60: #{relu_pca_forward.5} parent=50 // loop_header
                  %s214 = sphi 0, %s218
                  %p215 = scmp.ge.s32.totalorder %s214, 1
                  %s219 = sphi %s176, %s176
                  %s220 = sphi %s174, %s174
                $region61: #{relu_pca_forward.5} parent=50 // loop_header_branch
                  %217 = sbr.rel (%p215) target = $region65
                $region62: #{relu_pca_forward.5} parent=50 // loop_body
                  %v221 = vld [vmem:[%s219] sm:%s212]
                  %222 = vst [vmem:[%s220] sm:%s212] %v221
                  %v223 = vld [vmem:[%s219 + $0x10] sm:%s212]
                  %224 = vst [vmem:[%s220 + $0x4] sm:%s212] %v223
                  %v225 = vld [vmem:[%s219 + $0x20] sm:%s212]
                  %226 = vst [vmem:[%s220 + $0x8] sm:%s212] %v225
                  %v227 = vld [vmem:[%s219 + $0x30] sm:%s212]
                  %228 = vst [vmem:[%s220 + $0xc] sm:%s212] %v227
                $region63: #{relu_pca_forward.5} parent=50 // loop_footer
                  %s218 = sadd.s32 1, %s214
                $region64: #{relu_pca_forward.5} parent=50 // loop_footer_branch
                  %213 = sbr.rel target = $region60
                $region65: #{relu_pca_forward.5} parent=50 // loop_exit
                  _
              $region51: #{relu_pca_forward.5} parent=35 // pred_fallthru
                _
            $region36: #{relu_pca_forward.5} parent=31 // pred_fallthru
              _
            // Predicated region
            $region37: #{relu_pca_forward.5} parent=31 // pred_check
              _
            $region38: #{relu_pca_forward.5} parent=31 // pred_check_branch
              %182 = sbr.rel (0) target = $region40
            $region39: #{relu_pca_forward.5} parent=31 // pred_region
              %s184 = ssub.s32 16, 1
              loop: start=0, step=1, limit=1
              $region41: #{relu_pca_forward.5} parent=39 // loop_pre_header
                _
              $region42: #{relu_pca_forward.5} parent=39 // loop_header
                %s186 = sphi 0, %s190
                %p187 = scmp.ge.s32.totalorder %s186, 1
                %s191 = sphi %s176, %s176
                %s192 = sphi %s174, %s174
              $region43: #{relu_pca_forward.5} parent=39 // loop_header_branch
                %189 = sbr.rel (%p187) target = $region47
              $region44: #{relu_pca_forward.5} parent=39 // loop_body
                %v193 = vld [vmem:[%s191] sm:%s184]
                %194 = vst [vmem:[%s192] sm:%s184] %v193
                %v195 = vld [vmem:[%s191 + $0x10] sm:%s184]
                %196 = vst [vmem:[%s192 + $0x4] sm:%s184] %v195
                %v197 = vld [vmem:[%s191 + $0x20] sm:%s184]
                %198 = vst [vmem:[%s192 + $0x8] sm:%s184] %v197
                %v199 = vld [vmem:[%s191 + $0x30] sm:%s184]
                %200 = vst [vmem:[%s192 + $0xc] sm:%s184] %v199
              $region45: #{relu_pca_forward.5} parent=39 // loop_footer
                %s190 = sadd.s32 1, %s186
              $region46: #{relu_pca_forward.5} parent=39 // loop_footer_branch
                %185 = sbr.rel target = $region42
              $region47: #{relu_pca_forward.5} parent=39 // loop_exit
                _
            $region40: #{relu_pca_forward.5} parent=31 // pred_fallthru
              _
          $region32: #{relu_pca_forward.5} parent=27 // pred_fallthru
            _
          %229 = vnop
        $region28: #{relu_pca_forward.5} parent=23 // pred_fallthru
          _
      $region24: #{relu_pca_forward.5} parent=5 // pred_fallthru
        _
      %p230 = scmp.le.s32.totalorder 1, %s12
      %p231 = scmp.lt.s32.totalorder %s12, 5
      %p232 = pnand %p230, %p231
      %p233 = pneg %p232
      // Predicated region
      $region66: #{relu_pca_forward.5} parent=5 // pred_check
        _
      $region67: #{relu_pca_forward.5} parent=5 // pred_check_branch
        %235 = sbr.rel (%p232) target = $region69
      $region68: #{relu_pca_forward.5} parent=5 // pred_region
        %s236 = ssub.s32 %s12, 1
        %s237 = sand.u32 %s25, 1
        %s238 = sand.u32 %s25, 1
        %s239 = smul.addr %s238, 16
        %s240 = scalar_lea.vmem [#allocation2], %s239
        // Predicated region
        $region70: #{relu_pca_forward.5} parent=68 // pred_check
          %p241 = pneg %p38
        $region71: #{relu_pca_forward.5} parent=68 // pred_check_branch
          %243 = sbr.rel (%p241) target = $region73
        $region72: #{relu_pca_forward.5} parent=68 // pred_region
          _
        $region73: #{relu_pca_forward.5} parent=68 // pred_fallthru
          _
        %s244 = sand.u32 %s25, 1
        %s245 = sand.u32 %s25, 1
        %s246 = smul.addr %s245, 16
        %s247 = scalar_lea.vmem [#allocation2], %s246
        %p248 = pneg %p38
        %p249 = pneg %p35
        %p250 = pneg %p59
        %p251 = pneg %p56
        %p252 = pneg %p80
        %p253 = pneg %p77
        %p254 = pneg %p101
        %p255 = pneg %p98
        %p256 = pneg %p122
        %p257 = pneg %p119
        %p258 = pneg %p143
        %p259 = pneg %p140
        %p261 = scmp.eq.s32.totalorder %s17, 0
        // Predicated region
        $region74: #{relu_pca_forward.5} parent=68 // pred_check
          %p262 = pneg %p261
        $region75: #{relu_pca_forward.5} parent=68 // pred_check_branch
          %264 = sbr.rel (%p262) target = $region77
        $region76: #{relu_pca_forward.5} parent=68 // pred_region
          %vm265 = vcmask 7168
          %266 = vst.msk [vmem:[%s3] sm:$0xff] %vm265, 0.0
          %267 = vst.msk [vmem:[%s3 + $0x8] sm:$0xff] %vm265, 0.0
          %268 = vst.msk [vmem:[%s3 + $0x10] sm:$0xff] %vm265, 0.0
          %269 = vst.msk [vmem:[%s3 + $0x18] sm:$0xff] %vm265, 0.0
          %270 = vst.msk [vmem:[%s4] sm:$0xff] %vm265, -inf
          %271 = vst.msk [vmem:[%s4 + $0x8] sm:$0xff] %vm265, -inf
          %272 = vst.msk [vmem:[%s4 + $0x10] sm:$0xff] %vm265, -inf
          %273 = vst.msk [vmem:[%s4 + $0x18] sm:$0xff] %vm265, -inf
          %274 = vst.msk [vmem:[%s5] sm:$0xff] %vm265, inf
          %275 = vst.msk [vmem:[%s5 + $0x8] sm:$0xff] %vm265, inf
          %276 = vst.msk [vmem:[%s5 + $0x10] sm:$0xff] %vm265, inf
          %277 = vst.msk [vmem:[%s5 + $0x18] sm:$0xff] %vm265, inf
        $region77: #{relu_pca_forward.5} parent=68 // pred_fallthru
          _
        %v278 = vld [vmem:[%s240] sm:$0xf]
        %v279 = vld [vmem:[%s240 + $0x4] sm:$0xf]
        %v280 = vld [vmem:[%s240 + $0x8] sm:$0xf]
        %v281 = vld [vmem:[%s240 + $0xc] sm:$0xf]
        %v282 = vunpack.c.l.bf16 %v278
        %v283 = vunpack.c.l.bf16 %v279
        %v284 = vunpack.c.l.bf16 %v280
        %v285 = vunpack.c.l.bf16 %v281
        %v286 = vmax.f32 %v282, 0.0
        %v287 = vmax.f32 %v283, 0.0
        %v288 = vmax.f32 %v284, 0.0
        %v289 = vmax.f32 %v285, 0.0
        %v290 = vld [vmem:[%s2] sm:$0xff]
        %v291 = vld [vmem:[%s2 + $0x8] sm:$0xff]
        %v292 = vld [vmem:[%s2 + $0x10] sm:$0xff]
        %v293 = vld [vmem:[%s2 + $0x18] sm:$0xff]
        %295 = vset.pattern.permute.xlu0 0
        %296 = vperm.xlu0 %295, %v290
        %v297 = vpop.permute.xlu0 %296
        %300 = vset.pattern.permute.xlu0 0
        %301 = vperm.xlu0 %300, %v291
        %v302 = vpop.permute.xlu0 %301
        %305 = vset.pattern.permute.xlu0 0
        %306 = vperm.xlu0 %305, %v292
        %v307 = vpop.permute.xlu0 %306
        %310 = vset.pattern.permute.xlu0 0
        %311 = vperm.xlu0 %310, %v293
        %v312 = vpop.permute.xlu0 %311
        %v314 = vsub.f32 %v286, %v297
        %v315 = vsub.f32 %v287, %v302
        %v316 = vsub.f32 %v288, %v307
        %v317 = vsub.f32 %v289, %v312
        %v318 = vpack.c.bf16 %v315, %v314
        %v319 = vpack.c.bf16 %v317, %v316
        %v320 = vld [vmem:[%s1] sm:$0xf]
        %v321 = vld [vmem:[%s1 + $0x4] sm:$0xf]
        %v322 = vld [vmem:[%s1 + $0x8] sm:$0xf]
        %v323 = vld [vmem:[%s1 + $0xc] sm:$0xf]
        %v328 = vunpack.c.l.b16 %v320
        %v329 = vunpack.c.l.b16 %v321
        %v330 = vunpack.c.l.b16 %v322
        %v331 = vunpack.c.l.b16 %v323
        %v332 = vpack.c.b16 %v329, %v328
        %v333 = vpack.c.b16 %v331, %v330
        %vm334 = vcmask 261120
        %v336 = vsel %vm334, %v332, 0
        %v339 = vsel %vm334, %v333, 0
        %341 = vmatprep.subr.bf16.mxu0 0
        %342 = vmatpush1.bf16.msra.mxu0 0
        %343 = vmatprep.subr.bf16.mxu0 0
        %344 = vmatpush1.bf16.msra.mxu0 0
        %345 = vmatprep.subr.bf16.mxu0 0
        %346 = vmatpush1.bf16.msra.mxu0 0
        %347 = vmatprep.subr.bf16.mxu0 0
        %348 = vmatpush1.bf16.msra.mxu0 0
        %349 = vmatprep.subr.bf16.mxu0 0
        %350 = vmatpush1.bf16.msra.mxu0 0
        %351 = vmatprep.subr.bf16.mxu0 0
        %352 = vmatpush1.bf16.msra.mxu0 0
        %353 = vmatprep.subr.bf16.mxu0 0
        %354 = vmatpush1.bf16.msra.mxu0 %v319
        %355 = vmatprep.subr.bf16.mxu0 0
        %356 = vmatpush1.bf16.msra.mxu0 %v318
        %357 = vmatprep.subr.bf16.mxu0 0
        %358 = vmatpush2.bf16.msra.mxu0 0
        %359 = vmatprep.subr.bf16.mxu0 0
        %360 = vmatpush2.bf16.msra.mxu0 0
        %361 = vmatprep.subr.bf16.mxu0 0
        %362 = vmatpush2.bf16.msra.mxu0 0
        %363 = vmatprep.subr.bf16.mxu0 0
        %364 = vmatpush2.bf16.msra.mxu0 0
        %365 = vmatprep.subr.bf16.mxu0 0
        %366 = vmatpush2.bf16.msra.mxu0 0
        %367 = vmatprep.subr.bf16.mxu0 0
        %368 = vmatpush2.bf16.msra.mxu0 0
        %369 = vmatprep.subr.bf16.mxu0 0
        %370 = vmatpush2.bf16.msra.mxu0 0
        %371 = vmatprep.subr.bf16.mxu0 0
        %372 = vmatpush2.bf16.msra.mxu0 0
        %373 = vmatprep.mubr.bf16.mxu0 0
        %374 = vmatmul.mubr.bf16.gmra.mxu0 %v336
        %v375 = vpop.f32.mrf.mxu0
        %v376 = vadd.f32 0.0, %v375
        %v377 = vpop.f32.mrf.mxu0
        %v378 = vpop.f32.mrf.mxu0
        %v379 = vadd.f32 0.0, %v378
        %v380 = vpop.f32.mrf.mxu0
        %381 = vmatprep.mubr.bf16.mxu0 0
        %382 = vmatmul.mubr.bf16.gmra.mxu0 %v339
        %v383 = vpop.f32.mrf.mxu0
        %v384 = vadd.f32 0.0, %v383
        %v385 = vpop.f32.mrf.mxu0
        %v386 = vpop.f32.mrf.mxu0
        %v387 = vadd.f32 0.0, %v386
        %v388 = vpop.f32.mrf.mxu0
        %389 = vdwg.mxu0
        %v390 = vld [vmem:[%s3] sm:$0xff]
        %v391 = vld [vmem:[%s3 + $0x8] sm:$0xff]
        %v392 = vld [vmem:[%s3 + $0x10] sm:$0xff]
        %v393 = vld [vmem:[%s3 + $0x18] sm:$0xff]
        %v394 = vand.u32 2147483647, %v376
        %v395 = vand.u32 2147483647, %v379
        %v396 = vand.u32 2147483647, %v384
        %v397 = vand.u32 2147483647, %v387
        %398 = vadd.xlane.f32.xlu0 %v394
        %v399 = vpop.xlane.xlu0 %398
        %400 = vadd.xlane.f32.xlu0 %v395
        %v401 = vpop.xlane.xlu0 %400
        %402 = vadd.xlane.f32.xlu0 %v396
        %v403 = vpop.xlane.xlu0 %402
        %404 = vadd.xlane.f32.xlu0 %v397
        %v405 = vpop.xlane.xlu0 %404
        %v406 = vadd.f32 %v390, %v399
        %v407 = vadd.f32 %v391, %v401
        %v408 = vadd.f32 %v392, %v403
        %v409 = vadd.f32 %v393, %v405
        %vm410 = vcmask 7168
        %411 = vst.msk [vmem:[%s3] sm:$0xff] %vm410, %v406
        %412 = vst.msk [vmem:[%s3 + $0x8] sm:$0xff] %vm410, %v407
        %413 = vst.msk [vmem:[%s3 + $0x10] sm:$0xff] %vm410, %v408
        %414 = vst.msk [vmem:[%s3 + $0x18] sm:$0xff] %vm410, %v409
        %v415 = vld [vmem:[%s4] sm:$0xff]
        %v416 = vld [vmem:[%s4 + $0x8] sm:$0xff]
        %v417 = vld [vmem:[%s4 + $0x10] sm:$0xff]
        %v418 = vld [vmem:[%s4 + $0x18] sm:$0xff]
        %419 = vmax.xlane.f32.xlu0 %v376
        %v420 = vpop.xlane.xlu0 %419
        %421 = vmax.xlane.f32.xlu0 %v379
        %v422 = vpop.xlane.xlu0 %421
        %423 = vmax.xlane.f32.xlu0 %v384
        %v424 = vpop.xlane.xlu0 %423
        %425 = vmax.xlane.f32.xlu0 %v387
        %v426 = vpop.xlane.xlu0 %425
        %v427 = vmax.f32 %v415, %v420
        %v428 = vmax.f32 %v416, %v422
        %v429 = vmax.f32 %v417, %v424
        %v430 = vmax.f32 %v418, %v426
        %431 = vst.msk [vmem:[%s4] sm:$0xff] %vm410, %v427
        %432 = vst.msk [vmem:[%s4 + $0x8] sm:$0xff] %vm410, %v428
        %433 = vst.msk [vmem:[%s4 + $0x10] sm:$0xff] %vm410, %v429
        %434 = vst.msk [vmem:[%s4 + $0x18] sm:$0xff] %vm410, %v430
        %v435 = vld [vmem:[%s5] sm:$0xff]
        %v436 = vld [vmem:[%s5 + $0x8] sm:$0xff]
        %v437 = vld [vmem:[%s5 + $0x10] sm:$0xff]
        %v438 = vld [vmem:[%s5 + $0x18] sm:$0xff]
        %439 = vmin.xlane.f32.xlu0 %v376
        %v440 = vpop.xlane.xlu0 %439
        %441 = vmin.xlane.f32.xlu0 %v379
        %v442 = vpop.xlane.xlu0 %441
        %443 = vmin.xlane.f32.xlu0 %v384
        %v444 = vpop.xlane.xlu0 %443
        %445 = vmin.xlane.f32.xlu0 %v387
        %v446 = vpop.xlane.xlu0 %445
        %v447 = vmin.f32 %v435, %v440
        %v448 = vmin.f32 %v436, %v442
        %v449 = vmin.f32 %v437, %v444
        %v450 = vmin.f32 %v438, %v446
        %451 = vst.msk [vmem:[%s5] sm:$0xff] %vm410, %v447
        %452 = vst.msk [vmem:[%s5 + $0x8] sm:$0xff] %vm410, %v448
        %453 = vst.msk [vmem:[%s5 + $0x10] sm:$0xff] %vm410, %v449
        %454 = vst.msk [vmem:[%s5 + $0x18] sm:$0xff] %vm410, %v450
        // Predicated region
        $region78: #{relu_pca_forward.5} parent=68 // pred_check
          %p455 = pneg %p98
        $region79: #{relu_pca_forward.5} parent=68 // pred_check_branch
          %457 = sbr.rel (%p455) target = $region81
        $region80: #{relu_pca_forward.5} parent=68 // pred_region
          _
        $region81: #{relu_pca_forward.5} parent=68 // pred_fallthru
          _
        // Predicated region
        $region82: #{relu_pca_forward.5} parent=68 // pred_check
          %p458 = pneg %p119
        $region83: #{relu_pca_forward.5} parent=68 // pred_check_branch
          %460 = sbr.rel (%p458) target = $region85
        $region84: #{relu_pca_forward.5} parent=68 // pred_region
          _
        $region85: #{relu_pca_forward.5} parent=68 // pred_fallthru
          _
        // Predicated region
        $region86: #{relu_pca_forward.5} parent=68 // pred_check
          %p461 = pneg %p140
        $region87: #{relu_pca_forward.5} parent=68 // pred_check_branch
          %463 = sbr.rel (%p461) target = $region89
        $region88: #{relu_pca_forward.5} parent=68 // pred_region
          _
        $region89: #{relu_pca_forward.5} parent=68 // pred_fallthru
          _
        // Predicated region
        $region90: #{relu_pca_forward.5} parent=68 // pred_check
          %p464 = pneg %p98
        $region91: #{relu_pca_forward.5} parent=68 // pred_check_branch
          %466 = sbr.rel (%p464) target = $region93
        $region92: #{relu_pca_forward.5} parent=68 // pred_region
          _
        $region93: #{relu_pca_forward.5} parent=68 // pred_fallthru
          _
        // Predicated region
        $region94: #{relu_pca_forward.5} parent=68 // pred_check
          %p467 = pneg %p119
        $region95: #{relu_pca_forward.5} parent=68 // pred_check_branch
          %469 = sbr.rel (%p467) target = $region97
        $region96: #{relu_pca_forward.5} parent=68 // pred_region
          _
        $region97: #{relu_pca_forward.5} parent=68 // pred_fallthru
          _
        // Predicated region
        $region98: #{relu_pca_forward.5} parent=68 // pred_check
          %p470 = pneg %p140
        $region99: #{relu_pca_forward.5} parent=68 // pred_check_branch
          %472 = sbr.rel (%p470) target = $region101
        $region100: #{relu_pca_forward.5} parent=68 // pred_region
          _
        $region101: #{relu_pca_forward.5} parent=68 // pred_fallthru
          _
      $region69: #{relu_pca_forward.5} parent=5 // pred_fallthru
        _
      %p473 = scmp.le.s32.totalorder 2, %s12
      // Predicated region
      $region102: #{relu_pca_forward.5} parent=5 // pred_check
        %p474 = pneg %p473
      $region103: #{relu_pca_forward.5} parent=5 // pred_check_branch
        %476 = sbr.rel (%p474) target = $region105
      $region104: #{relu_pca_forward.5} parent=5 // pred_region
        %s477 = ssub.s32 %s12, 2
      $region105: #{relu_pca_forward.5} parent=5 // pred_fallthru
        _
    $region6: #{relu_pca_forward.5} parent=1 // loop_footer
      %s16 = sadd.s32 1, %s12
    $region7: #{relu_pca_forward.5} parent=1 // loop_footer_branch
      %11 = sbr.rel target = $region3
    $region8: #{relu_pca_forward.5} parent=1 // loop_exit
      _

// kernel: relu_pca_forward.6
$region0: #{relu_pca_forward.6}
  #allocation0 [shape = 'u32[]', space=smem, size = 0x4, offset = 0x4, fixed_abs, tag = 'smem constant byte address 0x4 - core index']
  #allocation1 [shape = 'u32[144,128]{1,0:T(1,128)}', space=vmem, size = 0x12000, scoped, tag = 'internal scratch']
  %s0 = inlined_call_operand.vmem [shape: bf16[32,512], index: 0, kind: input, shape index: {}]
  %s1 = inlined_call_operand.vmem [shape: bf16[32,32], index: 1, kind: input, shape index: {}]
  %s2 = inlined_call_operand.vmem [shape: f32[32,1], index: 2, kind: input, shape index: {}]
  %s3 = inlined_call_operand.vmem [shape: f32[32,1], index: 3, kind: input, shape index: {}]
  %s4 = inlined_call_operand.vmem [shape: f32[32,1], index: 4, kind: input, shape index: {}]
  %s5 = inlined_call_operand.vmem [shape: f32[32,1], index: 5, kind: input, shape index: {}]
  %s6 = inlined_call_operand.vmem [shape: f32[32,1], index: 6, kind: input, shape index: {}]
  %s7 = inlined_call_operand.vmem [shape: f32[32,1], index: 7, kind: input, shape index: {}]
  %s8 = inlined_call_operand.vmem [shape: f32[32,1], index: 8, kind: output, shape index: {}]
  %s9 = sld [smem:[#allocation0]]
  $region110: #{relu_pca_forward.6} parent=0
    _
  %s11 = ssub.s32 1, %s9
  %s12 = scalar_select 0, %s11, %s9
  $region1: #{relu_pca_forward.6} parent=0
    #allocation2 [shape = 'u8[16384]{0}', space=vmem, size = 0x4000, scoped, tag = 'input window, operand 0']
    loop: start=0, step=1, limit=6
    $region2: #{relu_pca_forward.6} parent=1 // loop_pre_header
      _
    $region3: #{relu_pca_forward.6} parent=1 // loop_header
      %s14 = sphi 0, %s18
      %p15 = scmp.ge.s32.totalorder %s14, 6
      %s24 = sphi 0, %s26
      %s27 = sphi 0, %s24
      %s28 = sphi 0, %s27
      %s44 = sphi 0, %s28
      %s48 = sphi 0, %s48
      %s50 = sphi 0, %s48
      %s51 = sphi 0, %s50
      %s65 = sphi 0, %s51
      %s69 = sphi 0, %s69
      %s71 = sphi 0, %s69
      %s72 = sphi 0, %s71
      %s86 = sphi 0, %s72
      %s90 = sphi 0, %s90
      %s92 = sphi 0, %s90
      %s93 = sphi 0, %s92
      %s107 = sphi 0, %s93
      %s111 = sphi 0, %s111
      %s113 = sphi 0, %s111
      %s114 = sphi 0, %s113
      %s128 = sphi 0, %s114
      %s132 = sphi 0, %s132
      %s134 = sphi 0, %s132
      %s135 = sphi 0, %s134
      %s149 = sphi 0, %s135
      %s153 = sphi 0, %s153
      %s155 = sphi 0, %s153
      %s156 = sphi 0, %s155
      %s170 = sphi 0, %s156
      %s174 = sphi 0, %s174
      %s176 = sphi 0, %s174
      %s177 = sphi 0, %s176
      %s191 = sphi 0, %s177
      %s195 = sphi 0, %s195
      %s197 = sphi 0, %s195
      %s198 = sphi 0, %s197
      %s212 = sphi 0, %s198
    $region4: #{relu_pca_forward.6} parent=1 // loop_header_branch
      %17 = sbr.rel (%p15) target = $region8
    $region5: #{relu_pca_forward.6} parent=1 // loop_body
      %s19 = ssub.s32 %s14, 1
      %s20 = ssub.s32 %s14, 2
      %s21 = sadd.s32 %s14, 1
      %s22 = ssub.s32 %s14, %s21
      %p23 = scmp.eq.s32.totalorder %s22, 0
      %s25 = sadd.s32 %s24, 1
      %s26 = scalar_select %p23, %s24, %s25
      %p29 = pneg %p23
      %p30 = scmp.eq.s32.totalorder %s14, 3
      %p31 = por %p29, %p30
      %p32 = scmp.ne.s32.totalorder %s24, %s27
      %p33 = scmp.eq.s32.totalorder %s14, 0
      %p34 = por %p32, %p33
      %p35 = scmp.ne.s32.totalorder %s24, %s27
      %p36 = scmp.eq.s32.totalorder %s19, 3
      %p37 = por %p35, %p36
      %p38 = scmp.ne.s32.totalorder %s27, %s28
      %p39 = scmp.eq.s32.totalorder %s19, 0
      %p40 = por %p38, %p39
      %p41 = scmp.ne.s32.totalorder %s27, %s28
      %p42 = scmp.eq.s32.totalorder %s20, 3
      %p43 = por %p41, %p42
      %p45 = scmp.ne.s32.totalorder %s28, %s44
      %p46 = scmp.eq.s32.totalorder %s20, 0
      %p47 = por %p45, %p46
      %s49 = sadd.s32 %s48, 1
      %p52 = scmp.eq.s32.totalorder %s14, 3
      %p53 = scmp.ne.s32.totalorder %s48, %s50
      %p54 = scmp.eq.s32.totalorder %s14, 0
      %p55 = por %p53, %p54
      %p56 = scmp.ne.s32.totalorder %s48, %s50
      %p57 = scmp.eq.s32.totalorder %s19, 3
      %p58 = por %p56, %p57
      %p59 = scmp.ne.s32.totalorder %s50, %s51
      %p60 = scmp.eq.s32.totalorder %s19, 0
      %p61 = por %p59, %p60
      %p62 = scmp.ne.s32.totalorder %s50, %s51
      %p63 = scmp.eq.s32.totalorder %s20, 3
      %p64 = por %p62, %p63
      %p66 = scmp.ne.s32.totalorder %s51, %s65
      %p67 = scmp.eq.s32.totalorder %s20, 0
      %p68 = por %p66, %p67
      %s70 = sadd.s32 %s69, 1
      %p73 = scmp.eq.s32.totalorder %s14, 3
      %p74 = scmp.ne.s32.totalorder %s69, %s71
      %p75 = scmp.eq.s32.totalorder %s14, 0
      %p76 = por %p74, %p75
      %p77 = scmp.ne.s32.totalorder %s69, %s71
      %p78 = scmp.eq.s32.totalorder %s19, 3
      %p79 = por %p77, %p78
      %p80 = scmp.ne.s32.totalorder %s71, %s72
      %p81 = scmp.eq.s32.totalorder %s19, 0
      %p82 = por %p80, %p81
      %p83 = scmp.ne.s32.totalorder %s71, %s72
      %p84 = scmp.eq.s32.totalorder %s20, 3
      %p85 = por %p83, %p84
      %p87 = scmp.ne.s32.totalorder %s72, %s86
      %p88 = scmp.eq.s32.totalorder %s20, 0
      %p89 = por %p87, %p88
      %s91 = sadd.s32 %s90, 1
      %p94 = scmp.eq.s32.totalorder %s14, 3
      %p95 = scmp.ne.s32.totalorder %s90, %s92
      %p96 = scmp.eq.s32.totalorder %s14, 0
      %p97 = por %p95, %p96
      %p98 = scmp.ne.s32.totalorder %s90, %s92
      %p99 = scmp.eq.s32.totalorder %s19, 3
      %p100 = por %p98, %p99
      %p101 = scmp.ne.s32.totalorder %s92, %s93
      %p102 = scmp.eq.s32.totalorder %s19, 0
      %p103 = por %p101, %p102
      %p104 = scmp.ne.s32.totalorder %s92, %s93
      %p105 = scmp.eq.s32.totalorder %s20, 3
      %p106 = por %p104, %p105
      %p108 = scmp.ne.s32.totalorder %s93, %s107
      %p109 = scmp.eq.s32.totalorder %s20, 0
      %p110 = por %p108, %p109
      %s112 = sadd.s32 %s111, 1
      %p115 = scmp.eq.s32.totalorder %s14, 3
      %p116 = scmp.ne.s32.totalorder %s111, %s113
      %p117 = scmp.eq.s32.totalorder %s14, 0
      %p118 = por %p116, %p117
      %p119 = scmp.ne.s32.totalorder %s111, %s113
      %p120 = scmp.eq.s32.totalorder %s19, 3
      %p121 = por %p119, %p120
      %p122 = scmp.ne.s32.totalorder %s113, %s114
      %p123 = scmp.eq.s32.totalorder %s19, 0
      %p124 = por %p122, %p123
      %p125 = scmp.ne.s32.totalorder %s113, %s114
      %p126 = scmp.eq.s32.totalorder %s20, 3
      %p127 = por %p125, %p126
      %p129 = scmp.ne.s32.totalorder %s114, %s128
      %p130 = scmp.eq.s32.totalorder %s20, 0
      %p131 = por %p129, %p130
      %s133 = sadd.s32 %s132, 1
      %p136 = scmp.eq.s32.totalorder %s14, 3
      %p137 = scmp.ne.s32.totalorder %s132, %s134
      %p138 = scmp.eq.s32.totalorder %s14, 0
      %p139 = por %p137, %p138
      %p140 = scmp.ne.s32.totalorder %s132, %s134
      %p141 = scmp.eq.s32.totalorder %s19, 3
      %p142 = por %p140, %p141
      %p143 = scmp.ne.s32.totalorder %s134, %s135
      %p144 = scmp.eq.s32.totalorder %s19, 0
      %p145 = por %p143, %p144
      %p146 = scmp.ne.s32.totalorder %s134, %s135
      %p147 = scmp.eq.s32.totalorder %s20, 3
      %p148 = por %p146, %p147
      %p150 = scmp.ne.s32.totalorder %s135, %s149
      %p151 = scmp.eq.s32.totalorder %s20, 0
      %p152 = por %p150, %p151
      %s154 = sadd.s32 %s153, 1
      %p157 = scmp.eq.s32.totalorder %s14, 3
      %p158 = scmp.ne.s32.totalorder %s153, %s155
      %p159 = scmp.eq.s32.totalorder %s14, 0
      %p160 = por %p158, %p159
      %p161 = scmp.ne.s32.totalorder %s153, %s155
      %p162 = scmp.eq.s32.totalorder %s19, 3
      %p163 = por %p161, %p162
      %p164 = scmp.ne.s32.totalorder %s155, %s156
      %p165 = scmp.eq.s32.totalorder %s19, 0
      %p166 = por %p164, %p165
      %p167 = scmp.ne.s32.totalorder %s155, %s156
      %p168 = scmp.eq.s32.totalorder %s20, 3
      %p169 = por %p167, %p168
      %p171 = scmp.ne.s32.totalorder %s156, %s170
      %p172 = scmp.eq.s32.totalorder %s20, 0
      %p173 = por %p171, %p172
      %s175 = sadd.s32 %s174, 1
      %p178 = scmp.eq.s32.totalorder %s14, 3
      %p179 = scmp.ne.s32.totalorder %s174, %s176
      %p180 = scmp.eq.s32.totalorder %s14, 0
      %p181 = por %p179, %p180
      %p182 = scmp.ne.s32.totalorder %s174, %s176
      %p183 = scmp.eq.s32.totalorder %s19, 3
      %p184 = por %p182, %p183
      %p185 = scmp.ne.s32.totalorder %s176, %s177
      %p186 = scmp.eq.s32.totalorder %s19, 0
      %p187 = por %p185, %p186
      %p188 = scmp.ne.s32.totalorder %s176, %s177
      %p189 = scmp.eq.s32.totalorder %s20, 3
      %p190 = por %p188, %p189
      %p192 = scmp.ne.s32.totalorder %s177, %s191
      %p193 = scmp.eq.s32.totalorder %s20, 0
      %p194 = por %p192, %p193
      %s196 = sadd.s32 %s195, 1
      %p199 = scmp.eq.s32.totalorder %s14, 3
      %p200 = scmp.ne.s32.totalorder %s195, %s197
      %p201 = scmp.eq.s32.totalorder %s14, 0
      %p202 = por %p200, %p201
      %p203 = scmp.ne.s32.totalorder %s195, %s197
      %p204 = scmp.eq.s32.totalorder %s19, 3
      %p205 = por %p203, %p204
      %p206 = scmp.ne.s32.totalorder %s197, %s198
      %p207 = scmp.eq.s32.totalorder %s19, 0
      %p208 = por %p206, %p207
      %p209 = scmp.ne.s32.totalorder %s197, %s198
      %p210 = scmp.eq.s32.totalorder %s20, 3
      %p211 = por %p209, %p210
      %p213 = scmp.ne.s32.totalorder %s198, %s212
      %p214 = scmp.eq.s32.totalorder %s20, 0
      %p215 = por %p213, %p214
      %p216 = scmp.le.s32.totalorder 1, %s14
      %p217 = scmp.lt.s32.totalorder %s14, 5
      %p218 = pnand %p216, %p217
      %p219 = pneg %p218
      // Predicated region
      $region9: #{relu_pca_forward.6} parent=5 // pred_check
        _
      $region10: #{relu_pca_forward.6} parent=5 // pred_check_branch
        %221 = sbr.rel (%p218) target = $region12
      $region11: #{relu_pca_forward.6} parent=5 // pred_region
        %s222 = ssub.s32 %s14, 1
        // Predicated region
        $region13: #{relu_pca_forward.6} parent=11 // pred_check
          %p223 = pneg %p61
        $region14: #{relu_pca_forward.6} parent=11 // pred_check_branch
          %225 = sbr.rel (%p223) target = $region16
        $region15: #{relu_pca_forward.6} parent=11 // pred_region
          _
        $region16: #{relu_pca_forward.6} parent=11 // pred_fallthru
          _
        // Predicated region
        $region17: #{relu_pca_forward.6} parent=11 // pred_check
          %p226 = pneg %p82
        $region18: #{relu_pca_forward.6} parent=11 // pred_check_branch
          %228 = sbr.rel (%p226) target = $region20
        $region19: #{relu_pca_forward.6} parent=11 // pred_region
          _
        $region20: #{relu_pca_forward.6} parent=11 // pred_fallthru
          _
        // Predicated region
        $region21: #{relu_pca_forward.6} parent=11 // pred_check
          %p229 = pneg %p103
        $region22: #{relu_pca_forward.6} parent=11 // pred_check_branch
          %231 = sbr.rel (%p229) target = $region24
        $region23: #{relu_pca_forward.6} parent=11 // pred_region
          _
        $region24: #{relu_pca_forward.6} parent=11 // pred_fallthru
          _
        // Predicated region
        $region25: #{relu_pca_forward.6} parent=11 // pred_check
          %p232 = pneg %p124
        $region26: #{relu_pca_forward.6} parent=11 // pred_check_branch
          %234 = sbr.rel (%p232) target = $region28
        $region27: #{relu_pca_forward.6} parent=11 // pred_region
          _
        $region28: #{relu_pca_forward.6} parent=11 // pred_fallthru
          _
        // Predicated region
        $region29: #{relu_pca_forward.6} parent=11 // pred_check
          %p235 = pneg %p145
        $region30: #{relu_pca_forward.6} parent=11 // pred_check_branch
          %237 = sbr.rel (%p235) target = $region32
        $region31: #{relu_pca_forward.6} parent=11 // pred_region
          _
        $region32: #{relu_pca_forward.6} parent=11 // pred_fallthru
          _
        // Predicated region
        $region33: #{relu_pca_forward.6} parent=11 // pred_check
          %p238 = pneg %p166
        $region34: #{relu_pca_forward.6} parent=11 // pred_check_branch
          %240 = sbr.rel (%p238) target = $region36
        $region35: #{relu_pca_forward.6} parent=11 // pred_region
          _
        $region36: #{relu_pca_forward.6} parent=11 // pred_fallthru
          _
        // Predicated region
        $region37: #{relu_pca_forward.6} parent=11 // pred_check
          %p241 = pneg %p187
        $region38: #{relu_pca_forward.6} parent=11 // pred_check_branch
          %243 = sbr.rel (%p241) target = $region40
        $region39: #{relu_pca_forward.6} parent=11 // pred_region
          _
        $region40: #{relu_pca_forward.6} parent=11 // pred_fallthru
          _
      $region12: #{relu_pca_forward.6} parent=5 // pred_fallthru
        _
      %p244 = scmp.lt.s32.totalorder %s14, 4
      // Predicated region
      $region41: #{relu_pca_forward.6} parent=5 // pred_check
        %p245 = pneg %p244
      $region42: #{relu_pca_forward.6} parent=5 // pred_check_branch
        %247 = sbr.rel (%p245) target = $region44
      $region43: #{relu_pca_forward.6} parent=5 // pred_region
        // Predicated region
        $region45: #{relu_pca_forward.6} parent=43 // pred_check
          %p248 = pneg %p34
        $region46: #{relu_pca_forward.6} parent=43 // pred_check_branch
          %250 = sbr.rel (%p248) target = $region48
        $region47: #{relu_pca_forward.6} parent=43 // pred_region
          %s251 = sand.u32 %s24, 1
          %s252 = sand.u32 %s24, 1
          %s253 = smul.addr %s252, 16
          %s254 = scalar_lea.vmem [#allocation2], %s253
          %s255 = smul.addr %s14, 4
          %s256 = scalar_lea.vmem %s0, %s255
          // Predicated region
          $region49: #{relu_pca_forward.6} parent=47 // pred_check
            _
          $region50: #{relu_pca_forward.6} parent=47 // pred_check_branch
            %258 = sbr.rel (0) target = $region52
          $region51: #{relu_pca_forward.6} parent=47 // pred_region
            // Predicated region
            $region53: #{relu_pca_forward.6} parent=51 // pred_check
              _
            $region54: #{relu_pca_forward.6} parent=51 // pred_check_branch
              %260 = sbr.rel target = $region56
            $region55: #{relu_pca_forward.6} parent=51 // pred_region
              // Predicated region
              $region68: #{relu_pca_forward.6} parent=55 // pred_check
                _
              $region69: #{relu_pca_forward.6} parent=55 // pred_check_branch
                %282 = sbr.rel (0) target = $region71
              $region70: #{relu_pca_forward.6} parent=55 // pred_region
                loop: start=0, step=1, limit=1
                $region72: #{relu_pca_forward.6} parent=70 // loop_pre_header
                  _
                $region73: #{relu_pca_forward.6} parent=70 // loop_header
                  %s284 = sphi 0, %s288
                  %p285 = scmp.ge.s32.totalorder %s284, 1
                  %s289 = sphi %s256, %s256
                  %s290 = sphi %s254, %s254
                $region74: #{relu_pca_forward.6} parent=70 // loop_header_branch
                  %287 = sbr.rel (%p285) target = $region78
                $region75: #{relu_pca_forward.6} parent=70 // loop_body
                  _
                $region76: #{relu_pca_forward.6} parent=70 // loop_footer
                  %s288 = sadd.s32 1, %s284
                $region77: #{relu_pca_forward.6} parent=70 // loop_footer_branch
                  %283 = sbr.rel target = $region73
                $region78: #{relu_pca_forward.6} parent=70 // loop_exit
                  _
                %s292 = ssub.s32 16, 1
                loop: start=0, step=1, limit=1
                $region79: #{relu_pca_forward.6} parent=70 // loop_pre_header
                  _
                $region80: #{relu_pca_forward.6} parent=70 // loop_header
                  %s294 = sphi 0, %s298
                  %p295 = scmp.ge.s32.totalorder %s294, 1
                  %s299 = sphi %s256, %s256
                  %s300 = sphi %s254, %s254
                $region81: #{relu_pca_forward.6} parent=70 // loop_header_branch
                  %297 = sbr.rel (%p295) target = $region85
                $region82: #{relu_pca_forward.6} parent=70 // loop_body
                  %v301 = vld [vmem:[%s299] sm:%s292]
                  %302 = vst [vmem:[%s300] sm:%s292] %v301
                  %v303 = vld [vmem:[%s299 + $0x10] sm:%s292]
                  %304 = vst [vmem:[%s300 + $0x4] sm:%s292] %v303
                  %v305 = vld [vmem:[%s299 + $0x20] sm:%s292]
                  %306 = vst [vmem:[%s300 + $0x8] sm:%s292] %v305
                  %v307 = vld [vmem:[%s299 + $0x30] sm:%s292]
                  %308 = vst [vmem:[%s300 + $0xc] sm:%s292] %v307
                $region83: #{relu_pca_forward.6} parent=70 // loop_footer
                  %s298 = sadd.s32 1, %s294
                $region84: #{relu_pca_forward.6} parent=70 // loop_footer_branch
                  %293 = sbr.rel target = $region80
                $region85: #{relu_pca_forward.6} parent=70 // loop_exit
                  _
              $region71: #{relu_pca_forward.6} parent=55 // pred_fallthru
                _
            $region56: #{relu_pca_forward.6} parent=51 // pred_fallthru
              _
            // Predicated region
            $region57: #{relu_pca_forward.6} parent=51 // pred_check
              _
            $region58: #{relu_pca_forward.6} parent=51 // pred_check_branch
              %262 = sbr.rel (0) target = $region60
            $region59: #{relu_pca_forward.6} parent=51 // pred_region
              %s264 = ssub.s32 16, 1
              loop: start=0, step=1, limit=1
              $region61: #{relu_pca_forward.6} parent=59 // loop_pre_header
                _
              $region62: #{relu_pca_forward.6} parent=59 // loop_header
                %s266 = sphi 0, %s270
                %p267 = scmp.ge.s32.totalorder %s266, 1
                %s271 = sphi %s256, %s256
                %s272 = sphi %s254, %s254
              $region63: #{relu_pca_forward.6} parent=59 // loop_header_branch
                %269 = sbr.rel (%p267) target = $region67
              $region64: #{relu_pca_forward.6} parent=59 // loop_body
                %v273 = vld [vmem:[%s271] sm:%s264]
                %274 = vst [vmem:[%s272] sm:%s264] %v273
                %v275 = vld [vmem:[%s271 + $0x10] sm:%s264]
                %276 = vst [vmem:[%s272 + $0x4] sm:%s264] %v275
                %v277 = vld [vmem:[%s271 + $0x20] sm:%s264]
                %278 = vst [vmem:[%s272 + $0x8] sm:%s264] %v277
                %v279 = vld [vmem:[%s271 + $0x30] sm:%s264]
                %280 = vst [vmem:[%s272 + $0xc] sm:%s264] %v279
              $region65: #{relu_pca_forward.6} parent=59 // loop_footer
                %s270 = sadd.s32 1, %s266
              $region66: #{relu_pca_forward.6} parent=59 // loop_footer_branch
                %265 = sbr.rel target = $region62
              $region67: #{relu_pca_forward.6} parent=59 // loop_exit
                _
            $region60: #{relu_pca_forward.6} parent=51 // pred_fallthru
              _
          $region52: #{relu_pca_forward.6} parent=47 // pred_fallthru
            _
          %309 = vnop
        $region48: #{relu_pca_forward.6} parent=43 // pred_fallthru
          _
      $region44: #{relu_pca_forward.6} parent=5 // pred_fallthru
        _
      %p310 = scmp.le.s32.totalorder 1, %s14
      %p311 = scmp.lt.s32.totalorder %s14, 5
      %p312 = pnand %p310, %p311
      %p313 = pneg %p312
      // Predicated region
      $region86: #{relu_pca_forward.6} parent=5 // pred_check
        _
      $region87: #{relu_pca_forward.6} parent=5 // pred_check_branch
        %315 = sbr.rel (%p312) target = $region89
      $region88: #{relu_pca_forward.6} parent=5 // pred_region
        %s316 = ssub.s32 %s14, 1
        %s317 = sand.u32 %s27, 1
        %s318 = sand.u32 %s27, 1
        %s319 = smul.addr %s318, 16
        %s320 = scalar_lea.vmem [#allocation2], %s319
        // Predicated region
        $region90: #{relu_pca_forward.6} parent=88 // pred_check
          %p321 = pneg %p40
        $region91: #{relu_pca_forward.6} parent=88 // pred_check_branch
          %323 = sbr.rel (%p321) target = $region93
        $region92: #{relu_pca_forward.6} parent=88 // pred_region
          _
        $region93: #{relu_pca_forward.6} parent=88 // pred_fallthru
          _
        %s324 = sand.u32 %s27, 1
        %s325 = sand.u32 %s27, 1
        %s326 = smul.addr %s325, 16
        %s327 = scalar_lea.vmem [#allocation2], %s326
        %p328 = pneg %p40
        %p329 = pneg %p37
        %p330 = pneg %p61
        %p331 = pneg %p58
        %p332 = pneg %p82
        %p333 = pneg %p79
        %p334 = pneg %p103
        %p335 = pneg %p100
        %p336 = pneg %p124
        %p337 = pneg %p121
        %p338 = pneg %p145
        %p339 = pneg %p142
        %p340 = pneg %p166
        %p341 = pneg %p163
        %p342 = pneg %p187
        %p343 = pneg %p184
        %p344 = pneg %p208
        %p345 = pneg %p205
        %p347 = scmp.eq.s32.totalorder %s19, 0
        // Predicated region
        $region94: #{relu_pca_forward.6} parent=88 // pred_check
          %p348 = pneg %p347
        $region95: #{relu_pca_forward.6} parent=88 // pred_check_branch
          %350 = sbr.rel (%p348) target = $region97
        $region96: #{relu_pca_forward.6} parent=88 // pred_region
          %vm351 = vcmask 7168
          %352 = vst.msk [vmem:[%s8] sm:$0xff] %vm351, 0.0
          %353 = vst.msk [vmem:[%s8 + $0x8] sm:$0xff] %vm351, 0.0
          %354 = vst.msk [vmem:[%s8 + $0x10] sm:$0xff] %vm351, 0.0
          %355 = vst.msk [vmem:[%s8 + $0x18] sm:$0xff] %vm351, 0.0
        $region97: #{relu_pca_forward.6} parent=88 // pred_fallthru
          _
        %v356 = vld [vmem:[%s320] sm:$0xf]
        %v357 = vld [vmem:[%s320 + $0x4] sm:$0xf]
        %v358 = vld [vmem:[%s320 + $0x8] sm:$0xf]
        %v359 = vld [vmem:[%s320 + $0xc] sm:$0xf]
        %v360 = vunpack.c.l.bf16 %v356
        %v361 = vunpack.c.l.bf16 %v357
        %v362 = vunpack.c.l.bf16 %v358
        %v363 = vunpack.c.l.bf16 %v359
        %v364 = vmax.f32 %v360, 0.0
        %v365 = vmax.f32 %v361, 0.0
        %v366 = vmax.f32 %v362, 0.0
        %v367 = vmax.f32 %v363, 0.0
        %v368 = vld [vmem:[%s2] sm:$0xff]
        %v369 = vld [vmem:[%s2 + $0x8] sm:$0xff]
        %v370 = vld [vmem:[%s2 + $0x10] sm:$0xff]
        %v371 = vld [vmem:[%s2 + $0x18] sm:$0xff]
        %373 = vset.pattern.permute.xlu0 0
        %374 = vperm.xlu0 %373, %v368
        %v375 = vpop.permute.xlu0 %374
        %378 = vset.pattern.permute.xlu0 0
        %379 = vperm.xlu0 %378, %v369
        %v380 = vpop.permute.xlu0 %379
        %383 = vset.pattern.permute.xlu0 0
        %384 = vperm.xlu0 %383, %v370
        %v385 = vpop.permute.xlu0 %384
        %388 = vset.pattern.permute.xlu0 0
        %389 = vperm.xlu0 %388, %v371
        %v390 = vpop.permute.xlu0 %389
        %v392 = vsub.f32 %v364, %v375
        %v393 = vsub.f32 %v365, %v380
        %v394 = vsub.f32 %v366, %v385
        %v395 = vsub.f32 %v367, %v390
        %v396 = vpack.c.bf16 %v393, %v392
        %v397 = vpack.c.bf16 %v395, %v394
        %v398 = vld [vmem:[%s1] sm:$0xf]
        %v399 = vld [vmem:[%s1 + $0x4] sm:$0xf]
        %v400 = vld [vmem:[%s1 + $0x8] sm:$0xf]
        %v401 = vld [vmem:[%s1 + $0xc] sm:$0xf]
        %v406 = vunpack.c.l.b16 %v398
        %v407 = vunpack.c.l.b16 %v399
        %v408 = vunpack.c.l.b16 %v400
        %v409 = vunpack.c.l.b16 %v401
        %v410 = vpack.c.b16 %v407, %v406
        %v411 = vpack.c.b16 %v409, %v408
        %vm412 = vcmask 261120
        %v414 = vsel %vm412, %v410, 0
        %v417 = vsel %vm412, %v411, 0
        %419 = vmatprep.subr.bf16.mxu0 0
        %420 = vmatpush1.bf16.msra.mxu0 0
        %421 = vmatprep.subr.bf16.mxu0 0
        %422 = vmatpush1.bf16.msra.mxu0 0
        %423 = vmatprep.subr.bf16.mxu0 0
        %424 = vmatpush1.bf16.msra.mxu0 0
        %425 = vmatprep.subr.bf16.mxu0 0
        %426 = vmatpush1.bf16.msra.mxu0 0
        %427 = vmatprep.subr.bf16.mxu0 0
        %428 = vmatpush1.bf16.msra.mxu0 0
        %429 = vmatprep.subr.bf16.mxu0 0
        %430 = vmatpush1.bf16.msra.mxu0 0
        %431 = vmatprep.subr.bf16.mxu0 0
        %432 = vmatpush1.bf16.msra.mxu0 %v397
        %433 = vmatprep.subr.bf16.mxu0 0
        %434 = vmatpush1.bf16.msra.mxu0 %v396
        %435 = vmatprep.subr.bf16.mxu0 0
        %436 = vmatpush2.bf16.msra.mxu0 0
        %437 = vmatprep.subr.bf16.mxu0 0
        %438 = vmatpush2.bf16.msra.mxu0 0
        %439 = vmatprep.subr.bf16.mxu0 0
        %440 = vmatpush2.bf16.msra.mxu0 0
        %441 = vmatprep.subr.bf16.mxu0 0
        %442 = vmatpush2.bf16.msra.mxu0 0
        %443 = vmatprep.subr.bf16.mxu0 0
        %444 = vmatpush2.bf16.msra.mxu0 0
        %445 = vmatprep.subr.bf16.mxu0 0
        %446 = vmatpush2.bf16.msra.mxu0 0
        %447 = vmatprep.subr.bf16.mxu0 0
        %448 = vmatpush2.bf16.msra.mxu0 0
        %449 = vmatprep.subr.bf16.mxu0 0
        %450 = vmatpush2.bf16.msra.mxu0 0
        %451 = vmatprep.mubr.bf16.mxu0 0
        %452 = vmatmul.mubr.bf16.gmra.mxu0 %v414
        %v453 = vpop.f32.mrf.mxu0
        %v454 = vadd.f32 0.0, %v453
        %v455 = vpop.f32.mrf.mxu0
        %v456 = vpop.f32.mrf.mxu0
        %v457 = vadd.f32 0.0, %v456
        %v458 = vpop.f32.mrf.mxu0
        %459 = vmatprep.mubr.bf16.mxu0 0
        %460 = vmatmul.mubr.bf16.gmra.mxu0 %v417
        %v461 = vpop.f32.mrf.mxu0
        %v462 = vadd.f32 0.0, %v461
        %v463 = vpop.f32.mrf.mxu0
        %v464 = vpop.f32.mrf.mxu0
        %v465 = vadd.f32 0.0, %v464
        %v466 = vpop.f32.mrf.mxu0
        %467 = vdwg.mxu0
        %v468 = vld [vmem:[%s3] sm:$0xff]
        %v469 = vld [vmem:[%s3 + $0x8] sm:$0xff]
        %v470 = vld [vmem:[%s3 + $0x10] sm:$0xff]
        %v471 = vld [vmem:[%s3 + $0x18] sm:$0xff]
        %v472 = vsub.f32 0.0, %v468
        %v473 = vsub.f32 0.0, %v469
        %v474 = vsub.f32 0.0, %v470
        %v475 = vsub.f32 0.0, %v471
        %477 = vset.pattern.permute.xlu0 0
        %478 = vperm.xlu0 %477, %v472
        %v479 = vpop.permute.xlu0 %478
        %482 = vset.pattern.permute.xlu0 0
        %483 = vperm.xlu0 %482, %v473
        %v484 = vpop.permute.xlu0 %483
        %487 = vset.pattern.permute.xlu0 0
        %488 = vperm.xlu0 %487, %v474
        %v489 = vpop.permute.xlu0 %488
        %492 = vset.pattern.permute.xlu0 0
        %493 = vperm.xlu0 %492, %v475
        %v494 = vpop.permute.xlu0 %493
        %v496 = vmax.f32 %v479, %v454
        %v497 = vmax.f32 %v484, %v457
        %v498 = vmax.f32 %v489, %v462
        %v499 = vmax.f32 %v494, %v465
        %501 = vset.pattern.permute.xlu0 0
        %502 = vperm.xlu0 %501, %v468
        %v503 = vpop.permute.xlu0 %502
        %506 = vset.pattern.permute.xlu0 0
        %507 = vperm.xlu0 %506, %v469
        %v508 = vpop.permute.xlu0 %507
        %511 = vset.pattern.permute.xlu0 0
        %512 = vperm.xlu0 %511, %v470
        %v513 = vpop.permute.xlu0 %512
        %516 = vset.pattern.permute.xlu0 0
        %517 = vperm.xlu0 %516, %v471
        %v518 = vpop.permute.xlu0 %517
        %v520 = vmin.f32 %v503, %v496
        %v521 = vmin.f32 %v508, %v497
        %v522 = vmin.f32 %v513, %v498
        %v523 = vmin.f32 %v518, %v499
        %v524 = vld [vmem:[%s6] sm:$0xff]
        %v525 = vld [vmem:[%s6 + $0x8] sm:$0xff]
        %v526 = vld [vmem:[%s6 + $0x10] sm:$0xff]
        %v527 = vld [vmem:[%s6 + $0x18] sm:$0xff]
        %529 = vset.pattern.permute.xlu0 0
        %530 = vperm.xlu0 %529, %v524
        %v531 = vpop.permute.xlu0 %530
        %534 = vset.pattern.permute.xlu0 0
        %535 = vperm.xlu0 %534, %v525
        %v536 = vpop.permute.xlu0 %535
        %539 = vset.pattern.permute.xlu0 0
        %540 = vperm.xlu0 %539, %v526
        %v541 = vpop.permute.xlu0 %540
        %544 = vset.pattern.permute.xlu0 0
        %545 = vperm.xlu0 %544, %v527
        %v546 = vpop.permute.xlu0 %545
        %v548 = vsub.f32 %v520, %v531
        %v549 = vsub.f32 %v521, %v536
        %v550 = vsub.f32 %v522, %v541
        %v551 = vsub.f32 %v523, %v546
        %v552 = vld [vmem:[%s4] sm:$0xff]
        %v553 = vld [vmem:[%s4 + $0x8] sm:$0xff]
        %v554 = vld [vmem:[%s4 + $0x10] sm:$0xff]
        %v555 = vld [vmem:[%s4 + $0x18] sm:$0xff]
        %557 = vset.pattern.permute.xlu0 0
        %558 = vperm.xlu0 %557, %v552
        %v559 = vpop.permute.xlu0 %558
        %562 = vset.pattern.permute.xlu0 0
        %563 = vperm.xlu0 %562, %v553
        %v564 = vpop.permute.xlu0 %563
        %567 = vset.pattern.permute.xlu0 0
        %568 = vperm.xlu0 %567, %v554
        %v569 = vpop.permute.xlu0 %568
        %572 = vset.pattern.permute.xlu0 0
        %573 = vperm.xlu0 %572, %v555
        %v574 = vpop.permute.xlu0 %573
        %v576 = vmul.f32 %v548, %v559
        %v577 = vmul.f32 %v549, %v564
        %v578 = vmul.f32 %v550, %v569
        %v579 = vmul.f32 %v551, %v574
        %v580 = vround.ne.pseudo %v576
        %v581 = vround.ne.pseudo %v577
        %v582 = vround.ne.pseudo %v578
        %v583 = vround.ne.pseudo %v579
        %v584 = vld [vmem:[%s5] sm:$0xff]
        %v585 = vld [vmem:[%s5 + $0x8] sm:$0xff]
        %v586 = vld [vmem:[%s5 + $0x10] sm:$0xff]
        %v587 = vld [vmem:[%s5 + $0x18] sm:$0xff]
        %589 = vset.pattern.permute.xlu0 0
        %590 = vperm.xlu0 %589, %v584
        %v591 = vpop.permute.xlu0 %590
        %594 = vset.pattern.permute.xlu0 0
        %595 = vperm.xlu0 %594, %v585
        %v596 = vpop.permute.xlu0 %595
        %599 = vset.pattern.permute.xlu0 0
        %600 = vperm.xlu0 %599, %v586
        %v601 = vpop.permute.xlu0 %600
        %604 = vset.pattern.permute.xlu0 0
        %605 = vperm.xlu0 %604, %v587
        %v606 = vpop.permute.xlu0 %605
        %v608 = vmul.f32 %v580, %v591
        %v609 = vmul.f32 %v581, %v596
        %v610 = vmul.f32 %v582, %v601
        %v611 = vmul.f32 %v583, %v606
        %v612 = vadd.f32 %v608, %v531
        %v613 = vadd.f32 %v609, %v536
        %v614 = vadd.f32 %v610, %v541
        %v615 = vadd.f32 %v611, %v546
        %v616 = vld [vmem:[%s7] sm:$0xff]
        %v617 = vld [vmem:[%s7 + $0x8] sm:$0xff]
        %v618 = vld [vmem:[%s7 + $0x10] sm:$0xff]
        %v619 = vld [vmem:[%s7 + $0x18] sm:$0xff]
        %vm620 = vcmp.gt.f32.partialorder %v616, 0.5
        %vm621 = vcmp.gt.f32.partialorder %v617, 0.5
        %vm622 = vcmp.gt.f32.partialorder %v618, 0.5
        %vm623 = vcmp.gt.f32.partialorder %v619, 0.5
        %v624 = vsel %vm620, 1, 0
        %v625 = vsel %vm621, 1, 0
        %v626 = vsel %vm622, 1, 0
        %v627 = vsel %vm623, 1, 0
        %628 = vset.pattern.permute.xlu0 0
        %629 = vperm.xlu0 %628, %v624
        %v630 = vpop.permute.xlu0 %629
        %631 = vset.pattern.permute.xlu0 0
        %632 = vperm.xlu0 %631, %v625
        %v633 = vpop.permute.xlu0 %632
        %634 = vset.pattern.permute.xlu0 0
        %635 = vperm.xlu0 %634, %v626
        %v636 = vpop.permute.xlu0 %635
        %637 = vset.pattern.permute.xlu0 0
        %638 = vperm.xlu0 %637, %v627
        %v639 = vpop.permute.xlu0 %638
        %vm640 = vcmp.eq.s32.totalorder %v630, 1
        %vm641 = vcmp.eq.s32.totalorder %v633, 1
        %vm642 = vcmp.eq.s32.totalorder %v636, 1
        %vm643 = vcmp.eq.s32.totalorder %v639, 1
        %v644 = vsel %vm640, %v520, %v612
        %v645 = vsel %vm641, %v521, %v613
        %v646 = vsel %vm642, %v522, %v614
        %v647 = vsel %vm643, %v523, %v615
        %v648 = vld [vmem:[%s8] sm:$0xff]
        %v649 = vld [vmem:[%s8 + $0x8] sm:$0xff]
        %v650 = vld [vmem:[%s8 + $0x10] sm:$0xff]
        %v651 = vld [vmem:[%s8 + $0x18] sm:$0xff]
        %652 = vadd.xlane.f32.xlu0 %v644
        %v653 = vpop.xlane.xlu0 %652
        %654 = vadd.xlane.f32.xlu0 %v645
        %v655 = vpop.xlane.xlu0 %654
        %656 = vadd.xlane.f32.xlu0 %v646
        %v657 = vpop.xlane.xlu0 %656
        %658 = vadd.xlane.f32.xlu0 %v647
        %v659 = vpop.xlane.xlu0 %658
        %v660 = vadd.f32 %v648, %v653
        %v661 = vadd.f32 %v649, %v655
        %v662 = vadd.f32 %v650, %v657
        %v663 = vadd.f32 %v651, %v659
        %vm664 = vcmask 7168
        %665 = vst.msk [vmem:[%s8] sm:$0xff] %vm664, %v660
        %666 = vst.msk [vmem:[%s8 + $0x8] sm:$0xff] %vm664, %v661
        %667 = vst.msk [vmem:[%s8 + $0x10] sm:$0xff] %vm664, %v662
        %668 = vst.msk [vmem:[%s8 + $0x18] sm:$0xff] %vm664, %v663
        // Predicated region
        $region98: #{relu_pca_forward.6} parent=88 // pred_check
          %p669 = pneg %p205
        $region99: #{relu_pca_forward.6} parent=88 // pred_check_branch
          %671 = sbr.rel (%p669) target = $region101
        $region100: #{relu_pca_forward.6} parent=88 // pred_region
          _
        $region101: #{relu_pca_forward.6} parent=88 // pred_fallthru
          _
        // Predicated region
        $region102: #{relu_pca_forward.6} parent=88 // pred_check
          %p672 = pneg %p205
        $region103: #{relu_pca_forward.6} parent=88 // pred_check_branch
          %674 = sbr.rel (%p672) target = $region105
        $region104: #{relu_pca_forward.6} parent=88 // pred_region
          _
        $region105: #{relu_pca_forward.6} parent=88 // pred_fallthru
          _
      $region89: #{relu_pca_forward.6} parent=5 // pred_fallthru
        _
      %p675 = scmp.le.s32.totalorder 2, %s14
      // Predicated region
      $region106: #{relu_pca_forward.6} parent=5 // pred_check
        %p676 = pneg %p675
      $region107: #{relu_pca_forward.6} parent=5 // pred_check_branch
        %678 = sbr.rel (%p676) target = $region109
      $region108: #{relu_pca_forward.6} parent=5 // pred_region
        %s679 = ssub.s32 %s14, 2
      $region109: #{relu_pca_forward.6} parent=5 // pred_fallthru
        _
    $region6: #{relu_pca_forward.6} parent=1 // loop_footer
      %s18 = sadd.s32 1, %s14
    $region7: #{relu_pca_forward.6} parent=1 // loop_footer_branch
      %13 = sbr.rel target = $region3
    $region8: #{relu_pca_forward.6} parent=1 // loop_exit
      _

// kernel: relu_pca_forward.7
$region0: #{relu_pca_forward.7}
  #allocation0 [shape = 'u32[]', space=smem, size = 0x4, offset = 0x4, fixed_abs, tag = 'smem constant byte address 0x4 - core index']
  #allocation1 [shape = 'u32[144,128]{1,0:T(1,128)}', space=vmem, size = 0x12000, scoped, tag = 'internal scratch']
  %s0 = inlined_call_operand.vmem [shape: bf16[32,512], index: 0, kind: input, shape index: {}]
  %s1 = inlined_call_operand.vmem [shape: bf16[32,32], index: 1, kind: input, shape index: {}]
  %s2 = inlined_call_operand.vmem [shape: bf16[32,32], index: 2, kind: input, shape index: {}]
  %s3 = inlined_call_operand.vmem [shape: f32[32,1], index: 3, kind: input, shape index: {}]
  %s4 = inlined_call_operand.vmem [shape: f32[32,1], index: 4, kind: input, shape index: {}]
  %s5 = inlined_call_operand.vmem [shape: f32[32,1], index: 5, kind: input, shape index: {}]
  %s6 = inlined_call_operand.vmem [shape: f32[32,1], index: 6, kind: input, shape index: {}]
  %s7 = inlined_call_operand.vmem [shape: f32[32,1], index: 7, kind: input, shape index: {}]
  %s8 = inlined_call_operand.vmem [shape: f32[32,1], index: 8, kind: input, shape index: {}]
  %s9 = inlined_call_operand.vmem [shape: f32[32,1], index: 9, kind: input, shape index: {}]
  %s10 = inlined_call_operand.vmem [shape: f32[32,512], index: 10, kind: output, shape index: {}]
  %s11 = sld [smem:[#allocation0]]
  $region148: #{relu_pca_forward.7} parent=0
    _
  %s13 = ssub.s32 1, %s11
  %s14 = scalar_select 0, %s13, %s11
  $region1: #{relu_pca_forward.7} parent=0
    #allocation2 [shape = 'u8[16384]{0}', space=vmem, size = 0x4000, scoped, tag = 'input window, operand 0']
    #allocation3 [shape = 'u8[32768]{0}', space=vmem, size = 0x8000, scoped, tag = 'output window, operand 0']
    loop: start=0, step=1, limit=6
    $region2: #{relu_pca_forward.7} parent=1 // loop_pre_header
      _
    $region3: #{relu_pca_forward.7} parent=1 // loop_header
      %s16 = sphi 0, %s20
      %p17 = scmp.ge.s32.totalorder %s16, 6
      %s26 = sphi 0, %s28
      %s29 = sphi 0, %s26
      %s30 = sphi 0, %s29
      %s46 = sphi 0, %s30
      %s50 = sphi 0, %s50
      %s52 = sphi 0, %s50
      %s53 = sphi 0, %s52
      %s67 = sphi 0, %s53
      %s71 = sphi 0, %s71
      %s73 = sphi 0, %s71
      %s74 = sphi 0, %s73
      %s88 = sphi 0, %s74
      %s92 = sphi 0, %s92
      %s94 = sphi 0, %s92
      %s95 = sphi 0, %s94
      %s109 = sphi 0, %s95
      %s113 = sphi 0, %s113
      %s115 = sphi 0, %s113
      %s116 = sphi 0, %s115
      %s130 = sphi 0, %s116
      %s134 = sphi 0, %s134
      %s136 = sphi 0, %s134
      %s137 = sphi 0, %s136
      %s151 = sphi 0, %s137
      %s155 = sphi 0, %s155
      %s157 = sphi 0, %s155
      %s158 = sphi 0, %s157
      %s172 = sphi 0, %s158
      %s176 = sphi 0, %s176
      %s178 = sphi 0, %s176
      %s179 = sphi 0, %s178
      %s193 = sphi 0, %s179
      %s197 = sphi 0, %s197
      %s199 = sphi 0, %s197
      %s200 = sphi 0, %s199
      %s214 = sphi 0, %s200
      %s218 = sphi 0, %s218
      %s220 = sphi 0, %s218
      %s221 = sphi 0, %s220
      %s235 = sphi 0, %s221
      %s241 = sphi 0, %s243
      %s244 = sphi 0, %s241
      %s245 = sphi 0, %s244
      %s261 = sphi 0, %s245
    $region4: #{relu_pca_forward.7} parent=1 // loop_header_branch
      %19 = sbr.rel (%p17) target = $region8
    $region5: #{relu_pca_forward.7} parent=1 // loop_body
      %s21 = ssub.s32 %s16, 1
      %s22 = ssub.s32 %s16, 2
      %s23 = sadd.s32 %s16, 1
      %s24 = ssub.s32 %s16, %s23
      %p25 = scmp.eq.s32.totalorder %s24, 0
      %s27 = sadd.s32 %s26, 1
      %s28 = scalar_select %p25, %s26, %s27
      %p31 = pneg %p25
      %p32 = scmp.eq.s32.totalorder %s16, 3
      %p33 = por %p31, %p32
      %p34 = scmp.ne.s32.totalorder %s26, %s29
      %p35 = scmp.eq.s32.totalorder %s16, 0
      %p36 = por %p34, %p35
      %p37 = scmp.ne.s32.totalorder %s26, %s29
      %p38 = scmp.eq.s32.totalorder %s21, 3
      %p39 = por %p37, %p38
      %p40 = scmp.ne.s32.totalorder %s29, %s30
      %p41 = scmp.eq.s32.totalorder %s21, 0
      %p42 = por %p40, %p41
      %p43 = scmp.ne.s32.totalorder %s29, %s30
      %p44 = scmp.eq.s32.totalorder %s22, 3
      %p45 = por %p43, %p44
      %p47 = scmp.ne.s32.totalorder %s30, %s46
      %p48 = scmp.eq.s32.totalorder %s22, 0
      %p49 = por %p47, %p48
      %s51 = sadd.s32 %s50, 1
      %p54 = scmp.eq.s32.totalorder %s16, 3
      %p55 = scmp.ne.s32.totalorder %s50, %s52
      %p56 = scmp.eq.s32.totalorder %s16, 0
      %p57 = por %p55, %p56
      %p58 = scmp.ne.s32.totalorder %s50, %s52
      %p59 = scmp.eq.s32.totalorder %s21, 3
      %p60 = por %p58, %p59
      %p61 = scmp.ne.s32.totalorder %s52, %s53
      %p62 = scmp.eq.s32.totalorder %s21, 0
      %p63 = por %p61, %p62
      %p64 = scmp.ne.s32.totalorder %s52, %s53
      %p65 = scmp.eq.s32.totalorder %s22, 3
      %p66 = por %p64, %p65
      %p68 = scmp.ne.s32.totalorder %s53, %s67
      %p69 = scmp.eq.s32.totalorder %s22, 0
      %p70 = por %p68, %p69
      %s72 = sadd.s32 %s71, 1
      %p75 = scmp.eq.s32.totalorder %s16, 3
      %p76 = scmp.ne.s32.totalorder %s71, %s73
      %p77 = scmp.eq.s32.totalorder %s16, 0
      %p78 = por %p76, %p77
      %p79 = scmp.ne.s32.totalorder %s71, %s73
      %p80 = scmp.eq.s32.totalorder %s21, 3
      %p81 = por %p79, %p80
      %p82 = scmp.ne.s32.totalorder %s73, %s74
      %p83 = scmp.eq.s32.totalorder %s21, 0
      %p84 = por %p82, %p83
      %p85 = scmp.ne.s32.totalorder %s73, %s74
      %p86 = scmp.eq.s32.totalorder %s22, 3
      %p87 = por %p85, %p86
      %p89 = scmp.ne.s32.totalorder %s74, %s88
      %p90 = scmp.eq.s32.totalorder %s22, 0
      %p91 = por %p89, %p90
      %s93 = sadd.s32 %s92, 1
      %p96 = scmp.eq.s32.totalorder %s16, 3
      %p97 = scmp.ne.s32.totalorder %s92, %s94
      %p98 = scmp.eq.s32.totalorder %s16, 0
      %p99 = por %p97, %p98
      %p100 = scmp.ne.s32.totalorder %s92, %s94
      %p101 = scmp.eq.s32.totalorder %s21, 3
      %p102 = por %p100, %p101
      %p103 = scmp.ne.s32.totalorder %s94, %s95
      %p104 = scmp.eq.s32.totalorder %s21, 0
      %p105 = por %p103, %p104
      %p106 = scmp.ne.s32.totalorder %s94, %s95
      %p107 = scmp.eq.s32.totalorder %s22, 3
      %p108 = por %p106, %p107
      %p110 = scmp.ne.s32.totalorder %s95, %s109
      %p111 = scmp.eq.s32.totalorder %s22, 0
      %p112 = por %p110, %p111
      %s114 = sadd.s32 %s113, 1
      %p117 = scmp.eq.s32.totalorder %s16, 3
      %p118 = scmp.ne.s32.totalorder %s113, %s115
      %p119 = scmp.eq.s32.totalorder %s16, 0
      %p120 = por %p118, %p119
      %p121 = scmp.ne.s32.totalorder %s113, %s115
      %p122 = scmp.eq.s32.totalorder %s21, 3
      %p123 = por %p121, %p122
      %p124 = scmp.ne.s32.totalorder %s115, %s116
      %p125 = scmp.eq.s32.totalorder %s21, 0
      %p126 = por %p124, %p125
      %p127 = scmp.ne.s32.totalorder %s115, %s116
      %p128 = scmp.eq.s32.totalorder %s22, 3
      %p129 = por %p127, %p128
      %p131 = scmp.ne.s32.totalorder %s116, %s130
      %p132 = scmp.eq.s32.totalorder %s22, 0
      %p133 = por %p131, %p132
      %s135 = sadd.s32 %s134, 1
      %p138 = scmp.eq.s32.totalorder %s16, 3
      %p139 = scmp.ne.s32.totalorder %s134, %s136
      %p140 = scmp.eq.s32.totalorder %s16, 0
      %p141 = por %p139, %p140
      %p142 = scmp.ne.s32.totalorder %s134, %s136
      %p143 = scmp.eq.s32.totalorder %s21, 3
      %p144 = por %p142, %p143
      %p145 = scmp.ne.s32.totalorder %s136, %s137
      %p146 = scmp.eq.s32.totalorder %s21, 0
      %p147 = por %p145, %p146
      %p148 = scmp.ne.s32.totalorder %s136, %s137
      %p149 = scmp.eq.s32.totalorder %s22, 3
      %p150 = por %p148, %p149
      %p152 = scmp.ne.s32.totalorder %s137, %s151
      %p153 = scmp.eq.s32.totalorder %s22, 0
      %p154 = por %p152, %p153
      %s156 = sadd.s32 %s155, 1
      %p159 = scmp.eq.s32.totalorder %s16, 3
      %p160 = scmp.ne.s32.totalorder %s155, %s157
      %p161 = scmp.eq.s32.totalorder %s16, 0
      %p162 = por %p160, %p161
      %p163 = scmp.ne.s32.totalorder %s155, %s157
      %p164 = scmp.eq.s32.totalorder %s21, 3
      %p165 = por %p163, %p164
      %p166 = scmp.ne.s32.totalorder %s157, %s158
      %p167 = scmp.eq.s32.totalorder %s21, 0
      %p168 = por %p166, %p167
      %p169 = scmp.ne.s32.totalorder %s157, %s158
      %p170 = scmp.eq.s32.totalorder %s22, 3
      %p171 = por %p169, %p170
      %p173 = scmp.ne.s32.totalorder %s158, %s172
      %p174 = scmp.eq.s32.totalorder %s22, 0
      %p175 = por %p173, %p174
      %s177 = sadd.s32 %s176, 1
      %p180 = scmp.eq.s32.totalorder %s16, 3
      %p181 = scmp.ne.s32.totalorder %s176, %s178
      %p182 = scmp.eq.s32.totalorder %s16, 0
      %p183 = por %p181, %p182
      %p184 = scmp.ne.s32.totalorder %s176, %s178
      %p185 = scmp.eq.s32.totalorder %s21, 3
      %p186 = por %p184, %p185
      %p187 = scmp.ne.s32.totalorder %s178, %s179
      %p188 = scmp.eq.s32.totalorder %s21, 0
      %p189 = por %p187, %p188
      %p190 = scmp.ne.s32.totalorder %s178, %s179
      %p191 = scmp.eq.s32.totalorder %s22, 3
      %p192 = por %p190, %p191
      %p194 = scmp.ne.s32.totalorder %s179, %s193
      %p195 = scmp.eq.s32.totalorder %s22, 0
      %p196 = por %p194, %p195
      %s198 = sadd.s32 %s197, 1
      %p201 = scmp.eq.s32.totalorder %s16, 3
      %p202 = scmp.ne.s32.totalorder %s197, %s199
      %p203 = scmp.eq.s32.totalorder %s16, 0
      %p204 = por %p202, %p203
      %p205 = scmp.ne.s32.totalorder %s197, %s199
      %p206 = scmp.eq.s32.totalorder %s21, 3
      %p207 = por %p205, %p206
      %p208 = scmp.ne.s32.totalorder %s199, %s200
      %p209 = scmp.eq.s32.totalorder %s21, 0
      %p210 = por %p208, %p209
      %p211 = scmp.ne.s32.totalorder %s199, %s200
      %p212 = scmp.eq.s32.totalorder %s22, 3
      %p213 = por %p211, %p212
      %p215 = scmp.ne.s32.totalorder %s200, %s214
      %p216 = scmp.eq.s32.totalorder %s22, 0
      %p217 = por %p215, %p216
      %s219 = sadd.s32 %s218, 1
      %p222 = scmp.eq.s32.totalorder %s16, 3
      %p223 = scmp.ne.s32.totalorder %s218, %s220
      %p224 = scmp.eq.s32.totalorder %s16, 0
      %p225 = por %p223, %p224
      %p226 = scmp.ne.s32.totalorder %s218, %s220
      %p227 = scmp.eq.s32.totalorder %s21, 3
      %p228 = por %p226, %p227
      %p229 = scmp.ne.s32.totalorder %s220, %s221
      %p230 = scmp.eq.s32.totalorder %s21, 0
      %p231 = por %p229, %p230
      %p232 = scmp.ne.s32.totalorder %s220, %s221
      %p233 = scmp.eq.s32.totalorder %s22, 3
      %p234 = por %p232, %p233
      %p236 = scmp.ne.s32.totalorder %s221, %s235
      %p237 = scmp.eq.s32.totalorder %s22, 0
      %p238 = por %p236, %p237
      %s239 = ssub.s32 %s16, %s23
      %p240 = scmp.eq.s32.totalorder %s239, 0
      %s242 = sadd.s32 %s241, 1
      %s243 = scalar_select %p240, %s241, %s242
      %p246 = pneg %p240
      %p247 = scmp.eq.s32.totalorder %s16, 3
      %p248 = por %p246, %p247
      %p249 = scmp.ne.s32.totalorder %s241, %s244
      %p250 = scmp.eq.s32.totalorder %s16, 0
      %p251 = por %p249, %p250
      %p252 = scmp.ne.s32.totalorder %s241, %s244
      %p253 = scmp.eq.s32.totalorder %s21, 3
      %p254 = por %p252, %p253
      %p255 = scmp.ne.s32.totalorder %s244, %s245
      %p256 = scmp.eq.s32.totalorder %s21, 0
      %p257 = por %p255, %p256
      %p258 = scmp.ne.s32.totalorder %s244, %s245
      %p259 = scmp.eq.s32.totalorder %s22, 3
      %p260 = por %p258, %p259
      %p262 = scmp.ne.s32.totalorder %s245, %s261
      %p263 = scmp.eq.s32.totalorder %s22, 0
      %p264 = por %p262, %p263
      %p265 = scmp.le.s32.totalorder 1, %s16
      %p266 = scmp.lt.s32.totalorder %s16, 5
      %p267 = pnand %p265, %p266
      %p268 = pneg %p267
      // Predicated region
      $region9: #{relu_pca_forward.7} parent=5 // pred_check
        _
      $region10: #{relu_pca_forward.7} parent=5 // pred_check_branch
        %270 = sbr.rel (%p267) target = $region12
      $region11: #{relu_pca_forward.7} parent=5 // pred_region
        %s271 = ssub.s32 %s16, 1
        // Predicated region
        $region13: #{relu_pca_forward.7} parent=11 // pred_check
          %p272 = pneg %p63
        $region14: #{relu_pca_forward.7} parent=11 // pred_check_branch
          %274 = sbr.rel (%p272) target = $region16
        $region15: #{relu_pca_forward.7} parent=11 // pred_region
          _
        $region16: #{relu_pca_forward.7} parent=11 // pred_fallthru
          _
        // Predicated region
        $region17: #{relu_pca_forward.7} parent=11 // pred_check
          %p275 = pneg %p84
        $region18: #{relu_pca_forward.7} parent=11 // pred_check_branch
          %277 = sbr.rel (%p275) target = $region20
        $region19: #{relu_pca_forward.7} parent=11 // pred_region
          _
        $region20: #{relu_pca_forward.7} parent=11 // pred_fallthru
          _
        // Predicated region
        $region21: #{relu_pca_forward.7} parent=11 // pred_check
          %p278 = pneg %p105
        $region22: #{relu_pca_forward.7} parent=11 // pred_check_branch
          %280 = sbr.rel (%p278) target = $region24
        $region23: #{relu_pca_forward.7} parent=11 // pred_region
          _
        $region24: #{relu_pca_forward.7} parent=11 // pred_fallthru
          _
        // Predicated region
        $region25: #{relu_pca_forward.7} parent=11 // pred_check
          %p281 = pneg %p126
        $region26: #{relu_pca_forward.7} parent=11 // pred_check_branch
          %283 = sbr.rel (%p281) target = $region28
        $region27: #{relu_pca_forward.7} parent=11 // pred_region
          _
        $region28: #{relu_pca_forward.7} parent=11 // pred_fallthru
          _
        // Predicated region
        $region29: #{relu_pca_forward.7} parent=11 // pred_check
          %p284 = pneg %p147
        $region30: #{relu_pca_forward.7} parent=11 // pred_check_branch
          %286 = sbr.rel (%p284) target = $region32
        $region31: #{relu_pca_forward.7} parent=11 // pred_region
          _
        $region32: #{relu_pca_forward.7} parent=11 // pred_fallthru
          _
        // Predicated region
        $region33: #{relu_pca_forward.7} parent=11 // pred_check
          %p287 = pneg %p168
        $region34: #{relu_pca_forward.7} parent=11 // pred_check_branch
          %289 = sbr.rel (%p287) target = $region36
        $region35: #{relu_pca_forward.7} parent=11 // pred_region
          _
        $region36: #{relu_pca_forward.7} parent=11 // pred_fallthru
          _
        // Predicated region
        $region37: #{relu_pca_forward.7} parent=11 // pred_check
          %p290 = pneg %p189
        $region38: #{relu_pca_forward.7} parent=11 // pred_check_branch
          %292 = sbr.rel (%p290) target = $region40
        $region39: #{relu_pca_forward.7} parent=11 // pred_region
          _
        $region40: #{relu_pca_forward.7} parent=11 // pred_fallthru
          _
        // Predicated region
        $region41: #{relu_pca_forward.7} parent=11 // pred_check
          %p293 = pneg %p210
        $region42: #{relu_pca_forward.7} parent=11 // pred_check_branch
          %295 = sbr.rel (%p293) target = $region44
        $region43: #{relu_pca_forward.7} parent=11 // pred_region
          _
        $region44: #{relu_pca_forward.7} parent=11 // pred_fallthru
          _
        // Predicated region
        $region45: #{relu_pca_forward.7} parent=11 // pred_check
          %p296 = pneg %p231
        $region46: #{relu_pca_forward.7} parent=11 // pred_check_branch
          %298 = sbr.rel (%p296) target = $region48
        $region47: #{relu_pca_forward.7} parent=11 // pred_region
          _
        $region48: #{relu_pca_forward.7} parent=11 // pred_fallthru
          _
      $region12: #{relu_pca_forward.7} parent=5 // pred_fallthru
        _
      %p299 = scmp.lt.s32.totalorder %s16, 4
      // Predicated region
      $region49: #{relu_pca_forward.7} parent=5 // pred_check
        %p300 = pneg %p299
      $region50: #{relu_pca_forward.7} parent=5 // pred_check_branch
        %302 = sbr.rel (%p300) target = $region52
      $region51: #{relu_pca_forward.7} parent=5 // pred_region
        // Predicated region
        $region53: #{relu_pca_forward.7} parent=51 // pred_check
          %p303 = pneg %p36
        $region54: #{relu_pca_forward.7} parent=51 // pred_check_branch
          %305 = sbr.rel (%p303) target = $region56
        $region55: #{relu_pca_forward.7} parent=51 // pred_region
          %s306 = sand.u32 %s26, 1
          %s307 = sand.u32 %s26, 1
          %s308 = smul.addr %s307, 16
          %s309 = scalar_lea.vmem [#allocation2], %s308
          %s310 = smul.addr %s16, 4
          %s311 = scalar_lea.vmem %s0, %s310
          // Predicated region
          $region57: #{relu_pca_forward.7} parent=55 // pred_check
            _
          $region58: #{relu_pca_forward.7} parent=55 // pred_check_branch
            %313 = sbr.rel (0) target = $region60
          $region59: #{relu_pca_forward.7} parent=55 // pred_region
            // Predicated region
            $region61: #{relu_pca_forward.7} parent=59 // pred_check
              _
            $region62: #{relu_pca_forward.7} parent=59 // pred_check_branch
              %315 = sbr.rel target = $region64
            $region63: #{relu_pca_forward.7} parent=59 // pred_region
              // Predicated region
              $region76: #{relu_pca_forward.7} parent=63 // pred_check
                _
              $region77: #{relu_pca_forward.7} parent=63 // pred_check_branch
                %337 = sbr.rel (0) target = $region79
              $region78: #{relu_pca_forward.7} parent=63 // pred_region
                loop: start=0, step=1, limit=1
                $region80: #{relu_pca_forward.7} parent=78 // loop_pre_header
                  _
                $region81: #{relu_pca_forward.7} parent=78 // loop_header
                  %s339 = sphi 0, %s343
                  %p340 = scmp.ge.s32.totalorder %s339, 1
                  %s344 = sphi %s311, %s311
                  %s345 = sphi %s309, %s309
                $region82: #{relu_pca_forward.7} parent=78 // loop_header_branch
                  %342 = sbr.rel (%p340) target = $region86
                $region83: #{relu_pca_forward.7} parent=78 // loop_body
                  _
                $region84: #{relu_pca_forward.7} parent=78 // loop_footer
                  %s343 = sadd.s32 1, %s339
                $region85: #{relu_pca_forward.7} parent=78 // loop_footer_branch
                  %338 = sbr.rel target = $region81
                $region86: #{relu_pca_forward.7} parent=78 // loop_exit
                  _
                %s347 = ssub.s32 16, 1
                loop: start=0, step=1, limit=1
                $region87: #{relu_pca_forward.7} parent=78 // loop_pre_header
                  _
                $region88: #{relu_pca_forward.7} parent=78 // loop_header
                  %s349 = sphi 0, %s353
                  %p350 = scmp.ge.s32.totalorder %s349, 1
                  %s354 = sphi %s311, %s311
                  %s355 = sphi %s309, %s309
                $region89: #{relu_pca_forward.7} parent=78 // loop_header_branch
                  %352 = sbr.rel (%p350) target = $region93
                $region90: #{relu_pca_forward.7} parent=78 // loop_body
                  %v356 = vld [vmem:[%s354] sm:%s347]
                  %357 = vst [vmem:[%s355] sm:%s347] %v356
                  %v358 = vld [vmem:[%s354 + $0x10] sm:%s347]
                  %359 = vst [vmem:[%s355 + $0x4] sm:%s347] %v358
                  %v360 = vld [vmem:[%s354 + $0x20] sm:%s347]
                  %361 = vst [vmem:[%s355 + $0x8] sm:%s347] %v360
                  %v362 = vld [vmem:[%s354 + $0x30] sm:%s347]
                  %363 = vst [vmem:[%s355 + $0xc] sm:%s347] %v362
                $region91: #{relu_pca_forward.7} parent=78 // loop_footer
                  %s353 = sadd.s32 1, %s349
                $region92: #{relu_pca_forward.7} parent=78 // loop_footer_branch
                  %348 = sbr.rel target = $region88
                $region93: #{relu_pca_forward.7} parent=78 // loop_exit
                  _
              $region79: #{relu_pca_forward.7} parent=63 // pred_fallthru
                _
            $region64: #{relu_pca_forward.7} parent=59 // pred_fallthru
              _
            // Predicated region
            $region65: #{relu_pca_forward.7} parent=59 // pred_check
              _
            $region66: #{relu_pca_forward.7} parent=59 // pred_check_branch
              %317 = sbr.rel (0) target = $region68
            $region67: #{relu_pca_forward.7} parent=59 // pred_region
              %s319 = ssub.s32 16, 1
              loop: start=0, step=1, limit=1
              $region69: #{relu_pca_forward.7} parent=67 // loop_pre_header
                _
              $region70: #{relu_pca_forward.7} parent=67 // loop_header
                %s321 = sphi 0, %s325
                %p322 = scmp.ge.s32.totalorder %s321, 1
                %s326 = sphi %s311, %s311
                %s327 = sphi %s309, %s309
              $region71: #{relu_pca_forward.7} parent=67 // loop_header_branch
                %324 = sbr.rel (%p322) target = $region75
              $region72: #{relu_pca_forward.7} parent=67 // loop_body
                %v328 = vld [vmem:[%s326] sm:%s319]
                %329 = vst [vmem:[%s327] sm:%s319] %v328
                %v330 = vld [vmem:[%s326 + $0x10] sm:%s319]
                %331 = vst [vmem:[%s327 + $0x4] sm:%s319] %v330
                %v332 = vld [vmem:[%s326 + $0x20] sm:%s319]
                %333 = vst [vmem:[%s327 + $0x8] sm:%s319] %v332
                %v334 = vld [vmem:[%s326 + $0x30] sm:%s319]
                %335 = vst [vmem:[%s327 + $0xc] sm:%s319] %v334
              $region73: #{relu_pca_forward.7} parent=67 // loop_footer
                %s325 = sadd.s32 1, %s321
              $region74: #{relu_pca_forward.7} parent=67 // loop_footer_branch
                %320 = sbr.rel target = $region70
              $region75: #{relu_pca_forward.7} parent=67 // loop_exit
                _
            $region68: #{relu_pca_forward.7} parent=59 // pred_fallthru
              _
          $region60: #{relu_pca_forward.7} parent=55 // pred_fallthru
            _
          %364 = vnop
        $region56: #{relu_pca_forward.7} parent=51 // pred_fallthru
          _
      $region52: #{relu_pca_forward.7} parent=5 // pred_fallthru
        _
      %p365 = scmp.le.s32.totalorder 1, %s16
      %p366 = scmp.lt.s32.totalorder %s16, 5
      %p367 = pnand %p365, %p366
      %p368 = pneg %p367
      // Predicated region
      $region94: #{relu_pca_forward.7} parent=5 // pred_check
        _
      $region95: #{relu_pca_forward.7} parent=5 // pred_check_branch
        %370 = sbr.rel (%p367) target = $region97
      $region96: #{relu_pca_forward.7} parent=5 // pred_region
        %s371 = ssub.s32 %s16, 1
        %s372 = sand.u32 %s29, 1
        %s373 = sand.u32 %s29, 1
        %s374 = smul.addr %s373, 16
        %s375 = scalar_lea.vmem [#allocation2], %s374
        // Predicated region
        $region98: #{relu_pca_forward.7} parent=96 // pred_check
          %p376 = pneg %p42
        $region99: #{relu_pca_forward.7} parent=96 // pred_check_branch
          %378 = sbr.rel (%p376) target = $region101
        $region100: #{relu_pca_forward.7} parent=96 // pred_region
          _
        $region101: #{relu_pca_forward.7} parent=96 // pred_fallthru
          _
        %s379 = sand.u32 %s29, 1
        %s380 = sand.u32 %s29, 1
        %s381 = smul.addr %s380, 16
        %s382 = scalar_lea.vmem [#allocation2], %s381
        %p383 = pneg %p42
        %p384 = pneg %p39
        %p385 = pneg %p63
        %p386 = pneg %p60
        %p387 = pneg %p84
        %p388 = pneg %p81
        %p389 = pneg %p105
        %p390 = pneg %p102
        %p391 = pneg %p126
        %p392 = pneg %p123
        %p393 = pneg %p147
        %p394 = pneg %p144
        %p395 = pneg %p168
        %p396 = pneg %p165
        %p397 = pneg %p189
        %p398 = pneg %p186
        %p399 = pneg %p210
        %p400 = pneg %p207
        %p401 = pneg %p231
        %p402 = pneg %p228
        %p403 = pneg %p257
        %p404 = pneg %p254
        %s405 = sand.u32 %s244, 1
        %s406 = sand.u32 %s244, 1
        %s407 = smul.addr %s406, 32
        %s408 = scalar_lea.vmem [#allocation3], %s407
        %v410 = vld [vmem:[%s375] sm:$0xf]
        %v411 = vld [vmem:[%s375 + $0x4] sm:$0xf]
        %v412 = vld [vmem:[%s375 + $0x8] sm:$0xf]
        %v413 = vld [vmem:[%s375 + $0xc] sm:$0xf]
        %v414 = vunpack.c.l.bf16 %v410
        %v415 = vunpack.c.l.bf16 %v411
        %v416 = vunpack.c.l.bf16 %v412
        %v417 = vunpack.c.l.bf16 %v413
        %v418 = vmax.f32 %v414, 0.0
        %v419 = vmax.f32 %v415, 0.0
        %v420 = vmax.f32 %v416, 0.0
        %v421 = vmax.f32 %v417, 0.0
        %v422 = vld [vmem:[%s3] sm:$0xff]
        %v423 = vld [vmem:[%s3 + $0x8] sm:$0xff]
        %v424 = vld [vmem:[%s3 + $0x10] sm:$0xff]
        %v425 = vld [vmem:[%s3 + $0x18] sm:$0xff]
        %427 = vset.pattern.permute.xlu0 0
        %428 = vperm.xlu0 %427, %v422
        %v429 = vpop.permute.xlu0 %428
        %432 = vset.pattern.permute.xlu0 0
        %433 = vperm.xlu0 %432, %v423
        %v434 = vpop.permute.xlu0 %433
        %437 = vset.pattern.permute.xlu0 0
        %438 = vperm.xlu0 %437, %v424
        %v439 = vpop.permute.xlu0 %438
        %442 = vset.pattern.permute.xlu0 0
        %443 = vperm.xlu0 %442, %v425
        %v444 = vpop.permute.xlu0 %443
        %v446 = vsub.f32 %v418, %v429
        %v447 = vsub.f32 %v419, %v434
        %v448 = vsub.f32 %v420, %v439
        %v449 = vsub.f32 %v421, %v444
        %v450 = vpack.c.bf16 %v447, %v446
        %v451 = vpack.c.bf16 %v449, %v448
        %v452 = vld [vmem:[%s1] sm:$0xf]
        %v453 = vld [vmem:[%s1 + $0x4] sm:$0xf]
        %v454 = vld [vmem:[%s1 + $0x8] sm:$0xf]
        %v455 = vld [vmem:[%s1 + $0xc] sm:$0xf]
        %v460 = vunpack.c.l.b16 %v452
        %v461 = vunpack.c.l.b16 %v453
        %v462 = vunpack.c.l.b16 %v454
        %v463 = vunpack.c.l.b16 %v455
        %v464 = vpack.c.b16 %v461, %v460
        %v465 = vpack.c.b16 %v463, %v462
        %vm466 = vcmask 261120
        %v468 = vsel %vm466, %v464, 0
        %v471 = vsel %vm466, %v465, 0
        %473 = vmatprep.subr.bf16.mxu0 0
        %474 = vmatpush1.bf16.msra.mxu0 0
        %475 = vmatprep.subr.bf16.mxu0 0
        %476 = vmatpush1.bf16.msra.mxu0 0
        %477 = vmatprep.subr.bf16.mxu0 0
        %478 = vmatpush1.bf16.msra.mxu0 0
        %479 = vmatprep.subr.bf16.mxu0 0
        %480 = vmatpush1.bf16.msra.mxu0 0
        %481 = vmatprep.subr.bf16.mxu0 0
        %482 = vmatpush1.bf16.msra.mxu0 0
        %483 = vmatprep.subr.bf16.mxu0 0
        %484 = vmatpush1.bf16.msra.mxu0 0
        %485 = vmatprep.subr.bf16.mxu0 0
        %486 = vmatpush1.bf16.msra.mxu0 %v451
        %487 = vmatprep.subr.bf16.mxu0 0
        %488 = vmatpush1.bf16.msra.mxu0 %v450
        %489 = vmatprep.subr.bf16.mxu0 0
        %490 = vmatpush2.bf16.msra.mxu0 0
        %491 = vmatprep.subr.bf16.mxu0 0
        %492 = vmatpush2.bf16.msra.mxu0 0
        %493 = vmatprep.subr.bf16.mxu0 0
        %494 = vmatpush2.bf16.msra.mxu0 0
        %495 = vmatprep.subr.bf16.mxu0 0
        %496 = vmatpush2.bf16.msra.mxu0 0
        %497 = vmatprep.subr.bf16.mxu0 0
        %498 = vmatpush2.bf16.msra.mxu0 0
        %499 = vmatprep.subr.bf16.mxu0 0
        %500 = vmatpush2.bf16.msra.mxu0 0
        %501 = vmatprep.subr.bf16.mxu0 0
        %502 = vmatpush2.bf16.msra.mxu0 0
        %503 = vmatprep.subr.bf16.mxu0 0
        %504 = vmatpush2.bf16.msra.mxu0 0
        %505 = vmatprep.mubr.bf16.mxu0 0
        %506 = vmatmul.mubr.bf16.gmra.mxu0 %v468
        %v507 = vpop.f32.mrf.mxu0
        %v508 = vadd.f32 0.0, %v507
        %v509 = vpop.f32.mrf.mxu0
        %v510 = vpop.f32.mrf.mxu0
        %v511 = vadd.f32 0.0, %v510
        %v512 = vpop.f32.mrf.mxu0
        %513 = vmatprep.mubr.bf16.mxu0 0
        %514 = vmatmul.mubr.bf16.gmra.mxu0 %v471
        %v515 = vpop.f32.mrf.mxu0
        %v516 = vadd.f32 0.0, %v515
        %v517 = vpop.f32.mrf.mxu0
        %v518 = vpop.f32.mrf.mxu0
        %v519 = vadd.f32 0.0, %v518
        %v520 = vpop.f32.mrf.mxu0
        %521 = vdwg.mxu0
        %v522 = vld [vmem:[%s4] sm:$0xff]
        %v523 = vld [vmem:[%s4 + $0x8] sm:$0xff]
        %v524 = vld [vmem:[%s4 + $0x10] sm:$0xff]
        %v525 = vld [vmem:[%s4 + $0x18] sm:$0xff]
        %v526 = vsub.f32 0.0, %v522
        %v527 = vsub.f32 0.0, %v523
        %v528 = vsub.f32 0.0, %v524
        %v529 = vsub.f32 0.0, %v525
        %531 = vset.pattern.permute.xlu0 0
        %532 = vperm.xlu0 %531, %v526
        %v533 = vpop.permute.xlu0 %532
        %536 = vset.pattern.permute.xlu0 0
        %537 = vperm.xlu0 %536, %v527
        %v538 = vpop.permute.xlu0 %537
        %541 = vset.pattern.permute.xlu0 0
        %542 = vperm.xlu0 %541, %v528
        %v543 = vpop.permute.xlu0 %542
        %546 = vset.pattern.permute.xlu0 0
        %547 = vperm.xlu0 %546, %v529
        %v548 = vpop.permute.xlu0 %547
        %v550 = vmax.f32 %v533, %v508
        %v551 = vmax.f32 %v538, %v511
        %v552 = vmax.f32 %v543, %v516
        %v553 = vmax.f32 %v548, %v519
        %555 = vset.pattern.permute.xlu0 0
        %556 = vperm.xlu0 %555, %v522
        %v557 = vpop.permute.xlu0 %556
        %560 = vset.pattern.permute.xlu0 0
        %561 = vperm.xlu0 %560, %v523
        %v562 = vpop.permute.xlu0 %561
        %565 = vset.pattern.permute.xlu0 0
        %566 = vperm.xlu0 %565, %v524
        %v567 = vpop.permute.xlu0 %566
        %570 = vset.pattern.permute.xlu0 0
        %571 = vperm.xlu0 %570, %v525
        %v572 = vpop.permute.xlu0 %571
        %v574 = vmin.f32 %v557, %v550
        %v575 = vmin.f32 %v562, %v551
        %v576 = vmin.f32 %v567, %v552
        %v577 = vmin.f32 %v572, %v553
        %v578 = vld [vmem:[%s7] sm:$0xff]
        %v579 = vld [vmem:[%s7 + $0x8] sm:$0xff]
        %v580 = vld [vmem:[%s7 + $0x10] sm:$0xff]
        %v581 = vld [vmem:[%s7 + $0x18] sm:$0xff]
        %583 = vset.pattern.permute.xlu0 0
        %584 = vperm.xlu0 %583, %v578
        %v585 = vpop.permute.xlu0 %584
        %588 = vset.pattern.permute.xlu0 0
        %589 = vperm.xlu0 %588, %v579
        %v590 = vpop.permute.xlu0 %589
        %593 = vset.pattern.permute.xlu0 0
        %594 = vperm.xlu0 %593, %v580
        %v595 = vpop.permute.xlu0 %594
        %598 = vset.pattern.permute.xlu0 0
        %599 = vperm.xlu0 %598, %v581
        %v600 = vpop.permute.xlu0 %599
        %v602 = vsub.f32 %v574, %v585
        %v603 = vsub.f32 %v575, %v590
        %v604 = vsub.f32 %v576, %v595
        %v605 = vsub.f32 %v577, %v600
        %v606 = vld [vmem:[%s5] sm:$0xff]
        %v607 = vld [vmem:[%s5 + $0x8] sm:$0xff]
        %v608 = vld [vmem:[%s5 + $0x10] sm:$0xff]
        %v609 = vld [vmem:[%s5 + $0x18] sm:$0xff]
        %611 = vset.pattern.permute.xlu0 0
        %612 = vperm.xlu0 %611, %v606
        %v613 = vpop.permute.xlu0 %612
        %616 = vset.pattern.permute.xlu0 0
        %617 = vperm.xlu0 %616, %v607
        %v618 = vpop.permute.xlu0 %617
        %621 = vset.pattern.permute.xlu0 0
        %622 = vperm.xlu0 %621, %v608
        %v623 = vpop.permute.xlu0 %622
        %626 = vset.pattern.permute.xlu0 0
        %627 = vperm.xlu0 %626, %v609
        %v628 = vpop.permute.xlu0 %627
        %v630 = vmul.f32 %v602, %v613
        %v631 = vmul.f32 %v603, %v618
        %v632 = vmul.f32 %v604, %v623
        %v633 = vmul.f32 %v605, %v628
        %v634 = vround.ne.pseudo %v630
        %v635 = vround.ne.pseudo %v631
        %v636 = vround.ne.pseudo %v632
        %v637 = vround.ne.pseudo %v633
        %v638 = vld [vmem:[%s6] sm:$0xff]
        %v639 = vld [vmem:[%s6 + $0x8] sm:$0xff]
        %v640 = vld [vmem:[%s6 + $0x10] sm:$0xff]
        %v641 = vld [vmem:[%s6 + $0x18] sm:$0xff]
        %643 = vset.pattern.permute.xlu0 0
        %644 = vperm.xlu0 %643, %v638
        %v645 = vpop.permute.xlu0 %644
        %648 = vset.pattern.permute.xlu0 0
        %649 = vperm.xlu0 %648, %v639
        %v650 = vpop.permute.xlu0 %649
        %653 = vset.pattern.permute.xlu0 0
        %654 = vperm.xlu0 %653, %v640
        %v655 = vpop.permute.xlu0 %654
        %658 = vset.pattern.permute.xlu0 0
        %659 = vperm.xlu0 %658, %v641
        %v660 = vpop.permute.xlu0 %659
        %v662 = vmul.f32 %v634, %v645
        %v663 = vmul.f32 %v635, %v650
        %v664 = vmul.f32 %v636, %v655
        %v665 = vmul.f32 %v637, %v660
        %v666 = vadd.f32 %v662, %v585
        %v667 = vadd.f32 %v663, %v590
        %v668 = vadd.f32 %v664, %v595
        %v669 = vadd.f32 %v665, %v600
        %v670 = vld [vmem:[%s8] sm:$0xff]
        %v671 = vld [vmem:[%s8 + $0x8] sm:$0xff]
        %v672 = vld [vmem:[%s8 + $0x10] sm:$0xff]
        %v673 = vld [vmem:[%s8 + $0x18] sm:$0xff]
        %vm674 = vcmp.gt.f32.partialorder %v670, 0.5
        %vm675 = vcmp.gt.f32.partialorder %v671, 0.5
        %vm676 = vcmp.gt.f32.partialorder %v672, 0.5
        %vm677 = vcmp.gt.f32.partialorder %v673, 0.5
        %v678 = vsel %vm674, 1, 0
        %v679 = vsel %vm675, 1, 0
        %v680 = vsel %vm676, 1, 0
        %v681 = vsel %vm677, 1, 0
        %682 = vset.pattern.permute.xlu0 0
        %683 = vperm.xlu0 %682, %v678
        %v684 = vpop.permute.xlu0 %683
        %685 = vset.pattern.permute.xlu0 0
        %686 = vperm.xlu0 %685, %v679
        %v687 = vpop.permute.xlu0 %686
        %688 = vset.pattern.permute.xlu0 0
        %689 = vperm.xlu0 %688, %v680
        %v690 = vpop.permute.xlu0 %689
        %691 = vset.pattern.permute.xlu0 0
        %692 = vperm.xlu0 %691, %v681
        %v693 = vpop.permute.xlu0 %692
        %vm694 = vcmp.eq.s32.totalorder %v684, 1
        %vm695 = vcmp.eq.s32.totalorder %v687, 1
        %vm696 = vcmp.eq.s32.totalorder %v690, 1
        %vm697 = vcmp.eq.s32.totalorder %v693, 1
        %v698 = vsel %vm694, %v574, %v666
        %v699 = vsel %vm695, %v575, %v667
        %v700 = vsel %vm696, %v576, %v668
        %v701 = vsel %vm697, %v577, %v669
        %v702 = vld [vmem:[%s2] sm:$0xf]
        %v703 = vld [vmem:[%s2 + $0x4] sm:$0xf]
        %v704 = vld [vmem:[%s2 + $0x8] sm:$0xf]
        %v705 = vld [vmem:[%s2 + $0xc] sm:$0xf]
        %v706 = vpack.c.bf16 %v699, %v698
        %v707 = vpack.c.bf16 %v701, %v700
        %v712 = vunpack.c.l.b16 %v702
        %v713 = vunpack.c.l.b16 %v703
        %v714 = vunpack.c.l.b16 %v704
        %v715 = vunpack.c.l.b16 %v705
        %v716 = vpack.c.b16 %v713, %v712
        %v717 = vpack.c.b16 %v715, %v714
        %v719 = vsel %vm466, %v716, 0
        %v722 = vsel %vm466, %v717, 0
        %724 = vmatprep.subr.bf16.mxu0 0
        %725 = vmatpush1.bf16.msra.mxu0 0
        %726 = vmatprep.subr.bf16.mxu0 0
        %727 = vmatpush1.bf16.msra.mxu0 0
        %728 = vmatprep.subr.bf16.mxu0 0
        %729 = vmatpush1.bf16.msra.mxu0 0
        %730 = vmatprep.subr.bf16.mxu0 0
        %731 = vmatpush1.bf16.msra.mxu0 0
        %732 = vmatprep.subr.bf16.mxu0 0
        %733 = vmatpush1.bf16.msra.mxu0 0
        %734 = vmatprep.subr.bf16.mxu0 0
        %735 = vmatpush1.bf16.msra.mxu0 0
        %736 = vmatprep.subr.bf16.mxu0 0
        %737 = vmatpush1.bf16.msra.mxu0 %v707
        %738 = vmatprep.subr.bf16.mxu0 0
        %739 = vmatpush1.bf16.msra.mxu0 %v706
        %740 = vmatprep.subr.bf16.mxu0 0
        %741 = vmatpush2.bf16.msra.mxu0 0
        %742 = vmatprep.subr.bf16.mxu0 0
        %743 = vmatpush2.bf16.msra.mxu0 0
        %744 = vmatprep.subr.bf16.mxu0 0
        %745 = vmatpush2.bf16.msra.mxu0 0
        %746 = vmatprep.subr.bf16.mxu0 0
        %747 = vmatpush2.bf16.msra.mxu0 0
        %748 = vmatprep.subr.bf16.mxu0 0
        %749 = vmatpush2.bf16.msra.mxu0 0
        %750 = vmatprep.subr.bf16.mxu0 0
        %751 = vmatpush2.bf16.msra.mxu0 0
        %752 = vmatprep.subr.bf16.mxu0 0
        %753 = vmatpush2.bf16.msra.mxu0 0
        %754 = vmatprep.subr.bf16.mxu0 0
        %755 = vmatpush2.bf16.msra.mxu0 0
        %756 = vmatprep.mubr.bf16.mxu0 0
        %757 = vmatmul.mubr.bf16.gmra.mxu0 %v719
        %v758 = vpop.f32.mrf.mxu0
        %v759 = vadd.f32 0.0, %v758
        %v760 = vpop.f32.mrf.mxu0
        %v761 = vpop.f32.mrf.mxu0
        %v762 = vadd.f32 0.0, %v761
        %v763 = vpop.f32.mrf.mxu0
        %764 = vmatprep.mubr.bf16.mxu0 0
        %765 = vmatmul.mubr.bf16.gmra.mxu0 %v722
        %v766 = vpop.f32.mrf.mxu0
        %v767 = vadd.f32 0.0, %v766
        %v768 = vpop.f32.mrf.mxu0
        %v769 = vpop.f32.mrf.mxu0
        %v770 = vadd.f32 0.0, %v769
        %v771 = vpop.f32.mrf.mxu0
        %772 = vdwg.mxu0
        %v773 = vld [vmem:[%s9] sm:$0xff]
        %v774 = vld [vmem:[%s9 + $0x8] sm:$0xff]
        %v775 = vld [vmem:[%s9 + $0x10] sm:$0xff]
        %v776 = vld [vmem:[%s9 + $0x18] sm:$0xff]
        %778 = vset.pattern.permute.xlu0 0
        %779 = vperm.xlu0 %778, %v773
        %v780 = vpop.permute.xlu0 %779
        %783 = vset.pattern.permute.xlu0 0
        %784 = vperm.xlu0 %783, %v774
        %v785 = vpop.permute.xlu0 %784
        %788 = vset.pattern.permute.xlu0 0
        %789 = vperm.xlu0 %788, %v775
        %v790 = vpop.permute.xlu0 %789
        %793 = vset.pattern.permute.xlu0 0
        %794 = vperm.xlu0 %793, %v776
        %v795 = vpop.permute.xlu0 %794
        %v797 = vsub.f32 %v759, %v780
        %v798 = vsub.f32 %v762, %v785
        %v799 = vsub.f32 %v767, %v790
        %v800 = vsub.f32 %v770, %v795
        %v801 = vadd.f32 %v797, %v429
        %v802 = vadd.f32 %v798, %v434
        %v803 = vadd.f32 %v799, %v439
        %v804 = vadd.f32 %v800, %v444
        %805 = vst [vmem:[%s408] sm:$0xff] %v801
        %806 = vst [vmem:[%s408 + $0x8] sm:$0xff] %v802
        %807 = vst [vmem:[%s408 + $0x10] sm:$0xff] %v803
        %808 = vst [vmem:[%s408 + $0x18] sm:$0xff] %v804
        %s809 = sand.u32 %s244, 1
        %s810 = sand.u32 %s244, 1
        %s811 = smul.addr %s810, 32
        %s812 = scalar_lea.vmem [#allocation3], %s811
        // Predicated region
        $region102: #{relu_pca_forward.7} parent=96 // pred_check
          %p813 = pneg %p254
        $region103: #{relu_pca_forward.7} parent=96 // pred_check_branch
          %815 = sbr.rel (%p813) target = $region105
        $region104: #{relu_pca_forward.7} parent=96 // pred_region
          %s816 = smul.addr %s21, 8
          %s817 = scalar_lea.vmem %s10, %s816
          // Predicated region
          $region106: #{relu_pca_forward.7} parent=104 // pred_check
            _
          $region107: #{relu_pca_forward.7} parent=104 // pred_check_branch
            %819 = sbr.rel (0) target = $region109
          $region108: #{relu_pca_forward.7} parent=104 // pred_region
            // Predicated region
            $region110: #{relu_pca_forward.7} parent=108 // pred_check
              _
            $region111: #{relu_pca_forward.7} parent=108 // pred_check_branch
              %821 = sbr.rel (0) target = $region113
            $region112: #{relu_pca_forward.7} parent=108 // pred_region
              // Predicated region
              $region125: #{relu_pca_forward.7} parent=112 // pred_check
                _
              $region126: #{relu_pca_forward.7} parent=112 // pred_check_branch
                %843 = sbr.rel (0) target = $region128
              $region127: #{relu_pca_forward.7} parent=112 // pred_region
                loop: start=0, step=1, limit=1
                $region129: #{relu_pca_forward.7} parent=127 // loop_pre_header
                  _
                $region130: #{relu_pca_forward.7} parent=127 // loop_header
                  %s845 = sphi 0, %s849
                  %p846 = scmp.ge.s32.totalorder %s845, 1
                  %s850 = sphi %s812, %s812
                  %s851 = sphi %s817, %s817
                $region131: #{relu_pca_forward.7} parent=127 // loop_header_branch
                  %848 = sbr.rel (%p846) target = $region135
                $region132: #{relu_pca_forward.7} parent=127 // loop_body
                  %v852 = vld [vmem:[%s850] sm:$0xff]
                  %853 = vst [vmem:[%s851] sm:$0xff] %v852
                  %v854 = vld [vmem:[%s850 + $0x8] sm:$0xff]
                  %855 = vst [vmem:[%s851 + $0x20] sm:$0xff] %v854
                  %v856 = vld [vmem:[%s850 + $0x10] sm:$0xff]
                  %857 = vst [vmem:[%s851 + $0x40] sm:$0xff] %v856
                  %v858 = vld [vmem:[%s850 + $0x18] sm:$0xff]
                  %859 = vst [vmem:[%s851 + $0x60] sm:$0xff] %v858
                $region133: #{relu_pca_forward.7} parent=127 // loop_footer
                  %s849 = sadd.s32 1, %s845
                $region134: #{relu_pca_forward.7} parent=127 // loop_footer_branch
                  %844 = sbr.rel target = $region130
                $region135: #{relu_pca_forward.7} parent=127 // loop_exit
                  _
              $region128: #{relu_pca_forward.7} parent=112 // pred_fallthru
                _
              // Predicated region
              $region136: #{relu_pca_forward.7} parent=112 // pred_check
                _
              $region137: #{relu_pca_forward.7} parent=112 // pred_check_branch
                %861 = sbr.rel target = $region139
              $region138: #{relu_pca_forward.7} parent=112 // pred_region
                _
              $region139: #{relu_pca_forward.7} parent=112 // pred_fallthru
                _
            $region113: #{relu_pca_forward.7} parent=108 // pred_fallthru
              _
            // Predicated region
            $region114: #{relu_pca_forward.7} parent=108 // pred_check
              _
            $region115: #{relu_pca_forward.7} parent=108 // pred_check_branch
              %823 = sbr.rel target = $region117
            $region116: #{relu_pca_forward.7} parent=108 // pred_region
              %s825 = ssub.s32 256, 1
              loop: start=0, step=1, limit=1
              $region118: #{relu_pca_forward.7} parent=116 // loop_pre_header
                _
              $region119: #{relu_pca_forward.7} parent=116 // loop_header
                %s827 = sphi 0, %s831
                %p828 = scmp.ge.s32.totalorder %s827, 1
                %s832 = sphi %s812, %s812
                %s833 = sphi %s817, %s817
              $region120: #{relu_pca_forward.7} parent=116 // loop_header_branch
                %830 = sbr.rel (%p828) target = $region124
              $region121: #{relu_pca_forward.7} parent=116 // loop_body
                %v834 = vld [vmem:[%s832] sm:%s825]
                %835 = vst [vmem:[%s833] sm:%s825] %v834
                %v836 = vld [vmem:[%s832 + $0x8] sm:%s825]
                %837 = vst [vmem:[%s833 + $0x20] sm:%s825] %v836
                %v838 = vld [vmem:[%s832 + $0x10] sm:%s825]
                %839 = vst [vmem:[%s833 + $0x40] sm:%s825] %v838
                %v840 = vld [vmem:[%s832 + $0x18] sm:%s825]
                %841 = vst [vmem:[%s833 + $0x60] sm:%s825] %v840
              $region122: #{relu_pca_forward.7} parent=116 // loop_footer
                %s831 = sadd.s32 1, %s827
              $region123: #{relu_pca_forward.7} parent=116 // loop_footer_branch
                %826 = sbr.rel target = $region119
              $region124: #{relu_pca_forward.7} parent=116 // loop_exit
                _
            $region117: #{relu_pca_forward.7} parent=108 // pred_fallthru
              _
          $region109: #{relu_pca_forward.7} parent=104 // pred_fallthru
            _
          %862 = vnop
        $region105: #{relu_pca_forward.7} parent=96 // pred_fallthru
          _
      $region97: #{relu_pca_forward.7} parent=5 // pred_fallthru
        _
      %p863 = scmp.le.s32.totalorder 2, %s16
      // Predicated region
      $region140: #{relu_pca_forward.7} parent=5 // pred_check
        %p864 = pneg %p863
      $region141: #{relu_pca_forward.7} parent=5 // pred_check_branch
        %866 = sbr.rel (%p864) target = $region143
      $region142: #{relu_pca_forward.7} parent=5 // pred_region
        %s867 = ssub.s32 %s16, 2
        // Predicated region
        $region144: #{relu_pca_forward.7} parent=142 // pred_check
          %p868 = pneg %p260
        $region145: #{relu_pca_forward.7} parent=142 // pred_check_branch
          %870 = sbr.rel (%p868) target = $region147
        $region146: #{relu_pca_forward.7} parent=142 // pred_region
          %s871 = sand.u32 %s245, 1
          %s872 = sand.u32 %s245, 1
          %s873 = smul.addr %s872, 32
          %s874 = scalar_lea.vmem [#allocation3], %s873
        $region147: #{relu_pca_forward.7} parent=142 // pred_fallthru
          _
      $region143: #{relu_pca_forward.7} parent=5 // pred_fallthru
        _
    $region6: #{relu_pca_forward.7} parent=1 // loop_footer
      %s20 = sadd.s32 1, %s16
    $region7: #{relu_pca_forward.7} parent=1 // loop_footer_branch
      %15 = sbr.rel target = $region3
    $region8: #{relu_pca_forward.7} parent=1 // loop_exit
      _

</llo_original>
